<compile_context>
chip_gen: v6e
topology: v6e:2x2x1
jax: 0.10.0
libtpu: 0.0.40
codegen_flags: <defaults>
</compile_context>

<pallas_src>
import math

import jax
import jax.numpy as jnp
from jax.experimental import pallas as pl
from jax.experimental.pallas import tpu as pltpu


def _make_dam_kernel(C, H, W, bps):
    HW = H * W
    CW = C * W
    CH = C * H

    def kernel(x_cf_ref, x_stk_ref, w1t_ref, w2_ref, wblk_ref, bh_ref, bw_ref,
               o_ref):
        # Weights are loaded once per grid step and reused for every batch
        # element handled by this step.
        w1t = w1t_ref[...]      # (C, mid)   f32  fc[0].weight, transposed
        w2 = w2_ref[...]        # (C, mid)   f32  fc[2].weight
        wblk = wblk_ref[...]    # (2C, H+W)  bf16 block-diag [wh 0; 0 ww]
        bh = bh_ref[...]        # (C, 1)     f32  ham bias
        bw = bw_ref[...]        # (C, 1)     f32  wam bias

        for b in range(bps):    # static unroll: bps = 1 (v7x) or B (v5e/v6e)
            x_cf = x_cf_ref[b]    # (C, H*W)          f32, x_cf[c, h*W+w]
            x_stk = x_stk_ref[b]  # (H+W, L)          bf16, rows 0:H = x_hf,
                                  #                   rows H:H+W = x_wf

            # ---------------- ChannelAttention (VPU/XLU only) ---------------
            avg = jnp.mean(x_cf, axis=-1, keepdims=True)            # (C, 1)
            mx = jnp.max(x_cf, axis=-1, keepdims=True)              # (C, 1)
            # mid=2 FC done as tiny weighted reductions, not MXU pushes.
            h_avg = jnp.maximum(
                jnp.sum(w1t * avg, axis=0, keepdims=True), 0.0)     # (1, mid)
            h_max = jnp.maximum(
                jnp.sum(w1t * mx, axis=0, keepdims=True), 0.0)      # (1, mid)
            logit = jnp.sum(w2 * (h_avg + h_max), axis=-1,
                            keepdims=True)                          # (C, 1)
            attn = jax.nn.sigmoid(logit)                            # (C, 1)

            x2_cf = x_cf * attn                                     # (C, H*W)

            # ---------------- SAM: fused H/W convolutions -------------------
            # Single bf16 MXU matmul (2C, H+W) @ (H+W, L) -> (2C, L) f32.
            y_full = jnp.dot(wblk, x_stk,
                             preferred_element_type=jnp.float32)
            yh0 = y_full[:C, :CW]   # (C, C*W): sum_h wh[o,h] * x[c,h,w]
            yw0 = y_full[C:, :CH]   # (C, C*H): sum_w ww[o,w] * x[c,h,w]

            # Apply channel attention + conv bias + bf16 cast while still in
            # the lane-dense 2-D layout (512 lanes), THEN reshape the bf16
            # result to the batched-matmul layout.
            attn_w = jnp.broadcast_to(attn[None], (1, C, W)).reshape(1, CW)
            if H == W:
                attn_h = attn_w
            else:
                attn_h = jnp.broadcast_to(attn[None], (1, C, H)).reshape(1, CH)
            yh2 = (yh0 * attn_w + bh).astype(jnp.bfloat16)          # (C, C*W)
            yw2 = (yw0 * attn_h + bw).astype(jnp.bfloat16)          # (C, C*H)

            yh3 = yh2.reshape(C, C, W)     # (o, c, w)
            yw3 = yw2.reshape(C, C, H)     # (o, c, h)
            # y[o,h,w] = sum_c yw3[o,c,h] * yh3[o,c,w]  (batched over o, MXU)
            y = jnp.einsum('och,ocw->ohw', yw3, yh3,
                           preferred_element_type=jnp.float32)      # (O,H,W)

            # Final sigmoid/multiply/store in the lane-dense (C, H*W) layout.
            out = jax.nn.sigmoid(y.reshape(C, HW)) * x2_cf
            o_ref[b] = out.astype(o_ref.dtype)

    return kernel


def _batch_per_step(B):
    """1 batch/step on dual-TC chips (v7x, shard across cores); fold the whole
    batch into one step on single-TC chips (v5e/v6e) to avoid per-step
    pipeline overhead."""
    try:
        kind = jax.devices()[0].device_kind.lower()
    except Exception:
        kind = ""
    dual_tc = ("v7" in kind) or ("7x" in kind)
    return 1 if (dual_tc and B > 1) else B


@jax.jit
def dam_forward(x, w1, w2, wh, bh, ww, bw):
    B, C, H, W = x.shape
    HW, CW, CH = H * W, C * W, C * H
    L = max(CW, CH)
    mid = w1.shape[0]
    bps = _batch_per_step(B)

    # Lane-dense views of x.  These are tiny XLA layout ops; under jit they
    # fuse with the bf16 cast / concatenate that feeds the pallas_call.
    x_cf = x.reshape(B, C, HW)                                   # f32 (B,C,HW)
    x_hf = jnp.transpose(x, (0, 2, 1, 3)).reshape(B, H, CW)      # (B,H,C*W)
    x_wf = jnp.transpose(x, (0, 3, 1, 2)).reshape(B, W, CH)      # (B,W,C*H)
    if CW < L:
        x_hf = jnp.pad(x_hf, ((0, 0), (0, 0), (0, L - CW)))
    if CH < L:
        x_wf = jnp.pad(x_wf, ((0, 0), (0, 0), (0, L - CH)))
    # Single stacked bf16 slab for the fused SAM matmul (halves slab DMA).
    x_stk = jnp.concatenate([x_hf, x_wf], axis=1).astype(jnp.bfloat16)

    # Block-diagonal fused SAM weight: rows 0:C contract over H (ham), rows
    # C:2C contract over W (wam).
    wblk = jnp.zeros((2 * C, H + W), jnp.float32)
    wblk = wblk.at[:C, :H].set(wh).at[C:, H:].set(ww).astype(jnp.bfloat16)

    w1t = jnp.transpose(w1)                                      # (C, mid)

    kernel = _make_dam_kernel(C, H, W, bps)

    grid_spec = pltpu.PrefetchScalarGridSpec(
        num_scalar_prefetch=0,
        grid=(B // bps,),
        in_specs=[
            pl.BlockSpec((bps, C, HW), lambda i: (i, 0, 0)),
            pl.BlockSpec((bps, H + W, L), lambda i: (i, 0, 0)),
            pl.BlockSpec((C, mid), lambda i: (0, 0)),
            pl.BlockSpec((C, mid), lambda i: (0, 0)),
            pl.BlockSpec((2 * C, H + W), lambda i: (0, 0)),
            pl.BlockSpec((C, 1), lambda i: (0, 0)),
            pl.BlockSpec((C, 1), lambda i: (0, 0)),
        ],
        out_specs=pl.BlockSpec((bps, C, HW), lambda i: (i, 0, 0)),
    )
    out_flat = pl.pallas_call(
        kernel,
        out_shape=jax.ShapeDtypeStruct((B, C, HW), x.dtype),
        grid_spec=grid_spec,
        compiler_params=pltpu.CompilerParams(
            dimension_semantics=("parallel",)),
    )(x_cf, x_stk, w1t, w2, wblk, bh, bw)
    return out_flat.reshape(B, C, H, W)


def dam_reference(x, w1, w2, wh, bh, ww, bw):
    """Pure-JAX f32 reference of the PyTorch forward pass (NCHW)."""
    avg = jnp.mean(x, axis=(2, 3))                      # (B, C)
    mx = jnp.max(x, axis=(2, 3))                        # (B, C)

    def fc(v):                                          # (B, C) -> (B, C)
        h = jnp.maximum(v @ w1.T, 0.0)
        return h @ w2.T

    attn = jax.nn.sigmoid(fc(avg) + fc(mx))             # (B, C)
    x2 = x * attn[:, :, None, None]                     # (B, C, H, W)

    yh = jnp.einsum('oh,bchw->bocw', wh, x2) + bh.reshape(1, -1, 1, 1)
    yw = jnp.einsum('ow,bchw->bohc', ww, x2) + bw.reshape(1, -1, 1, 1)
    y = jnp.einsum('bohc,bocw->bohw', yw, yh)
    return jax.nn.sigmoid(y) * x2


if __name__ == "__main__":
    B, C, H, W = 2, 32, 16, 16
    ratio = 16
    mid = C // ratio  # 2

    key = jax.random.PRNGKey(0)
    ks = jax.random.split(key, 7)
    x = jax.random.normal(ks[0], (B, C, H, W), jnp.float32)
    # Deterministic synthetic parameters (shapes from the module __init__).
    w1 = jax.random.normal(ks[1], (mid, C), jnp.float32) / math.sqrt(C)
    w2 = jax.random.normal(ks[2], (C, mid), jnp.float32) / math.sqrt(mid)
    wh = jax.random.normal(ks[3], (C, H), jnp.float32) / math.sqrt(H)
    bh = jax.random.normal(ks[4], (C, 1), jnp.float32) * 0.1
    ww = jax.random.normal(ks[5], (C, W), jnp.float32) / math.sqrt(W)
    bw = jax.random.normal(ks[6], (C, 1), jnp.float32) * 0.1

    out = dam_forward(x, w1, w2, wh, bh, ww, bw)
    out = jax.block_until_ready(out)

    ref = dam_reference(x, w1, w2, wh, bh, ww, bw)
    assert out.shape == (B, C, H, W)
    # SAM contractions run with bf16 operands on the MXU (f32 accumulation),
    # so the tolerance vs the f32 reference is loosened accordingly.
    assert jnp.allclose(out, ref, atol=5e-2, rtol=5e-2), "mismatch vs reference"
    print("KERNEL_OK")
</pallas_src>

<mosaic_0001>
module attributes {stable_mosaic.version = 11 : i64} {
  func.func @kernel(%arg0: i32, %arg1: memref<2x32x256xf32, #tpu.memory_space<vmem>>, %arg2: memref<2x32x512xbf16, #tpu.memory_space<vmem>>, %arg3: memref<32x2xf32, #tpu.memory_space<vmem>>, %arg4: memref<32x2xf32, #tpu.memory_space<vmem>>, %arg5: memref<64x32xbf16, #tpu.memory_space<vmem>>, %arg6: memref<32x1xf32, #tpu.memory_space<vmem>>, %arg7: memref<32x1xf32, #tpu.memory_space<vmem>>, %arg8: memref<2x32x256xf32, #tpu.memory_space<vmem>>) attributes {dimension_semantics = [#tpu.dimension_semantics<parallel>], iteration_bounds = array<i64: 1>, scalar_prefetch = 0 : i64, scratch_operands = 0 : i64, tpu.core_type = #tpu.core_type<tc>, window_params = [{transform_indices = @transform_0, window_bounds = array<i64: 2, 32, 256>}, {transform_indices = @transform_1, window_bounds = array<i64: 2, 32, 512>}, {pipeline_mode = #tpu.pipeline_mode<synchronous>, transform_indices = @transform_2, window_bounds = array<i64: 32, 2>}, {pipeline_mode = #tpu.pipeline_mode<synchronous>, transform_indices = @transform_3, window_bounds = array<i64: 32, 2>}, {pipeline_mode = #tpu.pipeline_mode<synchronous>, transform_indices = @transform_4, window_bounds = array<i64: 64, 32>}, {pipeline_mode = #tpu.pipeline_mode<synchronous>, transform_indices = @transform_5, window_bounds = array<i64: 32, 1>}, {pipeline_mode = #tpu.pipeline_mode<synchronous>, transform_indices = @transform_6, window_bounds = array<i64: 32, 1>}, {transform_indices = @transform_7, window_bounds = array<i64: 2, 32, 256>}]} {
    %c0 = arith.constant 0 : index
    %c0_0 = arith.constant 0 : index
    %0 = vector.load %arg3[%c0, %c0_0] : memref<32x2xf32, #tpu.memory_space<vmem>>, vector<32x2xf32>
    %c0_1 = arith.constant 0 : index
    %c0_2 = arith.constant 0 : index
    %1 = vector.load %arg4[%c0_1, %c0_2] : memref<32x2xf32, #tpu.memory_space<vmem>>, vector<32x2xf32>
    %c0_3 = arith.constant 0 : index
    %c0_4 = arith.constant 0 : index
    %2 = vector.load %arg5[%c0_3, %c0_4] : memref<64x32xbf16, #tpu.memory_space<vmem>>, vector<64x32xbf16>
    %c0_5 = arith.constant 0 : index
    %c0_6 = arith.constant 0 : index
    %3 = vector.load %arg6[%c0_5, %c0_6] : memref<32x1xf32, #tpu.memory_space<vmem>>, vector<32x1xf32>
    %c0_7 = arith.constant 0 : index
    %c0_8 = arith.constant 0 : index
    %4 = vector.load %arg7[%c0_7, %c0_8] : memref<32x1xf32, #tpu.memory_space<vmem>>, vector<32x1xf32>
    %c0_9 = arith.constant 0 : index
    %c0_10 = arith.constant 0 : index
    %c0_11 = arith.constant 0 : index
    %5 = vector.load %arg1[%c0_9, %c0_10, %c0_11] : memref<2x32x256xf32, #tpu.memory_space<vmem>>, vector<1x32x256xf32>
    %6 = vector.shape_cast %5 : vector<1x32x256xf32> to vector<32x256xf32>
    %c0_12 = arith.constant 0 : index
    %c0_13 = arith.constant 0 : index
    %c0_14 = arith.constant 0 : index
    %7 = vector.load %arg2[%c0_12, %c0_13, %c0_14] : memref<2x32x512xbf16, #tpu.memory_space<vmem>>, vector<1x32x512xbf16>
    %8 = vector.shape_cast %7 : vector<1x32x512xbf16> to vector<32x512xbf16>
    %cst = arith.constant dense<0.000000e+00> : vector<32xf32>
    %9 = vector.multi_reduction <add>, %6, %cst [1] : vector<32x256xf32> to vector<32xf32>
    %10 = vector.shape_cast %9 : vector<32xf32> to vector<32x1xf32>
    %cst_15 = arith.constant 2.560000e+02 : f32
    %11 = vector.broadcast %cst_15 : f32 to vector<32x1xf32>
    %12 = arith.divf %10, %11 : vector<32x1xf32>
    %cst_16 = arith.constant dense<0xFF800000> : vector<32xf32>
    %13 = vector.multi_reduction <maximumf>, %6, %cst_16 [1] : vector<32x256xf32> to vector<32xf32>
    %14 = vector.shape_cast %13 : vector<32xf32> to vector<32x1xf32>
    %15 = vector.broadcast %12 : vector<32x1xf32> to vector<32x2xf32>
    %16 = arith.mulf %0, %15 : vector<32x2xf32>
    %cst_17 = arith.constant dense<0.000000e+00> : vector<2xf32>
    %17 = vector.multi_reduction <add>, %16, %cst_17 [0] : vector<32x2xf32> to vector<2xf32>
    %18 = vector.shape_cast %17 : vector<2xf32> to vector<1x2xf32>
    %cst_18 = arith.constant 0.000000e+00 : f32
    %19 = vector.broadcast %cst_18 : f32 to vector<1x2xf32>
    %20 = arith.maximumf %18, %19 : vector<1x2xf32>
    %21 = vector.broadcast %14 : vector<32x1xf32> to vector<32x2xf32>
    %22 = arith.mulf %0, %21 : vector<32x2xf32>
    %cst_19 = arith.constant dense<0.000000e+00> : vector<2xf32>
    %23 = vector.multi_reduction <add>, %22, %cst_19 [0] : vector<32x2xf32> to vector<2xf32>
    %24 = vector.shape_cast %23 : vector<2xf32> to vector<1x2xf32>
    %cst_20 = arith.constant 0.000000e+00 : f32
    %25 = vector.broadcast %cst_20 : f32 to vector<1x2xf32>
    %26 = arith.maximumf %24, %25 : vector<1x2xf32>
    %27 = arith.addf %20, %26 : vector<1x2xf32>
    %28 = vector.broadcast %27 : vector<1x2xf32> to vector<32x2xf32>
    %29 = arith.mulf %1, %28 : vector<32x2xf32>
    %cst_21 = arith.constant dense<0.000000e+00> : vector<32xf32>
    %30 = vector.multi_reduction <add>, %29, %cst_21 [1] : vector<32x2xf32> to vector<32xf32>
    %31 = vector.shape_cast %30 : vector<32xf32> to vector<32x1xf32>
    %32 = arith.negf %31 : vector<32x1xf32>
    %33 = math.exp %32 : vector<32x1xf32>
    %cst_22 = arith.constant 1.000000e+00 : f32
    %34 = vector.broadcast %cst_22 : f32 to vector<32x1xf32>
    %35 = arith.addf %34, %33 : vector<32x1xf32>
    %36 = arith.divf %34, %35 : vector<32x1xf32>
    %37 = vector.broadcast %36 : vector<32x1xf32> to vector<32x256xf32>
    %38 = arith.mulf %6, %37 : vector<32x256xf32>
    %cst_23 = arith.constant dense<0.000000e+00> : vector<64x512xf32>
    %39 = tpu.matmul %2, %8, %cst_23 {dimension_numbers = #tpu.dot_dimension_numbers<[1], [0], [0], [1], [0, 0, 1, 1], [], []>} : vector<64x32xbf16>, vector<32x512xbf16>, vector<64x512xf32> -> vector<64x512xf32>
    %40 = vector.extract_strided_slice %39 {offsets = [0, 0], sizes = [32, 512], strides = [1, 1]} : vector<64x512xf32> to vector<32x512xf32>
    %41 = vector.extract_strided_slice %39 {offsets = [32, 0], sizes = [32, 512], strides = [1, 1]} : vector<64x512xf32> to vector<32x512xf32>
    %42 = vector.shape_cast %36 : vector<32x1xf32> to vector<1x32x1xf32>
    %43 = vector.shape_cast %42 : vector<1x32x1xf32> to vector<1x32x1xf32>
    %44 = vector.broadcast %43 : vector<1x32x1xf32> to vector<1x32x16xf32>
    %45 = vector.shape_cast %44 : vector<1x32x16xf32> to vector<1x512xf32>
    %46 = vector.broadcast %45 : vector<1x512xf32> to vector<32x512xf32>
    %47 = arith.mulf %40, %46 : vector<32x512xf32>
    %48 = vector.broadcast %3 : vector<32x1xf32> to vector<32x512xf32>
    %49 = arith.addf %47, %48 : vector<32x512xf32>
    %50 = arith.truncf %49 : vector<32x512xf32> to vector<32x512xbf16>
    %51 = vector.broadcast %45 : vector<1x512xf32> to vector<32x512xf32>
    %52 = arith.mulf %41, %51 : vector<32x512xf32>
    %53 = vector.broadcast %4 : vector<32x1xf32> to vector<32x512xf32>
    %54 = arith.addf %52, %53 : vector<32x512xf32>
    %55 = arith.truncf %54 : vector<32x512xf32> to vector<32x512xbf16>
    %56 = vector.shape_cast %50 : vector<32x512xbf16> to vector<32x32x16xbf16>
    %57 = vector.shape_cast %55 : vector<32x512xbf16> to vector<32x32x16xbf16>
    "tpu.trace_start"() <{level = 10 : i32, message = "och,ocw->ohw"}> : () -> ()
    %cst_24 = arith.constant dense<0.000000e+00> : vector<32x16x16xf32>
    %58 = tpu.matmul %57, %56, %cst_24 {dimension_numbers = #tpu.dot_dimension_numbers<[1], [1], [2], [2], [0, 0, 0, 2, 1, 2], [0], [0]>} : vector<32x32x16xbf16>, vector<32x32x16xbf16>, vector<32x16x16xf32> -> vector<32x16x16xf32>
    "tpu.trace_stop"() : () -> ()
    %59 = vector.shape_cast %58 : vector<32x16x16xf32> to vector<32x256xf32>
    %60 = arith.negf %59 : vector<32x256xf32>
    %61 = math.exp %60 : vector<32x256xf32>
    %cst_25 = arith.constant 1.000000e+00 : f32
    %62 = vector.broadcast %cst_25 : f32 to vector<32x256xf32>
    %63 = arith.addf %62, %61 : vector<32x256xf32>
    %64 = arith.divf %62, %63 : vector<32x256xf32>
    %65 = arith.mulf %64, %38 : vector<32x256xf32>
    %c0_26 = arith.constant 0 : index
    %c0_27 = arith.constant 0 : index
    %c0_28 = arith.constant 0 : index
    %66 = vector.load %arg8[%c0_26, %c0_27, %c0_28] : memref<2x32x256xf32, #tpu.memory_space<vmem>>, vector<1x32x256xf32>
    %67 = vector.shape_cast %66 : vector<1x32x256xf32> to vector<32x256xf32>
    %68 = vector.shape_cast %65 : vector<32x256xf32> to vector<1x32x256xf32>
    tpu.vector_store %arg8[%c0_26, %c0_27, %c0_28], %68 {strides = array<i32>} : memref<2x32x256xf32, #tpu.memory_space<vmem>>, vector<1x32x256xf32>,
    %c1 = arith.constant 1 : index
    %c0_29 = arith.constant 0 : index
    %c0_30 = arith.constant 0 : index
    %69 = vector.load %arg1[%c1, %c0_29, %c0_30] : memref<2x32x256xf32, #tpu.memory_space<vmem>>, vector<1x32x256xf32>
    %70 = vector.shape_cast %69 : vector<1x32x256xf32> to vector<32x256xf32>
    %c1_31 = arith.constant 1 : index
    %c0_32 = arith.constant 0 : index
    %c0_33 = arith.constant 0 : index
    %71 = vector.load %arg2[%c1_31, %c0_32, %c0_33] : memref<2x32x512xbf16, #tpu.memory_space<vmem>>, vector<1x32x512xbf16>
    %72 = vector.shape_cast %71 : vector<1x32x512xbf16> to vector<32x512xbf16>
    %cst_34 = arith.constant dense<0.000000e+00> : vector<32xf32>
    %73 = vector.multi_reduction <add>, %70, %cst_34 [1] : vector<32x256xf32> to vector<32xf32>
    %74 = vector.shape_cast %73 : vector<32xf32> to vector<32x1xf32>
    %cst_35 = arith.constant 2.560000e+02 : f32
    %75 = vector.broadcast %cst_35 : f32 to vector<32x1xf32>
    %76 = arith.divf %74, %75 : vector<32x1xf32>
    %cst_36 = arith.constant dense<0xFF800000> : vector<32xf32>
    %77 = vector.multi_reduction <maximumf>, %70, %cst_36 [1] : vector<32x256xf32> to vector<32xf32>
    %78 = vector.shape_cast %77 : vector<32xf32> to vector<32x1xf32>
    %79 = vector.broadcast %76 : vector<32x1xf32> to vector<32x2xf32>
    %80 = arith.mulf %0, %79 : vector<32x2xf32>
    %cst_37 = arith.constant dense<0.000000e+00> : vector<2xf32>
    %81 = vector.multi_reduction <add>, %80, %cst_37 [0] : vector<32x2xf32> to vector<2xf32>
    %82 = vector.shape_cast %81 : vector<2xf32> to vector<1x2xf32>
    %cst_38 = arith.constant 0.000000e+00 : f32
    %83 = vector.broadcast %cst_38 : f32 to vector<1x2xf32>
    %84 = arith.maximumf %82, %83 : vector<1x2xf32>
    %85 = vector.broadcast %78 : vector<32x1xf32> to vector<32x2xf32>
    %86 = arith.mulf %0, %85 : vector<32x2xf32>
    %cst_39 = arith.constant dense<0.000000e+00> : vector<2xf32>
    %87 = vector.multi_reduction <add>, %86, %cst_39 [0] : vector<32x2xf32> to vector<2xf32>
    %88 = vector.shape_cast %87 : vector<2xf32> to vector<1x2xf32>
    %cst_40 = arith.constant 0.000000e+00 : f32
    %89 = vector.broadcast %cst_40 : f32 to vector<1x2xf32>
    %90 = arith.maximumf %88, %89 : vector<1x2xf32>
    %91 = arith.addf %84, %90 : vector<1x2xf32>
    %92 = vector.broadcast %91 : vector<1x2xf32> to vector<32x2xf32>
    %93 = arith.mulf %1, %92 : vector<32x2xf32>
    %cst_41 = arith.constant dense<0.000000e+00> : vector<32xf32>
    %94 = vector.multi_reduction <add>, %93, %cst_41 [1] : vector<32x2xf32> to vector<32xf32>
    %95 = vector.shape_cast %94 : vector<32xf32> to vector<32x1xf32>
    %96 = arith.negf %95 : vector<32x1xf32>
    %97 = math.exp %96 : vector<32x1xf32>
    %cst_42 = arith.constant 1.000000e+00 : f32
    %98 = vector.broadcast %cst_42 : f32 to vector<32x1xf32>
    %99 = arith.addf %98, %97 : vector<32x1xf32>
    %100 = arith.divf %98, %99 : vector<32x1xf32>
    %101 = vector.broadcast %100 : vector<32x1xf32> to vector<32x256xf32>
    %102 = arith.mulf %70, %101 : vector<32x256xf32>
    %cst_43 = arith.constant dense<0.000000e+00> : vector<64x512xf32>
    %103 = tpu.matmul %2, %72, %cst_43 {dimension_numbers = #tpu.dot_dimension_numbers<[1], [0], [0], [1], [0, 0, 1, 1], [], []>} : vector<64x32xbf16>, vector<32x512xbf16>, vector<64x512xf32> -> vector<64x512xf32>
    %104 = vector.extract_strided_slice %103 {offsets = [0, 0], sizes = [32, 512], strides = [1, 1]} : vector<64x512xf32> to vector<32x512xf32>
    %105 = vector.extract_strided_slice %103 {offsets = [32, 0], sizes = [32, 512], strides = [1, 1]} : vector<64x512xf32> to vector<32x512xf32>
    %106 = vector.shape_cast %100 : vector<32x1xf32> to vector<1x32x1xf32>
    %107 = vector.shape_cast %106 : vector<1x32x1xf32> to vector<1x32x1xf32>
    %108 = vector.broadcast %107 : vector<1x32x1xf32> to vector<1x32x16xf32>
    %109 = vector.shape_cast %108 : vector<1x32x16xf32> to vector<1x512xf32>
    %110 = vector.broadcast %109 : vector<1x512xf32> to vector<32x512xf32>
    %111 = arith.mulf %104, %110 : vector<32x512xf32>
    %112 = vector.broadcast %3 : vector<32x1xf32> to vector<32x512xf32>
    %113 = arith.addf %111, %112 : vector<32x512xf32>
    %114 = arith.truncf %113 : vector<32x512xf32> to vector<32x512xbf16>
    %115 = vector.broadcast %109 : vector<1x512xf32> to vector<32x512xf32>
    %116 = arith.mulf %105, %115 : vector<32x512xf32>
    %117 = vector.broadcast %4 : vector<32x1xf32> to vector<32x512xf32>
    %118 = arith.addf %116, %117 : vector<32x512xf32>
    %119 = arith.truncf %118 : vector<32x512xf32> to vector<32x512xbf16>
    %120 = vector.shape_cast %114 : vector<32x512xbf16> to vector<32x32x16xbf16>
    %121 = vector.shape_cast %119 : vector<32x512xbf16> to vector<32x32x16xbf16>
    "tpu.trace_start"() <{level = 10 : i32, message = "och,ocw->ohw"}> : () -> ()
    %cst_44 = arith.constant dense<0.000000e+00> : vector<32x16x16xf32>
    %122 = tpu.matmul %121, %120, %cst_44 {dimension_numbers = #tpu.dot_dimension_numbers<[1], [1], [2], [2], [0, 0, 0, 2, 1, 2], [0], [0]>} : vector<32x32x16xbf16>, vector<32x32x16xbf16>, vector<32x16x16xf32> -> vector<32x16x16xf32>
    "tpu.trace_stop"() : () -> ()
    %123 = vector.shape_cast %122 : vector<32x16x16xf32> to vector<32x256xf32>
    %124 = arith.negf %123 : vector<32x256xf32>
    %125 = math.exp %124 : vector<32x256xf32>
    %cst_45 = arith.constant 1.000000e+00 : f32
    %126 = vector.broadcast %cst_45 : f32 to vector<32x256xf32>
    %127 = arith.addf %126, %125 : vector<32x256xf32>
    %128 = arith.divf %126, %127 : vector<32x256xf32>
    %129 = arith.mulf %128, %102 : vector<32x256xf32>
    %c1_46 = arith.constant 1 : index
    %c0_47 = arith.constant 0 : index
    %c0_48 = arith.constant 0 : index
    %130 = vector.load %arg8[%c1_46, %c0_47, %c0_48] : memref<2x32x256xf32, #tpu.memory_space<vmem>>, vector<1x32x256xf32>
    %131 = vector.shape_cast %130 : vector<1x32x256xf32> to vector<32x256xf32>
    %132 = vector.shape_cast %129 : vector<32x256xf32> to vector<1x32x256xf32>
    tpu.vector_store %arg8[%c1_46, %c0_47, %c0_48], %132 {strides = array<i32>} : memref<2x32x256xf32, #tpu.memory_space<vmem>>, vector<1x32x256xf32>,
    return
  }
  func.func @transform_0(%arg0: i32) -> (i32, i32, i32) {
    %c0_i32 = arith.constant 0 : i32
    %c0_i32_0 = arith.constant 0 : i32
    %c0_i32_1 = arith.constant 0 : i32
    return %arg0, %c0_i32, %c0_i32_0 : i32, i32, i32
  }
  func.func @transform_1(%arg0: i32) -> (i32, i32, i32) {
    %c0_i32 = arith.constant 0 : i32
    %c0_i32_0 = arith.constant 0 : i32
    %c0_i32_1 = arith.constant 0 : i32
    return %arg0, %c0_i32, %c0_i32_0 : i32, i32, i32
  }
  func.func @transform_2(%arg0: i32) -> (i32, i32) {
    %c0_i32 = arith.constant 0 : i32
    %c0_i32_0 = arith.constant 0 : i32
    %c0_i32_1 = arith.constant 0 : i32
    return %c0_i32, %c0_i32_0 : i32, i32
  }
  func.func @transform_3(%arg0: i32) -> (i32, i32) {
    %c0_i32 = arith.constant 0 : i32
    %c0_i32_0 = arith.constant 0 : i32
    %c0_i32_1 = arith.constant 0 : i32
    return %c0_i32, %c0_i32_0 : i32, i32
  }
  func.func @transform_4(%arg0: i32) -> (i32, i32) {
    %c0_i32 = arith.constant 0 : i32
    %c0_i32_0 = arith.constant 0 : i32
    %c0_i32_1 = arith.constant 0 : i32
    return %c0_i32, %c0_i32_0 : i32, i32
  }
  func.func @transform_5(%arg0: i32) -> (i32, i32) {
    %c0_i32 = arith.constant 0 : i32
    %c0_i32_0 = arith.constant 0 : i32
    %c0_i32_1 = arith.constant 0 : i32
    return %c0_i32, %c0_i32_0 : i32, i32
  }
  func.func @transform_6(%arg0: i32) -> (i32, i32) {
    %c0_i32 = arith.constant 0 : i32
    %c0_i32_0 = arith.constant 0 : i32
    %c0_i32_1 = arith.constant 0 : i32
    return %c0_i32, %c0_i32_0 : i32, i32
  }
  func.func @transform_7(%arg0: i32) -> (i32, i32, i32) {
    %c0_i32 = arith.constant 0 : i32
    %c0_i32_0 = arith.constant 0 : i32
    %c0_i32_1 = arith.constant 0 : i32
    return %arg0, %c0_i32, %c0_i32_0 : i32, i32, i32
  }
}

</mosaic_0001>

<llo_original>
// kernel: dam_forward.1
$region0: #{dam_forward.1}
  #allocation0 [shape = 'u32[]', space=smem, size = 0x4, offset = 0x4, fixed_abs, tag = 'smem constant byte address 0x4 - core index']
  #allocation1 [shape = 'u32[144,128]{1,0:T(1,128)}', space=vmem, size = 0x12000, scoped, tag = 'internal scratch']
  %s0 = inlined_call_operand.vmem [shape: f32[2,32,256], index: 0, kind: input, shape index: {}]
  %s1 = inlined_call_operand.vmem [shape: bf16[2,32,512], index: 1, kind: input, shape index: {}]
  %s2 = inlined_call_operand.vmem [shape: f32[32,2], index: 2, kind: input, shape index: {}]
  %s3 = inlined_call_operand.vmem [shape: f32[32,2], index: 3, kind: input, shape index: {}]
  %s4 = inlined_call_operand.vmem [shape: bf16[64,32], index: 4, kind: input, shape index: {}]
  %s5 = inlined_call_operand.vmem [shape: f32[32,1], index: 5, kind: input, shape index: {}]
  %s6 = inlined_call_operand.vmem [shape: f32[32,1], index: 6, kind: input, shape index: {}]
  %s7 = inlined_call_operand.vmem [shape: f32[2,32,256], index: 7, kind: output, shape index: {}]
  %s8 = sld [smem:[#allocation0]]
  $region38: #{dam_forward.1} parent=0
    _
  %s10 = ssub.s32 1, %s8
  %s11 = scalar_select 0, %s10, %s8
  // Predicated region
  $region2: #{dam_forward.1} parent=0 // pred_check
    _
  $region3: #{dam_forward.1} parent=0 // pred_check_branch
    %13 = sbr.rel (0) target = $region5
  $region4: #{dam_forward.1} parent=0 // pred_region
    _
  $region5: #{dam_forward.1} parent=0 // pred_fallthru
    _
  // Predicated region
  $region6: #{dam_forward.1} parent=0 // pred_check
    _
  $region7: #{dam_forward.1} parent=0 // pred_check_branch
    %15 = sbr.rel (0) target = $region9
  $region8: #{dam_forward.1} parent=0 // pred_region
    _
  $region9: #{dam_forward.1} parent=0 // pred_fallthru
    _
  // Predicated region
  $region10: #{dam_forward.1} parent=0 // pred_check
    _
  $region11: #{dam_forward.1} parent=0 // pred_check_branch
    %17 = sbr.rel (0) target = $region13
  $region12: #{dam_forward.1} parent=0 // pred_region
    _
  $region13: #{dam_forward.1} parent=0 // pred_fallthru
    _
  // Predicated region
  $region14: #{dam_forward.1} parent=0 // pred_check
    _
  $region15: #{dam_forward.1} parent=0 // pred_check_branch
    %19 = sbr.rel (0) target = $region17
  $region16: #{dam_forward.1} parent=0 // pred_region
    _
  $region17: #{dam_forward.1} parent=0 // pred_fallthru
    _
  // Predicated region
  $region18: #{dam_forward.1} parent=0 // pred_check
    _
  $region19: #{dam_forward.1} parent=0 // pred_check_branch
    %21 = sbr.rel (0) target = $region21
  $region20: #{dam_forward.1} parent=0 // pred_region
    _
  $region21: #{dam_forward.1} parent=0 // pred_fallthru
    _
  // Predicated region
  $region22: #{dam_forward.1} parent=0 // pred_check
    _
  $region23: #{dam_forward.1} parent=0 // pred_check_branch
    %23 = sbr.rel (0) target = $region25
  $region24: #{dam_forward.1} parent=0 // pred_region
    _
  $region25: #{dam_forward.1} parent=0 // pred_fallthru
    _
  // Predicated region
  $region26: #{dam_forward.1} parent=0 // pred_check
    _
  $region27: #{dam_forward.1} parent=0 // pred_check_branch
    %25 = sbr.rel (0) target = $region29
  $region28: #{dam_forward.1} parent=0 // pred_region
    _
  $region29: #{dam_forward.1} parent=0 // pred_fallthru
    _
  %v27 = vld [vmem:[%s2] sm:$0xff]
  %v28 = vld [vmem:[%s2 + $0x8] sm:$0xff]
  %v29 = vld [vmem:[%s2 + $0x10] sm:$0xff]
  %v30 = vld [vmem:[%s2 + $0x18] sm:$0xff]
  %v31 = vld [vmem:[%s3] sm:$0xff]
  %v32 = vld [vmem:[%s3 + $0x8] sm:$0xff]
  %v33 = vld [vmem:[%s3 + $0x10] sm:$0xff]
  %v34 = vld [vmem:[%s3 + $0x18] sm:$0xff]
  %v35 = vld [vmem:[%s4] sm:$0xf]
  %v36 = vld [vmem:[%s4 + $0x4] sm:$0xf]
  %v37 = vld [vmem:[%s4 + $0x8] sm:$0xf]
  %v38 = vld [vmem:[%s4 + $0xc] sm:$0xf]
  %v39 = vld [vmem:[%s4 + $0x10] sm:$0xf]
  %v40 = vld [vmem:[%s4 + $0x14] sm:$0xf]
  %v41 = vld [vmem:[%s4 + $0x18] sm:$0xf]
  %v42 = vld [vmem:[%s4 + $0x1c] sm:$0xf]
  %v43 = vld [vmem:[%s5] sm:$0xff]
  %v44 = vld [vmem:[%s5 + $0x8] sm:$0xff]
  %v45 = vld [vmem:[%s5 + $0x10] sm:$0xff]
  %v46 = vld [vmem:[%s5 + $0x18] sm:$0xff]
  %v47 = vld [vmem:[%s6] sm:$0xff]
  %v48 = vld [vmem:[%s6 + $0x8] sm:$0xff]
  %v49 = vld [vmem:[%s6 + $0x10] sm:$0xff]
  %v50 = vld [vmem:[%s6 + $0x18] sm:$0xff]
  %v51 = vld [vmem:[%s0] sm:$0xff]
  %v52 = vld [vmem:[%s0 + $0x8] sm:$0xff]
  %v53 = vld [vmem:[%s0 + $0x10] sm:$0xff]
  %v54 = vld [vmem:[%s0 + $0x18] sm:$0xff]
  %v55 = vld [vmem:[%s0 + $0x20] sm:$0xff]
  %v56 = vld [vmem:[%s0 + $0x28] sm:$0xff]
  %v57 = vld [vmem:[%s0 + $0x30] sm:$0xff]
  %v58 = vld [vmem:[%s0 + $0x38] sm:$0xff]
  %v59 = vld [vmem:[%s1] sm:$0xff]
  %v60 = vld [vmem:[%s1 + $0x8] sm:$0xff]
  %v61 = vld [vmem:[%s1 + $0x10] sm:$0xff]
  %v62 = vld [vmem:[%s1 + $0x18] sm:$0xff]
  %v63 = vld [vmem:[%s1 + $0x20] sm:$0xff]
  %v64 = vld [vmem:[%s1 + $0x28] sm:$0xff]
  %v65 = vld [vmem:[%s1 + $0x30] sm:$0xff]
  %v66 = vld [vmem:[%s1 + $0x38] sm:$0xff]
  %v67 = vadd.f32 %v51, %v52
  %68 = vadd.xlane.f32.xlu0 %v67
  %v69 = vpop.xlane.xlu0 %68
  %v70 = vadd.f32 %v53, %v54
  %71 = vadd.xlane.f32.xlu0 %v70
  %v72 = vpop.xlane.xlu0 %71
  %v73 = vadd.f32 %v55, %v56
  %74 = vadd.xlane.f32.xlu0 %v73
  %v75 = vpop.xlane.xlu0 %74
  %v76 = vadd.f32 %v57, %v58
  %77 = vadd.xlane.f32.xlu0 %v76
  %v78 = vpop.xlane.xlu0 %77
  %v79 = vrcp.pop 256.0
  %v80 = vmul.f32 %v69, %v79
  %v81 = vmul.f32 %v72, %v79
  %v82 = vmul.f32 %v75, %v79
  %v83 = vmul.f32 %v78, %v79
  %v84 = vmax.f32 %v51, %v52
  %85 = vmax.xlane.f32.xlu0 %v84
  %v86 = vpop.xlane.xlu0 %85
  %v87 = vmax.f32 %v53, %v54
  %88 = vmax.xlane.f32.xlu0 %v87
  %v89 = vpop.xlane.xlu0 %88
  %v90 = vmax.f32 %v55, %v56
  %91 = vmax.xlane.f32.xlu0 %v90
  %v92 = vpop.xlane.xlu0 %91
  %v93 = vmax.f32 %v57, %v58
  %94 = vmax.xlane.f32.xlu0 %v93
  %v95 = vpop.xlane.xlu0 %94
  %v96 = vmul.f32 %v27, %v80
  %v97 = vmul.f32 %v28, %v81
  %v98 = vmul.f32 %v29, %v82
  %v99 = vmul.f32 %v30, %v83
  %vm100 = vcmask 15360
  %v101 = vsel %vm100, %v96, 0.0
  %v102 = vsel %vm100, %v97, 0.0
  %v103 = vadd.f32 %v101, %v102
  %v104 = vsel %vm100, %v98, 0.0
  %v105 = vadd.f32 %v103, %v104
  %v106 = vsel %vm100, %v99, 0.0
  %v107 = vadd.f32 %v105, %v106
  %v108 = vrot.slane %v107, 4
  %v109 = vadd.f32 %v107, %v108
  %v110 = vrot.slane %v109, 2
  %v111 = vadd.f32 %v109, %v110
  %v112 = vrot.slane %v111, 1
  %v113 = vadd.f32 %v111, %v112
  %v114 = vmax.f32 %v113, 0.0
  %v115 = vmul.f32 %v27, %v86
  %v116 = vmul.f32 %v28, %v89
  %v117 = vmul.f32 %v29, %v92
  %v118 = vmul.f32 %v30, %v95
  %v119 = vsel %vm100, %v115, 0.0
  %v120 = vsel %vm100, %v116, 0.0
  %v121 = vadd.f32 %v119, %v120
  %v122 = vsel %vm100, %v117, 0.0
  %v123 = vadd.f32 %v121, %v122
  %v124 = vsel %vm100, %v118, 0.0
  %v125 = vadd.f32 %v123, %v124
  %v126 = vrot.slane %v125, 4
  %v127 = vadd.f32 %v125, %v126
  %v128 = vrot.slane %v127, 2
  %v129 = vadd.f32 %v127, %v128
  %v130 = vrot.slane %v129, 1
  %v131 = vadd.f32 %v129, %v130
  %v132 = vmax.f32 %v131, 0.0
  %v133 = vadd.f32 %v114, %v132
  %v134 = vmul.f32 %v31, %v133
  %v135 = vmul.f32 %v32, %v133
  %v136 = vmul.f32 %v33, %v133
  %v137 = vmul.f32 %v34, %v133
  %v138 = vsel %vm100, %v134, 0.0
  %139 = vadd.xlane.f32.xlu0 %v138
  %v140 = vpop.xlane.xlu0 %139
  %v141 = vsel %vm100, %v135, 0.0
  %142 = vadd.xlane.f32.xlu0 %v141
  %v143 = vpop.xlane.xlu0 %142
  %v144 = vsel %vm100, %v136, 0.0
  %145 = vadd.xlane.f32.xlu0 %v144
  %v146 = vpop.xlane.xlu0 %145
  %v147 = vsel %vm100, %v137, 0.0
  %148 = vadd.xlane.f32.xlu0 %v147
  %v149 = vpop.xlane.xlu0 %148
  %v150 = vxor.u32 %v140, 2147483648
  %v151 = vxor.u32 %v143, 2147483648
  %v152 = vxor.u32 %v146, 2147483648
  %v153 = vxor.u32 %v149, 2147483648
  %v154 = vmul.f32 %v150, 1.442695
  %v155 = vpow.pop %v154
  %v156 = vmul.f32 %v151, 1.442695
  %v157 = vpow.pop %v156
  %v158 = vmul.f32 %v152, 1.442695
  %v159 = vpow.pop %v158
  %v160 = vmul.f32 %v153, 1.442695
  %v161 = vpow.pop %v160
  %v162 = vadd.f32 %v155, 1.0
  %v163 = vadd.f32 %v157, 1.0
  %v164 = vadd.f32 %v159, 1.0
  %v165 = vadd.f32 %v161, 1.0
  %v166 = vrcp.pop %v162
  %v167 = vmul.f32 1.0, %v166
  %v168 = vrcp.pop %v163
  %v169 = vmul.f32 1.0, %v168
  %v170 = vrcp.pop %v164
  %v171 = vmul.f32 1.0, %v170
  %v172 = vrcp.pop %v165
  %v173 = vmul.f32 1.0, %v172
  %v174 = vmul.f32 %v51, %v167
  %v175 = vmul.f32 %v52, %v167
  %v176 = vmul.f32 %v53, %v169
  %v177 = vmul.f32 %v54, %v169
  %v178 = vmul.f32 %v55, %v171
  %v179 = vmul.f32 %v56, %v171
  %v180 = vmul.f32 %v57, %v173
  %v181 = vmul.f32 %v58, %v173
  %v190 = vunpack.c.l.b16 %v35
  %v191 = vunpack.c.l.b16 %v36
  %v192 = vunpack.c.l.b16 %v37
  %v193 = vunpack.c.l.b16 %v38
  %v194 = vunpack.c.l.b16 %v39
  %v195 = vunpack.c.l.b16 %v40
  %v196 = vunpack.c.l.b16 %v41
  %v197 = vunpack.c.l.b16 %v42
  %v198 = vpack.c.b16 %v191, %v190
  %v199 = vpack.c.b16 %v193, %v192
  %v200 = vpack.c.b16 %v195, %v194
  %v201 = vpack.c.b16 %v197, %v196
  %v210 = vunpack.c.l.b16 %v59
  %v211 = vunpack.c.h.b16 %v59
  %v212 = vunpack.c.l.b16 %v60
  %v213 = vunpack.c.h.b16 %v60
  %v214 = vunpack.c.l.b16 %v61
  %v215 = vunpack.c.h.b16 %v61
  %v216 = vunpack.c.l.b16 %v62
  %v217 = vunpack.c.h.b16 %v62
  %v218 = vunpack.c.l.b16 %v63
  %v219 = vunpack.c.h.b16 %v63
  %v220 = vunpack.c.l.b16 %v64
  %v221 = vunpack.c.h.b16 %v64
  %v222 = vunpack.c.l.b16 %v65
  %v223 = vunpack.c.h.b16 %v65
  %v224 = vunpack.c.l.b16 %v66
  %v225 = vunpack.c.h.b16 %v66
  %v226 = vpack.c.b16 %v214, %v210
  %v227 = vpack.c.b16 %v215, %v211
  %v228 = vpack.c.b16 %v216, %v212
  %v229 = vpack.c.b16 %v217, %v213
  %v230 = vpack.c.b16 %v222, %v218
  %v231 = vpack.c.b16 %v223, %v219
  %v232 = vpack.c.b16 %v224, %v220
  %v233 = vpack.c.b16 %v225, %v221
  %vm242 = vcmask 261120
  %v244 = vsel %vm242, %v198, 0
  %v247 = vsel %vm242, %v199, 0
  %v250 = vsel %vm242, %v200, 0
  %v253 = vsel %vm242, %v201, 0
  %255 = vmatprep.subr.bf16.mxu0 0
  %256 = vmatpush1.bf16.msra.mxu0 0
  %257 = vmatprep.subr.bf16.mxu0 0
  %258 = vmatpush1.bf16.msra.mxu0 0
  %259 = vmatprep.subr.bf16.mxu0 0
  %260 = vmatpush1.bf16.msra.mxu0 0
  %261 = vmatprep.subr.bf16.mxu0 0
  %262 = vmatpush1.bf16.msra.mxu0 0
  %263 = vmatprep.subr.bf16.mxu0 0
  %264 = vmatpush1.bf16.msra.mxu0 0
  %265 = vmatprep.subr.bf16.mxu0 0
  %266 = vmatpush1.bf16.msra.mxu0 0
  %267 = vmatprep.subr.bf16.mxu0 %v231
  %268 = vmatpush1.bf16.msra.mxu0 %v230
  %269 = vmatprep.subr.bf16.mxu0 %v227
  %270 = vmatpush1.bf16.msra.mxu0 %v226
  %271 = vmatprep.subr.bf16.mxu0 0
  %272 = vmatpush2.bf16.msra.mxu0 0
  %273 = vmatprep.subr.bf16.mxu0 0
  %274 = vmatpush2.bf16.msra.mxu0 0
  %275 = vmatprep.subr.bf16.mxu0 0
  %276 = vmatpush2.bf16.msra.mxu0 0
  %277 = vmatprep.subr.bf16.mxu0 0
  %278 = vmatpush2.bf16.msra.mxu0 0
  %279 = vmatprep.subr.bf16.mxu0 0
  %280 = vmatpush2.bf16.msra.mxu0 0
  %281 = vmatprep.subr.bf16.mxu0 0
  %282 = vmatpush2.bf16.msra.mxu0 0
  %283 = vmatprep.subr.bf16.mxu0 0
  %284 = vmatpush2.bf16.msra.mxu0 0
  %285 = vmatprep.subr.bf16.mxu0 0
  %286 = vmatpush2.bf16.msra.mxu0 0
  %287 = vmatprep.mubr.bf16.mxu0 0
  %288 = vmatmul.mubr.bf16.gmra.mxu0 %v244
  %v289 = vpop.f32.mrf.mxu0
  %v290 = vadd.f32 0.0, %v289
  %v291 = vpop.f32.mrf.mxu0
  %v292 = vadd.f32 0.0, %v291
  %v293 = vpop.f32.mrf.mxu0
  %v294 = vadd.f32 0.0, %v293
  %v295 = vpop.f32.mrf.mxu0
  %v296 = vadd.f32 0.0, %v295
  %297 = vmatprep.mubr.bf16.mxu0 0
  %298 = vmatmul.mubr.bf16.gmra.mxu0 %v247
  %v299 = vpop.f32.mrf.mxu0
  %v300 = vadd.f32 0.0, %v299
  %v301 = vpop.f32.mrf.mxu0
  %v302 = vadd.f32 0.0, %v301
  %v303 = vpop.f32.mrf.mxu0
  %v304 = vadd.f32 0.0, %v303
  %v305 = vpop.f32.mrf.mxu0
  %v306 = vadd.f32 0.0, %v305
  %307 = vmatprep.mubr.bf16.mxu0 0
  %308 = vmatmul.mubr.bf16.gmra.mxu0 %v250
  %v309 = vpop.f32.mrf.mxu0
  %v310 = vadd.f32 0.0, %v309
  %v311 = vpop.f32.mrf.mxu0
  %v312 = vadd.f32 0.0, %v311
  %v313 = vpop.f32.mrf.mxu0
  %v314 = vadd.f32 0.0, %v313
  %v315 = vpop.f32.mrf.mxu0
  %v316 = vadd.f32 0.0, %v315
  %317 = vmatprep.mubr.bf16.mxu0 0
  %318 = vmatmul.mubr.bf16.gmra.mxu0 %v253
  %v319 = vpop.f32.mrf.mxu0
  %v320 = vadd.f32 0.0, %v319
  %v321 = vpop.f32.mrf.mxu0
  %v322 = vadd.f32 0.0, %v321
  %v323 = vpop.f32.mrf.mxu0
  %v324 = vadd.f32 0.0, %v323
  %v325 = vpop.f32.mrf.mxu0
  %v326 = vadd.f32 0.0, %v325
  %327 = vdwg.mxu0
  %328 = vmatprep.subr.bf16.mxu0 0
  %329 = vmatpush1.bf16.msra.mxu0 0
  %330 = vmatprep.subr.bf16.mxu0 0
  %331 = vmatpush1.bf16.msra.mxu0 0
  %332 = vmatprep.subr.bf16.mxu0 0
  %333 = vmatpush1.bf16.msra.mxu0 0
  %334 = vmatprep.subr.bf16.mxu0 0
  %335 = vmatpush1.bf16.msra.mxu0 0
  %336 = vmatprep.subr.bf16.mxu0 0
  %337 = vmatpush1.bf16.msra.mxu0 0
  %338 = vmatprep.subr.bf16.mxu0 0
  %339 = vmatpush1.bf16.msra.mxu0 0
  %340 = vmatprep.subr.bf16.mxu0 %v233
  %341 = vmatpush1.bf16.msra.mxu0 %v232
  %342 = vmatprep.subr.bf16.mxu0 %v229
  %343 = vmatpush1.bf16.msra.mxu0 %v228
  %344 = vmatprep.subr.bf16.mxu0 0
  %345 = vmatpush2.bf16.msra.mxu0 0
  %346 = vmatprep.subr.bf16.mxu0 0
  %347 = vmatpush2.bf16.msra.mxu0 0
  %348 = vmatprep.subr.bf16.mxu0 0
  %349 = vmatpush2.bf16.msra.mxu0 0
  %350 = vmatprep.subr.bf16.mxu0 0
  %351 = vmatpush2.bf16.msra.mxu0 0
  %352 = vmatprep.subr.bf16.mxu0 0
  %353 = vmatpush2.bf16.msra.mxu0 0
  %354 = vmatprep.subr.bf16.mxu0 0
  %355 = vmatpush2.bf16.msra.mxu0 0
  %356 = vmatprep.subr.bf16.mxu0 0
  %357 = vmatpush2.bf16.msra.mxu0 0
  %358 = vmatprep.subr.bf16.mxu0 0
  %359 = vmatpush2.bf16.msra.mxu0 0
  %360 = vmatprep.mubr.bf16.mxu0 0
  %361 = vmatmul.mubr.bf16.gmra.mxu0 %v244
  %v362 = vpop.f32.mrf.mxu0
  %v363 = vadd.f32 0.0, %v362
  %v364 = vpop.f32.mrf.mxu0
  %v365 = vadd.f32 0.0, %v364
  %v366 = vpop.f32.mrf.mxu0
  %v367 = vadd.f32 0.0, %v366
  %v368 = vpop.f32.mrf.mxu0
  %v369 = vadd.f32 0.0, %v368
  %370 = vmatprep.mubr.bf16.mxu0 0
  %371 = vmatmul.mubr.bf16.gmra.mxu0 %v247
  %v372 = vpop.f32.mrf.mxu0
  %v373 = vadd.f32 0.0, %v372
  %v374 = vpop.f32.mrf.mxu0
  %v375 = vadd.f32 0.0, %v374
  %v376 = vpop.f32.mrf.mxu0
  %v377 = vadd.f32 0.0, %v376
  %v378 = vpop.f32.mrf.mxu0
  %v379 = vadd.f32 0.0, %v378
  %380 = vmatprep.mubr.bf16.mxu0 0
  %381 = vmatmul.mubr.bf16.gmra.mxu0 %v250
  %v382 = vpop.f32.mrf.mxu0
  %v383 = vadd.f32 0.0, %v382
  %v384 = vpop.f32.mrf.mxu0
  %v385 = vadd.f32 0.0, %v384
  %v386 = vpop.f32.mrf.mxu0
  %v387 = vadd.f32 0.0, %v386
  %v388 = vpop.f32.mrf.mxu0
  %v389 = vadd.f32 0.0, %v388
  %390 = vmatprep.mubr.bf16.mxu0 0
  %391 = vmatmul.mubr.bf16.gmra.mxu0 %v253
  %v392 = vpop.f32.mrf.mxu0
  %v393 = vadd.f32 0.0, %v392
  %v394 = vpop.f32.mrf.mxu0
  %v395 = vadd.f32 0.0, %v394
  %v396 = vpop.f32.mrf.mxu0
  %v397 = vadd.f32 0.0, %v396
  %v398 = vpop.f32.mrf.mxu0
  %v399 = vadd.f32 0.0, %v398
  %400 = vdwg.mxu0
  %v401 = vcombine.high %v167, 0.0
  %v403 = vunpack.c.l.s4 1983009808
  %v404 = vunpack.c.0.s8 %v403
  %v405 = vlaneseq
  %v406 = vshrl.u32 %v405, 7
  %v407 = vsub.s32 %v404, %v406
  %v408 = vrot.slane %v167, %v407
  %v410 = vunpack.c.l.s4 1983009808
  %v411 = vunpack.c.0.s8 %v410
  %v412 = vlaneseq
  %v413 = vshrl.u32 %v412, 7
  %v414 = vsub.s32 %v411, %v413
  %v415 = vrot.slane %v401, %v414
  %v416 = vcombine.high %v408, 0.0
  %v418 = vunpack.c.l.s4 1934713408
  %v419 = vunpack.c.0.s8 %v418
  %v420 = vlaneseq
  %v421 = vshrl.u32 %v420, 7
  %v422 = vsub.s32 %v419, %v421
  %v423 = vrot.slane %v408, %v422
  %v425 = vunpack.c.l.s4 1934713408
  %v426 = vunpack.c.0.s8 %v425
  %v427 = vlaneseq
  %v428 = vshrl.u32 %v427, 7
  %v429 = vsub.s32 %v426, %v428
  %v430 = vrot.slane %v416, %v429
  %v431 = vcombine.high %v415, 0.0
  %v433 = vunpack.c.l.s4 1934713408
  %v434 = vunpack.c.0.s8 %v433
  %v435 = vlaneseq
  %v436 = vshrl.u32 %v435, 7
  %v437 = vsub.s32 %v434, %v436
  %v438 = vrot.slane %v415, %v437
  %v440 = vunpack.c.l.s4 1934713408
  %v441 = vunpack.c.0.s8 %v440
  %v442 = vlaneseq
  %v443 = vshrl.u32 %v442, 7
  %v444 = vsub.s32 %v441, %v443
  %v445 = vrot.slane %v431, %v444
  %v446 = vcombine.high %v423, 0.0
  %v447 = vcombine.high %v430, 0.0
  %v448 = vcombine.high %v438, 0.0
  %v449 = vcombine.high %v445, 0.0
  %v450 = vcombine.high %v169, 0.0
  %v452 = vunpack.c.l.s4 1983009808
  %v453 = vunpack.c.0.s8 %v452
  %v454 = vlaneseq
  %v455 = vshrl.u32 %v454, 7
  %v456 = vsub.s32 %v453, %v455
  %v457 = vrot.slane %v169, %v456
  %v459 = vunpack.c.l.s4 1983009808
  %v460 = vunpack.c.0.s8 %v459
  %v461 = vlaneseq
  %v462 = vshrl.u32 %v461, 7
  %v463 = vsub.s32 %v460, %v462
  %v464 = vrot.slane %v450, %v463
  %v465 = vcombine.high %v457, 0.0
  %v467 = vunpack.c.l.s4 1934713408
  %v468 = vunpack.c.0.s8 %v467
  %v469 = vlaneseq
  %v470 = vshrl.u32 %v469, 7
  %v471 = vsub.s32 %v468, %v470
  %v472 = vrot.slane %v457, %v471
  %v474 = vunpack.c.l.s4 1934713408
  %v475 = vunpack.c.0.s8 %v474
  %v476 = vlaneseq
  %v477 = vshrl.u32 %v476, 7
  %v478 = vsub.s32 %v475, %v477
  %v479 = vrot.slane %v465, %v478
  %v480 = vcombine.high %v464, 0.0
  %v482 = vunpack.c.l.s4 1934713408
  %v483 = vunpack.c.0.s8 %v482
  %v484 = vlaneseq
  %v485 = vshrl.u32 %v484, 7
  %v486 = vsub.s32 %v483, %v485
  %v487 = vrot.slane %v464, %v486
  %v489 = vunpack.c.l.s4 1934713408
  %v490 = vunpack.c.0.s8 %v489
  %v491 = vlaneseq
  %v492 = vshrl.u32 %v491, 7
  %v493 = vsub.s32 %v490, %v492
  %v494 = vrot.slane %v480, %v493
  %v495 = vcombine.high %v472, 0.0
  %v496 = vcombine.high %v479, 0.0
  %v497 = vcombine.high %v487, 0.0
  %v498 = vcombine.high %v494, 0.0
  %v499 = vcombine.high %v171, 0.0
  %v501 = vunpack.c.l.s4 1983009808
  %v502 = vunpack.c.0.s8 %v501
  %v503 = vlaneseq
  %v504 = vshrl.u32 %v503, 7
  %v505 = vsub.s32 %v502, %v504
  %v506 = vrot.slane %v171, %v505
  %v508 = vunpack.c.l.s4 1983009808
  %v509 = vunpack.c.0.s8 %v508
  %v510 = vlaneseq
  %v511 = vshrl.u32 %v510, 7
  %v512 = vsub.s32 %v509, %v511
  %v513 = vrot.slane %v499, %v512
  %v514 = vcombine.high %v506, 0.0
  %v516 = vunpack.c.l.s4 1934713408
  %v517 = vunpack.c.0.s8 %v516
  %v518 = vlaneseq
  %v519 = vshrl.u32 %v518, 7
  %v520 = vsub.s32 %v517, %v519
  %v521 = vrot.slane %v506, %v520
  %v523 = vunpack.c.l.s4 1934713408
  %v524 = vunpack.c.0.s8 %v523
  %v525 = vlaneseq
  %v526 = vshrl.u32 %v525, 7
  %v527 = vsub.s32 %v524, %v526
  %v528 = vrot.slane %v514, %v527
  %v529 = vcombine.high %v513, 0.0
  %v531 = vunpack.c.l.s4 1934713408
  %v532 = vunpack.c.0.s8 %v531
  %v533 = vlaneseq
  %v534 = vshrl.u32 %v533, 7
  %v535 = vsub.s32 %v532, %v534
  %v536 = vrot.slane %v513, %v535
  %v538 = vunpack.c.l.s4 1934713408
  %v539 = vunpack.c.0.s8 %v538
  %v540 = vlaneseq
  %v541 = vshrl.u32 %v540, 7
  %v542 = vsub.s32 %v539, %v541
  %v543 = vrot.slane %v529, %v542
  %v544 = vcombine.high %v521, 0.0
  %v545 = vcombine.high %v528, 0.0
  %v546 = vcombine.high %v536, 0.0
  %v547 = vcombine.high %v543, 0.0
  %v548 = vcombine.high %v173, 0.0
  %v550 = vunpack.c.l.s4 1983009808
  %v551 = vunpack.c.0.s8 %v550
  %v552 = vlaneseq
  %v553 = vshrl.u32 %v552, 7
  %v554 = vsub.s32 %v551, %v553
  %v555 = vrot.slane %v173, %v554
  %v557 = vunpack.c.l.s4 1983009808
  %v558 = vunpack.c.0.s8 %v557
  %v559 = vlaneseq
  %v560 = vshrl.u32 %v559, 7
  %v561 = vsub.s32 %v558, %v560
  %v562 = vrot.slane %v548, %v561
  %v563 = vcombine.high %v555, 0.0
  %v565 = vunpack.c.l.s4 1934713408
  %v566 = vunpack.c.0.s8 %v565
  %v567 = vlaneseq
  %v568 = vshrl.u32 %v567, 7
  %v569 = vsub.s32 %v566, %v568
  %v570 = vrot.slane %v555, %v569
  %v572 = vunpack.c.l.s4 1934713408
  %v573 = vunpack.c.0.s8 %v572
  %v574 = vlaneseq
  %v575 = vshrl.u32 %v574, 7
  %v576 = vsub.s32 %v573, %v575
  %v577 = vrot.slane %v563, %v576
  %v578 = vcombine.high %v562, 0.0
  %v580 = vunpack.c.l.s4 1934713408
  %v581 = vunpack.c.0.s8 %v580
  %v582 = vlaneseq
  %v583 = vshrl.u32 %v582, 7
  %v584 = vsub.s32 %v581, %v583
  %v585 = vrot.slane %v562, %v584
  %v587 = vunpack.c.l.s4 1934713408
  %v588 = vunpack.c.0.s8 %v587
  %v589 = vlaneseq
  %v590 = vshrl.u32 %v589, 7
  %v591 = vsub.s32 %v588, %v590
  %v592 = vrot.slane %v578, %v591
  %v593 = vcombine.high %v570, 0.0
  %v594 = vcombine.high %v577, 0.0
  %v595 = vcombine.high %v585, 0.0
  %v596 = vcombine.high %v592, 0.0
  %598 = vrot.lane.b32.xlu0 %v446, 16
  %v599 = vpop.permute.xlu0 %598
  %602 = vrot.lane.b32.xlu0 %v430, 32
  %v603 = vpop.permute.xlu0 %602
  %606 = vrot.lane.b32.xlu0 %v447, 48
  %v607 = vpop.permute.xlu0 %606
  %610 = vrot.lane.b32.xlu0 %v438, 64
  %v611 = vpop.permute.xlu0 %610
  %614 = vrot.lane.b32.xlu0 %v448, 80
  %v615 = vpop.permute.xlu0 %614
  %618 = vrot.lane.b32.xlu0 %v445, 96
  %v619 = vpop.permute.xlu0 %618
  %622 = vrot.lane.b32.xlu0 %v449, 112
  %v623 = vpop.permute.xlu0 %622
  %626 = vrot.lane.b32.xlu0 %v495, 16
  %v627 = vpop.permute.xlu0 %626
  %630 = vrot.lane.b32.xlu0 %v479, 32
  %v631 = vpop.permute.xlu0 %630
  %634 = vrot.lane.b32.xlu0 %v496, 48
  %v635 = vpop.permute.xlu0 %634
  %638 = vrot.lane.b32.xlu0 %v487, 64
  %v639 = vpop.permute.xlu0 %638
  %642 = vrot.lane.b32.xlu0 %v497, 80
  %v643 = vpop.permute.xlu0 %642
  %646 = vrot.lane.b32.xlu0 %v494, 96
  %v647 = vpop.permute.xlu0 %646
  %650 = vrot.lane.b32.xlu0 %v498, 112
  %v651 = vpop.permute.xlu0 %650
  %654 = vrot.lane.b32.xlu0 %v544, 16
  %v655 = vpop.permute.xlu0 %654
  %658 = vrot.lane.b32.xlu0 %v528, 32
  %v659 = vpop.permute.xlu0 %658
  %662 = vrot.lane.b32.xlu0 %v545, 48
  %v663 = vpop.permute.xlu0 %662
  %666 = vrot.lane.b32.xlu0 %v536, 64
  %v667 = vpop.permute.xlu0 %666
  %670 = vrot.lane.b32.xlu0 %v546, 80
  %v671 = vpop.permute.xlu0 %670
  %674 = vrot.lane.b32.xlu0 %v543, 96
  %v675 = vpop.permute.xlu0 %674
  %678 = vrot.lane.b32.xlu0 %v547, 112
  %v679 = vpop.permute.xlu0 %678
  %682 = vrot.lane.b32.xlu0 %v593, 16
  %v683 = vpop.permute.xlu0 %682
  %686 = vrot.lane.b32.xlu0 %v577, 32
  %v687 = vpop.permute.xlu0 %686
  %690 = vrot.lane.b32.xlu0 %v594, 48
  %v691 = vpop.permute.xlu0 %690
  %694 = vrot.lane.b32.xlu0 %v585, 64
  %v695 = vpop.permute.xlu0 %694
  %698 = vrot.lane.b32.xlu0 %v595, 80
  %v699 = vpop.permute.xlu0 %698
  %702 = vrot.lane.b32.xlu0 %v592, 96
  %v703 = vpop.permute.xlu0 %702
  %706 = vrot.lane.b32.xlu0 %v596, 112
  %v707 = vpop.permute.xlu0 %706
  %vm709 = vcmask 130048
  %v710 = vsel %vm709, %v423, %v599
  %v711 = vsel %vm242, %v710, %v603
  %vm712 = vcmask 392192
  %v713 = vsel %vm712, %v711, %v607
  %vm714 = vcmask 523264
  %v715 = vsel %vm714, %v713, %v611
  %vm716 = vcmask 654336
  %v717 = vsel %vm716, %v715, %v615
  %vm718 = vcmask 785408
  %v719 = vsel %vm718, %v717, %v619
  %vm720 = vcmask 916480
  %v721 = vsel %vm720, %v719, %v623
  %v722 = vsel %vm709, %v472, %v627
  %v723 = vsel %vm242, %v722, %v631
  %v724 = vsel %vm712, %v723, %v635
  %v725 = vsel %vm714, %v724, %v639
  %v726 = vsel %vm716, %v725, %v643
  %v727 = vsel %vm718, %v726, %v647
  %v728 = vsel %vm720, %v727, %v651
  %v729 = vsel %vm709, %v521, %v655
  %v730 = vsel %vm242, %v729, %v659
  %v731 = vsel %vm712, %v730, %v663
  %v732 = vsel %vm714, %v731, %v667
  %v733 = vsel %vm716, %v732, %v671
  %v734 = vsel %vm718, %v733, %v675
  %v735 = vsel %vm720, %v734, %v679
  %v736 = vsel %vm709, %v570, %v683
  %v737 = vsel %vm242, %v736, %v687
  %v738 = vsel %vm712, %v737, %v691
  %v739 = vsel %vm714, %v738, %v695
  %v740 = vsel %vm716, %v739, %v699
  %v741 = vsel %vm718, %v740, %v703
  %v742 = vsel %vm720, %v741, %v707
  %v743 = vlaneseq
  %v744 = vshrl.u32 %v743, 7
  %v745 = vsub.s32 0, %v744
  %v746 = vrot.slane %v721, %v745
  %v747 = vlaneseq
  %v748 = vshrl.u32 %v747, 7
  %v749 = vsub.s32 0, %v748
  %v750 = vrot.slane %v728, %v749
  %v751 = vlaneseq
  %v752 = vshrl.u32 %v751, 7
  %v753 = vsub.s32 0, %v752
  %v754 = vrot.slane %v735, %v753
  %v755 = vlaneseq
  %v756 = vshrl.u32 %v755, 7
  %v757 = vsub.s32 0, %v756
  %v758 = vrot.slane %v742, %v757
  %v759 = vmul.f32 %v290, %v746
  %v760 = vmul.f32 %v292, %v750
  %v761 = vmul.f32 %v363, %v754
  %v762 = vmul.f32 %v365, %v758
  %v763 = vmul.f32 %v294, %v746
  %v764 = vmul.f32 %v296, %v750
  %v765 = vmul.f32 %v367, %v754
  %v766 = vmul.f32 %v369, %v758
  %v767 = vmul.f32 %v300, %v746
  %v768 = vmul.f32 %v302, %v750
  %v769 = vmul.f32 %v373, %v754
  %v770 = vmul.f32 %v375, %v758
  %v771 = vmul.f32 %v304, %v746
  %v772 = vmul.f32 %v306, %v750
  %v773 = vmul.f32 %v377, %v754
  %v774 = vmul.f32 %v379, %v758
  %776 = vset.pattern.permute.xlu0 0
  %777 = vperm.xlu0 %776, %v43
  %v778 = vpop.permute.xlu0 %777
  %781 = vset.pattern.permute.xlu0 0
  %782 = vperm.xlu0 %781, %v44
  %v783 = vpop.permute.xlu0 %782
  %786 = vset.pattern.permute.xlu0 0
  %787 = vperm.xlu0 %786, %v45
  %v788 = vpop.permute.xlu0 %787
  %791 = vset.pattern.permute.xlu0 0
  %792 = vperm.xlu0 %791, %v46
  %v793 = vpop.permute.xlu0 %792
  %v795 = vadd.f32 %v759, %v778
  %v796 = vadd.f32 %v760, %v778
  %v797 = vadd.f32 %v761, %v778
  %v798 = vadd.f32 %v762, %v778
  %v799 = vadd.f32 %v763, %v783
  %v800 = vadd.f32 %v764, %v783
  %v801 = vadd.f32 %v765, %v783
  %v802 = vadd.f32 %v766, %v783
  %v803 = vadd.f32 %v767, %v788
  %v804 = vadd.f32 %v768, %v788
  %v805 = vadd.f32 %v769, %v788
  %v806 = vadd.f32 %v770, %v788
  %v807 = vadd.f32 %v771, %v793
  %v808 = vadd.f32 %v772, %v793
  %v809 = vadd.f32 %v773, %v793
  %v810 = vadd.f32 %v774, %v793
  %v811 = vpack.c.bf16 %v799, %v795
  %v812 = vpack.c.bf16 %v800, %v796
  %v813 = vpack.c.bf16 %v801, %v797
  %v814 = vpack.c.bf16 %v802, %v798
  %v815 = vpack.c.bf16 %v807, %v803
  %v816 = vpack.c.bf16 %v808, %v804
  %v817 = vpack.c.bf16 %v809, %v805
  %v818 = vpack.c.bf16 %v810, %v806
  %v819 = vmul.f32 %v310, %v746
  %v820 = vmul.f32 %v312, %v750
  %v821 = vmul.f32 %v383, %v754
  %v822 = vmul.f32 %v385, %v758
  %v823 = vmul.f32 %v314, %v746
  %v824 = vmul.f32 %v316, %v750
  %v825 = vmul.f32 %v387, %v754
  %v826 = vmul.f32 %v389, %v758
  %v827 = vmul.f32 %v320, %v746
  %v828 = vmul.f32 %v322, %v750
  %v829 = vmul.f32 %v393, %v754
  %v830 = vmul.f32 %v395, %v758
  %v831 = vmul.f32 %v324, %v746
  %v832 = vmul.f32 %v326, %v750
  %v833 = vmul.f32 %v397, %v754
  %v834 = vmul.f32 %v399, %v758
  %836 = vset.pattern.permute.xlu0 0
  %837 = vperm.xlu0 %836, %v47
  %v838 = vpop.permute.xlu0 %837
  %841 = vset.pattern.permute.xlu0 0
  %842 = vperm.xlu0 %841, %v48
  %v843 = vpop.permute.xlu0 %842
  %846 = vset.pattern.permute.xlu0 0
  %847 = vperm.xlu0 %846, %v49
  %v848 = vpop.permute.xlu0 %847
  %851 = vset.pattern.permute.xlu0 0
  %852 = vperm.xlu0 %851, %v50
  %v853 = vpop.permute.xlu0 %852
  %v855 = vadd.f32 %v819, %v838
  %v856 = vadd.f32 %v820, %v838
  %v857 = vadd.f32 %v821, %v838
  %v858 = vadd.f32 %v822, %v838
  %v859 = vadd.f32 %v823, %v843
  %v860 = vadd.f32 %v824, %v843
  %v861 = vadd.f32 %v825, %v843
  %v862 = vadd.f32 %v826, %v843
  %v863 = vadd.f32 %v827, %v848
  %v864 = vadd.f32 %v828, %v848
  %v865 = vadd.f32 %v829, %v848
  %v866 = vadd.f32 %v830, %v848
  %v867 = vadd.f32 %v831, %v853
  %v868 = vadd.f32 %v832, %v853
  %v869 = vadd.f32 %v833, %v853
  %v870 = vadd.f32 %v834, %v853
  %v871 = vpack.c.bf16 %v859, %v855
  %v872 = vpack.c.bf16 %v860, %v856
  %v873 = vpack.c.bf16 %v861, %v857
  %v874 = vpack.c.bf16 %v862, %v858
  %v875 = vpack.c.bf16 %v867, %v863
  %v876 = vpack.c.bf16 %v868, %v864
  %v877 = vpack.c.bf16 %v869, %v865
  %v878 = vpack.c.bf16 %v870, %v866
  %881 = vrot.lane.b32.xlu0 %v811, 112
  %v882 = vpop.permute.xlu0 %881
  %883 = vrot.lane.b32.xlu0 %v815, 112
  %v884 = vpop.permute.xlu0 %883
  %887 = vrot.lane.b32.xlu0 %v811, 96
  %v888 = vpop.permute.xlu0 %887
  %889 = vrot.lane.b32.xlu0 %v815, 96
  %v890 = vpop.permute.xlu0 %889
  %893 = vrot.lane.b32.xlu0 %v811, 80
  %v894 = vpop.permute.xlu0 %893
  %895 = vrot.lane.b32.xlu0 %v815, 80
  %v896 = vpop.permute.xlu0 %895
  %899 = vrot.lane.b32.xlu0 %v811, 64
  %v900 = vpop.permute.xlu0 %899
  %901 = vrot.lane.b32.xlu0 %v815, 64
  %v902 = vpop.permute.xlu0 %901
  %905 = vrot.lane.b32.xlu0 %v811, 48
  %v906 = vpop.permute.xlu0 %905
  %907 = vrot.lane.b32.xlu0 %v815, 48
  %v908 = vpop.permute.xlu0 %907
  %911 = vrot.lane.b32.xlu0 %v811, 32
  %v912 = vpop.permute.xlu0 %911
  %913 = vrot.lane.b32.xlu0 %v815, 32
  %v914 = vpop.permute.xlu0 %913
  %917 = vrot.lane.b32.xlu0 %v811, 16
  %v918 = vpop.permute.xlu0 %917
  %919 = vrot.lane.b32.xlu0 %v815, 16
  %v920 = vpop.permute.xlu0 %919
  %925 = vrot.lane.b32.xlu0 %v812, 112
  %v926 = vpop.permute.xlu0 %925
  %927 = vrot.lane.b32.xlu0 %v816, 112
  %v928 = vpop.permute.xlu0 %927
  %931 = vrot.lane.b32.xlu0 %v812, 96
  %v932 = vpop.permute.xlu0 %931
  %933 = vrot.lane.b32.xlu0 %v816, 96
  %v934 = vpop.permute.xlu0 %933
  %937 = vrot.lane.b32.xlu0 %v812, 80
  %v938 = vpop.permute.xlu0 %937
  %939 = vrot.lane.b32.xlu0 %v816, 80
  %v940 = vpop.permute.xlu0 %939
  %943 = vrot.lane.b32.xlu0 %v812, 64
  %v944 = vpop.permute.xlu0 %943
  %945 = vrot.lane.b32.xlu0 %v816, 64
  %v946 = vpop.permute.xlu0 %945
  %949 = vrot.lane.b32.xlu0 %v812, 48
  %v950 = vpop.permute.xlu0 %949
  %951 = vrot.lane.b32.xlu0 %v816, 48
  %v952 = vpop.permute.xlu0 %951
  %955 = vrot.lane.b32.xlu0 %v812, 32
  %v956 = vpop.permute.xlu0 %955
  %957 = vrot.lane.b32.xlu0 %v816, 32
  %v958 = vpop.permute.xlu0 %957
  %961 = vrot.lane.b32.xlu0 %v812, 16
  %v962 = vpop.permute.xlu0 %961
  %963 = vrot.lane.b32.xlu0 %v816, 16
  %v964 = vpop.permute.xlu0 %963
  %969 = vrot.lane.b32.xlu0 %v813, 112
  %v970 = vpop.permute.xlu0 %969
  %971 = vrot.lane.b32.xlu0 %v817, 112
  %v972 = vpop.permute.xlu0 %971
  %975 = vrot.lane.b32.xlu0 %v813, 96
  %v976 = vpop.permute.xlu0 %975
  %977 = vrot.lane.b32.xlu0 %v817, 96
  %v978 = vpop.permute.xlu0 %977
  %981 = vrot.lane.b32.xlu0 %v813, 80
  %v982 = vpop.permute.xlu0 %981
  %983 = vrot.lane.b32.xlu0 %v817, 80
  %v984 = vpop.permute.xlu0 %983
  %987 = vrot.lane.b32.xlu0 %v813, 64
  %v988 = vpop.permute.xlu0 %987
  %989 = vrot.lane.b32.xlu0 %v817, 64
  %v990 = vpop.permute.xlu0 %989
  %993 = vrot.lane.b32.xlu0 %v813, 48
  %v994 = vpop.permute.xlu0 %993
  %995 = vrot.lane.b32.xlu0 %v817, 48
  %v996 = vpop.permute.xlu0 %995
  %999 = vrot.lane.b32.xlu0 %v813, 32
  %v1000 = vpop.permute.xlu0 %999
  %1001 = vrot.lane.b32.xlu0 %v817, 32
  %v1002 = vpop.permute.xlu0 %1001
  %1005 = vrot.lane.b32.xlu0 %v813, 16
  %v1006 = vpop.permute.xlu0 %1005
  %1007 = vrot.lane.b32.xlu0 %v817, 16
  %v1008 = vpop.permute.xlu0 %1007
  %1013 = vrot.lane.b32.xlu0 %v814, 112
  %v1014 = vpop.permute.xlu0 %1013
  %1015 = vrot.lane.b32.xlu0 %v818, 112
  %v1016 = vpop.permute.xlu0 %1015
  %1019 = vrot.lane.b32.xlu0 %v814, 96
  %v1020 = vpop.permute.xlu0 %1019
  %1021 = vrot.lane.b32.xlu0 %v818, 96
  %v1022 = vpop.permute.xlu0 %1021
  %1025 = vrot.lane.b32.xlu0 %v814, 80
  %v1026 = vpop.permute.xlu0 %1025
  %1027 = vrot.lane.b32.xlu0 %v818, 80
  %v1028 = vpop.permute.xlu0 %1027
  %1031 = vrot.lane.b32.xlu0 %v814, 64
  %v1032 = vpop.permute.xlu0 %1031
  %1033 = vrot.lane.b32.xlu0 %v818, 64
  %v1034 = vpop.permute.xlu0 %1033
  %1037 = vrot.lane.b32.xlu0 %v814, 48
  %v1038 = vpop.permute.xlu0 %1037
  %1039 = vrot.lane.b32.xlu0 %v818, 48
  %v1040 = vpop.permute.xlu0 %1039
  %1043 = vrot.lane.b32.xlu0 %v814, 32
  %v1044 = vpop.permute.xlu0 %1043
  %1045 = vrot.lane.b32.xlu0 %v818, 32
  %v1046 = vpop.permute.xlu0 %1045
  %1049 = vrot.lane.b32.xlu0 %v814, 16
  %v1050 = vpop.permute.xlu0 %1049
  %1051 = vrot.lane.b32.xlu0 %v818, 16
  %v1052 = vpop.permute.xlu0 %1051
  %v1055 = vcombine.low %v811, %v900
  %v1056 = vcombine.high %v811, %v900
  %v1058 = vunpack.c.l.s4 1983009808
  %v1059 = vunpack.c.0.s8 %v1058
  %v1060 = vlaneseq
  %v1061 = vshrl.u32 %v1060, 7
  %v1062 = vsub.s32 %v1059, %v1061
  %v1063 = vrot.slane %v1055, %v1062
  %v1065 = vunpack.c.l.s4 1983009808
  %v1066 = vunpack.c.0.s8 %v1065
  %v1067 = vlaneseq
  %v1068 = vshrl.u32 %v1067, 7
  %v1069 = vsub.s32 %v1066, %v1068
  %v1070 = vrot.slane %v1056, %v1069
  %v1071 = vcombine.low %v888, %v912
  %v1072 = vcombine.high %v888, %v912
  %v1074 = vunpack.c.l.s4 1983009808
  %v1075 = vunpack.c.0.s8 %v1074
  %v1076 = vlaneseq
  %v1077 = vshrl.u32 %v1076, 7
  %v1078 = vsub.s32 %v1075, %v1077
  %v1079 = vrot.slane %v1071, %v1078
  %v1081 = vunpack.c.l.s4 1983009808
  %v1082 = vunpack.c.0.s8 %v1081
  %v1083 = vlaneseq
  %v1084 = vshrl.u32 %v1083, 7
  %v1085 = vsub.s32 %v1082, %v1084
  %v1086 = vrot.slane %v1072, %v1085
  %v1087 = vcombine.low %v812, %v944
  %v1088 = vcombine.high %v812, %v944
  %v1090 = vunpack.c.l.s4 1983009808
  %v1091 = vunpack.c.0.s8 %v1090
  %v1092 = vlaneseq
  %v1093 = vshrl.u32 %v1092, 7
  %v1094 = vsub.s32 %v1091, %v1093
  %v1095 = vrot.slane %v1087, %v1094
  %v1097 = vunpack.c.l.s4 1983009808
  %v1098 = vunpack.c.0.s8 %v1097
  %v1099 = vlaneseq
  %v1100 = vshrl.u32 %v1099, 7
  %v1101 = vsub.s32 %v1098, %v1100
  %v1102 = vrot.slane %v1088, %v1101
  %v1103 = vcombine.low %v932, %v956
  %v1104 = vcombine.high %v932, %v956
  %v1106 = vunpack.c.l.s4 1983009808
  %v1107 = vunpack.c.0.s8 %v1106
  %v1108 = vlaneseq
  %v1109 = vshrl.u32 %v1108, 7
  %v1110 = vsub.s32 %v1107, %v1109
  %v1111 = vrot.slane %v1103, %v1110
  %v1113 = vunpack.c.l.s4 1983009808
  %v1114 = vunpack.c.0.s8 %v1113
  %v1115 = vlaneseq
  %v1116 = vshrl.u32 %v1115, 7
  %v1117 = vsub.s32 %v1114, %v1116
  %v1118 = vrot.slane %v1104, %v1117
  %v1119 = vcombine.low %v1063, %v1079
  %v1120 = vcombine.high %v1063, %v1079
  %v1122 = vunpack.c.l.s4 1934713408
  %v1123 = vunpack.c.0.s8 %v1122
  %v1124 = vlaneseq
  %v1125 = vshrl.u32 %v1124, 7
  %v1126 = vsub.s32 %v1123, %v1125
  %v1127 = vrot.slane %v1119, %v1126
  %v1129 = vunpack.c.l.s4 1934713408
  %v1130 = vunpack.c.0.s8 %v1129
  %v1131 = vlaneseq
  %v1132 = vshrl.u32 %v1131, 7
  %v1133 = vsub.s32 %v1130, %v1132
  %v1134 = vrot.slane %v1120, %v1133
  %v1135 = vcombine.low %v1070, %v1086
  %v1136 = vcombine.high %v1070, %v1086
  %v1138 = vunpack.c.l.s4 1934713408
  %v1139 = vunpack.c.0.s8 %v1138
  %v1140 = vlaneseq
  %v1141 = vshrl.u32 %v1140, 7
  %v1142 = vsub.s32 %v1139, %v1141
  %v1143 = vrot.slane %v1135, %v1142
  %v1145 = vunpack.c.l.s4 1934713408
  %v1146 = vunpack.c.0.s8 %v1145
  %v1147 = vlaneseq
  %v1148 = vshrl.u32 %v1147, 7
  %v1149 = vsub.s32 %v1146, %v1148
  %v1150 = vrot.slane %v1136, %v1149
  %v1151 = vcombine.low %v1095, %v1111
  %v1152 = vcombine.high %v1095, %v1111
  %v1154 = vunpack.c.l.s4 1934713408
  %v1155 = vunpack.c.0.s8 %v1154
  %v1156 = vlaneseq
  %v1157 = vshrl.u32 %v1156, 7
  %v1158 = vsub.s32 %v1155, %v1157
  %v1159 = vrot.slane %v1151, %v1158
  %v1161 = vunpack.c.l.s4 1934713408
  %v1162 = vunpack.c.0.s8 %v1161
  %v1163 = vlaneseq
  %v1164 = vshrl.u32 %v1163, 7
  %v1165 = vsub.s32 %v1162, %v1164
  %v1166 = vrot.slane %v1152, %v1165
  %v1167 = vcombine.low %v1102, %v1118
  %v1168 = vcombine.high %v1102, %v1118
  %v1170 = vunpack.c.l.s4 1934713408
  %v1171 = vunpack.c.0.s8 %v1170
  %v1172 = vlaneseq
  %v1173 = vshrl.u32 %v1172, 7
  %v1174 = vsub.s32 %v1171, %v1173
  %v1175 = vrot.slane %v1167, %v1174
  %v1177 = vunpack.c.l.s4 1934713408
  %v1178 = vunpack.c.0.s8 %v1177
  %v1179 = vlaneseq
  %v1180 = vshrl.u32 %v1179, 7
  %v1181 = vsub.s32 %v1178, %v1180
  %v1182 = vrot.slane %v1168, %v1181
  %v1183 = vcombine.low %v1127, %v1159
  %v1184 = vcombine.high %v1127, %v1159
  %v1185 = vcombine.low %v1134, %v1166
  %v1186 = vcombine.high %v1134, %v1166
  %v1187 = vcombine.low %v1143, %v1175
  %v1188 = vcombine.high %v1143, %v1175
  %v1189 = vcombine.low %v1150, %v1182
  %v1190 = vcombine.high %v1150, %v1182
  %v1191 = vcombine.low %v882, %v906
  %v1192 = vcombine.high %v882, %v906
  %v1194 = vunpack.c.l.s4 1983009808
  %v1195 = vunpack.c.0.s8 %v1194
  %v1196 = vlaneseq
  %v1197 = vshrl.u32 %v1196, 7
  %v1198 = vsub.s32 %v1195, %v1197
  %v1199 = vrot.slane %v1191, %v1198
  %v1201 = vunpack.c.l.s4 1983009808
  %v1202 = vunpack.c.0.s8 %v1201
  %v1203 = vlaneseq
  %v1204 = vshrl.u32 %v1203, 7
  %v1205 = vsub.s32 %v1202, %v1204
  %v1206 = vrot.slane %v1192, %v1205
  %v1207 = vcombine.low %v894, %v918
  %v1208 = vcombine.high %v894, %v918
  %v1210 = vunpack.c.l.s4 1983009808
  %v1211 = vunpack.c.0.s8 %v1210
  %v1212 = vlaneseq
  %v1213 = vshrl.u32 %v1212, 7
  %v1214 = vsub.s32 %v1211, %v1213
  %v1215 = vrot.slane %v1207, %v1214
  %v1217 = vunpack.c.l.s4 1983009808
  %v1218 = vunpack.c.0.s8 %v1217
  %v1219 = vlaneseq
  %v1220 = vshrl.u32 %v1219, 7
  %v1221 = vsub.s32 %v1218, %v1220
  %v1222 = vrot.slane %v1208, %v1221
  %v1223 = vcombine.low %v926, %v950
  %v1224 = vcombine.high %v926, %v950
  %v1226 = vunpack.c.l.s4 1983009808
  %v1227 = vunpack.c.0.s8 %v1226
  %v1228 = vlaneseq
  %v1229 = vshrl.u32 %v1228, 7
  %v1230 = vsub.s32 %v1227, %v1229
  %v1231 = vrot.slane %v1223, %v1230
  %v1233 = vunpack.c.l.s4 1983009808
  %v1234 = vunpack.c.0.s8 %v1233
  %v1235 = vlaneseq
  %v1236 = vshrl.u32 %v1235, 7
  %v1237 = vsub.s32 %v1234, %v1236
  %v1238 = vrot.slane %v1224, %v1237
  %v1239 = vcombine.low %v938, %v962
  %v1240 = vcombine.high %v938, %v962
  %v1242 = vunpack.c.l.s4 1983009808
  %v1243 = vunpack.c.0.s8 %v1242
  %v1244 = vlaneseq
  %v1245 = vshrl.u32 %v1244, 7
  %v1246 = vsub.s32 %v1243, %v1245
  %v1247 = vrot.slane %v1239, %v1246
  %v1249 = vunpack.c.l.s4 1983009808
  %v1250 = vunpack.c.0.s8 %v1249
  %v1251 = vlaneseq
  %v1252 = vshrl.u32 %v1251, 7
  %v1253 = vsub.s32 %v1250, %v1252
  %v1254 = vrot.slane %v1240, %v1253
  %v1255 = vcombine.low %v1199, %v1215
  %v1256 = vcombine.high %v1199, %v1215
  %v1258 = vunpack.c.l.s4 1934713408
  %v1259 = vunpack.c.0.s8 %v1258
  %v1260 = vlaneseq
  %v1261 = vshrl.u32 %v1260, 7
  %v1262 = vsub.s32 %v1259, %v1261
  %v1263 = vrot.slane %v1255, %v1262
  %v1265 = vunpack.c.l.s4 1934713408
  %v1266 = vunpack.c.0.s8 %v1265
  %v1267 = vlaneseq
  %v1268 = vshrl.u32 %v1267, 7
  %v1269 = vsub.s32 %v1266, %v1268
  %v1270 = vrot.slane %v1256, %v1269
  %v1271 = vcombine.low %v1206, %v1222
  %v1272 = vcombine.high %v1206, %v1222
  %v1274 = vunpack.c.l.s4 1934713408
  %v1275 = vunpack.c.0.s8 %v1274
  %v1276 = vlaneseq
  %v1277 = vshrl.u32 %v1276, 7
  %v1278 = vsub.s32 %v1275, %v1277
  %v1279 = vrot.slane %v1271, %v1278
  %v1281 = vunpack.c.l.s4 1934713408
  %v1282 = vunpack.c.0.s8 %v1281
  %v1283 = vlaneseq
  %v1284 = vshrl.u32 %v1283, 7
  %v1285 = vsub.s32 %v1282, %v1284
  %v1286 = vrot.slane %v1272, %v1285
  %v1287 = vcombine.low %v1231, %v1247
  %v1288 = vcombine.high %v1231, %v1247
  %v1290 = vunpack.c.l.s4 1934713408
  %v1291 = vunpack.c.0.s8 %v1290
  %v1292 = vlaneseq
  %v1293 = vshrl.u32 %v1292, 7
  %v1294 = vsub.s32 %v1291, %v1293
  %v1295 = vrot.slane %v1287, %v1294
  %v1297 = vunpack.c.l.s4 1934713408
  %v1298 = vunpack.c.0.s8 %v1297
  %v1299 = vlaneseq
  %v1300 = vshrl.u32 %v1299, 7
  %v1301 = vsub.s32 %v1298, %v1300
  %v1302 = vrot.slane %v1288, %v1301
  %v1303 = vcombine.low %v1238, %v1254
  %v1304 = vcombine.high %v1238, %v1254
  %v1306 = vunpack.c.l.s4 1934713408
  %v1307 = vunpack.c.0.s8 %v1306
  %v1308 = vlaneseq
  %v1309 = vshrl.u32 %v1308, 7
  %v1310 = vsub.s32 %v1307, %v1309
  %v1311 = vrot.slane %v1303, %v1310
  %v1313 = vunpack.c.l.s4 1934713408
  %v1314 = vunpack.c.0.s8 %v1313
  %v1315 = vlaneseq
  %v1316 = vshrl.u32 %v1315, 7
  %v1317 = vsub.s32 %v1314, %v1316
  %v1318 = vrot.slane %v1304, %v1317
  %v1319 = vcombine.low %v1263, %v1295
  %v1320 = vcombine.high %v1263, %v1295
  %v1321 = vcombine.low %v1270, %v1302
  %v1322 = vcombine.high %v1270, %v1302
  %v1323 = vcombine.low %v1279, %v1311
  %v1324 = vcombine.high %v1279, %v1311
  %v1325 = vcombine.low %v1286, %v1318
  %v1326 = vcombine.high %v1286, %v1318
  %v1327 = vcombine.low %v813, %v988
  %v1328 = vcombine.high %v813, %v988
  %v1330 = vunpack.c.l.s4 1983009808
  %v1331 = vunpack.c.0.s8 %v1330
  %v1332 = vlaneseq
  %v1333 = vshrl.u32 %v1332, 7
  %v1334 = vsub.s32 %v1331, %v1333
  %v1335 = vrot.slane %v1327, %v1334
  %v1337 = vunpack.c.l.s4 1983009808
  %v1338 = vunpack.c.0.s8 %v1337
  %v1339 = vlaneseq
  %v1340 = vshrl.u32 %v1339, 7
  %v1341 = vsub.s32 %v1338, %v1340
  %v1342 = vrot.slane %v1328, %v1341
  %v1343 = vcombine.low %v976, %v1000
  %v1344 = vcombine.high %v976, %v1000
  %v1346 = vunpack.c.l.s4 1983009808
  %v1347 = vunpack.c.0.s8 %v1346
  %v1348 = vlaneseq
  %v1349 = vshrl.u32 %v1348, 7
  %v1350 = vsub.s32 %v1347, %v1349
  %v1351 = vrot.slane %v1343, %v1350
  %v1353 = vunpack.c.l.s4 1983009808
  %v1354 = vunpack.c.0.s8 %v1353
  %v1355 = vlaneseq
  %v1356 = vshrl.u32 %v1355, 7
  %v1357 = vsub.s32 %v1354, %v1356
  %v1358 = vrot.slane %v1344, %v1357
  %v1359 = vcombine.low %v814, %v1032
  %v1360 = vcombine.high %v814, %v1032
  %v1362 = vunpack.c.l.s4 1983009808
  %v1363 = vunpack.c.0.s8 %v1362
  %v1364 = vlaneseq
  %v1365 = vshrl.u32 %v1364, 7
  %v1366 = vsub.s32 %v1363, %v1365
  %v1367 = vrot.slane %v1359, %v1366
  %v1369 = vunpack.c.l.s4 1983009808
  %v1370 = vunpack.c.0.s8 %v1369
  %v1371 = vlaneseq
  %v1372 = vshrl.u32 %v1371, 7
  %v1373 = vsub.s32 %v1370, %v1372
  %v1374 = vrot.slane %v1360, %v1373
  %v1375 = vcombine.low %v1020, %v1044
  %v1376 = vcombine.high %v1020, %v1044
  %v1378 = vunpack.c.l.s4 1983009808
  %v1379 = vunpack.c.0.s8 %v1378
  %v1380 = vlaneseq
  %v1381 = vshrl.u32 %v1380, 7
  %v1382 = vsub.s32 %v1379, %v1381
  %v1383 = vrot.slane %v1375, %v1382
  %v1385 = vunpack.c.l.s4 1983009808
  %v1386 = vunpack.c.0.s8 %v1385
  %v1387 = vlaneseq
  %v1388 = vshrl.u32 %v1387, 7
  %v1389 = vsub.s32 %v1386, %v1388
  %v1390 = vrot.slane %v1376, %v1389
  %v1391 = vcombine.low %v1335, %v1351
  %v1392 = vcombine.high %v1335, %v1351
  %v1394 = vunpack.c.l.s4 1934713408
  %v1395 = vunpack.c.0.s8 %v1394
  %v1396 = vlaneseq
  %v1397 = vshrl.u32 %v1396, 7
  %v1398 = vsub.s32 %v1395, %v1397
  %v1399 = vrot.slane %v1391, %v1398
  %v1401 = vunpack.c.l.s4 1934713408
  %v1402 = vunpack.c.0.s8 %v1401
  %v1403 = vlaneseq
  %v1404 = vshrl.u32 %v1403, 7
  %v1405 = vsub.s32 %v1402, %v1404
  %v1406 = vrot.slane %v1392, %v1405
  %v1407 = vcombine.low %v1342, %v1358
  %v1408 = vcombine.high %v1342, %v1358
  %v1410 = vunpack.c.l.s4 1934713408
  %v1411 = vunpack.c.0.s8 %v1410
  %v1412 = vlaneseq
  %v1413 = vshrl.u32 %v1412, 7
  %v1414 = vsub.s32 %v1411, %v1413
  %v1415 = vrot.slane %v1407, %v1414
  %v1417 = vunpack.c.l.s4 1934713408
  %v1418 = vunpack.c.0.s8 %v1417
  %v1419 = vlaneseq
  %v1420 = vshrl.u32 %v1419, 7
  %v1421 = vsub.s32 %v1418, %v1420
  %v1422 = vrot.slane %v1408, %v1421
  %v1423 = vcombine.low %v1367, %v1383
  %v1424 = vcombine.high %v1367, %v1383
  %v1426 = vunpack.c.l.s4 1934713408
  %v1427 = vunpack.c.0.s8 %v1426
  %v1428 = vlaneseq
  %v1429 = vshrl.u32 %v1428, 7
  %v1430 = vsub.s32 %v1427, %v1429
  %v1431 = vrot.slane %v1423, %v1430
  %v1433 = vunpack.c.l.s4 1934713408
  %v1434 = vunpack.c.0.s8 %v1433
  %v1435 = vlaneseq
  %v1436 = vshrl.u32 %v1435, 7
  %v1437 = vsub.s32 %v1434, %v1436
  %v1438 = vrot.slane %v1424, %v1437
  %v1439 = vcombine.low %v1374, %v1390
  %v1440 = vcombine.high %v1374, %v1390
  %v1442 = vunpack.c.l.s4 1934713408
  %v1443 = vunpack.c.0.s8 %v1442
  %v1444 = vlaneseq
  %v1445 = vshrl.u32 %v1444, 7
  %v1446 = vsub.s32 %v1443, %v1445
  %v1447 = vrot.slane %v1439, %v1446
  %v1449 = vunpack.c.l.s4 1934713408
  %v1450 = vunpack.c.0.s8 %v1449
  %v1451 = vlaneseq
  %v1452 = vshrl.u32 %v1451, 7
  %v1453 = vsub.s32 %v1450, %v1452
  %v1454 = vrot.slane %v1440, %v1453
  %v1455 = vcombine.low %v1399, %v1431
  %v1456 = vcombine.high %v1399, %v1431
  %v1457 = vcombine.low %v1406, %v1438
  %v1458 = vcombine.high %v1406, %v1438
  %v1459 = vcombine.low %v1415, %v1447
  %v1460 = vcombine.high %v1415, %v1447
  %v1461 = vcombine.low %v1422, %v1454
  %v1462 = vcombine.high %v1422, %v1454
  %v1463 = vcombine.low %v970, %v994
  %v1464 = vcombine.high %v970, %v994
  %v1466 = vunpack.c.l.s4 1983009808
  %v1467 = vunpack.c.0.s8 %v1466
  %v1468 = vlaneseq
  %v1469 = vshrl.u32 %v1468, 7
  %v1470 = vsub.s32 %v1467, %v1469
  %v1471 = vrot.slane %v1463, %v1470
  %v1473 = vunpack.c.l.s4 1983009808
  %v1474 = vunpack.c.0.s8 %v1473
  %v1475 = vlaneseq
  %v1476 = vshrl.u32 %v1475, 7
  %v1477 = vsub.s32 %v1474, %v1476
  %v1478 = vrot.slane %v1464, %v1477
  %v1479 = vcombine.low %v982, %v1006
  %v1480 = vcombine.high %v982, %v1006
  %v1482 = vunpack.c.l.s4 1983009808
  %v1483 = vunpack.c.0.s8 %v1482
  %v1484 = vlaneseq
  %v1485 = vshrl.u32 %v1484, 7
  %v1486 = vsub.s32 %v1483, %v1485
  %v1487 = vrot.slane %v1479, %v1486
  %v1489 = vunpack.c.l.s4 1983009808
  %v1490 = vunpack.c.0.s8 %v1489
  %v1491 = vlaneseq
  %v1492 = vshrl.u32 %v1491, 7
  %v1493 = vsub.s32 %v1490, %v1492
  %v1494 = vrot.slane %v1480, %v1493
  %v1495 = vcombine.low %v1014, %v1038
  %v1496 = vcombine.high %v1014, %v1038
  %v1498 = vunpack.c.l.s4 1983009808
  %v1499 = vunpack.c.0.s8 %v1498
  %v1500 = vlaneseq
  %v1501 = vshrl.u32 %v1500, 7
  %v1502 = vsub.s32 %v1499, %v1501
  %v1503 = vrot.slane %v1495, %v1502
  %v1505 = vunpack.c.l.s4 1983009808
  %v1506 = vunpack.c.0.s8 %v1505
  %v1507 = vlaneseq
  %v1508 = vshrl.u32 %v1507, 7
  %v1509 = vsub.s32 %v1506, %v1508
  %v1510 = vrot.slane %v1496, %v1509
  %v1511 = vcombine.low %v1026, %v1050
  %v1512 = vcombine.high %v1026, %v1050
  %v1514 = vunpack.c.l.s4 1983009808
  %v1515 = vunpack.c.0.s8 %v1514
  %v1516 = vlaneseq
  %v1517 = vshrl.u32 %v1516, 7
  %v1518 = vsub.s32 %v1515, %v1517
  %v1519 = vrot.slane %v1511, %v1518
  %v1521 = vunpack.c.l.s4 1983009808
  %v1522 = vunpack.c.0.s8 %v1521
  %v1523 = vlaneseq
  %v1524 = vshrl.u32 %v1523, 7
  %v1525 = vsub.s32 %v1522, %v1524
  %v1526 = vrot.slane %v1512, %v1525
  %v1527 = vcombine.low %v1471, %v1487
  %v1528 = vcombine.high %v1471, %v1487
  %v1530 = vunpack.c.l.s4 1934713408
  %v1531 = vunpack.c.0.s8 %v1530
  %v1532 = vlaneseq
  %v1533 = vshrl.u32 %v1532, 7
  %v1534 = vsub.s32 %v1531, %v1533
  %v1535 = vrot.slane %v1527, %v1534
  %v1537 = vunpack.c.l.s4 1934713408
  %v1538 = vunpack.c.0.s8 %v1537
  %v1539 = vlaneseq
  %v1540 = vshrl.u32 %v1539, 7
  %v1541 = vsub.s32 %v1538, %v1540
  %v1542 = vrot.slane %v1528, %v1541
  %v1543 = vcombine.low %v1478, %v1494
  %v1544 = vcombine.high %v1478, %v1494
  %v1546 = vunpack.c.l.s4 1934713408
  %v1547 = vunpack.c.0.s8 %v1546
  %v1548 = vlaneseq
  %v1549 = vshrl.u32 %v1548, 7
  %v1550 = vsub.s32 %v1547, %v1549
  %v1551 = vrot.slane %v1543, %v1550
  %v1553 = vunpack.c.l.s4 1934713408
  %v1554 = vunpack.c.0.s8 %v1553
  %v1555 = vlaneseq
  %v1556 = vshrl.u32 %v1555, 7
  %v1557 = vsub.s32 %v1554, %v1556
  %v1558 = vrot.slane %v1544, %v1557
  %v1559 = vcombine.low %v1503, %v1519
  %v1560 = vcombine.high %v1503, %v1519
  %v1562 = vunpack.c.l.s4 1934713408
  %v1563 = vunpack.c.0.s8 %v1562
  %v1564 = vlaneseq
  %v1565 = vshrl.u32 %v1564, 7
  %v1566 = vsub.s32 %v1563, %v1565
  %v1567 = vrot.slane %v1559, %v1566
  %v1569 = vunpack.c.l.s4 1934713408
  %v1570 = vunpack.c.0.s8 %v1569
  %v1571 = vlaneseq
  %v1572 = vshrl.u32 %v1571, 7
  %v1573 = vsub.s32 %v1570, %v1572
  %v1574 = vrot.slane %v1560, %v1573
  %v1575 = vcombine.low %v1510, %v1526
  %v1576 = vcombine.high %v1510, %v1526
  %v1578 = vunpack.c.l.s4 1934713408
  %v1579 = vunpack.c.0.s8 %v1578
  %v1580 = vlaneseq
  %v1581 = vshrl.u32 %v1580, 7
  %v1582 = vsub.s32 %v1579, %v1581
  %v1583 = vrot.slane %v1575, %v1582
  %v1585 = vunpack.c.l.s4 1934713408
  %v1586 = vunpack.c.0.s8 %v1585
  %v1587 = vlaneseq
  %v1588 = vshrl.u32 %v1587, 7
  %v1589 = vsub.s32 %v1586, %v1588
  %v1590 = vrot.slane %v1576, %v1589
  %v1591 = vcombine.low %v1535, %v1567
  %v1592 = vcombine.high %v1535, %v1567
  %v1593 = vcombine.low %v1542, %v1574
  %v1594 = vcombine.high %v1542, %v1574
  %v1595 = vcombine.low %v1551, %v1583
  %v1596 = vcombine.high %v1551, %v1583
  %v1597 = vcombine.low %v1558, %v1590
  %v1598 = vcombine.high %v1558, %v1590
  %v1599 = vcombine.low %v815, %v902
  %v1600 = vcombine.high %v815, %v902
  %v1602 = vunpack.c.l.s4 1983009808
  %v1603 = vunpack.c.0.s8 %v1602
  %v1604 = vlaneseq
  %v1605 = vshrl.u32 %v1604, 7
  %v1606 = vsub.s32 %v1603, %v1605
  %v1607 = vrot.slane %v1599, %v1606
  %v1609 = vunpack.c.l.s4 1983009808
  %v1610 = vunpack.c.0.s8 %v1609
  %v1611 = vlaneseq
  %v1612 = vshrl.u32 %v1611, 7
  %v1613 = vsub.s32 %v1610, %v1612
  %v1614 = vrot.slane %v1600, %v1613
  %v1615 = vcombine.low %v890, %v914
  %v1616 = vcombine.high %v890, %v914
  %v1618 = vunpack.c.l.s4 1983009808
  %v1619 = vunpack.c.0.s8 %v1618
  %v1620 = vlaneseq
  %v1621 = vshrl.u32 %v1620, 7
  %v1622 = vsub.s32 %v1619, %v1621
  %v1623 = vrot.slane %v1615, %v1622
  %v1625 = vunpack.c.l.s4 1983009808
  %v1626 = vunpack.c.0.s8 %v1625
  %v1627 = vlaneseq
  %v1628 = vshrl.u32 %v1627, 7
  %v1629 = vsub.s32 %v1626, %v1628
  %v1630 = vrot.slane %v1616, %v1629
  %v1631 = vcombine.low %v816, %v946
  %v1632 = vcombine.high %v816, %v946
  %v1634 = vunpack.c.l.s4 1983009808
  %v1635 = vunpack.c.0.s8 %v1634
  %v1636 = vlaneseq
  %v1637 = vshrl.u32 %v1636, 7
  %v1638 = vsub.s32 %v1635, %v1637
  %v1639 = vrot.slane %v1631, %v1638
  %v1641 = vunpack.c.l.s4 1983009808
  %v1642 = vunpack.c.0.s8 %v1641
  %v1643 = vlaneseq
  %v1644 = vshrl.u32 %v1643, 7
  %v1645 = vsub.s32 %v1642, %v1644
  %v1646 = vrot.slane %v1632, %v1645
  %v1647 = vcombine.low %v934, %v958
  %v1648 = vcombine.high %v934, %v958
  %v1650 = vunpack.c.l.s4 1983009808
  %v1651 = vunpack.c.0.s8 %v1650
  %v1652 = vlaneseq
  %v1653 = vshrl.u32 %v1652, 7
  %v1654 = vsub.s32 %v1651, %v1653
  %v1655 = vrot.slane %v1647, %v1654
  %v1657 = vunpack.c.l.s4 1983009808
  %v1658 = vunpack.c.0.s8 %v1657
  %v1659 = vlaneseq
  %v1660 = vshrl.u32 %v1659, 7
  %v1661 = vsub.s32 %v1658, %v1660
  %v1662 = vrot.slane %v1648, %v1661
  %v1663 = vcombine.low %v1607, %v1623
  %v1664 = vcombine.high %v1607, %v1623
  %v1666 = vunpack.c.l.s4 1934713408
  %v1667 = vunpack.c.0.s8 %v1666
  %v1668 = vlaneseq
  %v1669 = vshrl.u32 %v1668, 7
  %v1670 = vsub.s32 %v1667, %v1669
  %v1671 = vrot.slane %v1663, %v1670
  %v1673 = vunpack.c.l.s4 1934713408
  %v1674 = vunpack.c.0.s8 %v1673
  %v1675 = vlaneseq
  %v1676 = vshrl.u32 %v1675, 7
  %v1677 = vsub.s32 %v1674, %v1676
  %v1678 = vrot.slane %v1664, %v1677
  %v1679 = vcombine.low %v1614, %v1630
  %v1680 = vcombine.high %v1614, %v1630
  %v1682 = vunpack.c.l.s4 1934713408
  %v1683 = vunpack.c.0.s8 %v1682
  %v1684 = vlaneseq
  %v1685 = vshrl.u32 %v1684, 7
  %v1686 = vsub.s32 %v1683, %v1685
  %v1687 = vrot.slane %v1679, %v1686
  %v1689 = vunpack.c.l.s4 1934713408
  %v1690 = vunpack.c.0.s8 %v1689
  %v1691 = vlaneseq
  %v1692 = vshrl.u32 %v1691, 7
  %v1693 = vsub.s32 %v1690, %v1692
  %v1694 = vrot.slane %v1680, %v1693
  %v1695 = vcombine.low %v1639, %v1655
  %v1696 = vcombine.high %v1639, %v1655
  %v1698 = vunpack.c.l.s4 1934713408
  %v1699 = vunpack.c.0.s8 %v1698
  %v1700 = vlaneseq
  %v1701 = vshrl.u32 %v1700, 7
  %v1702 = vsub.s32 %v1699, %v1701
  %v1703 = vrot.slane %v1695, %v1702
  %v1705 = vunpack.c.l.s4 1934713408
  %v1706 = vunpack.c.0.s8 %v1705
  %v1707 = vlaneseq
  %v1708 = vshrl.u32 %v1707, 7
  %v1709 = vsub.s32 %v1706, %v1708
  %v1710 = vrot.slane %v1696, %v1709
  %v1711 = vcombine.low %v1646, %v1662
  %v1712 = vcombine.high %v1646, %v1662
  %v1714 = vunpack.c.l.s4 1934713408
  %v1715 = vunpack.c.0.s8 %v1714
  %v1716 = vlaneseq
  %v1717 = vshrl.u32 %v1716, 7
  %v1718 = vsub.s32 %v1715, %v1717
  %v1719 = vrot.slane %v1711, %v1718
  %v1721 = vunpack.c.l.s4 1934713408
  %v1722 = vunpack.c.0.s8 %v1721
  %v1723 = vlaneseq
  %v1724 = vshrl.u32 %v1723, 7
  %v1725 = vsub.s32 %v1722, %v1724
  %v1726 = vrot.slane %v1712, %v1725
  %v1727 = vcombine.low %v1671, %v1703
  %v1728 = vcombine.high %v1671, %v1703
  %v1729 = vcombine.low %v1678, %v1710
  %v1730 = vcombine.high %v1678, %v1710
  %v1731 = vcombine.low %v1687, %v1719
  %v1732 = vcombine.high %v1687, %v1719
  %v1733 = vcombine.low %v1694, %v1726
  %v1734 = vcombine.high %v1694, %v1726
  %v1735 = vcombine.low %v884, %v908
  %v1736 = vcombine.high %v884, %v908
  %v1738 = vunpack.c.l.s4 1983009808
  %v1739 = vunpack.c.0.s8 %v1738
  %v1740 = vlaneseq
  %v1741 = vshrl.u32 %v1740, 7
  %v1742 = vsub.s32 %v1739, %v1741
  %v1743 = vrot.slane %v1735, %v1742
  %v1745 = vunpack.c.l.s4 1983009808
  %v1746 = vunpack.c.0.s8 %v1745
  %v1747 = vlaneseq
  %v1748 = vshrl.u32 %v1747, 7
  %v1749 = vsub.s32 %v1746, %v1748
  %v1750 = vrot.slane %v1736, %v1749
  %v1751 = vcombine.low %v896, %v920
  %v1752 = vcombine.high %v896, %v920
  %v1754 = vunpack.c.l.s4 1983009808
  %v1755 = vunpack.c.0.s8 %v1754
  %v1756 = vlaneseq
  %v1757 = vshrl.u32 %v1756, 7
  %v1758 = vsub.s32 %v1755, %v1757
  %v1759 = vrot.slane %v1751, %v1758
  %v1761 = vunpack.c.l.s4 1983009808
  %v1762 = vunpack.c.0.s8 %v1761
  %v1763 = vlaneseq
  %v1764 = vshrl.u32 %v1763, 7
  %v1765 = vsub.s32 %v1762, %v1764
  %v1766 = vrot.slane %v1752, %v1765
  %v1767 = vcombine.low %v928, %v952
  %v1768 = vcombine.high %v928, %v952
  %v1770 = vunpack.c.l.s4 1983009808
  %v1771 = vunpack.c.0.s8 %v1770
  %v1772 = vlaneseq
  %v1773 = vshrl.u32 %v1772, 7
  %v1774 = vsub.s32 %v1771, %v1773
  %v1775 = vrot.slane %v1767, %v1774
  %v1777 = vunpack.c.l.s4 1983009808
  %v1778 = vunpack.c.0.s8 %v1777
  %v1779 = vlaneseq
  %v1780 = vshrl.u32 %v1779, 7
  %v1781 = vsub.s32 %v1778, %v1780
  %v1782 = vrot.slane %v1768, %v1781
  %v1783 = vcombine.low %v940, %v964
  %v1784 = vcombine.high %v940, %v964
  %v1786 = vunpack.c.l.s4 1983009808
  %v1787 = vunpack.c.0.s8 %v1786
  %v1788 = vlaneseq
  %v1789 = vshrl.u32 %v1788, 7
  %v1790 = vsub.s32 %v1787, %v1789
  %v1791 = vrot.slane %v1783, %v1790
  %v1793 = vunpack.c.l.s4 1983009808
  %v1794 = vunpack.c.0.s8 %v1793
  %v1795 = vlaneseq
  %v1796 = vshrl.u32 %v1795, 7
  %v1797 = vsub.s32 %v1794, %v1796
  %v1798 = vrot.slane %v1784, %v1797
  %v1799 = vcombine.low %v1743, %v1759
  %v1800 = vcombine.high %v1743, %v1759
  %v1802 = vunpack.c.l.s4 1934713408
  %v1803 = vunpack.c.0.s8 %v1802
  %v1804 = vlaneseq
  %v1805 = vshrl.u32 %v1804, 7
  %v1806 = vsub.s32 %v1803, %v1805
  %v1807 = vrot.slane %v1799, %v1806
  %v1809 = vunpack.c.l.s4 1934713408
  %v1810 = vunpack.c.0.s8 %v1809
  %v1811 = vlaneseq
  %v1812 = vshrl.u32 %v1811, 7
  %v1813 = vsub.s32 %v1810, %v1812
  %v1814 = vrot.slane %v1800, %v1813
  %v1815 = vcombine.low %v1750, %v1766
  %v1816 = vcombine.high %v1750, %v1766
  %v1818 = vunpack.c.l.s4 1934713408
  %v1819 = vunpack.c.0.s8 %v1818
  %v1820 = vlaneseq
  %v1821 = vshrl.u32 %v1820, 7
  %v1822 = vsub.s32 %v1819, %v1821
  %v1823 = vrot.slane %v1815, %v1822
  %v1825 = vunpack.c.l.s4 1934713408
  %v1826 = vunpack.c.0.s8 %v1825
  %v1827 = vlaneseq
  %v1828 = vshrl.u32 %v1827, 7
  %v1829 = vsub.s32 %v1826, %v1828
  %v1830 = vrot.slane %v1816, %v1829
  %v1831 = vcombine.low %v1775, %v1791
  %v1832 = vcombine.high %v1775, %v1791
  %v1834 = vunpack.c.l.s4 1934713408
  %v1835 = vunpack.c.0.s8 %v1834
  %v1836 = vlaneseq
  %v1837 = vshrl.u32 %v1836, 7
  %v1838 = vsub.s32 %v1835, %v1837
  %v1839 = vrot.slane %v1831, %v1838
  %v1841 = vunpack.c.l.s4 1934713408
  %v1842 = vunpack.c.0.s8 %v1841
  %v1843 = vlaneseq
  %v1844 = vshrl.u32 %v1843, 7
  %v1845 = vsub.s32 %v1842, %v1844
  %v1846 = vrot.slane %v1832, %v1845
  %v1847 = vcombine.low %v1782, %v1798
  %v1848 = vcombine.high %v1782, %v1798
  %v1850 = vunpack.c.l.s4 1934713408
  %v1851 = vunpack.c.0.s8 %v1850
  %v1852 = vlaneseq
  %v1853 = vshrl.u32 %v1852, 7
  %v1854 = vsub.s32 %v1851, %v1853
  %v1855 = vrot.slane %v1847, %v1854
  %v1857 = vunpack.c.l.s4 1934713408
  %v1858 = vunpack.c.0.s8 %v1857
  %v1859 = vlaneseq
  %v1860 = vshrl.u32 %v1859, 7
  %v1861 = vsub.s32 %v1858, %v1860
  %v1862 = vrot.slane %v1848, %v1861
  %v1863 = vcombine.low %v1807, %v1839
  %v1864 = vcombine.high %v1807, %v1839
  %v1865 = vcombine.low %v1814, %v1846
  %v1866 = vcombine.high %v1814, %v1846
  %v1867 = vcombine.low %v1823, %v1855
  %v1868 = vcombine.high %v1823, %v1855
  %v1869 = vcombine.low %v1830, %v1862
  %v1870 = vcombine.high %v1830, %v1862
  %v1871 = vcombine.low %v817, %v990
  %v1872 = vcombine.high %v817, %v990
  %v1874 = vunpack.c.l.s4 1983009808
  %v1875 = vunpack.c.0.s8 %v1874
  %v1876 = vlaneseq
  %v1877 = vshrl.u32 %v1876, 7
  %v1878 = vsub.s32 %v1875, %v1877
  %v1879 = vrot.slane %v1871, %v1878
  %v1881 = vunpack.c.l.s4 1983009808
  %v1882 = vunpack.c.0.s8 %v1881
  %v1883 = vlaneseq
  %v1884 = vshrl.u32 %v1883, 7
  %v1885 = vsub.s32 %v1882, %v1884
  %v1886 = vrot.slane %v1872, %v1885
  %v1887 = vcombine.low %v978, %v1002
  %v1888 = vcombine.high %v978, %v1002
  %v1890 = vunpack.c.l.s4 1983009808
  %v1891 = vunpack.c.0.s8 %v1890
  %v1892 = vlaneseq
  %v1893 = vshrl.u32 %v1892, 7
  %v1894 = vsub.s32 %v1891, %v1893
  %v1895 = vrot.slane %v1887, %v1894
  %v1897 = vunpack.c.l.s4 1983009808
  %v1898 = vunpack.c.0.s8 %v1897
  %v1899 = vlaneseq
  %v1900 = vshrl.u32 %v1899, 7
  %v1901 = vsub.s32 %v1898, %v1900
  %v1902 = vrot.slane %v1888, %v1901
  %v1903 = vcombine.low %v818, %v1034
  %v1904 = vcombine.high %v818, %v1034
  %v1906 = vunpack.c.l.s4 1983009808
  %v1907 = vunpack.c.0.s8 %v1906
  %v1908 = vlaneseq
  %v1909 = vshrl.u32 %v1908, 7
  %v1910 = vsub.s32 %v1907, %v1909
  %v1911 = vrot.slane %v1903, %v1910
  %v1913 = vunpack.c.l.s4 1983009808
  %v1914 = vunpack.c.0.s8 %v1913
  %v1915 = vlaneseq
  %v1916 = vshrl.u32 %v1915, 7
  %v1917 = vsub.s32 %v1914, %v1916
  %v1918 = vrot.slane %v1904, %v1917
  %v1919 = vcombine.low %v1022, %v1046
  %v1920 = vcombine.high %v1022, %v1046
  %v1922 = vunpack.c.l.s4 1983009808
  %v1923 = vunpack.c.0.s8 %v1922
  %v1924 = vlaneseq
  %v1925 = vshrl.u32 %v1924, 7
  %v1926 = vsub.s32 %v1923, %v1925
  %v1927 = vrot.slane %v1919, %v1926
  %v1929 = vunpack.c.l.s4 1983009808
  %v1930 = vunpack.c.0.s8 %v1929
  %v1931 = vlaneseq
  %v1932 = vshrl.u32 %v1931, 7
  %v1933 = vsub.s32 %v1930, %v1932
  %v1934 = vrot.slane %v1920, %v1933
  %v1935 = vcombine.low %v1879, %v1895
  %v1936 = vcombine.high %v1879, %v1895
  %v1938 = vunpack.c.l.s4 1934713408
  %v1939 = vunpack.c.0.s8 %v1938
  %v1940 = vlaneseq
  %v1941 = vshrl.u32 %v1940, 7
  %v1942 = vsub.s32 %v1939, %v1941
  %v1943 = vrot.slane %v1935, %v1942
  %v1945 = vunpack.c.l.s4 1934713408
  %v1946 = vunpack.c.0.s8 %v1945
  %v1947 = vlaneseq
  %v1948 = vshrl.u32 %v1947, 7
  %v1949 = vsub.s32 %v1946, %v1948
  %v1950 = vrot.slane %v1936, %v1949
  %v1951 = vcombine.low %v1886, %v1902
  %v1952 = vcombine.high %v1886, %v1902
  %v1954 = vunpack.c.l.s4 1934713408
  %v1955 = vunpack.c.0.s8 %v1954
  %v1956 = vlaneseq
  %v1957 = vshrl.u32 %v1956, 7
  %v1958 = vsub.s32 %v1955, %v1957
  %v1959 = vrot.slane %v1951, %v1958
  %v1961 = vunpack.c.l.s4 1934713408
  %v1962 = vunpack.c.0.s8 %v1961
  %v1963 = vlaneseq
  %v1964 = vshrl.u32 %v1963, 7
  %v1965 = vsub.s32 %v1962, %v1964
  %v1966 = vrot.slane %v1952, %v1965
  %v1967 = vcombine.low %v1911, %v1927
  %v1968 = vcombine.high %v1911, %v1927
  %v1970 = vunpack.c.l.s4 1934713408
  %v1971 = vunpack.c.0.s8 %v1970
  %v1972 = vlaneseq
  %v1973 = vshrl.u32 %v1972, 7
  %v1974 = vsub.s32 %v1971, %v1973
  %v1975 = vrot.slane %v1967, %v1974
  %v1977 = vunpack.c.l.s4 1934713408
  %v1978 = vunpack.c.0.s8 %v1977
  %v1979 = vlaneseq
  %v1980 = vshrl.u32 %v1979, 7
  %v1981 = vsub.s32 %v1978, %v1980
  %v1982 = vrot.slane %v1968, %v1981
  %v1983 = vcombine.low %v1918, %v1934
  %v1984 = vcombine.high %v1918, %v1934
  %v1986 = vunpack.c.l.s4 1934713408
  %v1987 = vunpack.c.0.s8 %v1986
  %v1988 = vlaneseq
  %v1989 = vshrl.u32 %v1988, 7
  %v1990 = vsub.s32 %v1987, %v1989
  %v1991 = vrot.slane %v1983, %v1990
  %v1993 = vunpack.c.l.s4 1934713408
  %v1994 = vunpack.c.0.s8 %v1993
  %v1995 = vlaneseq
  %v1996 = vshrl.u32 %v1995, 7
  %v1997 = vsub.s32 %v1994, %v1996
  %v1998 = vrot.slane %v1984, %v1997
  %v1999 = vcombine.low %v1943, %v1975
  %v2000 = vcombine.high %v1943, %v1975
  %v2001 = vcombine.low %v1950, %v1982
  %v2002 = vcombine.high %v1950, %v1982
  %v2003 = vcombine.low %v1959, %v1991
  %v2004 = vcombine.high %v1959, %v1991
  %v2005 = vcombine.low %v1966, %v1998
  %v2006 = vcombine.high %v1966, %v1998
  %v2007 = vcombine.low %v972, %v996
  %v2008 = vcombine.high %v972, %v996
  %v2010 = vunpack.c.l.s4 1983009808
  %v2011 = vunpack.c.0.s8 %v2010
  %v2012 = vlaneseq
  %v2013 = vshrl.u32 %v2012, 7
  %v2014 = vsub.s32 %v2011, %v2013
  %v2015 = vrot.slane %v2007, %v2014
  %v2017 = vunpack.c.l.s4 1983009808
  %v2018 = vunpack.c.0.s8 %v2017
  %v2019 = vlaneseq
  %v2020 = vshrl.u32 %v2019, 7
  %v2021 = vsub.s32 %v2018, %v2020
  %v2022 = vrot.slane %v2008, %v2021
  %v2023 = vcombine.low %v984, %v1008
  %v2024 = vcombine.high %v984, %v1008
  %v2026 = vunpack.c.l.s4 1983009808
  %v2027 = vunpack.c.0.s8 %v2026
  %v2028 = vlaneseq
  %v2029 = vshrl.u32 %v2028, 7
  %v2030 = vsub.s32 %v2027, %v2029
  %v2031 = vrot.slane %v2023, %v2030
  %v2033 = vunpack.c.l.s4 1983009808
  %v2034 = vunpack.c.0.s8 %v2033
  %v2035 = vlaneseq
  %v2036 = vshrl.u32 %v2035, 7
  %v2037 = vsub.s32 %v2034, %v2036
  %v2038 = vrot.slane %v2024, %v2037
  %v2039 = vcombine.low %v1016, %v1040
  %v2040 = vcombine.high %v1016, %v1040
  %v2042 = vunpack.c.l.s4 1983009808
  %v2043 = vunpack.c.0.s8 %v2042
  %v2044 = vlaneseq
  %v2045 = vshrl.u32 %v2044, 7
  %v2046 = vsub.s32 %v2043, %v2045
  %v2047 = vrot.slane %v2039, %v2046
  %v2049 = vunpack.c.l.s4 1983009808
  %v2050 = vunpack.c.0.s8 %v2049
  %v2051 = vlaneseq
  %v2052 = vshrl.u32 %v2051, 7
  %v2053 = vsub.s32 %v2050, %v2052
  %v2054 = vrot.slane %v2040, %v2053
  %v2055 = vcombine.low %v1028, %v1052
  %v2056 = vcombine.high %v1028, %v1052
  %v2058 = vunpack.c.l.s4 1983009808
  %v2059 = vunpack.c.0.s8 %v2058
  %v2060 = vlaneseq
  %v2061 = vshrl.u32 %v2060, 7
  %v2062 = vsub.s32 %v2059, %v2061
  %v2063 = vrot.slane %v2055, %v2062
  %v2065 = vunpack.c.l.s4 1983009808
  %v2066 = vunpack.c.0.s8 %v2065
  %v2067 = vlaneseq
  %v2068 = vshrl.u32 %v2067, 7
  %v2069 = vsub.s32 %v2066, %v2068
  %v2070 = vrot.slane %v2056, %v2069
  %v2071 = vcombine.low %v2015, %v2031
  %v2072 = vcombine.high %v2015, %v2031
  %v2074 = vunpack.c.l.s4 1934713408
  %v2075 = vunpack.c.0.s8 %v2074
  %v2076 = vlaneseq
  %v2077 = vshrl.u32 %v2076, 7
  %v2078 = vsub.s32 %v2075, %v2077
  %v2079 = vrot.slane %v2071, %v2078
  %v2081 = vunpack.c.l.s4 1934713408
  %v2082 = vunpack.c.0.s8 %v2081
  %v2083 = vlaneseq
  %v2084 = vshrl.u32 %v2083, 7
  %v2085 = vsub.s32 %v2082, %v2084
  %v2086 = vrot.slane %v2072, %v2085
  %v2087 = vcombine.low %v2022, %v2038
  %v2088 = vcombine.high %v2022, %v2038
  %v2090 = vunpack.c.l.s4 1934713408
  %v2091 = vunpack.c.0.s8 %v2090
  %v2092 = vlaneseq
  %v2093 = vshrl.u32 %v2092, 7
  %v2094 = vsub.s32 %v2091, %v2093
  %v2095 = vrot.slane %v2087, %v2094
  %v2097 = vunpack.c.l.s4 1934713408
  %v2098 = vunpack.c.0.s8 %v2097
  %v2099 = vlaneseq
  %v2100 = vshrl.u32 %v2099, 7
  %v2101 = vsub.s32 %v2098, %v2100
  %v2102 = vrot.slane %v2088, %v2101
  %v2103 = vcombine.low %v2047, %v2063
  %v2104 = vcombine.high %v2047, %v2063
  %v2106 = vunpack.c.l.s4 1934713408
  %v2107 = vunpack.c.0.s8 %v2106
  %v2108 = vlaneseq
  %v2109 = vshrl.u32 %v2108, 7
  %v2110 = vsub.s32 %v2107, %v2109
  %v2111 = vrot.slane %v2103, %v2110
  %v2113 = vunpack.c.l.s4 1934713408
  %v2114 = vunpack.c.0.s8 %v2113
  %v2115 = vlaneseq
  %v2116 = vshrl.u32 %v2115, 7
  %v2117 = vsub.s32 %v2114, %v2116
  %v2118 = vrot.slane %v2104, %v2117
  %v2119 = vcombine.low %v2054, %v2070
  %v2120 = vcombine.high %v2054, %v2070
  %v2122 = vunpack.c.l.s4 1934713408
  %v2123 = vunpack.c.0.s8 %v2122
  %v2124 = vlaneseq
  %v2125 = vshrl.u32 %v2124, 7
  %v2126 = vsub.s32 %v2123, %v2125
  %v2127 = vrot.slane %v2119, %v2126
  %v2129 = vunpack.c.l.s4 1934713408
  %v2130 = vunpack.c.0.s8 %v2129
  %v2131 = vlaneseq
  %v2132 = vshrl.u32 %v2131, 7
  %v2133 = vsub.s32 %v2130, %v2132
  %v2134 = vrot.slane %v2120, %v2133
  %v2135 = vcombine.low %v2079, %v2111
  %v2136 = vcombine.high %v2079, %v2111
  %v2137 = vcombine.low %v2086, %v2118
  %v2138 = vcombine.high %v2086, %v2118
  %v2139 = vcombine.low %v2095, %v2127
  %v2140 = vcombine.high %v2095, %v2127
  %v2141 = vcombine.low %v2102, %v2134
  %v2142 = vcombine.high %v2102, %v2134
  %v2145 = vpack.i.b16 %v1319, %v1183
  %v2147 = vshrl.u32 %v1183, 16
  %v2148 = vshrl.u32 %v1319, 16
  %v2149 = vpack.i.b16 %v2148, %v2147
  %v2153 = vpack.i.b16 %v1320, %v1184
  %v2155 = vshrl.u32 %v1184, 16
  %v2156 = vshrl.u32 %v1320, 16
  %v2157 = vpack.i.b16 %v2156, %v2155
  %v2161 = vpack.i.b16 %v1321, %v1185
  %v2163 = vshrl.u32 %v1185, 16
  %v2164 = vshrl.u32 %v1321, 16
  %v2165 = vpack.i.b16 %v2164, %v2163
  %v2169 = vpack.i.b16 %v1322, %v1186
  %v2171 = vshrl.u32 %v1186, 16
  %v2172 = vshrl.u32 %v1322, 16
  %v2173 = vpack.i.b16 %v2172, %v2171
  %v2177 = vpack.i.b16 %v1323, %v1187
  %v2179 = vshrl.u32 %v1187, 16
  %v2180 = vshrl.u32 %v1323, 16
  %v2181 = vpack.i.b16 %v2180, %v2179
  %v2185 = vpack.i.b16 %v1324, %v1188
  %v2187 = vshrl.u32 %v1188, 16
  %v2188 = vshrl.u32 %v1324, 16
  %v2189 = vpack.i.b16 %v2188, %v2187
  %v2193 = vpack.i.b16 %v1325, %v1189
  %v2195 = vshrl.u32 %v1189, 16
  %v2196 = vshrl.u32 %v1325, 16
  %v2197 = vpack.i.b16 %v2196, %v2195
  %v2201 = vpack.i.b16 %v1326, %v1190
  %v2203 = vshrl.u32 %v1190, 16
  %v2204 = vshrl.u32 %v1326, 16
  %v2205 = vpack.i.b16 %v2204, %v2203
  %v2209 = vpack.i.b16 %v1863, %v1727
  %v2211 = vshrl.u32 %v1727, 16
  %v2212 = vshrl.u32 %v1863, 16
  %v2213 = vpack.i.b16 %v2212, %v2211
  %v2217 = vpack.i.b16 %v1864, %v1728
  %v2219 = vshrl.u32 %v1728, 16
  %v2220 = vshrl.u32 %v1864, 16
  %v2221 = vpack.i.b16 %v2220, %v2219
  %v2225 = vpack.i.b16 %v1865, %v1729
  %v2227 = vshrl.u32 %v1729, 16
  %v2228 = vshrl.u32 %v1865, 16
  %v2229 = vpack.i.b16 %v2228, %v2227
  %v2233 = vpack.i.b16 %v1866, %v1730
  %v2235 = vshrl.u32 %v1730, 16
  %v2236 = vshrl.u32 %v1866, 16
  %v2237 = vpack.i.b16 %v2236, %v2235
  %v2241 = vpack.i.b16 %v1867, %v1731
  %v2243 = vshrl.u32 %v1731, 16
  %v2244 = vshrl.u32 %v1867, 16
  %v2245 = vpack.i.b16 %v2244, %v2243
  %v2249 = vpack.i.b16 %v1868, %v1732
  %v2251 = vshrl.u32 %v1732, 16
  %v2252 = vshrl.u32 %v1868, 16
  %v2253 = vpack.i.b16 %v2252, %v2251
  %v2257 = vpack.i.b16 %v1869, %v1733
  %v2259 = vshrl.u32 %v1733, 16
  %v2260 = vshrl.u32 %v1869, 16
  %v2261 = vpack.i.b16 %v2260, %v2259
  %v2265 = vpack.i.b16 %v1870, %v1734
  %v2267 = vshrl.u32 %v1734, 16
  %v2268 = vshrl.u32 %v1870, 16
  %v2269 = vpack.i.b16 %v2268, %v2267
  %v2273 = vpack.i.b16 %v1591, %v1455
  %v2275 = vshrl.u32 %v1455, 16
  %v2276 = vshrl.u32 %v1591, 16
  %v2277 = vpack.i.b16 %v2276, %v2275
  %v2281 = vpack.i.b16 %v1592, %v1456
  %v2283 = vshrl.u32 %v1456, 16
  %v2284 = vshrl.u32 %v1592, 16
  %v2285 = vpack.i.b16 %v2284, %v2283
  %v2289 = vpack.i.b16 %v1593, %v1457
  %v2291 = vshrl.u32 %v1457, 16
  %v2292 = vshrl.u32 %v1593, 16
  %v2293 = vpack.i.b16 %v2292, %v2291
  %v2297 = vpack.i.b16 %v1594, %v1458
  %v2299 = vshrl.u32 %v1458, 16
  %v2300 = vshrl.u32 %v1594, 16
  %v2301 = vpack.i.b16 %v2300, %v2299
  %v2305 = vpack.i.b16 %v1595, %v1459
  %v2307 = vshrl.u32 %v1459, 16
  %v2308 = vshrl.u32 %v1595, 16
  %v2309 = vpack.i.b16 %v2308, %v2307
  %v2313 = vpack.i.b16 %v1596, %v1460
  %v2315 = vshrl.u32 %v1460, 16
  %v2316 = vshrl.u32 %v1596, 16
  %v2317 = vpack.i.b16 %v2316, %v2315
  %v2321 = vpack.i.b16 %v1597, %v1461
  %v2323 = vshrl.u32 %v1461, 16
  %v2324 = vshrl.u32 %v1597, 16
  %v2325 = vpack.i.b16 %v2324, %v2323
  %v2329 = vpack.i.b16 %v1598, %v1462
  %v2331 = vshrl.u32 %v1462, 16
  %v2332 = vshrl.u32 %v1598, 16
  %v2333 = vpack.i.b16 %v2332, %v2331
  %v2337 = vpack.i.b16 %v2135, %v1999
  %v2339 = vshrl.u32 %v1999, 16
  %v2340 = vshrl.u32 %v2135, 16
  %v2341 = vpack.i.b16 %v2340, %v2339
  %v2345 = vpack.i.b16 %v2136, %v2000
  %v2347 = vshrl.u32 %v2000, 16
  %v2348 = vshrl.u32 %v2136, 16
  %v2349 = vpack.i.b16 %v2348, %v2347
  %v2353 = vpack.i.b16 %v2137, %v2001
  %v2355 = vshrl.u32 %v2001, 16
  %v2356 = vshrl.u32 %v2137, 16
  %v2357 = vpack.i.b16 %v2356, %v2355
  %v2361 = vpack.i.b16 %v2138, %v2002
  %v2363 = vshrl.u32 %v2002, 16
  %v2364 = vshrl.u32 %v2138, 16
  %v2365 = vpack.i.b16 %v2364, %v2363
  %v2369 = vpack.i.b16 %v2139, %v2003
  %v2371 = vshrl.u32 %v2003, 16
  %v2372 = vshrl.u32 %v2139, 16
  %v2373 = vpack.i.b16 %v2372, %v2371
  %v2377 = vpack.i.b16 %v2140, %v2004
  %v2379 = vshrl.u32 %v2004, 16
  %v2380 = vshrl.u32 %v2140, 16
  %v2381 = vpack.i.b16 %v2380, %v2379
  %v2385 = vpack.i.b16 %v2141, %v2005
  %v2387 = vshrl.u32 %v2005, 16
  %v2388 = vshrl.u32 %v2141, 16
  %v2389 = vpack.i.b16 %v2388, %v2387
  %v2393 = vpack.i.b16 %v2142, %v2006
  %v2395 = vshrl.u32 %v2006, 16
  %v2396 = vshrl.u32 %v2142, 16
  %v2397 = vpack.i.b16 %v2396, %v2395
  %2401 = vrot.lane.b32.xlu0 %v871, 112
  %v2402 = vpop.permute.xlu0 %2401
  %2403 = vrot.lane.b32.xlu0 %v875, 112
  %v2404 = vpop.permute.xlu0 %2403
  %2407 = vrot.lane.b32.xlu0 %v871, 96
  %v2408 = vpop.permute.xlu0 %2407
  %2409 = vrot.lane.b32.xlu0 %v875, 96
  %v2410 = vpop.permute.xlu0 %2409
  %2413 = vrot.lane.b32.xlu0 %v871, 80
  %v2414 = vpop.permute.xlu0 %2413
  %2415 = vrot.lane.b32.xlu0 %v875, 80
  %v2416 = vpop.permute.xlu0 %2415
  %2419 = vrot.lane.b32.xlu0 %v871, 64
  %v2420 = vpop.permute.xlu0 %2419
  %2421 = vrot.lane.b32.xlu0 %v875, 64
  %v2422 = vpop.permute.xlu0 %2421
  %2425 = vrot.lane.b32.xlu0 %v871, 48
  %v2426 = vpop.permute.xlu0 %2425
  %2427 = vrot.lane.b32.xlu0 %v875, 48
  %v2428 = vpop.permute.xlu0 %2427
  %2431 = vrot.lane.b32.xlu0 %v871, 32
  %v2432 = vpop.permute.xlu0 %2431
  %2433 = vrot.lane.b32.xlu0 %v875, 32
  %v2434 = vpop.permute.xlu0 %2433
  %2437 = vrot.lane.b32.xlu0 %v871, 16
  %v2438 = vpop.permute.xlu0 %2437
  %2439 = vrot.lane.b32.xlu0 %v875, 16
  %v2440 = vpop.permute.xlu0 %2439
  %2445 = vrot.lane.b32.xlu0 %v872, 112
  %v2446 = vpop.permute.xlu0 %2445
  %2447 = vrot.lane.b32.xlu0 %v876, 112
  %v2448 = vpop.permute.xlu0 %2447
  %2451 = vrot.lane.b32.xlu0 %v872, 96
  %v2452 = vpop.permute.xlu0 %2451
  %2453 = vrot.lane.b32.xlu0 %v876, 96
  %v2454 = vpop.permute.xlu0 %2453
  %2457 = vrot.lane.b32.xlu0 %v872, 80
  %v2458 = vpop.permute.xlu0 %2457
  %2459 = vrot.lane.b32.xlu0 %v876, 80
  %v2460 = vpop.permute.xlu0 %2459
  %2463 = vrot.lane.b32.xlu0 %v872, 64
  %v2464 = vpop.permute.xlu0 %2463
  %2465 = vrot.lane.b32.xlu0 %v876, 64
  %v2466 = vpop.permute.xlu0 %2465
  %2469 = vrot.lane.b32.xlu0 %v872, 48
  %v2470 = vpop.permute.xlu0 %2469
  %2471 = vrot.lane.b32.xlu0 %v876, 48
  %v2472 = vpop.permute.xlu0 %2471
  %2475 = vrot.lane.b32.xlu0 %v872, 32
  %v2476 = vpop.permute.xlu0 %2475
  %2477 = vrot.lane.b32.xlu0 %v876, 32
  %v2478 = vpop.permute.xlu0 %2477
  %2481 = vrot.lane.b32.xlu0 %v872, 16
  %v2482 = vpop.permute.xlu0 %2481
  %2483 = vrot.lane.b32.xlu0 %v876, 16
  %v2484 = vpop.permute.xlu0 %2483
  %2489 = vrot.lane.b32.xlu0 %v873, 112
  %v2490 = vpop.permute.xlu0 %2489
  %2491 = vrot.lane.b32.xlu0 %v877, 112
  %v2492 = vpop.permute.xlu0 %2491
  %2495 = vrot.lane.b32.xlu0 %v873, 96
  %v2496 = vpop.permute.xlu0 %2495
  %2497 = vrot.lane.b32.xlu0 %v877, 96
  %v2498 = vpop.permute.xlu0 %2497
  %2501 = vrot.lane.b32.xlu0 %v873, 80
  %v2502 = vpop.permute.xlu0 %2501
  %2503 = vrot.lane.b32.xlu0 %v877, 80
  %v2504 = vpop.permute.xlu0 %2503
  %2507 = vrot.lane.b32.xlu0 %v873, 64
  %v2508 = vpop.permute.xlu0 %2507
  %2509 = vrot.lane.b32.xlu0 %v877, 64
  %v2510 = vpop.permute.xlu0 %2509
  %2513 = vrot.lane.b32.xlu0 %v873, 48
  %v2514 = vpop.permute.xlu0 %2513
  %2515 = vrot.lane.b32.xlu0 %v877, 48
  %v2516 = vpop.permute.xlu0 %2515
  %2519 = vrot.lane.b32.xlu0 %v873, 32
  %v2520 = vpop.permute.xlu0 %2519
  %2521 = vrot.lane.b32.xlu0 %v877, 32
  %v2522 = vpop.permute.xlu0 %2521
  %2525 = vrot.lane.b32.xlu0 %v873, 16
  %v2526 = vpop.permute.xlu0 %2525
  %2527 = vrot.lane.b32.xlu0 %v877, 16
  %v2528 = vpop.permute.xlu0 %2527
  %2533 = vrot.lane.b32.xlu0 %v874, 112
  %v2534 = vpop.permute.xlu0 %2533
  %2535 = vrot.lane.b32.xlu0 %v878, 112
  %v2536 = vpop.permute.xlu0 %2535
  %2539 = vrot.lane.b32.xlu0 %v874, 96
  %v2540 = vpop.permute.xlu0 %2539
  %2541 = vrot.lane.b32.xlu0 %v878, 96
  %v2542 = vpop.permute.xlu0 %2541
  %2545 = vrot.lane.b32.xlu0 %v874, 80
  %v2546 = vpop.permute.xlu0 %2545
  %2547 = vrot.lane.b32.xlu0 %v878, 80
  %v2548 = vpop.permute.xlu0 %2547
  %2551 = vrot.lane.b32.xlu0 %v874, 64
  %v2552 = vpop.permute.xlu0 %2551
  %2553 = vrot.lane.b32.xlu0 %v878, 64
  %v2554 = vpop.permute.xlu0 %2553
  %2557 = vrot.lane.b32.xlu0 %v874, 48
  %v2558 = vpop.permute.xlu0 %2557
  %2559 = vrot.lane.b32.xlu0 %v878, 48
  %v2560 = vpop.permute.xlu0 %2559
  %2563 = vrot.lane.b32.xlu0 %v874, 32
  %v2564 = vpop.permute.xlu0 %2563
  %2565 = vrot.lane.b32.xlu0 %v878, 32
  %v2566 = vpop.permute.xlu0 %2565
  %2569 = vrot.lane.b32.xlu0 %v874, 16
  %v2570 = vpop.permute.xlu0 %2569
  %2571 = vrot.lane.b32.xlu0 %v878, 16
  %v2572 = vpop.permute.xlu0 %2571
  %v2575 = vcombine.low %v871, %v2420
  %v2576 = vcombine.high %v871, %v2420
  %v2578 = vunpack.c.l.s4 1983009808
  %v2579 = vunpack.c.0.s8 %v2578
  %v2580 = vlaneseq
  %v2581 = vshrl.u32 %v2580, 7
  %v2582 = vsub.s32 %v2579, %v2581
  %v2583 = vrot.slane %v2575, %v2582
  %v2585 = vunpack.c.l.s4 1983009808
  %v2586 = vunpack.c.0.s8 %v2585
  %v2587 = vlaneseq
  %v2588 = vshrl.u32 %v2587, 7
  %v2589 = vsub.s32 %v2586, %v2588
  %v2590 = vrot.slane %v2576, %v2589
  %v2591 = vcombine.low %v2408, %v2432
  %v2592 = vcombine.high %v2408, %v2432
  %v2594 = vunpack.c.l.s4 1983009808
  %v2595 = vunpack.c.0.s8 %v2594
  %v2596 = vlaneseq
  %v2597 = vshrl.u32 %v2596, 7
  %v2598 = vsub.s32 %v2595, %v2597
  %v2599 = vrot.slane %v2591, %v2598
  %v2601 = vunpack.c.l.s4 1983009808
  %v2602 = vunpack.c.0.s8 %v2601
  %v2603 = vlaneseq
  %v2604 = vshrl.u32 %v2603, 7
  %v2605 = vsub.s32 %v2602, %v2604
  %v2606 = vrot.slane %v2592, %v2605
  %v2607 = vcombine.low %v872, %v2464
  %v2608 = vcombine.high %v872, %v2464
  %v2610 = vunpack.c.l.s4 1983009808
  %v2611 = vunpack.c.0.s8 %v2610
  %v2612 = vlaneseq
  %v2613 = vshrl.u32 %v2612, 7
  %v2614 = vsub.s32 %v2611, %v2613
  %v2615 = vrot.slane %v2607, %v2614
  %v2617 = vunpack.c.l.s4 1983009808
  %v2618 = vunpack.c.0.s8 %v2617
  %v2619 = vlaneseq
  %v2620 = vshrl.u32 %v2619, 7
  %v2621 = vsub.s32 %v2618, %v2620
  %v2622 = vrot.slane %v2608, %v2621
  %v2623 = vcombine.low %v2452, %v2476
  %v2624 = vcombine.high %v2452, %v2476
  %v2626 = vunpack.c.l.s4 1983009808
  %v2627 = vunpack.c.0.s8 %v2626
  %v2628 = vlaneseq
  %v2629 = vshrl.u32 %v2628, 7
  %v2630 = vsub.s32 %v2627, %v2629
  %v2631 = vrot.slane %v2623, %v2630
  %v2633 = vunpack.c.l.s4 1983009808
  %v2634 = vunpack.c.0.s8 %v2633
  %v2635 = vlaneseq
  %v2636 = vshrl.u32 %v2635, 7
  %v2637 = vsub.s32 %v2634, %v2636
  %v2638 = vrot.slane %v2624, %v2637
  %v2639 = vcombine.low %v2583, %v2599
  %v2640 = vcombine.high %v2583, %v2599
  %v2642 = vunpack.c.l.s4 1934713408
  %v2643 = vunpack.c.0.s8 %v2642
  %v2644 = vlaneseq
  %v2645 = vshrl.u32 %v2644, 7
  %v2646 = vsub.s32 %v2643, %v2645
  %v2647 = vrot.slane %v2639, %v2646
  %v2649 = vunpack.c.l.s4 1934713408
  %v2650 = vunpack.c.0.s8 %v2649
  %v2651 = vlaneseq
  %v2652 = vshrl.u32 %v2651, 7
  %v2653 = vsub.s32 %v2650, %v2652
  %v2654 = vrot.slane %v2640, %v2653
  %v2655 = vcombine.low %v2590, %v2606
  %v2656 = vcombine.high %v2590, %v2606
  %v2658 = vunpack.c.l.s4 1934713408
  %v2659 = vunpack.c.0.s8 %v2658
  %v2660 = vlaneseq
  %v2661 = vshrl.u32 %v2660, 7
  %v2662 = vsub.s32 %v2659, %v2661
  %v2663 = vrot.slane %v2655, %v2662
  %v2665 = vunpack.c.l.s4 1934713408
  %v2666 = vunpack.c.0.s8 %v2665
  %v2667 = vlaneseq
  %v2668 = vshrl.u32 %v2667, 7
  %v2669 = vsub.s32 %v2666, %v2668
  %v2670 = vrot.slane %v2656, %v2669
  %v2671 = vcombine.low %v2615, %v2631
  %v2672 = vcombine.high %v2615, %v2631
  %v2674 = vunpack.c.l.s4 1934713408
  %v2675 = vunpack.c.0.s8 %v2674
  %v2676 = vlaneseq
  %v2677 = vshrl.u32 %v2676, 7
  %v2678 = vsub.s32 %v2675, %v2677
  %v2679 = vrot.slane %v2671, %v2678
  %v2681 = vunpack.c.l.s4 1934713408
  %v2682 = vunpack.c.0.s8 %v2681
  %v2683 = vlaneseq
  %v2684 = vshrl.u32 %v2683, 7
  %v2685 = vsub.s32 %v2682, %v2684
  %v2686 = vrot.slane %v2672, %v2685
  %v2687 = vcombine.low %v2622, %v2638
  %v2688 = vcombine.high %v2622, %v2638
  %v2690 = vunpack.c.l.s4 1934713408
  %v2691 = vunpack.c.0.s8 %v2690
  %v2692 = vlaneseq
  %v2693 = vshrl.u32 %v2692, 7
  %v2694 = vsub.s32 %v2691, %v2693
  %v2695 = vrot.slane %v2687, %v2694
  %v2697 = vunpack.c.l.s4 1934713408
  %v2698 = vunpack.c.0.s8 %v2697
  %v2699 = vlaneseq
  %v2700 = vshrl.u32 %v2699, 7
  %v2701 = vsub.s32 %v2698, %v2700
  %v2702 = vrot.slane %v2688, %v2701
  %v2703 = vcombine.low %v2647, %v2679
  %v2704 = vcombine.high %v2647, %v2679
  %v2705 = vcombine.low %v2654, %v2686
  %v2706 = vcombine.high %v2654, %v2686
  %v2707 = vcombine.low %v2663, %v2695
  %v2708 = vcombine.high %v2663, %v2695
  %v2709 = vcombine.low %v2670, %v2702
  %v2710 = vcombine.high %v2670, %v2702
  %v2711 = vcombine.low %v2402, %v2426
  %v2712 = vcombine.high %v2402, %v2426
  %v2714 = vunpack.c.l.s4 1983009808
  %v2715 = vunpack.c.0.s8 %v2714
  %v2716 = vlaneseq
  %v2717 = vshrl.u32 %v2716, 7
  %v2718 = vsub.s32 %v2715, %v2717
  %v2719 = vrot.slane %v2711, %v2718
  %v2721 = vunpack.c.l.s4 1983009808
  %v2722 = vunpack.c.0.s8 %v2721
  %v2723 = vlaneseq
  %v2724 = vshrl.u32 %v2723, 7
  %v2725 = vsub.s32 %v2722, %v2724
  %v2726 = vrot.slane %v2712, %v2725
  %v2727 = vcombine.low %v2414, %v2438
  %v2728 = vcombine.high %v2414, %v2438
  %v2730 = vunpack.c.l.s4 1983009808
  %v2731 = vunpack.c.0.s8 %v2730
  %v2732 = vlaneseq
  %v2733 = vshrl.u32 %v2732, 7
  %v2734 = vsub.s32 %v2731, %v2733
  %v2735 = vrot.slane %v2727, %v2734
  %v2737 = vunpack.c.l.s4 1983009808
  %v2738 = vunpack.c.0.s8 %v2737
  %v2739 = vlaneseq
  %v2740 = vshrl.u32 %v2739, 7
  %v2741 = vsub.s32 %v2738, %v2740
  %v2742 = vrot.slane %v2728, %v2741
  %v2743 = vcombine.low %v2446, %v2470
  %v2744 = vcombine.high %v2446, %v2470
  %v2746 = vunpack.c.l.s4 1983009808
  %v2747 = vunpack.c.0.s8 %v2746
  %v2748 = vlaneseq
  %v2749 = vshrl.u32 %v2748, 7
  %v2750 = vsub.s32 %v2747, %v2749
  %v2751 = vrot.slane %v2743, %v2750
  %v2753 = vunpack.c.l.s4 1983009808
  %v2754 = vunpack.c.0.s8 %v2753
  %v2755 = vlaneseq
  %v2756 = vshrl.u32 %v2755, 7
  %v2757 = vsub.s32 %v2754, %v2756
  %v2758 = vrot.slane %v2744, %v2757
  %v2759 = vcombine.low %v2458, %v2482
  %v2760 = vcombine.high %v2458, %v2482
  %v2762 = vunpack.c.l.s4 1983009808
  %v2763 = vunpack.c.0.s8 %v2762
  %v2764 = vlaneseq
  %v2765 = vshrl.u32 %v2764, 7
  %v2766 = vsub.s32 %v2763, %v2765
  %v2767 = vrot.slane %v2759, %v2766
  %v2769 = vunpack.c.l.s4 1983009808
  %v2770 = vunpack.c.0.s8 %v2769
  %v2771 = vlaneseq
  %v2772 = vshrl.u32 %v2771, 7
  %v2773 = vsub.s32 %v2770, %v2772
  %v2774 = vrot.slane %v2760, %v2773
  %v2775 = vcombine.low %v2719, %v2735
  %v2776 = vcombine.high %v2719, %v2735
  %v2778 = vunpack.c.l.s4 1934713408
  %v2779 = vunpack.c.0.s8 %v2778
  %v2780 = vlaneseq
  %v2781 = vshrl.u32 %v2780, 7
  %v2782 = vsub.s32 %v2779, %v2781
  %v2783 = vrot.slane %v2775, %v2782
  %v2785 = vunpack.c.l.s4 1934713408
  %v2786 = vunpack.c.0.s8 %v2785
  %v2787 = vlaneseq
  %v2788 = vshrl.u32 %v2787, 7
  %v2789 = vsub.s32 %v2786, %v2788
  %v2790 = vrot.slane %v2776, %v2789
  %v2791 = vcombine.low %v2726, %v2742
  %v2792 = vcombine.high %v2726, %v2742
  %v2794 = vunpack.c.l.s4 1934713408
  %v2795 = vunpack.c.0.s8 %v2794
  %v2796 = vlaneseq
  %v2797 = vshrl.u32 %v2796, 7
  %v2798 = vsub.s32 %v2795, %v2797
  %v2799 = vrot.slane %v2791, %v2798
  %v2801 = vunpack.c.l.s4 1934713408
  %v2802 = vunpack.c.0.s8 %v2801
  %v2803 = vlaneseq
  %v2804 = vshrl.u32 %v2803, 7
  %v2805 = vsub.s32 %v2802, %v2804
  %v2806 = vrot.slane %v2792, %v2805
  %v2807 = vcombine.low %v2751, %v2767
  %v2808 = vcombine.high %v2751, %v2767
  %v2810 = vunpack.c.l.s4 1934713408
  %v2811 = vunpack.c.0.s8 %v2810
  %v2812 = vlaneseq
  %v2813 = vshrl.u32 %v2812, 7
  %v2814 = vsub.s32 %v2811, %v2813
  %v2815 = vrot.slane %v2807, %v2814
  %v2817 = vunpack.c.l.s4 1934713408
  %v2818 = vunpack.c.0.s8 %v2817
  %v2819 = vlaneseq
  %v2820 = vshrl.u32 %v2819, 7
  %v2821 = vsub.s32 %v2818, %v2820
  %v2822 = vrot.slane %v2808, %v2821
  %v2823 = vcombine.low %v2758, %v2774
  %v2824 = vcombine.high %v2758, %v2774
  %v2826 = vunpack.c.l.s4 1934713408
  %v2827 = vunpack.c.0.s8 %v2826
  %v2828 = vlaneseq
  %v2829 = vshrl.u32 %v2828, 7
  %v2830 = vsub.s32 %v2827, %v2829
  %v2831 = vrot.slane %v2823, %v2830
  %v2833 = vunpack.c.l.s4 1934713408
  %v2834 = vunpack.c.0.s8 %v2833
  %v2835 = vlaneseq
  %v2836 = vshrl.u32 %v2835, 7
  %v2837 = vsub.s32 %v2834, %v2836
  %v2838 = vrot.slane %v2824, %v2837
  %v2839 = vcombine.low %v2783, %v2815
  %v2840 = vcombine.high %v2783, %v2815
  %v2841 = vcombine.low %v2790, %v2822
  %v2842 = vcombine.high %v2790, %v2822
  %v2843 = vcombine.low %v2799, %v2831
  %v2844 = vcombine.high %v2799, %v2831
  %v2845 = vcombine.low %v2806, %v2838
  %v2846 = vcombine.high %v2806, %v2838
  %v2847 = vcombine.low %v873, %v2508
  %v2848 = vcombine.high %v873, %v2508
  %v2850 = vunpack.c.l.s4 1983009808
  %v2851 = vunpack.c.0.s8 %v2850
  %v2852 = vlaneseq
  %v2853 = vshrl.u32 %v2852, 7
  %v2854 = vsub.s32 %v2851, %v2853
  %v2855 = vrot.slane %v2847, %v2854
  %v2857 = vunpack.c.l.s4 1983009808
  %v2858 = vunpack.c.0.s8 %v2857
  %v2859 = vlaneseq
  %v2860 = vshrl.u32 %v2859, 7
  %v2861 = vsub.s32 %v2858, %v2860
  %v2862 = vrot.slane %v2848, %v2861
  %v2863 = vcombine.low %v2496, %v2520
  %v2864 = vcombine.high %v2496, %v2520
  %v2866 = vunpack.c.l.s4 1983009808
  %v2867 = vunpack.c.0.s8 %v2866
  %v2868 = vlaneseq
  %v2869 = vshrl.u32 %v2868, 7
  %v2870 = vsub.s32 %v2867, %v2869
  %v2871 = vrot.slane %v2863, %v2870
  %v2873 = vunpack.c.l.s4 1983009808
  %v2874 = vunpack.c.0.s8 %v2873
  %v2875 = vlaneseq
  %v2876 = vshrl.u32 %v2875, 7
  %v2877 = vsub.s32 %v2874, %v2876
  %v2878 = vrot.slane %v2864, %v2877
  %v2879 = vcombine.low %v874, %v2552
  %v2880 = vcombine.high %v874, %v2552
  %v2882 = vunpack.c.l.s4 1983009808
  %v2883 = vunpack.c.0.s8 %v2882
  %v2884 = vlaneseq
  %v2885 = vshrl.u32 %v2884, 7
  %v2886 = vsub.s32 %v2883, %v2885
  %v2887 = vrot.slane %v2879, %v2886
  %v2889 = vunpack.c.l.s4 1983009808
  %v2890 = vunpack.c.0.s8 %v2889
  %v2891 = vlaneseq
  %v2892 = vshrl.u32 %v2891, 7
  %v2893 = vsub.s32 %v2890, %v2892
  %v2894 = vrot.slane %v2880, %v2893
  %v2895 = vcombine.low %v2540, %v2564
  %v2896 = vcombine.high %v2540, %v2564
  %v2898 = vunpack.c.l.s4 1983009808
  %v2899 = vunpack.c.0.s8 %v2898
  %v2900 = vlaneseq
  %v2901 = vshrl.u32 %v2900, 7
  %v2902 = vsub.s32 %v2899, %v2901
  %v2903 = vrot.slane %v2895, %v2902
  %v2905 = vunpack.c.l.s4 1983009808
  %v2906 = vunpack.c.0.s8 %v2905
  %v2907 = vlaneseq
  %v2908 = vshrl.u32 %v2907, 7
  %v2909 = vsub.s32 %v2906, %v2908
  %v2910 = vrot.slane %v2896, %v2909
  %v2911 = vcombine.low %v2855, %v2871
  %v2912 = vcombine.high %v2855, %v2871
  %v2914 = vunpack.c.l.s4 1934713408
  %v2915 = vunpack.c.0.s8 %v2914
  %v2916 = vlaneseq
  %v2917 = vshrl.u32 %v2916, 7
  %v2918 = vsub.s32 %v2915, %v2917
  %v2919 = vrot.slane %v2911, %v2918
  %v2921 = vunpack.c.l.s4 1934713408
  %v2922 = vunpack.c.0.s8 %v2921
  %v2923 = vlaneseq
  %v2924 = vshrl.u32 %v2923, 7
  %v2925 = vsub.s32 %v2922, %v2924
  %v2926 = vrot.slane %v2912, %v2925
  %v2927 = vcombine.low %v2862, %v2878
  %v2928 = vcombine.high %v2862, %v2878
  %v2930 = vunpack.c.l.s4 1934713408
  %v2931 = vunpack.c.0.s8 %v2930
  %v2932 = vlaneseq
  %v2933 = vshrl.u32 %v2932, 7
  %v2934 = vsub.s32 %v2931, %v2933
  %v2935 = vrot.slane %v2927, %v2934
  %v2937 = vunpack.c.l.s4 1934713408
  %v2938 = vunpack.c.0.s8 %v2937
  %v2939 = vlaneseq
  %v2940 = vshrl.u32 %v2939, 7
  %v2941 = vsub.s32 %v2938, %v2940
  %v2942 = vrot.slane %v2928, %v2941
  %v2943 = vcombine.low %v2887, %v2903
  %v2944 = vcombine.high %v2887, %v2903
  %v2946 = vunpack.c.l.s4 1934713408
  %v2947 = vunpack.c.0.s8 %v2946
  %v2948 = vlaneseq
  %v2949 = vshrl.u32 %v2948, 7
  %v2950 = vsub.s32 %v2947, %v2949
  %v2951 = vrot.slane %v2943, %v2950
  %v2953 = vunpack.c.l.s4 1934713408
  %v2954 = vunpack.c.0.s8 %v2953
  %v2955 = vlaneseq
  %v2956 = vshrl.u32 %v2955, 7
  %v2957 = vsub.s32 %v2954, %v2956
  %v2958 = vrot.slane %v2944, %v2957
  %v2959 = vcombine.low %v2894, %v2910
  %v2960 = vcombine.high %v2894, %v2910
  %v2962 = vunpack.c.l.s4 1934713408
  %v2963 = vunpack.c.0.s8 %v2962
  %v2964 = vlaneseq
  %v2965 = vshrl.u32 %v2964, 7
  %v2966 = vsub.s32 %v2963, %v2965
  %v2967 = vrot.slane %v2959, %v2966
  %v2969 = vunpack.c.l.s4 1934713408
  %v2970 = vunpack.c.0.s8 %v2969
  %v2971 = vlaneseq
  %v2972 = vshrl.u32 %v2971, 7
  %v2973 = vsub.s32 %v2970, %v2972
  %v2974 = vrot.slane %v2960, %v2973
  %v2975 = vcombine.low %v2919, %v2951
  %v2976 = vcombine.high %v2919, %v2951
  %v2977 = vcombine.low %v2926, %v2958
  %v2978 = vcombine.high %v2926, %v2958
  %v2979 = vcombine.low %v2935, %v2967
  %v2980 = vcombine.high %v2935, %v2967
  %v2981 = vcombine.low %v2942, %v2974
  %v2982 = vcombine.high %v2942, %v2974
  %v2983 = vcombine.low %v2490, %v2514
  %v2984 = vcombine.high %v2490, %v2514
  %v2986 = vunpack.c.l.s4 1983009808
  %v2987 = vunpack.c.0.s8 %v2986
  %v2988 = vlaneseq
  %v2989 = vshrl.u32 %v2988, 7
  %v2990 = vsub.s32 %v2987, %v2989
  %v2991 = vrot.slane %v2983, %v2990
  %v2993 = vunpack.c.l.s4 1983009808
  %v2994 = vunpack.c.0.s8 %v2993
  %v2995 = vlaneseq
  %v2996 = vshrl.u32 %v2995, 7
  %v2997 = vsub.s32 %v2994, %v2996
  %v2998 = vrot.slane %v2984, %v2997
  %v2999 = vcombine.low %v2502, %v2526
  %v3000 = vcombine.high %v2502, %v2526
  %v3002 = vunpack.c.l.s4 1983009808
  %v3003 = vunpack.c.0.s8 %v3002
  %v3004 = vlaneseq
  %v3005 = vshrl.u32 %v3004, 7
  %v3006 = vsub.s32 %v3003, %v3005
  %v3007 = vrot.slane %v2999, %v3006
  %v3009 = vunpack.c.l.s4 1983009808
  %v3010 = vunpack.c.0.s8 %v3009
  %v3011 = vlaneseq
  %v3012 = vshrl.u32 %v3011, 7
  %v3013 = vsub.s32 %v3010, %v3012
  %v3014 = vrot.slane %v3000, %v3013
  %v3015 = vcombine.low %v2534, %v2558
  %v3016 = vcombine.high %v2534, %v2558
  %v3018 = vunpack.c.l.s4 1983009808
  %v3019 = vunpack.c.0.s8 %v3018
  %v3020 = vlaneseq
  %v3021 = vshrl.u32 %v3020, 7
  %v3022 = vsub.s32 %v3019, %v3021
  %v3023 = vrot.slane %v3015, %v3022
  %v3025 = vunpack.c.l.s4 1983009808
  %v3026 = vunpack.c.0.s8 %v3025
  %v3027 = vlaneseq
  %v3028 = vshrl.u32 %v3027, 7
  %v3029 = vsub.s32 %v3026, %v3028
  %v3030 = vrot.slane %v3016, %v3029
  %v3031 = vcombine.low %v2546, %v2570
  %v3032 = vcombine.high %v2546, %v2570
  %v3034 = vunpack.c.l.s4 1983009808
  %v3035 = vunpack.c.0.s8 %v3034
  %v3036 = vlaneseq
  %v3037 = vshrl.u32 %v3036, 7
  %v3038 = vsub.s32 %v3035, %v3037
  %v3039 = vrot.slane %v3031, %v3038
  %v3041 = vunpack.c.l.s4 1983009808
  %v3042 = vunpack.c.0.s8 %v3041
  %v3043 = vlaneseq
  %v3044 = vshrl.u32 %v3043, 7
  %v3045 = vsub.s32 %v3042, %v3044
  %v3046 = vrot.slane %v3032, %v3045
  %v3047 = vcombine.low %v2991, %v3007
  %v3048 = vcombine.high %v2991, %v3007
  %v3050 = vunpack.c.l.s4 1934713408
  %v3051 = vunpack.c.0.s8 %v3050
  %v3052 = vlaneseq
  %v3053 = vshrl.u32 %v3052, 7
  %v3054 = vsub.s32 %v3051, %v3053
  %v3055 = vrot.slane %v3047, %v3054
  %v3057 = vunpack.c.l.s4 1934713408
  %v3058 = vunpack.c.0.s8 %v3057
  %v3059 = vlaneseq
  %v3060 = vshrl.u32 %v3059, 7
  %v3061 = vsub.s32 %v3058, %v3060
  %v3062 = vrot.slane %v3048, %v3061
  %v3063 = vcombine.low %v2998, %v3014
  %v3064 = vcombine.high %v2998, %v3014
  %v3066 = vunpack.c.l.s4 1934713408
  %v3067 = vunpack.c.0.s8 %v3066
  %v3068 = vlaneseq
  %v3069 = vshrl.u32 %v3068, 7
  %v3070 = vsub.s32 %v3067, %v3069
  %v3071 = vrot.slane %v3063, %v3070
  %v3073 = vunpack.c.l.s4 1934713408
  %v3074 = vunpack.c.0.s8 %v3073
  %v3075 = vlaneseq
  %v3076 = vshrl.u32 %v3075, 7
  %v3077 = vsub.s32 %v3074, %v3076
  %v3078 = vrot.slane %v3064, %v3077
  %v3079 = vcombine.low %v3023, %v3039
  %v3080 = vcombine.high %v3023, %v3039
  %v3082 = vunpack.c.l.s4 1934713408
  %v3083 = vunpack.c.0.s8 %v3082
  %v3084 = vlaneseq
  %v3085 = vshrl.u32 %v3084, 7
  %v3086 = vsub.s32 %v3083, %v3085
  %v3087 = vrot.slane %v3079, %v3086
  %v3089 = vunpack.c.l.s4 1934713408
  %v3090 = vunpack.c.0.s8 %v3089
  %v3091 = vlaneseq
  %v3092 = vshrl.u32 %v3091, 7
  %v3093 = vsub.s32 %v3090, %v3092
  %v3094 = vrot.slane %v3080, %v3093
  %v3095 = vcombine.low %v3030, %v3046
  %v3096 = vcombine.high %v3030, %v3046
  %v3098 = vunpack.c.l.s4 1934713408
  %v3099 = vunpack.c.0.s8 %v3098
  %v3100 = vlaneseq
  %v3101 = vshrl.u32 %v3100, 7
  %v3102 = vsub.s32 %v3099, %v3101
  %v3103 = vrot.slane %v3095, %v3102
  %v3105 = vunpack.c.l.s4 1934713408
  %v3106 = vunpack.c.0.s8 %v3105
  %v3107 = vlaneseq
  %v3108 = vshrl.u32 %v3107, 7
  %v3109 = vsub.s32 %v3106, %v3108
  %v3110 = vrot.slane %v3096, %v3109
  %v3111 = vcombine.low %v3055, %v3087
  %v3112 = vcombine.high %v3055, %v3087
  %v3113 = vcombine.low %v3062, %v3094
  %v3114 = vcombine.high %v3062, %v3094
  %v3115 = vcombine.low %v3071, %v3103
  %v3116 = vcombine.high %v3071, %v3103
  %v3117 = vcombine.low %v3078, %v3110
  %v3118 = vcombine.high %v3078, %v3110
  %v3119 = vcombine.low %v875, %v2422
  %v3120 = vcombine.high %v875, %v2422
  %v3122 = vunpack.c.l.s4 1983009808
  %v3123 = vunpack.c.0.s8 %v3122
  %v3124 = vlaneseq
  %v3125 = vshrl.u32 %v3124, 7
  %v3126 = vsub.s32 %v3123, %v3125
  %v3127 = vrot.slane %v3119, %v3126
  %v3129 = vunpack.c.l.s4 1983009808
  %v3130 = vunpack.c.0.s8 %v3129
  %v3131 = vlaneseq
  %v3132 = vshrl.u32 %v3131, 7
  %v3133 = vsub.s32 %v3130, %v3132
  %v3134 = vrot.slane %v3120, %v3133
  %v3135 = vcombine.low %v2410, %v2434
  %v3136 = vcombine.high %v2410, %v2434
  %v3138 = vunpack.c.l.s4 1983009808
  %v3139 = vunpack.c.0.s8 %v3138
  %v3140 = vlaneseq
  %v3141 = vshrl.u32 %v3140, 7
  %v3142 = vsub.s32 %v3139, %v3141
  %v3143 = vrot.slane %v3135, %v3142
  %v3145 = vunpack.c.l.s4 1983009808
  %v3146 = vunpack.c.0.s8 %v3145
  %v3147 = vlaneseq
  %v3148 = vshrl.u32 %v3147, 7
  %v3149 = vsub.s32 %v3146, %v3148
  %v3150 = vrot.slane %v3136, %v3149
  %v3151 = vcombine.low %v876, %v2466
  %v3152 = vcombine.high %v876, %v2466
  %v3154 = vunpack.c.l.s4 1983009808
  %v3155 = vunpack.c.0.s8 %v3154
  %v3156 = vlaneseq
  %v3157 = vshrl.u32 %v3156, 7
  %v3158 = vsub.s32 %v3155, %v3157
  %v3159 = vrot.slane %v3151, %v3158
  %v3161 = vunpack.c.l.s4 1983009808
  %v3162 = vunpack.c.0.s8 %v3161
  %v3163 = vlaneseq
  %v3164 = vshrl.u32 %v3163, 7
  %v3165 = vsub.s32 %v3162, %v3164
  %v3166 = vrot.slane %v3152, %v3165
  %v3167 = vcombine.low %v2454, %v2478
  %v3168 = vcombine.high %v2454, %v2478
  %v3170 = vunpack.c.l.s4 1983009808
  %v3171 = vunpack.c.0.s8 %v3170
  %v3172 = vlaneseq
  %v3173 = vshrl.u32 %v3172, 7
  %v3174 = vsub.s32 %v3171, %v3173
  %v3175 = vrot.slane %v3167, %v3174
  %v3177 = vunpack.c.l.s4 1983009808
  %v3178 = vunpack.c.0.s8 %v3177
  %v3179 = vlaneseq
  %v3180 = vshrl.u32 %v3179, 7
  %v3181 = vsub.s32 %v3178, %v3180
  %v3182 = vrot.slane %v3168, %v3181
  %v3183 = vcombine.low %v3127, %v3143
  %v3184 = vcombine.high %v3127, %v3143
  %v3186 = vunpack.c.l.s4 1934713408
  %v3187 = vunpack.c.0.s8 %v3186
  %v3188 = vlaneseq
  %v3189 = vshrl.u32 %v3188, 7
  %v3190 = vsub.s32 %v3187, %v3189
  %v3191 = vrot.slane %v3183, %v3190
  %v3193 = vunpack.c.l.s4 1934713408
  %v3194 = vunpack.c.0.s8 %v3193
  %v3195 = vlaneseq
  %v3196 = vshrl.u32 %v3195, 7
  %v3197 = vsub.s32 %v3194, %v3196
  %v3198 = vrot.slane %v3184, %v3197
  %v3199 = vcombine.low %v3134, %v3150
  %v3200 = vcombine.high %v3134, %v3150
  %v3202 = vunpack.c.l.s4 1934713408
  %v3203 = vunpack.c.0.s8 %v3202
  %v3204 = vlaneseq
  %v3205 = vshrl.u32 %v3204, 7
  %v3206 = vsub.s32 %v3203, %v3205
  %v3207 = vrot.slane %v3199, %v3206
  %v3209 = vunpack.c.l.s4 1934713408
  %v3210 = vunpack.c.0.s8 %v3209
  %v3211 = vlaneseq
  %v3212 = vshrl.u32 %v3211, 7
  %v3213 = vsub.s32 %v3210, %v3212
  %v3214 = vrot.slane %v3200, %v3213
  %v3215 = vcombine.low %v3159, %v3175
  %v3216 = vcombine.high %v3159, %v3175
  %v3218 = vunpack.c.l.s4 1934713408
  %v3219 = vunpack.c.0.s8 %v3218
  %v3220 = vlaneseq
  %v3221 = vshrl.u32 %v3220, 7
  %v3222 = vsub.s32 %v3219, %v3221
  %v3223 = vrot.slane %v3215, %v3222
  %v3225 = vunpack.c.l.s4 1934713408
  %v3226 = vunpack.c.0.s8 %v3225
  %v3227 = vlaneseq
  %v3228 = vshrl.u32 %v3227, 7
  %v3229 = vsub.s32 %v3226, %v3228
  %v3230 = vrot.slane %v3216, %v3229
  %v3231 = vcombine.low %v3166, %v3182
  %v3232 = vcombine.high %v3166, %v3182
  %v3234 = vunpack.c.l.s4 1934713408
  %v3235 = vunpack.c.0.s8 %v3234
  %v3236 = vlaneseq
  %v3237 = vshrl.u32 %v3236, 7
  %v3238 = vsub.s32 %v3235, %v3237
  %v3239 = vrot.slane %v3231, %v3238
  %v3241 = vunpack.c.l.s4 1934713408
  %v3242 = vunpack.c.0.s8 %v3241
  %v3243 = vlaneseq
  %v3244 = vshrl.u32 %v3243, 7
  %v3245 = vsub.s32 %v3242, %v3244
  %v3246 = vrot.slane %v3232, %v3245
  %v3247 = vcombine.low %v3191, %v3223
  %v3248 = vcombine.high %v3191, %v3223
  %v3249 = vcombine.low %v3198, %v3230
  %v3250 = vcombine.high %v3198, %v3230
  %v3251 = vcombine.low %v3207, %v3239
  %v3252 = vcombine.high %v3207, %v3239
  %v3253 = vcombine.low %v3214, %v3246
  %v3254 = vcombine.high %v3214, %v3246
  %v3255 = vcombine.low %v2404, %v2428
  %v3256 = vcombine.high %v2404, %v2428
  %v3258 = vunpack.c.l.s4 1983009808
  %v3259 = vunpack.c.0.s8 %v3258
  %v3260 = vlaneseq
  %v3261 = vshrl.u32 %v3260, 7
  %v3262 = vsub.s32 %v3259, %v3261
  %v3263 = vrot.slane %v3255, %v3262
  %v3265 = vunpack.c.l.s4 1983009808
  %v3266 = vunpack.c.0.s8 %v3265
  %v3267 = vlaneseq
  %v3268 = vshrl.u32 %v3267, 7
  %v3269 = vsub.s32 %v3266, %v3268
  %v3270 = vrot.slane %v3256, %v3269
  %v3271 = vcombine.low %v2416, %v2440
  %v3272 = vcombine.high %v2416, %v2440
  %v3274 = vunpack.c.l.s4 1983009808
  %v3275 = vunpack.c.0.s8 %v3274
  %v3276 = vlaneseq
  %v3277 = vshrl.u32 %v3276, 7
  %v3278 = vsub.s32 %v3275, %v3277
  %v3279 = vrot.slane %v3271, %v3278
  %v3281 = vunpack.c.l.s4 1983009808
  %v3282 = vunpack.c.0.s8 %v3281
  %v3283 = vlaneseq
  %v3284 = vshrl.u32 %v3283, 7
  %v3285 = vsub.s32 %v3282, %v3284
  %v3286 = vrot.slane %v3272, %v3285
  %v3287 = vcombine.low %v2448, %v2472
  %v3288 = vcombine.high %v2448, %v2472
  %v3290 = vunpack.c.l.s4 1983009808
  %v3291 = vunpack.c.0.s8 %v3290
  %v3292 = vlaneseq
  %v3293 = vshrl.u32 %v3292, 7
  %v3294 = vsub.s32 %v3291, %v3293
  %v3295 = vrot.slane %v3287, %v3294
  %v3297 = vunpack.c.l.s4 1983009808
  %v3298 = vunpack.c.0.s8 %v3297
  %v3299 = vlaneseq
  %v3300 = vshrl.u32 %v3299, 7
  %v3301 = vsub.s32 %v3298, %v3300
  %v3302 = vrot.slane %v3288, %v3301
  %v3303 = vcombine.low %v2460, %v2484
  %v3304 = vcombine.high %v2460, %v2484
  %v3306 = vunpack.c.l.s4 1983009808
  %v3307 = vunpack.c.0.s8 %v3306
  %v3308 = vlaneseq
  %v3309 = vshrl.u32 %v3308, 7
  %v3310 = vsub.s32 %v3307, %v3309
  %v3311 = vrot.slane %v3303, %v3310
  %v3313 = vunpack.c.l.s4 1983009808
  %v3314 = vunpack.c.0.s8 %v3313
  %v3315 = vlaneseq
  %v3316 = vshrl.u32 %v3315, 7
  %v3317 = vsub.s32 %v3314, %v3316
  %v3318 = vrot.slane %v3304, %v3317
  %v3319 = vcombine.low %v3263, %v3279
  %v3320 = vcombine.high %v3263, %v3279
  %v3322 = vunpack.c.l.s4 1934713408
  %v3323 = vunpack.c.0.s8 %v3322
  %v3324 = vlaneseq
  %v3325 = vshrl.u32 %v3324, 7
  %v3326 = vsub.s32 %v3323, %v3325
  %v3327 = vrot.slane %v3319, %v3326
  %v3329 = vunpack.c.l.s4 1934713408
  %v3330 = vunpack.c.0.s8 %v3329
  %v3331 = vlaneseq
  %v3332 = vshrl.u32 %v3331, 7
  %v3333 = vsub.s32 %v3330, %v3332
  %v3334 = vrot.slane %v3320, %v3333
  %v3335 = vcombine.low %v3270, %v3286
  %v3336 = vcombine.high %v3270, %v3286
  %v3338 = vunpack.c.l.s4 1934713408
  %v3339 = vunpack.c.0.s8 %v3338
  %v3340 = vlaneseq
  %v3341 = vshrl.u32 %v3340, 7
  %v3342 = vsub.s32 %v3339, %v3341
  %v3343 = vrot.slane %v3335, %v3342
  %v3345 = vunpack.c.l.s4 1934713408
  %v3346 = vunpack.c.0.s8 %v3345
  %v3347 = vlaneseq
  %v3348 = vshrl.u32 %v3347, 7
  %v3349 = vsub.s32 %v3346, %v3348
  %v3350 = vrot.slane %v3336, %v3349
  %v3351 = vcombine.low %v3295, %v3311
  %v3352 = vcombine.high %v3295, %v3311
  %v3354 = vunpack.c.l.s4 1934713408
  %v3355 = vunpack.c.0.s8 %v3354
  %v3356 = vlaneseq
  %v3357 = vshrl.u32 %v3356, 7
  %v3358 = vsub.s32 %v3355, %v3357
  %v3359 = vrot.slane %v3351, %v3358
  %v3361 = vunpack.c.l.s4 1934713408
  %v3362 = vunpack.c.0.s8 %v3361
  %v3363 = vlaneseq
  %v3364 = vshrl.u32 %v3363, 7
  %v3365 = vsub.s32 %v3362, %v3364
  %v3366 = vrot.slane %v3352, %v3365
  %v3367 = vcombine.low %v3302, %v3318
  %v3368 = vcombine.high %v3302, %v3318
  %v3370 = vunpack.c.l.s4 1934713408
  %v3371 = vunpack.c.0.s8 %v3370
  %v3372 = vlaneseq
  %v3373 = vshrl.u32 %v3372, 7
  %v3374 = vsub.s32 %v3371, %v3373
  %v3375 = vrot.slane %v3367, %v3374
  %v3377 = vunpack.c.l.s4 1934713408
  %v3378 = vunpack.c.0.s8 %v3377
  %v3379 = vlaneseq
  %v3380 = vshrl.u32 %v3379, 7
  %v3381 = vsub.s32 %v3378, %v3380
  %v3382 = vrot.slane %v3368, %v3381
  %v3383 = vcombine.low %v3327, %v3359
  %v3384 = vcombine.high %v3327, %v3359
  %v3385 = vcombine.low %v3334, %v3366
  %v3386 = vcombine.high %v3334, %v3366
  %v3387 = vcombine.low %v3343, %v3375
  %v3388 = vcombine.high %v3343, %v3375
  %v3389 = vcombine.low %v3350, %v3382
  %v3390 = vcombine.high %v3350, %v3382
  %v3391 = vcombine.low %v877, %v2510
  %v3392 = vcombine.high %v877, %v2510
  %v3394 = vunpack.c.l.s4 1983009808
  %v3395 = vunpack.c.0.s8 %v3394
  %v3396 = vlaneseq
  %v3397 = vshrl.u32 %v3396, 7
  %v3398 = vsub.s32 %v3395, %v3397
  %v3399 = vrot.slane %v3391, %v3398
  %v3401 = vunpack.c.l.s4 1983009808
  %v3402 = vunpack.c.0.s8 %v3401
  %v3403 = vlaneseq
  %v3404 = vshrl.u32 %v3403, 7
  %v3405 = vsub.s32 %v3402, %v3404
  %v3406 = vrot.slane %v3392, %v3405
  %v3407 = vcombine.low %v2498, %v2522
  %v3408 = vcombine.high %v2498, %v2522
  %v3410 = vunpack.c.l.s4 1983009808
  %v3411 = vunpack.c.0.s8 %v3410
  %v3412 = vlaneseq
  %v3413 = vshrl.u32 %v3412, 7
  %v3414 = vsub.s32 %v3411, %v3413
  %v3415 = vrot.slane %v3407, %v3414
  %v3417 = vunpack.c.l.s4 1983009808
  %v3418 = vunpack.c.0.s8 %v3417
  %v3419 = vlaneseq
  %v3420 = vshrl.u32 %v3419, 7
  %v3421 = vsub.s32 %v3418, %v3420
  %v3422 = vrot.slane %v3408, %v3421
  %v3423 = vcombine.low %v878, %v2554
  %v3424 = vcombine.high %v878, %v2554
  %v3426 = vunpack.c.l.s4 1983009808
  %v3427 = vunpack.c.0.s8 %v3426
  %v3428 = vlaneseq
  %v3429 = vshrl.u32 %v3428, 7
  %v3430 = vsub.s32 %v3427, %v3429
  %v3431 = vrot.slane %v3423, %v3430
  %v3433 = vunpack.c.l.s4 1983009808
  %v3434 = vunpack.c.0.s8 %v3433
  %v3435 = vlaneseq
  %v3436 = vshrl.u32 %v3435, 7
  %v3437 = vsub.s32 %v3434, %v3436
  %v3438 = vrot.slane %v3424, %v3437
  %v3439 = vcombine.low %v2542, %v2566
  %v3440 = vcombine.high %v2542, %v2566
  %v3442 = vunpack.c.l.s4 1983009808
  %v3443 = vunpack.c.0.s8 %v3442
  %v3444 = vlaneseq
  %v3445 = vshrl.u32 %v3444, 7
  %v3446 = vsub.s32 %v3443, %v3445
  %v3447 = vrot.slane %v3439, %v3446
  %v3449 = vunpack.c.l.s4 1983009808
  %v3450 = vunpack.c.0.s8 %v3449
  %v3451 = vlaneseq
  %v3452 = vshrl.u32 %v3451, 7
  %v3453 = vsub.s32 %v3450, %v3452
  %v3454 = vrot.slane %v3440, %v3453
  %v3455 = vcombine.low %v3399, %v3415
  %v3456 = vcombine.high %v3399, %v3415
  %v3458 = vunpack.c.l.s4 1934713408
  %v3459 = vunpack.c.0.s8 %v3458
  %v3460 = vlaneseq
  %v3461 = vshrl.u32 %v3460, 7
  %v3462 = vsub.s32 %v3459, %v3461
  %v3463 = vrot.slane %v3455, %v3462
  %v3465 = vunpack.c.l.s4 1934713408
  %v3466 = vunpack.c.0.s8 %v3465
  %v3467 = vlaneseq
  %v3468 = vshrl.u32 %v3467, 7
  %v3469 = vsub.s32 %v3466, %v3468
  %v3470 = vrot.slane %v3456, %v3469
  %v3471 = vcombine.low %v3406, %v3422
  %v3472 = vcombine.high %v3406, %v3422
  %v3474 = vunpack.c.l.s4 1934713408
  %v3475 = vunpack.c.0.s8 %v3474
  %v3476 = vlaneseq
  %v3477 = vshrl.u32 %v3476, 7
  %v3478 = vsub.s32 %v3475, %v3477
  %v3479 = vrot.slane %v3471, %v3478
  %v3481 = vunpack.c.l.s4 1934713408
  %v3482 = vunpack.c.0.s8 %v3481
  %v3483 = vlaneseq
  %v3484 = vshrl.u32 %v3483, 7
  %v3485 = vsub.s32 %v3482, %v3484
  %v3486 = vrot.slane %v3472, %v3485
  %v3487 = vcombine.low %v3431, %v3447
  %v3488 = vcombine.high %v3431, %v3447
  %v3490 = vunpack.c.l.s4 1934713408
  %v3491 = vunpack.c.0.s8 %v3490
  %v3492 = vlaneseq
  %v3493 = vshrl.u32 %v3492, 7
  %v3494 = vsub.s32 %v3491, %v3493
  %v3495 = vrot.slane %v3487, %v3494
  %v3497 = vunpack.c.l.s4 1934713408
  %v3498 = vunpack.c.0.s8 %v3497
  %v3499 = vlaneseq
  %v3500 = vshrl.u32 %v3499, 7
  %v3501 = vsub.s32 %v3498, %v3500
  %v3502 = vrot.slane %v3488, %v3501
  %v3503 = vcombine.low %v3438, %v3454
  %v3504 = vcombine.high %v3438, %v3454
  %v3506 = vunpack.c.l.s4 1934713408
  %v3507 = vunpack.c.0.s8 %v3506
  %v3508 = vlaneseq
  %v3509 = vshrl.u32 %v3508, 7
  %v3510 = vsub.s32 %v3507, %v3509
  %v3511 = vrot.slane %v3503, %v3510
  %v3513 = vunpack.c.l.s4 1934713408
  %v3514 = vunpack.c.0.s8 %v3513
  %v3515 = vlaneseq
  %v3516 = vshrl.u32 %v3515, 7
  %v3517 = vsub.s32 %v3514, %v3516
  %v3518 = vrot.slane %v3504, %v3517
  %v3519 = vcombine.low %v3463, %v3495
  %v3520 = vcombine.high %v3463, %v3495
  %v3521 = vcombine.low %v3470, %v3502
  %v3522 = vcombine.high %v3470, %v3502
  %v3523 = vcombine.low %v3479, %v3511
  %v3524 = vcombine.high %v3479, %v3511
  %v3525 = vcombine.low %v3486, %v3518
  %v3526 = vcombine.high %v3486, %v3518
  %v3527 = vcombine.low %v2492, %v2516
  %v3528 = vcombine.high %v2492, %v2516
  %v3530 = vunpack.c.l.s4 1983009808
  %v3531 = vunpack.c.0.s8 %v3530
  %v3532 = vlaneseq
  %v3533 = vshrl.u32 %v3532, 7
  %v3534 = vsub.s32 %v3531, %v3533
  %v3535 = vrot.slane %v3527, %v3534
  %v3537 = vunpack.c.l.s4 1983009808
  %v3538 = vunpack.c.0.s8 %v3537
  %v3539 = vlaneseq
  %v3540 = vshrl.u32 %v3539, 7
  %v3541 = vsub.s32 %v3538, %v3540
  %v3542 = vrot.slane %v3528, %v3541
  %v3543 = vcombine.low %v2504, %v2528
  %v3544 = vcombine.high %v2504, %v2528
  %v3546 = vunpack.c.l.s4 1983009808
  %v3547 = vunpack.c.0.s8 %v3546
  %v3548 = vlaneseq
  %v3549 = vshrl.u32 %v3548, 7
  %v3550 = vsub.s32 %v3547, %v3549
  %v3551 = vrot.slane %v3543, %v3550
  %v3553 = vunpack.c.l.s4 1983009808
  %v3554 = vunpack.c.0.s8 %v3553
  %v3555 = vlaneseq
  %v3556 = vshrl.u32 %v3555, 7
  %v3557 = vsub.s32 %v3554, %v3556
  %v3558 = vrot.slane %v3544, %v3557
  %v3559 = vcombine.low %v2536, %v2560
  %v3560 = vcombine.high %v2536, %v2560
  %v3562 = vunpack.c.l.s4 1983009808
  %v3563 = vunpack.c.0.s8 %v3562
  %v3564 = vlaneseq
  %v3565 = vshrl.u32 %v3564, 7
  %v3566 = vsub.s32 %v3563, %v3565
  %v3567 = vrot.slane %v3559, %v3566
  %v3569 = vunpack.c.l.s4 1983009808
  %v3570 = vunpack.c.0.s8 %v3569
  %v3571 = vlaneseq
  %v3572 = vshrl.u32 %v3571, 7
  %v3573 = vsub.s32 %v3570, %v3572
  %v3574 = vrot.slane %v3560, %v3573
  %v3575 = vcombine.low %v2548, %v2572
  %v3576 = vcombine.high %v2548, %v2572
  %v3578 = vunpack.c.l.s4 1983009808
  %v3579 = vunpack.c.0.s8 %v3578
  %v3580 = vlaneseq
  %v3581 = vshrl.u32 %v3580, 7
  %v3582 = vsub.s32 %v3579, %v3581
  %v3583 = vrot.slane %v3575, %v3582
  %v3585 = vunpack.c.l.s4 1983009808
  %v3586 = vunpack.c.0.s8 %v3585
  %v3587 = vlaneseq
  %v3588 = vshrl.u32 %v3587, 7
  %v3589 = vsub.s32 %v3586, %v3588
  %v3590 = vrot.slane %v3576, %v3589
  %v3591 = vcombine.low %v3535, %v3551
  %v3592 = vcombine.high %v3535, %v3551
  %v3594 = vunpack.c.l.s4 1934713408
  %v3595 = vunpack.c.0.s8 %v3594
  %v3596 = vlaneseq
  %v3597 = vshrl.u32 %v3596, 7
  %v3598 = vsub.s32 %v3595, %v3597
  %v3599 = vrot.slane %v3591, %v3598
  %v3601 = vunpack.c.l.s4 1934713408
  %v3602 = vunpack.c.0.s8 %v3601
  %v3603 = vlaneseq
  %v3604 = vshrl.u32 %v3603, 7
  %v3605 = vsub.s32 %v3602, %v3604
  %v3606 = vrot.slane %v3592, %v3605
  %v3607 = vcombine.low %v3542, %v3558
  %v3608 = vcombine.high %v3542, %v3558
  %v3610 = vunpack.c.l.s4 1934713408
  %v3611 = vunpack.c.0.s8 %v3610
  %v3612 = vlaneseq
  %v3613 = vshrl.u32 %v3612, 7
  %v3614 = vsub.s32 %v3611, %v3613
  %v3615 = vrot.slane %v3607, %v3614
  %v3617 = vunpack.c.l.s4 1934713408
  %v3618 = vunpack.c.0.s8 %v3617
  %v3619 = vlaneseq
  %v3620 = vshrl.u32 %v3619, 7
  %v3621 = vsub.s32 %v3618, %v3620
  %v3622 = vrot.slane %v3608, %v3621
  %v3623 = vcombine.low %v3567, %v3583
  %v3624 = vcombine.high %v3567, %v3583
  %v3626 = vunpack.c.l.s4 1934713408
  %v3627 = vunpack.c.0.s8 %v3626
  %v3628 = vlaneseq
  %v3629 = vshrl.u32 %v3628, 7
  %v3630 = vsub.s32 %v3627, %v3629
  %v3631 = vrot.slane %v3623, %v3630
  %v3633 = vunpack.c.l.s4 1934713408
  %v3634 = vunpack.c.0.s8 %v3633
  %v3635 = vlaneseq
  %v3636 = vshrl.u32 %v3635, 7
  %v3637 = vsub.s32 %v3634, %v3636
  %v3638 = vrot.slane %v3624, %v3637
  %v3639 = vcombine.low %v3574, %v3590
  %v3640 = vcombine.high %v3574, %v3590
  %v3642 = vunpack.c.l.s4 1934713408
  %v3643 = vunpack.c.0.s8 %v3642
  %v3644 = vlaneseq
  %v3645 = vshrl.u32 %v3644, 7
  %v3646 = vsub.s32 %v3643, %v3645
  %v3647 = vrot.slane %v3639, %v3646
  %v3649 = vunpack.c.l.s4 1934713408
  %v3650 = vunpack.c.0.s8 %v3649
  %v3651 = vlaneseq
  %v3652 = vshrl.u32 %v3651, 7
  %v3653 = vsub.s32 %v3650, %v3652
  %v3654 = vrot.slane %v3640, %v3653
  %v3655 = vcombine.low %v3599, %v3631
  %v3656 = vcombine.high %v3599, %v3631
  %v3657 = vcombine.low %v3606, %v3638
  %v3658 = vcombine.high %v3606, %v3638
  %v3659 = vcombine.low %v3615, %v3647
  %v3660 = vcombine.high %v3615, %v3647
  %v3661 = vcombine.low %v3622, %v3654
  %v3662 = vcombine.high %v3622, %v3654
  %v3665 = vpack.i.b16 %v2839, %v2703
  %v3667 = vshrl.u32 %v2703, 16
  %v3668 = vshrl.u32 %v2839, 16
  %v3669 = vpack.i.b16 %v3668, %v3667
  %v3673 = vpack.i.b16 %v2840, %v2704
  %v3675 = vshrl.u32 %v2704, 16
  %v3676 = vshrl.u32 %v2840, 16
  %v3677 = vpack.i.b16 %v3676, %v3675
  %v3681 = vpack.i.b16 %v2841, %v2705
  %v3683 = vshrl.u32 %v2705, 16
  %v3684 = vshrl.u32 %v2841, 16
  %v3685 = vpack.i.b16 %v3684, %v3683
  %v3689 = vpack.i.b16 %v2842, %v2706
  %v3691 = vshrl.u32 %v2706, 16
  %v3692 = vshrl.u32 %v2842, 16
  %v3693 = vpack.i.b16 %v3692, %v3691
  %v3697 = vpack.i.b16 %v2843, %v2707
  %v3699 = vshrl.u32 %v2707, 16
  %v3700 = vshrl.u32 %v2843, 16
  %v3701 = vpack.i.b16 %v3700, %v3699
  %v3705 = vpack.i.b16 %v2844, %v2708
  %v3707 = vshrl.u32 %v2708, 16
  %v3708 = vshrl.u32 %v2844, 16
  %v3709 = vpack.i.b16 %v3708, %v3707
  %v3713 = vpack.i.b16 %v2845, %v2709
  %v3715 = vshrl.u32 %v2709, 16
  %v3716 = vshrl.u32 %v2845, 16
  %v3717 = vpack.i.b16 %v3716, %v3715
  %v3721 = vpack.i.b16 %v2846, %v2710
  %v3723 = vshrl.u32 %v2710, 16
  %v3724 = vshrl.u32 %v2846, 16
  %v3725 = vpack.i.b16 %v3724, %v3723
  %v3729 = vpack.i.b16 %v3383, %v3247
  %v3731 = vshrl.u32 %v3247, 16
  %v3732 = vshrl.u32 %v3383, 16
  %v3733 = vpack.i.b16 %v3732, %v3731
  %v3737 = vpack.i.b16 %v3384, %v3248
  %v3739 = vshrl.u32 %v3248, 16
  %v3740 = vshrl.u32 %v3384, 16
  %v3741 = vpack.i.b16 %v3740, %v3739
  %v3745 = vpack.i.b16 %v3385, %v3249
  %v3747 = vshrl.u32 %v3249, 16
  %v3748 = vshrl.u32 %v3385, 16
  %v3749 = vpack.i.b16 %v3748, %v3747
  %v3753 = vpack.i.b16 %v3386, %v3250
  %v3755 = vshrl.u32 %v3250, 16
  %v3756 = vshrl.u32 %v3386, 16
  %v3757 = vpack.i.b16 %v3756, %v3755
  %v3761 = vpack.i.b16 %v3387, %v3251
  %v3763 = vshrl.u32 %v3251, 16
  %v3764 = vshrl.u32 %v3387, 16
  %v3765 = vpack.i.b16 %v3764, %v3763
  %v3769 = vpack.i.b16 %v3388, %v3252
  %v3771 = vshrl.u32 %v3252, 16
  %v3772 = vshrl.u32 %v3388, 16
  %v3773 = vpack.i.b16 %v3772, %v3771
  %v3777 = vpack.i.b16 %v3389, %v3253
  %v3779 = vshrl.u32 %v3253, 16
  %v3780 = vshrl.u32 %v3389, 16
  %v3781 = vpack.i.b16 %v3780, %v3779
  %v3785 = vpack.i.b16 %v3390, %v3254
  %v3787 = vshrl.u32 %v3254, 16
  %v3788 = vshrl.u32 %v3390, 16
  %v3789 = vpack.i.b16 %v3788, %v3787
  %v3793 = vpack.i.b16 %v3111, %v2975
  %v3795 = vshrl.u32 %v2975, 16
  %v3796 = vshrl.u32 %v3111, 16
  %v3797 = vpack.i.b16 %v3796, %v3795
  %v3801 = vpack.i.b16 %v3112, %v2976
  %v3803 = vshrl.u32 %v2976, 16
  %v3804 = vshrl.u32 %v3112, 16
  %v3805 = vpack.i.b16 %v3804, %v3803
  %v3809 = vpack.i.b16 %v3113, %v2977
  %v3811 = vshrl.u32 %v2977, 16
  %v3812 = vshrl.u32 %v3113, 16
  %v3813 = vpack.i.b16 %v3812, %v3811
  %v3817 = vpack.i.b16 %v3114, %v2978
  %v3819 = vshrl.u32 %v2978, 16
  %v3820 = vshrl.u32 %v3114, 16
  %v3821 = vpack.i.b16 %v3820, %v3819
  %v3825 = vpack.i.b16 %v3115, %v2979
  %v3827 = vshrl.u32 %v2979, 16
  %v3828 = vshrl.u32 %v3115, 16
  %v3829 = vpack.i.b16 %v3828, %v3827
  %v3833 = vpack.i.b16 %v3116, %v2980
  %v3835 = vshrl.u32 %v2980, 16
  %v3836 = vshrl.u32 %v3116, 16
  %v3837 = vpack.i.b16 %v3836, %v3835
  %v3841 = vpack.i.b16 %v3117, %v2981
  %v3843 = vshrl.u32 %v2981, 16
  %v3844 = vshrl.u32 %v3117, 16
  %v3845 = vpack.i.b16 %v3844, %v3843
  %v3849 = vpack.i.b16 %v3118, %v2982
  %v3851 = vshrl.u32 %v2982, 16
  %v3852 = vshrl.u32 %v3118, 16
  %v3853 = vpack.i.b16 %v3852, %v3851
  %v3857 = vpack.i.b16 %v3655, %v3519
  %v3859 = vshrl.u32 %v3519, 16
  %v3860 = vshrl.u32 %v3655, 16
  %v3861 = vpack.i.b16 %v3860, %v3859
  %v3865 = vpack.i.b16 %v3656, %v3520
  %v3867 = vshrl.u32 %v3520, 16
  %v3868 = vshrl.u32 %v3656, 16
  %v3869 = vpack.i.b16 %v3868, %v3867
  %v3873 = vpack.i.b16 %v3657, %v3521
  %v3875 = vshrl.u32 %v3521, 16
  %v3876 = vshrl.u32 %v3657, 16
  %v3877 = vpack.i.b16 %v3876, %v3875
  %v3881 = vpack.i.b16 %v3658, %v3522
  %v3883 = vshrl.u32 %v3522, 16
  %v3884 = vshrl.u32 %v3658, 16
  %v3885 = vpack.i.b16 %v3884, %v3883
  %v3889 = vpack.i.b16 %v3659, %v3523
  %v3891 = vshrl.u32 %v3523, 16
  %v3892 = vshrl.u32 %v3659, 16
  %v3893 = vpack.i.b16 %v3892, %v3891
  %v3897 = vpack.i.b16 %v3660, %v3524
  %v3899 = vshrl.u32 %v3524, 16
  %v3900 = vshrl.u32 %v3660, 16
  %v3901 = vpack.i.b16 %v3900, %v3899
  %v3905 = vpack.i.b16 %v3661, %v3525
  %v3907 = vshrl.u32 %v3525, 16
  %v3908 = vshrl.u32 %v3661, 16
  %v3909 = vpack.i.b16 %v3908, %v3907
  %v3913 = vpack.i.b16 %v3662, %v3526
  %v3915 = vshrl.u32 %v3526, 16
  %v3916 = vshrl.u32 %v3662, 16
  %v3917 = vpack.i.b16 %v3916, %v3915
  %3919 = vxpose.xlu0.c.b16.start [1/8] %v3665, 128
  %3920 = vxpose.xlu0.c.b16.cont [2/8] %v3793, 128
  %3921 = vxpose.xlu0.c.b16.cont [3/8] 0, 128
  %3922 = vxpose.xlu0.c.b16.cont [4/8] 0, 128
  %3923 = vxpose.xlu0.c.b16.cont [5/8] 0, 128
  %3924 = vxpose.xlu0.c.b16.cont [6/8] 0, 128
  %3925 = vxpose.xlu0.c.b16.cont [7/8] 0, 128
  %3926 = vxpose.xlu0.c.b16.end [8/8] 0, 128
  %v3927 = vpop.trf.xlu0
  %v3928 = vpop.trf.xlu0
  %v3929 = vpop.trf.xlu0
  %v3930 = vpop.trf.xlu0
  %v3931 = vpop.trf.xlu0
  %v3932 = vpop.trf.xlu0
  %v3933 = vpop.trf.xlu0
  %v3934 = vpop.trf.xlu0
  %v3936 = vsel %vm242, %v3927, 0
  %3938 = vmatprep.subr.bf16.mxu0 0
  %3939 = vmatpush1.bf16.msra.mxu0 0
  %3940 = vmatprep.subr.bf16.mxu0 0
  %3941 = vmatpush1.bf16.msra.mxu0 0
  %3942 = vmatprep.subr.bf16.mxu0 0
  %3943 = vmatpush1.bf16.msra.mxu0 0
  %3944 = vmatprep.subr.bf16.mxu0 0
  %3945 = vmatpush1.bf16.msra.mxu0 0
  %3946 = vmatprep.subr.bf16.mxu0 0
  %3947 = vmatpush1.bf16.msra.mxu0 0
  %3948 = vmatprep.subr.bf16.mxu0 0
  %3949 = vmatpush1.bf16.msra.mxu0 0
  %3950 = vmatprep.subr.bf16.mxu0 0
  %3951 = vmatpush1.bf16.msra.mxu0 %v2273
  %3952 = vmatprep.subr.bf16.mxu0 0
  %3953 = vmatpush1.bf16.msra.mxu0 %v2145
  %3954 = vmatprep.subr.bf16.mxu0 0
  %3955 = vmatpush2.bf16.msra.mxu0 0
  %3956 = vmatprep.subr.bf16.mxu0 0
  %3957 = vmatpush2.bf16.msra.mxu0 0
  %3958 = vmatprep.subr.bf16.mxu0 0
  %3959 = vmatpush2.bf16.msra.mxu0 0
  %3960 = vmatprep.subr.bf16.mxu0 0
  %3961 = vmatpush2.bf16.msra.mxu0 0
  %3962 = vmatprep.subr.bf16.mxu0 0
  %3963 = vmatpush2.bf16.msra.mxu0 0
  %3964 = vmatprep.subr.bf16.mxu0 0
  %3965 = vmatpush2.bf16.msra.mxu0 0
  %3966 = vmatprep.subr.bf16.mxu0 0
  %3967 = vmatpush2.bf16.msra.mxu0 0
  %3968 = vmatprep.subr.bf16.mxu0 0
  %3969 = vmatpush2.bf16.msra.mxu0 0
  %3970 = vmatprep.mubr.bf16.mxu0 0
  %3971 = vmatmul.mubr.bf16.gmra.mxu0 %v3936
  %v3972 = vpop.f32.mrf.mxu0
  %v3973 = vadd.f32 0.0, %v3972
  %v3974 = vpop.f32.mrf.mxu0
  %v3975 = vpop.f32.mrf.mxu0
  %v3976 = vadd.f32 0.0, %v3975
  %v3977 = vpop.f32.mrf.mxu0
  %3978 = vdwg.mxu0
  %3979 = vxpose.xlu0.c.b16.start [1/8] %v3669, 128
  %3980 = vxpose.xlu0.c.b16.cont [2/8] %v3797, 128
  %3981 = vxpose.xlu0.c.b16.cont [3/8] 0, 128
  %3982 = vxpose.xlu0.c.b16.cont [4/8] 0, 128
  %3983 = vxpose.xlu0.c.b16.cont [5/8] 0, 128
  %3984 = vxpose.xlu0.c.b16.cont [6/8] 0, 128
  %3985 = vxpose.xlu0.c.b16.cont [7/8] 0, 128
  %3986 = vxpose.xlu0.c.b16.end [8/8] 0, 128
  %v3987 = vpop.trf.xlu0
  %v3988 = vpop.trf.xlu0
  %v3989 = vpop.trf.xlu0
  %v3990 = vpop.trf.xlu0
  %v3991 = vpop.trf.xlu0
  %v3992 = vpop.trf.xlu0
  %v3993 = vpop.trf.xlu0
  %v3994 = vpop.trf.xlu0
  %v3996 = vsel %vm242, %v3987, 0
  %3998 = vmatprep.subr.bf16.mxu0 0
  %3999 = vmatpush1.bf16.msra.mxu0 0
  %4000 = vmatprep.subr.bf16.mxu0 0
  %4001 = vmatpush1.bf16.msra.mxu0 0
  %4002 = vmatprep.subr.bf16.mxu0 0
  %4003 = vmatpush1.bf16.msra.mxu0 0
  %4004 = vmatprep.subr.bf16.mxu0 0
  %4005 = vmatpush1.bf16.msra.mxu0 0
  %4006 = vmatprep.subr.bf16.mxu0 0
  %4007 = vmatpush1.bf16.msra.mxu0 0
  %4008 = vmatprep.subr.bf16.mxu0 0
  %4009 = vmatpush1.bf16.msra.mxu0 0
  %4010 = vmatprep.subr.bf16.mxu0 0
  %4011 = vmatpush1.bf16.msra.mxu0 %v2277
  %4012 = vmatprep.subr.bf16.mxu0 0
  %4013 = vmatpush1.bf16.msra.mxu0 %v2149
  %4014 = vmatprep.subr.bf16.mxu0 0
  %4015 = vmatpush2.bf16.msra.mxu0 0
  %4016 = vmatprep.subr.bf16.mxu0 0
  %4017 = vmatpush2.bf16.msra.mxu0 0
  %4018 = vmatprep.subr.bf16.mxu0 0
  %4019 = vmatpush2.bf16.msra.mxu0 0
  %4020 = vmatprep.subr.bf16.mxu0 0
  %4021 = vmatpush2.bf16.msra.mxu0 0
  %4022 = vmatprep.subr.bf16.mxu0 0
  %4023 = vmatpush2.bf16.msra.mxu0 0
  %4024 = vmatprep.subr.bf16.mxu0 0
  %4025 = vmatpush2.bf16.msra.mxu0 0
  %4026 = vmatprep.subr.bf16.mxu0 0
  %4027 = vmatpush2.bf16.msra.mxu0 0
  %4028 = vmatprep.subr.bf16.mxu0 0
  %4029 = vmatpush2.bf16.msra.mxu0 0
  %4030 = vmatprep.mubr.bf16.mxu0 0
  %4031 = vmatmul.mubr.bf16.gmra.mxu0 %v3996
  %v4032 = vpop.f32.mrf.mxu0
  %v4033 = vadd.f32 0.0, %v4032
  %v4034 = vpop.f32.mrf.mxu0
  %v4035 = vpop.f32.mrf.mxu0
  %v4036 = vadd.f32 0.0, %v4035
  %v4037 = vpop.f32.mrf.mxu0
  %4038 = vdwg.mxu0
  %4039 = vxpose.xlu0.c.b16.start [1/8] %v3673, 128
  %4040 = vxpose.xlu0.c.b16.cont [2/8] %v3801, 128
  %4041 = vxpose.xlu0.c.b16.cont [3/8] 0, 128
  %4042 = vxpose.xlu0.c.b16.cont [4/8] 0, 128
  %4043 = vxpose.xlu0.c.b16.cont [5/8] 0, 128
  %4044 = vxpose.xlu0.c.b16.cont [6/8] 0, 128
  %4045 = vxpose.xlu0.c.b16.cont [7/8] 0, 128
  %4046 = vxpose.xlu0.c.b16.end [8/8] 0, 128
  %v4047 = vpop.trf.xlu0
  %v4048 = vpop.trf.xlu0
  %v4049 = vpop.trf.xlu0
  %v4050 = vpop.trf.xlu0
  %v4051 = vpop.trf.xlu0
  %v4052 = vpop.trf.xlu0
  %v4053 = vpop.trf.xlu0
  %v4054 = vpop.trf.xlu0
  %v4056 = vsel %vm242, %v4047, 0
  %4058 = vmatprep.subr.bf16.mxu0 0
  %4059 = vmatpush1.bf16.msra.mxu0 0
  %4060 = vmatprep.subr.bf16.mxu0 0
  %4061 = vmatpush1.bf16.msra.mxu0 0
  %4062 = vmatprep.subr.bf16.mxu0 0
  %4063 = vmatpush1.bf16.msra.mxu0 0
  %4064 = vmatprep.subr.bf16.mxu0 0
  %4065 = vmatpush1.bf16.msra.mxu0 0
  %4066 = vmatprep.subr.bf16.mxu0 0
  %4067 = vmatpush1.bf16.msra.mxu0 0
  %4068 = vmatprep.subr.bf16.mxu0 0
  %4069 = vmatpush1.bf16.msra.mxu0 0
  %4070 = vmatprep.subr.bf16.mxu0 0
  %4071 = vmatpush1.bf16.msra.mxu0 %v2281
  %4072 = vmatprep.subr.bf16.mxu0 0
  %4073 = vmatpush1.bf16.msra.mxu0 %v2153
  %4074 = vmatprep.subr.bf16.mxu0 0
  %4075 = vmatpush2.bf16.msra.mxu0 0
  %4076 = vmatprep.subr.bf16.mxu0 0
  %4077 = vmatpush2.bf16.msra.mxu0 0
  %4078 = vmatprep.subr.bf16.mxu0 0
  %4079 = vmatpush2.bf16.msra.mxu0 0
  %4080 = vmatprep.subr.bf16.mxu0 0
  %4081 = vmatpush2.bf16.msra.mxu0 0
  %4082 = vmatprep.subr.bf16.mxu0 0
  %4083 = vmatpush2.bf16.msra.mxu0 0
  %4084 = vmatprep.subr.bf16.mxu0 0
  %4085 = vmatpush2.bf16.msra.mxu0 0
  %4086 = vmatprep.subr.bf16.mxu0 0
  %4087 = vmatpush2.bf16.msra.mxu0 0
  %4088 = vmatprep.subr.bf16.mxu0 0
  %4089 = vmatpush2.bf16.msra.mxu0 0
  %4090 = vmatprep.mubr.bf16.mxu0 0
  %4091 = vmatmul.mubr.bf16.gmra.mxu0 %v4056
  %v4092 = vpop.f32.mrf.mxu0
  %v4093 = vadd.f32 0.0, %v4092
  %v4094 = vpop.f32.mrf.mxu0
  %v4095 = vpop.f32.mrf.mxu0
  %v4096 = vadd.f32 0.0, %v4095
  %v4097 = vpop.f32.mrf.mxu0
  %4098 = vdwg.mxu0
  %4099 = vxpose.xlu0.c.b16.start [1/8] %v3677, 128
  %4100 = vxpose.xlu0.c.b16.cont [2/8] %v3805, 128
  %4101 = vxpose.xlu0.c.b16.cont [3/8] 0, 128
  %4102 = vxpose.xlu0.c.b16.cont [4/8] 0, 128
  %4103 = vxpose.xlu0.c.b16.cont [5/8] 0, 128
  %4104 = vxpose.xlu0.c.b16.cont [6/8] 0, 128
  %4105 = vxpose.xlu0.c.b16.cont [7/8] 0, 128
  %4106 = vxpose.xlu0.c.b16.end [8/8] 0, 128
  %v4107 = vpop.trf.xlu0
  %v4108 = vpop.trf.xlu0
  %v4109 = vpop.trf.xlu0
  %v4110 = vpop.trf.xlu0
  %v4111 = vpop.trf.xlu0
  %v4112 = vpop.trf.xlu0
  %v4113 = vpop.trf.xlu0
  %v4114 = vpop.trf.xlu0
  %v4116 = vsel %vm242, %v4107, 0
  %4118 = vmatprep.subr.bf16.mxu0 0
  %4119 = vmatpush1.bf16.msra.mxu0 0
  %4120 = vmatprep.subr.bf16.mxu0 0
  %4121 = vmatpush1.bf16.msra.mxu0 0
  %4122 = vmatprep.subr.bf16.mxu0 0
  %4123 = vmatpush1.bf16.msra.mxu0 0
  %4124 = vmatprep.subr.bf16.mxu0 0
  %4125 = vmatpush1.bf16.msra.mxu0 0
  %4126 = vmatprep.subr.bf16.mxu0 0
  %4127 = vmatpush1.bf16.msra.mxu0 0
  %4128 = vmatprep.subr.bf16.mxu0 0
  %4129 = vmatpush1.bf16.msra.mxu0 0
  %4130 = vmatprep.subr.bf16.mxu0 0
  %4131 = vmatpush1.bf16.msra.mxu0 %v2285
  %4132 = vmatprep.subr.bf16.mxu0 0
  %4133 = vmatpush1.bf16.msra.mxu0 %v2157
  %4134 = vmatprep.subr.bf16.mxu0 0
  %4135 = vmatpush2.bf16.msra.mxu0 0
  %4136 = vmatprep.subr.bf16.mxu0 0
  %4137 = vmatpush2.bf16.msra.mxu0 0
  %4138 = vmatprep.subr.bf16.mxu0 0
  %4139 = vmatpush2.bf16.msra.mxu0 0
  %4140 = vmatprep.subr.bf16.mxu0 0
  %4141 = vmatpush2.bf16.msra.mxu0 0
  %4142 = vmatprep.subr.bf16.mxu0 0
  %4143 = vmatpush2.bf16.msra.mxu0 0
  %4144 = vmatprep.subr.bf16.mxu0 0
  %4145 = vmatpush2.bf16.msra.mxu0 0
  %4146 = vmatprep.subr.bf16.mxu0 0
  %4147 = vmatpush2.bf16.msra.mxu0 0
  %4148 = vmatprep.subr.bf16.mxu0 0
  %4149 = vmatpush2.bf16.msra.mxu0 0
  %4150 = vmatprep.mubr.bf16.mxu0 0
  %4151 = vmatmul.mubr.bf16.gmra.mxu0 %v4116
  %v4152 = vpop.f32.mrf.mxu0
  %v4153 = vadd.f32 0.0, %v4152
  %v4154 = vpop.f32.mrf.mxu0
  %v4155 = vpop.f32.mrf.mxu0
  %v4156 = vadd.f32 0.0, %v4155
  %v4157 = vpop.f32.mrf.mxu0
  %4158 = vdwg.mxu0
  %4159 = vxpose.xlu0.c.b16.start [1/8] %v3681, 128
  %4160 = vxpose.xlu0.c.b16.cont [2/8] %v3809, 128
  %4161 = vxpose.xlu0.c.b16.cont [3/8] 0, 128
  %4162 = vxpose.xlu0.c.b16.cont [4/8] 0, 128
  %4163 = vxpose.xlu0.c.b16.cont [5/8] 0, 128
  %4164 = vxpose.xlu0.c.b16.cont [6/8] 0, 128
  %4165 = vxpose.xlu0.c.b16.cont [7/8] 0, 128
  %4166 = vxpose.xlu0.c.b16.end [8/8] 0, 128
  %v4167 = vpop.trf.xlu0
  %v4168 = vpop.trf.xlu0
  %v4169 = vpop.trf.xlu0
  %v4170 = vpop.trf.xlu0
  %v4171 = vpop.trf.xlu0
  %v4172 = vpop.trf.xlu0
  %v4173 = vpop.trf.xlu0
  %v4174 = vpop.trf.xlu0
  %v4176 = vsel %vm242, %v4167, 0
  %4178 = vmatprep.subr.bf16.mxu0 0
  %4179 = vmatpush1.bf16.msra.mxu0 0
  %4180 = vmatprep.subr.bf16.mxu0 0
  %4181 = vmatpush1.bf16.msra.mxu0 0
  %4182 = vmatprep.subr.bf16.mxu0 0
  %4183 = vmatpush1.bf16.msra.mxu0 0
  %4184 = vmatprep.subr.bf16.mxu0 0
  %4185 = vmatpush1.bf16.msra.mxu0 0
  %4186 = vmatprep.subr.bf16.mxu0 0
  %4187 = vmatpush1.bf16.msra.mxu0 0
  %4188 = vmatprep.subr.bf16.mxu0 0
  %4189 = vmatpush1.bf16.msra.mxu0 0
  %4190 = vmatprep.subr.bf16.mxu0 0
  %4191 = vmatpush1.bf16.msra.mxu0 %v2289
  %4192 = vmatprep.subr.bf16.mxu0 0
  %4193 = vmatpush1.bf16.msra.mxu0 %v2161
  %4194 = vmatprep.subr.bf16.mxu0 0
  %4195 = vmatpush2.bf16.msra.mxu0 0
  %4196 = vmatprep.subr.bf16.mxu0 0
  %4197 = vmatpush2.bf16.msra.mxu0 0
  %4198 = vmatprep.subr.bf16.mxu0 0
  %4199 = vmatpush2.bf16.msra.mxu0 0
  %4200 = vmatprep.subr.bf16.mxu0 0
  %4201 = vmatpush2.bf16.msra.mxu0 0
  %4202 = vmatprep.subr.bf16.mxu0 0
  %4203 = vmatpush2.bf16.msra.mxu0 0
  %4204 = vmatprep.subr.bf16.mxu0 0
  %4205 = vmatpush2.bf16.msra.mxu0 0
  %4206 = vmatprep.subr.bf16.mxu0 0
  %4207 = vmatpush2.bf16.msra.mxu0 0
  %4208 = vmatprep.subr.bf16.mxu0 0
  %4209 = vmatpush2.bf16.msra.mxu0 0
  %4210 = vmatprep.mubr.bf16.mxu0 0
  %4211 = vmatmul.mubr.bf16.gmra.mxu0 %v4176
  %v4212 = vpop.f32.mrf.mxu0
  %v4213 = vadd.f32 0.0, %v4212
  %v4214 = vpop.f32.mrf.mxu0
  %v4215 = vpop.f32.mrf.mxu0
  %v4216 = vadd.f32 0.0, %v4215
  %v4217 = vpop.f32.mrf.mxu0
  %4218 = vdwg.mxu0
  %4219 = vxpose.xlu0.c.b16.start [1/8] %v3685, 128
  %4220 = vxpose.xlu0.c.b16.cont [2/8] %v3813, 128
  %4221 = vxpose.xlu0.c.b16.cont [3/8] 0, 128
  %4222 = vxpose.xlu0.c.b16.cont [4/8] 0, 128
  %4223 = vxpose.xlu0.c.b16.cont [5/8] 0, 128
  %4224 = vxpose.xlu0.c.b16.cont [6/8] 0, 128
  %4225 = vxpose.xlu0.c.b16.cont [7/8] 0, 128
  %4226 = vxpose.xlu0.c.b16.end [8/8] 0, 128
  %v4227 = vpop.trf.xlu0
  %v4228 = vpop.trf.xlu0
  %v4229 = vpop.trf.xlu0
  %v4230 = vpop.trf.xlu0
  %v4231 = vpop.trf.xlu0
  %v4232 = vpop.trf.xlu0
  %v4233 = vpop.trf.xlu0
  %v4234 = vpop.trf.xlu0
  %v4236 = vsel %vm242, %v4227, 0
  %4238 = vmatprep.subr.bf16.mxu0 0
  %4239 = vmatpush1.bf16.msra.mxu0 0
  %4240 = vmatprep.subr.bf16.mxu0 0
  %4241 = vmatpush1.bf16.msra.mxu0 0
  %4242 = vmatprep.subr.bf16.mxu0 0
  %4243 = vmatpush1.bf16.msra.mxu0 0
  %4244 = vmatprep.subr.bf16.mxu0 0
  %4245 = vmatpush1.bf16.msra.mxu0 0
  %4246 = vmatprep.subr.bf16.mxu0 0
  %4247 = vmatpush1.bf16.msra.mxu0 0
  %4248 = vmatprep.subr.bf16.mxu0 0
  %4249 = vmatpush1.bf16.msra.mxu0 0
  %4250 = vmatprep.subr.bf16.mxu0 0
  %4251 = vmatpush1.bf16.msra.mxu0 %v2293
  %4252 = vmatprep.subr.bf16.mxu0 0
  %4253 = vmatpush1.bf16.msra.mxu0 %v2165
  %4254 = vmatprep.subr.bf16.mxu0 0
  %4255 = vmatpush2.bf16.msra.mxu0 0
  %4256 = vmatprep.subr.bf16.mxu0 0
  %4257 = vmatpush2.bf16.msra.mxu0 0
  %4258 = vmatprep.subr.bf16.mxu0 0
  %4259 = vmatpush2.bf16.msra.mxu0 0
  %4260 = vmatprep.subr.bf16.mxu0 0
  %4261 = vmatpush2.bf16.msra.mxu0 0
  %4262 = vmatprep.subr.bf16.mxu0 0
  %4263 = vmatpush2.bf16.msra.mxu0 0
  %4264 = vmatprep.subr.bf16.mxu0 0
  %4265 = vmatpush2.bf16.msra.mxu0 0
  %4266 = vmatprep.subr.bf16.mxu0 0
  %4267 = vmatpush2.bf16.msra.mxu0 0
  %4268 = vmatprep.subr.bf16.mxu0 0
  %4269 = vmatpush2.bf16.msra.mxu0 0
  %4270 = vmatprep.mubr.bf16.mxu0 0
  %4271 = vmatmul.mubr.bf16.gmra.mxu0 %v4236
  %v4272 = vpop.f32.mrf.mxu0
  %v4273 = vadd.f32 0.0, %v4272
  %v4274 = vpop.f32.mrf.mxu0
  %v4275 = vpop.f32.mrf.mxu0
  %v4276 = vadd.f32 0.0, %v4275
  %v4277 = vpop.f32.mrf.mxu0
  %4278 = vdwg.mxu0
  %4279 = vxpose.xlu0.c.b16.start [1/8] %v3689, 128
  %4280 = vxpose.xlu0.c.b16.cont [2/8] %v3817, 128
  %4281 = vxpose.xlu0.c.b16.cont [3/8] 0, 128
  %4282 = vxpose.xlu0.c.b16.cont [4/8] 0, 128
  %4283 = vxpose.xlu0.c.b16.cont [5/8] 0, 128
  %4284 = vxpose.xlu0.c.b16.cont [6/8] 0, 128
  %4285 = vxpose.xlu0.c.b16.cont [7/8] 0, 128
  %4286 = vxpose.xlu0.c.b16.end [8/8] 0, 128
  %v4287 = vpop.trf.xlu0
  %v4288 = vpop.trf.xlu0
  %v4289 = vpop.trf.xlu0
  %v4290 = vpop.trf.xlu0
  %v4291 = vpop.trf.xlu0
  %v4292 = vpop.trf.xlu0
  %v4293 = vpop.trf.xlu0
  %v4294 = vpop.trf.xlu0
  %v4296 = vsel %vm242, %v4287, 0
  %4298 = vmatprep.subr.bf16.mxu0 0
  %4299 = vmatpush1.bf16.msra.mxu0 0
  %4300 = vmatprep.subr.bf16.mxu0 0
  %4301 = vmatpush1.bf16.msra.mxu0 0
  %4302 = vmatprep.subr.bf16.mxu0 0
  %4303 = vmatpush1.bf16.msra.mxu0 0
  %4304 = vmatprep.subr.bf16.mxu0 0
  %4305 = vmatpush1.bf16.msra.mxu0 0
  %4306 = vmatprep.subr.bf16.mxu0 0
  %4307 = vmatpush1.bf16.msra.mxu0 0
  %4308 = vmatprep.subr.bf16.mxu0 0
  %4309 = vmatpush1.bf16.msra.mxu0 0
  %4310 = vmatprep.subr.bf16.mxu0 0
  %4311 = vmatpush1.bf16.msra.mxu0 %v2297
  %4312 = vmatprep.subr.bf16.mxu0 0
  %4313 = vmatpush1.bf16.msra.mxu0 %v2169
  %4314 = vmatprep.subr.bf16.mxu0 0
  %4315 = vmatpush2.bf16.msra.mxu0 0
  %4316 = vmatprep.subr.bf16.mxu0 0
  %4317 = vmatpush2.bf16.msra.mxu0 0
  %4318 = vmatprep.subr.bf16.mxu0 0
  %4319 = vmatpush2.bf16.msra.mxu0 0
  %4320 = vmatprep.subr.bf16.mxu0 0
  %4321 = vmatpush2.bf16.msra.mxu0 0
  %4322 = vmatprep.subr.bf16.mxu0 0
  %4323 = vmatpush2.bf16.msra.mxu0 0
  %4324 = vmatprep.subr.bf16.mxu0 0
  %4325 = vmatpush2.bf16.msra.mxu0 0
  %4326 = vmatprep.subr.bf16.mxu0 0
  %4327 = vmatpush2.bf16.msra.mxu0 0
  %4328 = vmatprep.subr.bf16.mxu0 0
  %4329 = vmatpush2.bf16.msra.mxu0 0
  %4330 = vmatprep.mubr.bf16.mxu0 0
  %4331 = vmatmul.mubr.bf16.gmra.mxu0 %v4296
  %v4332 = vpop.f32.mrf.mxu0
  %v4333 = vadd.f32 0.0, %v4332
  %v4334 = vpop.f32.mrf.mxu0
  %v4335 = vpop.f32.mrf.mxu0
  %v4336 = vadd.f32 0.0, %v4335
  %v4337 = vpop.f32.mrf.mxu0
  %4338 = vdwg.mxu0
  %4339 = vxpose.xlu0.c.b16.start [1/8] %v3693, 128
  %4340 = vxpose.xlu0.c.b16.cont [2/8] %v3821, 128
  %4341 = vxpose.xlu0.c.b16.cont [3/8] 0, 128
  %4342 = vxpose.xlu0.c.b16.cont [4/8] 0, 128
  %4343 = vxpose.xlu0.c.b16.cont [5/8] 0, 128
  %4344 = vxpose.xlu0.c.b16.cont [6/8] 0, 128
  %4345 = vxpose.xlu0.c.b16.cont [7/8] 0, 128
  %4346 = vxpose.xlu0.c.b16.end [8/8] 0, 128
  %v4347 = vpop.trf.xlu0
  %v4348 = vpop.trf.xlu0
  %v4349 = vpop.trf.xlu0
  %v4350 = vpop.trf.xlu0
  %v4351 = vpop.trf.xlu0
  %v4352 = vpop.trf.xlu0
  %v4353 = vpop.trf.xlu0
  %v4354 = vpop.trf.xlu0
  %v4356 = vsel %vm242, %v4347, 0
  %4358 = vmatprep.subr.bf16.mxu0 0
  %4359 = vmatpush1.bf16.msra.mxu0 0
  %4360 = vmatprep.subr.bf16.mxu0 0
  %4361 = vmatpush1.bf16.msra.mxu0 0
  %4362 = vmatprep.subr.bf16.mxu0 0
  %4363 = vmatpush1.bf16.msra.mxu0 0
  %4364 = vmatprep.subr.bf16.mxu0 0
  %4365 = vmatpush1.bf16.msra.mxu0 0
  %4366 = vmatprep.subr.bf16.mxu0 0
  %4367 = vmatpush1.bf16.msra.mxu0 0
  %4368 = vmatprep.subr.bf16.mxu0 0
  %4369 = vmatpush1.bf16.msra.mxu0 0
  %4370 = vmatprep.subr.bf16.mxu0 0
  %4371 = vmatpush1.bf16.msra.mxu0 %v2301
  %4372 = vmatprep.subr.bf16.mxu0 0
  %4373 = vmatpush1.bf16.msra.mxu0 %v2173
  %4374 = vmatprep.subr.bf16.mxu0 0
  %4375 = vmatpush2.bf16.msra.mxu0 0
  %4376 = vmatprep.subr.bf16.mxu0 0
  %4377 = vmatpush2.bf16.msra.mxu0 0
  %4378 = vmatprep.subr.bf16.mxu0 0
  %4379 = vmatpush2.bf16.msra.mxu0 0
  %4380 = vmatprep.subr.bf16.mxu0 0
  %4381 = vmatpush2.bf16.msra.mxu0 0
  %4382 = vmatprep.subr.bf16.mxu0 0
  %4383 = vmatpush2.bf16.msra.mxu0 0
  %4384 = vmatprep.subr.bf16.mxu0 0
  %4385 = vmatpush2.bf16.msra.mxu0 0
  %4386 = vmatprep.subr.bf16.mxu0 0
  %4387 = vmatpush2.bf16.msra.mxu0 0
  %4388 = vmatprep.subr.bf16.mxu0 0
  %4389 = vmatpush2.bf16.msra.mxu0 0
  %4390 = vmatprep.mubr.bf16.mxu0 0
  %4391 = vmatmul.mubr.bf16.gmra.mxu0 %v4356
  %v4392 = vpop.f32.mrf.mxu0
  %v4393 = vadd.f32 0.0, %v4392
  %v4394 = vpop.f32.mrf.mxu0
  %v4395 = vpop.f32.mrf.mxu0
  %v4396 = vadd.f32 0.0, %v4395
  %v4397 = vpop.f32.mrf.mxu0
  %4398 = vdwg.mxu0
  %4399 = vxpose.xlu0.c.b16.start [1/8] %v3697, 128
  %4400 = vxpose.xlu0.c.b16.cont [2/8] %v3825, 128
  %4401 = vxpose.xlu0.c.b16.cont [3/8] 0, 128
  %4402 = vxpose.xlu0.c.b16.cont [4/8] 0, 128
  %4403 = vxpose.xlu0.c.b16.cont [5/8] 0, 128
  %4404 = vxpose.xlu0.c.b16.cont [6/8] 0, 128
  %4405 = vxpose.xlu0.c.b16.cont [7/8] 0, 128
  %4406 = vxpose.xlu0.c.b16.end [8/8] 0, 128
  %v4407 = vpop.trf.xlu0
  %v4408 = vpop.trf.xlu0
  %v4409 = vpop.trf.xlu0
  %v4410 = vpop.trf.xlu0
  %v4411 = vpop.trf.xlu0
  %v4412 = vpop.trf.xlu0
  %v4413 = vpop.trf.xlu0
  %v4414 = vpop.trf.xlu0
  %v4416 = vsel %vm242, %v4407, 0
  %4418 = vmatprep.subr.bf16.mxu0 0
  %4419 = vmatpush1.bf16.msra.mxu0 0
  %4420 = vmatprep.subr.bf16.mxu0 0
  %4421 = vmatpush1.bf16.msra.mxu0 0
  %4422 = vmatprep.subr.bf16.mxu0 0
  %4423 = vmatpush1.bf16.msra.mxu0 0
  %4424 = vmatprep.subr.bf16.mxu0 0
  %4425 = vmatpush1.bf16.msra.mxu0 0
  %4426 = vmatprep.subr.bf16.mxu0 0
  %4427 = vmatpush1.bf16.msra.mxu0 0
  %4428 = vmatprep.subr.bf16.mxu0 0
  %4429 = vmatpush1.bf16.msra.mxu0 0
  %4430 = vmatprep.subr.bf16.mxu0 0
  %4431 = vmatpush1.bf16.msra.mxu0 %v2305
  %4432 = vmatprep.subr.bf16.mxu0 0
  %4433 = vmatpush1.bf16.msra.mxu0 %v2177
  %4434 = vmatprep.subr.bf16.mxu0 0
  %4435 = vmatpush2.bf16.msra.mxu0 0
  %4436 = vmatprep.subr.bf16.mxu0 0
  %4437 = vmatpush2.bf16.msra.mxu0 0
  %4438 = vmatprep.subr.bf16.mxu0 0
  %4439 = vmatpush2.bf16.msra.mxu0 0
  %4440 = vmatprep.subr.bf16.mxu0 0
  %4441 = vmatpush2.bf16.msra.mxu0 0
  %4442 = vmatprep.subr.bf16.mxu0 0
  %4443 = vmatpush2.bf16.msra.mxu0 0
  %4444 = vmatprep.subr.bf16.mxu0 0
  %4445 = vmatpush2.bf16.msra.mxu0 0
  %4446 = vmatprep.subr.bf16.mxu0 0
  %4447 = vmatpush2.bf16.msra.mxu0 0
  %4448 = vmatprep.subr.bf16.mxu0 0
  %4449 = vmatpush2.bf16.msra.mxu0 0
  %4450 = vmatprep.mubr.bf16.mxu0 0
  %4451 = vmatmul.mubr.bf16.gmra.mxu0 %v4416
  %v4452 = vpop.f32.mrf.mxu0
  %v4453 = vadd.f32 0.0, %v4452
  %v4454 = vpop.f32.mrf.mxu0
  %v4455 = vpop.f32.mrf.mxu0
  %v4456 = vadd.f32 0.0, %v4455
  %v4457 = vpop.f32.mrf.mxu0
  %4458 = vdwg.mxu0
  %4459 = vxpose.xlu0.c.b16.start [1/8] %v3701, 128
  %4460 = vxpose.xlu0.c.b16.cont [2/8] %v3829, 128
  %4461 = vxpose.xlu0.c.b16.cont [3/8] 0, 128
  %4462 = vxpose.xlu0.c.b16.cont [4/8] 0, 128
  %4463 = vxpose.xlu0.c.b16.cont [5/8] 0, 128
  %4464 = vxpose.xlu0.c.b16.cont [6/8] 0, 128
  %4465 = vxpose.xlu0.c.b16.cont [7/8] 0, 128
  %4466 = vxpose.xlu0.c.b16.end [8/8] 0, 128
  %v4467 = vpop.trf.xlu0
  %v4468 = vpop.trf.xlu0
  %v4469 = vpop.trf.xlu0
  %v4470 = vpop.trf.xlu0
  %v4471 = vpop.trf.xlu0
  %v4472 = vpop.trf.xlu0
  %v4473 = vpop.trf.xlu0
  %v4474 = vpop.trf.xlu0
  %v4476 = vsel %vm242, %v4467, 0
  %4478 = vmatprep.subr.bf16.mxu0 0
  %4479 = vmatpush1.bf16.msra.mxu0 0
  %4480 = vmatprep.subr.bf16.mxu0 0
  %4481 = vmatpush1.bf16.msra.mxu0 0
  %4482 = vmatprep.subr.bf16.mxu0 0
  %4483 = vmatpush1.bf16.msra.mxu0 0
  %4484 = vmatprep.subr.bf16.mxu0 0
  %4485 = vmatpush1.bf16.msra.mxu0 0
  %4486 = vmatprep.subr.bf16.mxu0 0
  %4487 = vmatpush1.bf16.msra.mxu0 0
  %4488 = vmatprep.subr.bf16.mxu0 0
  %4489 = vmatpush1.bf16.msra.mxu0 0
  %4490 = vmatprep.subr.bf16.mxu0 0
  %4491 = vmatpush1.bf16.msra.mxu0 %v2309
  %4492 = vmatprep.subr.bf16.mxu0 0
  %4493 = vmatpush1.bf16.msra.mxu0 %v2181
  %4494 = vmatprep.subr.bf16.mxu0 0
  %4495 = vmatpush2.bf16.msra.mxu0 0
  %4496 = vmatprep.subr.bf16.mxu0 0
  %4497 = vmatpush2.bf16.msra.mxu0 0
  %4498 = vmatprep.subr.bf16.mxu0 0
  %4499 = vmatpush2.bf16.msra.mxu0 0
  %4500 = vmatprep.subr.bf16.mxu0 0
  %4501 = vmatpush2.bf16.msra.mxu0 0
  %4502 = vmatprep.subr.bf16.mxu0 0
  %4503 = vmatpush2.bf16.msra.mxu0 0
  %4504 = vmatprep.subr.bf16.mxu0 0
  %4505 = vmatpush2.bf16.msra.mxu0 0
  %4506 = vmatprep.subr.bf16.mxu0 0
  %4507 = vmatpush2.bf16.msra.mxu0 0
  %4508 = vmatprep.subr.bf16.mxu0 0
  %4509 = vmatpush2.bf16.msra.mxu0 0
  %4510 = vmatprep.mubr.bf16.mxu0 0
  %4511 = vmatmul.mubr.bf16.gmra.mxu0 %v4476
  %v4512 = vpop.f32.mrf.mxu0
  %v4513 = vadd.f32 0.0, %v4512
  %v4514 = vpop.f32.mrf.mxu0
  %v4515 = vpop.f32.mrf.mxu0
  %v4516 = vadd.f32 0.0, %v4515
  %v4517 = vpop.f32.mrf.mxu0
  %4518 = vdwg.mxu0
  %4519 = vxpose.xlu0.c.b16.start [1/8] %v3705, 128
  %4520 = vxpose.xlu0.c.b16.cont [2/8] %v3833, 128
  %4521 = vxpose.xlu0.c.b16.cont [3/8] 0, 128
  %4522 = vxpose.xlu0.c.b16.cont [4/8] 0, 128
  %4523 = vxpose.xlu0.c.b16.cont [5/8] 0, 128
  %4524 = vxpose.xlu0.c.b16.cont [6/8] 0, 128
  %4525 = vxpose.xlu0.c.b16.cont [7/8] 0, 128
  %4526 = vxpose.xlu0.c.b16.end [8/8] 0, 128
  %v4527 = vpop.trf.xlu0
  %v4528 = vpop.trf.xlu0
  %v4529 = vpop.trf.xlu0
  %v4530 = vpop.trf.xlu0
  %v4531 = vpop.trf.xlu0
  %v4532 = vpop.trf.xlu0
  %v4533 = vpop.trf.xlu0
  %v4534 = vpop.trf.xlu0
  %v4536 = vsel %vm242, %v4527, 0
  %4538 = vmatprep.subr.bf16.mxu0 0
  %4539 = vmatpush1.bf16.msra.mxu0 0
  %4540 = vmatprep.subr.bf16.mxu0 0
  %4541 = vmatpush1.bf16.msra.mxu0 0
  %4542 = vmatprep.subr.bf16.mxu0 0
  %4543 = vmatpush1.bf16.msra.mxu0 0
  %4544 = vmatprep.subr.bf16.mxu0 0
  %4545 = vmatpush1.bf16.msra.mxu0 0
  %4546 = vmatprep.subr.bf16.mxu0 0
  %4547 = vmatpush1.bf16.msra.mxu0 0
  %4548 = vmatprep.subr.bf16.mxu0 0
  %4549 = vmatpush1.bf16.msra.mxu0 0
  %4550 = vmatprep.subr.bf16.mxu0 0
  %4551 = vmatpush1.bf16.msra.mxu0 %v2313
  %4552 = vmatprep.subr.bf16.mxu0 0
  %4553 = vmatpush1.bf16.msra.mxu0 %v2185
  %4554 = vmatprep.subr.bf16.mxu0 0
  %4555 = vmatpush2.bf16.msra.mxu0 0
  %4556 = vmatprep.subr.bf16.mxu0 0
  %4557 = vmatpush2.bf16.msra.mxu0 0
  %4558 = vmatprep.subr.bf16.mxu0 0
  %4559 = vmatpush2.bf16.msra.mxu0 0
  %4560 = vmatprep.subr.bf16.mxu0 0
  %4561 = vmatpush2.bf16.msra.mxu0 0
  %4562 = vmatprep.subr.bf16.mxu0 0
  %4563 = vmatpush2.bf16.msra.mxu0 0
  %4564 = vmatprep.subr.bf16.mxu0 0
  %4565 = vmatpush2.bf16.msra.mxu0 0
  %4566 = vmatprep.subr.bf16.mxu0 0
  %4567 = vmatpush2.bf16.msra.mxu0 0
  %4568 = vmatprep.subr.bf16.mxu0 0
  %4569 = vmatpush2.bf16.msra.mxu0 0
  %4570 = vmatprep.mubr.bf16.mxu0 0
  %4571 = vmatmul.mubr.bf16.gmra.mxu0 %v4536
  %v4572 = vpop.f32.mrf.mxu0
  %v4573 = vadd.f32 0.0, %v4572
  %v4574 = vpop.f32.mrf.mxu0
  %v4575 = vpop.f32.mrf.mxu0
  %v4576 = vadd.f32 0.0, %v4575
  %v4577 = vpop.f32.mrf.mxu0
  %4578 = vdwg.mxu0
  %4579 = vxpose.xlu0.c.b16.start [1/8] %v3709, 128
  %4580 = vxpose.xlu0.c.b16.cont [2/8] %v3837, 128
  %4581 = vxpose.xlu0.c.b16.cont [3/8] 0, 128
  %4582 = vxpose.xlu0.c.b16.cont [4/8] 0, 128
  %4583 = vxpose.xlu0.c.b16.cont [5/8] 0, 128
  %4584 = vxpose.xlu0.c.b16.cont [6/8] 0, 128
  %4585 = vxpose.xlu0.c.b16.cont [7/8] 0, 128
  %4586 = vxpose.xlu0.c.b16.end [8/8] 0, 128
  %v4587 = vpop.trf.xlu0
  %v4588 = vpop.trf.xlu0
  %v4589 = vpop.trf.xlu0
  %v4590 = vpop.trf.xlu0
  %v4591 = vpop.trf.xlu0
  %v4592 = vpop.trf.xlu0
  %v4593 = vpop.trf.xlu0
  %v4594 = vpop.trf.xlu0
  %v4596 = vsel %vm242, %v4587, 0
  %4598 = vmatprep.subr.bf16.mxu0 0
  %4599 = vmatpush1.bf16.msra.mxu0 0
  %4600 = vmatprep.subr.bf16.mxu0 0
  %4601 = vmatpush1.bf16.msra.mxu0 0
  %4602 = vmatprep.subr.bf16.mxu0 0
  %4603 = vmatpush1.bf16.msra.mxu0 0
  %4604 = vmatprep.subr.bf16.mxu0 0
  %4605 = vmatpush1.bf16.msra.mxu0 0
  %4606 = vmatprep.subr.bf16.mxu0 0
  %4607 = vmatpush1.bf16.msra.mxu0 0
  %4608 = vmatprep.subr.bf16.mxu0 0
  %4609 = vmatpush1.bf16.msra.mxu0 0
  %4610 = vmatprep.subr.bf16.mxu0 0
  %4611 = vmatpush1.bf16.msra.mxu0 %v2317
  %4612 = vmatprep.subr.bf16.mxu0 0
  %4613 = vmatpush1.bf16.msra.mxu0 %v2189
  %4614 = vmatprep.subr.bf16.mxu0 0
  %4615 = vmatpush2.bf16.msra.mxu0 0
  %4616 = vmatprep.subr.bf16.mxu0 0
  %4617 = vmatpush2.bf16.msra.mxu0 0
  %4618 = vmatprep.subr.bf16.mxu0 0
  %4619 = vmatpush2.bf16.msra.mxu0 0
  %4620 = vmatprep.subr.bf16.mxu0 0
  %4621 = vmatpush2.bf16.msra.mxu0 0
  %4622 = vmatprep.subr.bf16.mxu0 0
  %4623 = vmatpush2.bf16.msra.mxu0 0
  %4624 = vmatprep.subr.bf16.mxu0 0
  %4625 = vmatpush2.bf16.msra.mxu0 0
  %4626 = vmatprep.subr.bf16.mxu0 0
  %4627 = vmatpush2.bf16.msra.mxu0 0
  %4628 = vmatprep.subr.bf16.mxu0 0
  %4629 = vmatpush2.bf16.msra.mxu0 0
  %4630 = vmatprep.mubr.bf16.mxu0 0
  %4631 = vmatmul.mubr.bf16.gmra.mxu0 %v4596
  %v4632 = vpop.f32.mrf.mxu0
  %v4633 = vadd.f32 0.0, %v4632
  %v4634 = vpop.f32.mrf.mxu0
  %v4635 = vpop.f32.mrf.mxu0
  %v4636 = vadd.f32 0.0, %v4635
  %v4637 = vpop.f32.mrf.mxu0
  %4638 = vdwg.mxu0
  %4639 = vxpose.xlu0.c.b16.start [1/8] %v3713, 128
  %4640 = vxpose.xlu0.c.b16.cont [2/8] %v3841, 128
  %4641 = vxpose.xlu0.c.b16.cont [3/8] 0, 128
  %4642 = vxpose.xlu0.c.b16.cont [4/8] 0, 128
  %4643 = vxpose.xlu0.c.b16.cont [5/8] 0, 128
  %4644 = vxpose.xlu0.c.b16.cont [6/8] 0, 128
  %4645 = vxpose.xlu0.c.b16.cont [7/8] 0, 128
  %4646 = vxpose.xlu0.c.b16.end [8/8] 0, 128
  %v4647 = vpop.trf.xlu0
  %v4648 = vpop.trf.xlu0
  %v4649 = vpop.trf.xlu0
  %v4650 = vpop.trf.xlu0
  %v4651 = vpop.trf.xlu0
  %v4652 = vpop.trf.xlu0
  %v4653 = vpop.trf.xlu0
  %v4654 = vpop.trf.xlu0
  %v4656 = vsel %vm242, %v4647, 0
  %4658 = vmatprep.subr.bf16.mxu0 0
  %4659 = vmatpush1.bf16.msra.mxu0 0
  %4660 = vmatprep.subr.bf16.mxu0 0
  %4661 = vmatpush1.bf16.msra.mxu0 0
  %4662 = vmatprep.subr.bf16.mxu0 0
  %4663 = vmatpush1.bf16.msra.mxu0 0
  %4664 = vmatprep.subr.bf16.mxu0 0
  %4665 = vmatpush1.bf16.msra.mxu0 0
  %4666 = vmatprep.subr.bf16.mxu0 0
  %4667 = vmatpush1.bf16.msra.mxu0 0
  %4668 = vmatprep.subr.bf16.mxu0 0
  %4669 = vmatpush1.bf16.msra.mxu0 0
  %4670 = vmatprep.subr.bf16.mxu0 0
  %4671 = vmatpush1.bf16.msra.mxu0 %v2321
  %4672 = vmatprep.subr.bf16.mxu0 0
  %4673 = vmatpush1.bf16.msra.mxu0 %v2193
  %4674 = vmatprep.subr.bf16.mxu0 0
  %4675 = vmatpush2.bf16.msra.mxu0 0
  %4676 = vmatprep.subr.bf16.mxu0 0
  %4677 = vmatpush2.bf16.msra.mxu0 0
  %4678 = vmatprep.subr.bf16.mxu0 0
  %4679 = vmatpush2.bf16.msra.mxu0 0
  %4680 = vmatprep.subr.bf16.mxu0 0
  %4681 = vmatpush2.bf16.msra.mxu0 0
  %4682 = vmatprep.subr.bf16.mxu0 0
  %4683 = vmatpush2.bf16.msra.mxu0 0
  %4684 = vmatprep.subr.bf16.mxu0 0
  %4685 = vmatpush2.bf16.msra.mxu0 0
  %4686 = vmatprep.subr.bf16.mxu0 0
  %4687 = vmatpush2.bf16.msra.mxu0 0
  %4688 = vmatprep.subr.bf16.mxu0 0
  %4689 = vmatpush2.bf16.msra.mxu0 0
  %4690 = vmatprep.mubr.bf16.mxu0 0
  %4691 = vmatmul.mubr.bf16.gmra.mxu0 %v4656
  %v4692 = vpop.f32.mrf.mxu0
  %v4693 = vadd.f32 0.0, %v4692
  %v4694 = vpop.f32.mrf.mxu0
  %v4695 = vpop.f32.mrf.mxu0
  %v4696 = vadd.f32 0.0, %v4695
  %v4697 = vpop.f32.mrf.mxu0
  %4698 = vdwg.mxu0
  %4699 = vxpose.xlu0.c.b16.start [1/8] %v3717, 128
  %4700 = vxpose.xlu0.c.b16.cont [2/8] %v3845, 128
  %4701 = vxpose.xlu0.c.b16.cont [3/8] 0, 128
  %4702 = vxpose.xlu0.c.b16.cont [4/8] 0, 128
  %4703 = vxpose.xlu0.c.b16.cont [5/8] 0, 128
  %4704 = vxpose.xlu0.c.b16.cont [6/8] 0, 128
  %4705 = vxpose.xlu0.c.b16.cont [7/8] 0, 128
  %4706 = vxpose.xlu0.c.b16.end [8/8] 0, 128
  %v4707 = vpop.trf.xlu0
  %v4708 = vpop.trf.xlu0
  %v4709 = vpop.trf.xlu0
  %v4710 = vpop.trf.xlu0
  %v4711 = vpop.trf.xlu0
  %v4712 = vpop.trf.xlu0
  %v4713 = vpop.trf.xlu0
  %v4714 = vpop.trf.xlu0
  %v4716 = vsel %vm242, %v4707, 0
  %4718 = vmatprep.subr.bf16.mxu0 0
  %4719 = vmatpush1.bf16.msra.mxu0 0
  %4720 = vmatprep.subr.bf16.mxu0 0
  %4721 = vmatpush1.bf16.msra.mxu0 0
  %4722 = vmatprep.subr.bf16.mxu0 0
  %4723 = vmatpush1.bf16.msra.mxu0 0
  %4724 = vmatprep.subr.bf16.mxu0 0
  %4725 = vmatpush1.bf16.msra.mxu0 0
  %4726 = vmatprep.subr.bf16.mxu0 0
  %4727 = vmatpush1.bf16.msra.mxu0 0
  %4728 = vmatprep.subr.bf16.mxu0 0
  %4729 = vmatpush1.bf16.msra.mxu0 0
  %4730 = vmatprep.subr.bf16.mxu0 0
  %4731 = vmatpush1.bf16.msra.mxu0 %v2325
  %4732 = vmatprep.subr.bf16.mxu0 0
  %4733 = vmatpush1.bf16.msra.mxu0 %v2197
  %4734 = vmatprep.subr.bf16.mxu0 0
  %4735 = vmatpush2.bf16.msra.mxu0 0
  %4736 = vmatprep.subr.bf16.mxu0 0
  %4737 = vmatpush2.bf16.msra.mxu0 0
  %4738 = vmatprep.subr.bf16.mxu0 0
  %4739 = vmatpush2.bf16.msra.mxu0 0
  %4740 = vmatprep.subr.bf16.mxu0 0
  %4741 = vmatpush2.bf16.msra.mxu0 0
  %4742 = vmatprep.subr.bf16.mxu0 0
  %4743 = vmatpush2.bf16.msra.mxu0 0
  %4744 = vmatprep.subr.bf16.mxu0 0
  %4745 = vmatpush2.bf16.msra.mxu0 0
  %4746 = vmatprep.subr.bf16.mxu0 0
  %4747 = vmatpush2.bf16.msra.mxu0 0
  %4748 = vmatprep.subr.bf16.mxu0 0
  %4749 = vmatpush2.bf16.msra.mxu0 0
  %4750 = vmatprep.mubr.bf16.mxu0 0
  %4751 = vmatmul.mubr.bf16.gmra.mxu0 %v4716
  %v4752 = vpop.f32.mrf.mxu0
  %v4753 = vadd.f32 0.0, %v4752
  %v4754 = vpop.f32.mrf.mxu0
  %v4755 = vpop.f32.mrf.mxu0
  %v4756 = vadd.f32 0.0, %v4755
  %v4757 = vpop.f32.mrf.mxu0
  %4758 = vdwg.mxu0
  %4759 = vxpose.xlu0.c.b16.start [1/8] %v3721, 128
  %4760 = vxpose.xlu0.c.b16.cont [2/8] %v3849, 128
  %4761 = vxpose.xlu0.c.b16.cont [3/8] 0, 128
  %4762 = vxpose.xlu0.c.b16.cont [4/8] 0, 128
  %4763 = vxpose.xlu0.c.b16.cont [5/8] 0, 128
  %4764 = vxpose.xlu0.c.b16.cont [6/8] 0, 128
  %4765 = vxpose.xlu0.c.b16.cont [7/8] 0, 128
  %4766 = vxpose.xlu0.c.b16.end [8/8] 0, 128
  %v4767 = vpop.trf.xlu0
  %v4768 = vpop.trf.xlu0
  %v4769 = vpop.trf.xlu0
  %v4770 = vpop.trf.xlu0
  %v4771 = vpop.trf.xlu0
  %v4772 = vpop.trf.xlu0
  %v4773 = vpop.trf.xlu0
  %v4774 = vpop.trf.xlu0
  %v4776 = vsel %vm242, %v4767, 0
  %4778 = vmatprep.subr.bf16.mxu0 0
  %4779 = vmatpush1.bf16.msra.mxu0 0
  %4780 = vmatprep.subr.bf16.mxu0 0
  %4781 = vmatpush1.bf16.msra.mxu0 0
  %4782 = vmatprep.subr.bf16.mxu0 0
  %4783 = vmatpush1.bf16.msra.mxu0 0
  %4784 = vmatprep.subr.bf16.mxu0 0
  %4785 = vmatpush1.bf16.msra.mxu0 0
  %4786 = vmatprep.subr.bf16.mxu0 0
  %4787 = vmatpush1.bf16.msra.mxu0 0
  %4788 = vmatprep.subr.bf16.mxu0 0
  %4789 = vmatpush1.bf16.msra.mxu0 0
  %4790 = vmatprep.subr.bf16.mxu0 0
  %4791 = vmatpush1.bf16.msra.mxu0 %v2329
  %4792 = vmatprep.subr.bf16.mxu0 0
  %4793 = vmatpush1.bf16.msra.mxu0 %v2201
  %4794 = vmatprep.subr.bf16.mxu0 0
  %4795 = vmatpush2.bf16.msra.mxu0 0
  %4796 = vmatprep.subr.bf16.mxu0 0
  %4797 = vmatpush2.bf16.msra.mxu0 0
  %4798 = vmatprep.subr.bf16.mxu0 0
  %4799 = vmatpush2.bf16.msra.mxu0 0
  %4800 = vmatprep.subr.bf16.mxu0 0
  %4801 = vmatpush2.bf16.msra.mxu0 0
  %4802 = vmatprep.subr.bf16.mxu0 0
  %4803 = vmatpush2.bf16.msra.mxu0 0
  %4804 = vmatprep.subr.bf16.mxu0 0
  %4805 = vmatpush2.bf16.msra.mxu0 0
  %4806 = vmatprep.subr.bf16.mxu0 0
  %4807 = vmatpush2.bf16.msra.mxu0 0
  %4808 = vmatprep.subr.bf16.mxu0 0
  %4809 = vmatpush2.bf16.msra.mxu0 0
  %4810 = vmatprep.mubr.bf16.mxu0 0
  %4811 = vmatmul.mubr.bf16.gmra.mxu0 %v4776
  %v4812 = vpop.f32.mrf.mxu0
  %v4813 = vadd.f32 0.0, %v4812
  %v4814 = vpop.f32.mrf.mxu0
  %v4815 = vpop.f32.mrf.mxu0
  %v4816 = vadd.f32 0.0, %v4815
  %v4817 = vpop.f32.mrf.mxu0
  %4818 = vdwg.mxu0
  %4819 = vxpose.xlu0.c.b16.start [1/8] %v3725, 128
  %4820 = vxpose.xlu0.c.b16.cont [2/8] %v3853, 128
  %4821 = vxpose.xlu0.c.b16.cont [3/8] 0, 128
  %4822 = vxpose.xlu0.c.b16.cont [4/8] 0, 128
  %4823 = vxpose.xlu0.c.b16.cont [5/8] 0, 128
  %4824 = vxpose.xlu0.c.b16.cont [6/8] 0, 128
  %4825 = vxpose.xlu0.c.b16.cont [7/8] 0, 128
  %4826 = vxpose.xlu0.c.b16.end [8/8] 0, 128
  %v4827 = vpop.trf.xlu0
  %v4828 = vpop.trf.xlu0
  %v4829 = vpop.trf.xlu0
  %v4830 = vpop.trf.xlu0
  %v4831 = vpop.trf.xlu0
  %v4832 = vpop.trf.xlu0
  %v4833 = vpop.trf.xlu0
  %v4834 = vpop.trf.xlu0
  %v4836 = vsel %vm242, %v4827, 0
  %4838 = vmatprep.subr.bf16.mxu0 0
  %4839 = vmatpush1.bf16.msra.mxu0 0
  %4840 = vmatprep.subr.bf16.mxu0 0
  %4841 = vmatpush1.bf16.msra.mxu0 0
  %4842 = vmatprep.subr.bf16.mxu0 0
  %4843 = vmatpush1.bf16.msra.mxu0 0
  %4844 = vmatprep.subr.bf16.mxu0 0
  %4845 = vmatpush1.bf16.msra.mxu0 0
  %4846 = vmatprep.subr.bf16.mxu0 0
  %4847 = vmatpush1.bf16.msra.mxu0 0
  %4848 = vmatprep.subr.bf16.mxu0 0
  %4849 = vmatpush1.bf16.msra.mxu0 0
  %4850 = vmatprep.subr.bf16.mxu0 0
  %4851 = vmatpush1.bf16.msra.mxu0 %v2333
  %4852 = vmatprep.subr.bf16.mxu0 0
  %4853 = vmatpush1.bf16.msra.mxu0 %v2205
  %4854 = vmatprep.subr.bf16.mxu0 0
  %4855 = vmatpush2.bf16.msra.mxu0 0
  %4856 = vmatprep.subr.bf16.mxu0 0
  %4857 = vmatpush2.bf16.msra.mxu0 0
  %4858 = vmatprep.subr.bf16.mxu0 0
  %4859 = vmatpush2.bf16.msra.mxu0 0
  %4860 = vmatprep.subr.bf16.mxu0 0
  %4861 = vmatpush2.bf16.msra.mxu0 0
  %4862 = vmatprep.subr.bf16.mxu0 0
  %4863 = vmatpush2.bf16.msra.mxu0 0
  %4864 = vmatprep.subr.bf16.mxu0 0
  %4865 = vmatpush2.bf16.msra.mxu0 0
  %4866 = vmatprep.subr.bf16.mxu0 0
  %4867 = vmatpush2.bf16.msra.mxu0 0
  %4868 = vmatprep.subr.bf16.mxu0 0
  %4869 = vmatpush2.bf16.msra.mxu0 0
  %4870 = vmatprep.mubr.bf16.mxu0 0
  %4871 = vmatmul.mubr.bf16.gmra.mxu0 %v4836
  %v4872 = vpop.f32.mrf.mxu0
  %v4873 = vadd.f32 0.0, %v4872
  %v4874 = vpop.f32.mrf.mxu0
  %v4875 = vpop.f32.mrf.mxu0
  %v4876 = vadd.f32 0.0, %v4875
  %v4877 = vpop.f32.mrf.mxu0
  %4878 = vdwg.mxu0
  %4879 = vxpose.xlu0.c.b16.start [1/8] %v3729, 128
  %4880 = vxpose.xlu0.c.b16.cont [2/8] %v3857, 128
  %4881 = vxpose.xlu0.c.b16.cont [3/8] 0, 128
  %4882 = vxpose.xlu0.c.b16.cont [4/8] 0, 128
  %4883 = vxpose.xlu0.c.b16.cont [5/8] 0, 128
  %4884 = vxpose.xlu0.c.b16.cont [6/8] 0, 128
  %4885 = vxpose.xlu0.c.b16.cont [7/8] 0, 128
  %4886 = vxpose.xlu0.c.b16.end [8/8] 0, 128
  %v4887 = vpop.trf.xlu0
  %v4888 = vpop.trf.xlu0
  %v4889 = vpop.trf.xlu0
  %v4890 = vpop.trf.xlu0
  %v4891 = vpop.trf.xlu0
  %v4892 = vpop.trf.xlu0
  %v4893 = vpop.trf.xlu0
  %v4894 = vpop.trf.xlu0
  %v4896 = vsel %vm242, %v4887, 0
  %4898 = vmatprep.subr.bf16.mxu0 0
  %4899 = vmatpush1.bf16.msra.mxu0 0
  %4900 = vmatprep.subr.bf16.mxu0 0
  %4901 = vmatpush1.bf16.msra.mxu0 0
  %4902 = vmatprep.subr.bf16.mxu0 0
  %4903 = vmatpush1.bf16.msra.mxu0 0
  %4904 = vmatprep.subr.bf16.mxu0 0
  %4905 = vmatpush1.bf16.msra.mxu0 0
  %4906 = vmatprep.subr.bf16.mxu0 0
  %4907 = vmatpush1.bf16.msra.mxu0 0
  %4908 = vmatprep.subr.bf16.mxu0 0
  %4909 = vmatpush1.bf16.msra.mxu0 0
  %4910 = vmatprep.subr.bf16.mxu0 0
  %4911 = vmatpush1.bf16.msra.mxu0 %v2337
  %4912 = vmatprep.subr.bf16.mxu0 0
  %4913 = vmatpush1.bf16.msra.mxu0 %v2209
  %4914 = vmatprep.subr.bf16.mxu0 0
  %4915 = vmatpush2.bf16.msra.mxu0 0
  %4916 = vmatprep.subr.bf16.mxu0 0
  %4917 = vmatpush2.bf16.msra.mxu0 0
  %4918 = vmatprep.subr.bf16.mxu0 0
  %4919 = vmatpush2.bf16.msra.mxu0 0
  %4920 = vmatprep.subr.bf16.mxu0 0
  %4921 = vmatpush2.bf16.msra.mxu0 0
  %4922 = vmatprep.subr.bf16.mxu0 0
  %4923 = vmatpush2.bf16.msra.mxu0 0
  %4924 = vmatprep.subr.bf16.mxu0 0
  %4925 = vmatpush2.bf16.msra.mxu0 0
  %4926 = vmatprep.subr.bf16.mxu0 0
  %4927 = vmatpush2.bf16.msra.mxu0 0
  %4928 = vmatprep.subr.bf16.mxu0 0
  %4929 = vmatpush2.bf16.msra.mxu0 0
  %4930 = vmatprep.mubr.bf16.mxu0 0
  %4931 = vmatmul.mubr.bf16.gmra.mxu0 %v4896
  %v4932 = vpop.f32.mrf.mxu0
  %v4933 = vadd.f32 0.0, %v4932
  %v4934 = vpop.f32.mrf.mxu0
  %v4935 = vpop.f32.mrf.mxu0
  %v4936 = vadd.f32 0.0, %v4935
  %v4937 = vpop.f32.mrf.mxu0
  %4938 = vdwg.mxu0
  %4939 = vxpose.xlu0.c.b16.start [1/8] %v3733, 128
  %4940 = vxpose.xlu0.c.b16.cont [2/8] %v3861, 128
  %4941 = vxpose.xlu0.c.b16.cont [3/8] 0, 128
  %4942 = vxpose.xlu0.c.b16.cont [4/8] 0, 128
  %4943 = vxpose.xlu0.c.b16.cont [5/8] 0, 128
  %4944 = vxpose.xlu0.c.b16.cont [6/8] 0, 128
  %4945 = vxpose.xlu0.c.b16.cont [7/8] 0, 128
  %4946 = vxpose.xlu0.c.b16.end [8/8] 0, 128
  %v4947 = vpop.trf.xlu0
  %v4948 = vpop.trf.xlu0
  %v4949 = vpop.trf.xlu0
  %v4950 = vpop.trf.xlu0
  %v4951 = vpop.trf.xlu0
  %v4952 = vpop.trf.xlu0
  %v4953 = vpop.trf.xlu0
  %v4954 = vpop.trf.xlu0
  %v4956 = vsel %vm242, %v4947, 0
  %4958 = vmatprep.subr.bf16.mxu0 0
  %4959 = vmatpush1.bf16.msra.mxu0 0
  %4960 = vmatprep.subr.bf16.mxu0 0
  %4961 = vmatpush1.bf16.msra.mxu0 0
  %4962 = vmatprep.subr.bf16.mxu0 0
  %4963 = vmatpush1.bf16.msra.mxu0 0
  %4964 = vmatprep.subr.bf16.mxu0 0
  %4965 = vmatpush1.bf16.msra.mxu0 0
  %4966 = vmatprep.subr.bf16.mxu0 0
  %4967 = vmatpush1.bf16.msra.mxu0 0
  %4968 = vmatprep.subr.bf16.mxu0 0
  %4969 = vmatpush1.bf16.msra.mxu0 0
  %4970 = vmatprep.subr.bf16.mxu0 0
  %4971 = vmatpush1.bf16.msra.mxu0 %v2341
  %4972 = vmatprep.subr.bf16.mxu0 0
  %4973 = vmatpush1.bf16.msra.mxu0 %v2213
  %4974 = vmatprep.subr.bf16.mxu0 0
  %4975 = vmatpush2.bf16.msra.mxu0 0
  %4976 = vmatprep.subr.bf16.mxu0 0
  %4977 = vmatpush2.bf16.msra.mxu0 0
  %4978 = vmatprep.subr.bf16.mxu0 0
  %4979 = vmatpush2.bf16.msra.mxu0 0
  %4980 = vmatprep.subr.bf16.mxu0 0
  %4981 = vmatpush2.bf16.msra.mxu0 0
  %4982 = vmatprep.subr.bf16.mxu0 0
  %4983 = vmatpush2.bf16.msra.mxu0 0
  %4984 = vmatprep.subr.bf16.mxu0 0
  %4985 = vmatpush2.bf16.msra.mxu0 0
  %4986 = vmatprep.subr.bf16.mxu0 0
  %4987 = vmatpush2.bf16.msra.mxu0 0
  %4988 = vmatprep.subr.bf16.mxu0 0
  %4989 = vmatpush2.bf16.msra.mxu0 0
  %4990 = vmatprep.mubr.bf16.mxu0 0
  %4991 = vmatmul.mubr.bf16.gmra.mxu0 %v4956
  %v4992 = vpop.f32.mrf.mxu0
  %v4993 = vadd.f32 0.0, %v4992
  %v4994 = vpop.f32.mrf.mxu0
  %v4995 = vpop.f32.mrf.mxu0
  %v4996 = vadd.f32 0.0, %v4995
  %v4997 = vpop.f32.mrf.mxu0
  %4998 = vdwg.mxu0
  %4999 = vxpose.xlu0.c.b16.start [1/8] %v3737, 128
  %5000 = vxpose.xlu0.c.b16.cont [2/8] %v3865, 128
  %5001 = vxpose.xlu0.c.b16.cont [3/8] 0, 128
  %5002 = vxpose.xlu0.c.b16.cont [4/8] 0, 128
  %5003 = vxpose.xlu0.c.b16.cont [5/8] 0, 128
  %5004 = vxpose.xlu0.c.b16.cont [6/8] 0, 128
  %5005 = vxpose.xlu0.c.b16.cont [7/8] 0, 128
  %5006 = vxpose.xlu0.c.b16.end [8/8] 0, 128
  %v5007 = vpop.trf.xlu0
  %v5008 = vpop.trf.xlu0
  %v5009 = vpop.trf.xlu0
  %v5010 = vpop.trf.xlu0
  %v5011 = vpop.trf.xlu0
  %v5012 = vpop.trf.xlu0
  %v5013 = vpop.trf.xlu0
  %v5014 = vpop.trf.xlu0
  %v5016 = vsel %vm242, %v5007, 0
  %5018 = vmatprep.subr.bf16.mxu0 0
  %5019 = vmatpush1.bf16.msra.mxu0 0
  %5020 = vmatprep.subr.bf16.mxu0 0
  %5021 = vmatpush1.bf16.msra.mxu0 0
  %5022 = vmatprep.subr.bf16.mxu0 0
  %5023 = vmatpush1.bf16.msra.mxu0 0
  %5024 = vmatprep.subr.bf16.mxu0 0
  %5025 = vmatpush1.bf16.msra.mxu0 0
  %5026 = vmatprep.subr.bf16.mxu0 0
  %5027 = vmatpush1.bf16.msra.mxu0 0
  %5028 = vmatprep.subr.bf16.mxu0 0
  %5029 = vmatpush1.bf16.msra.mxu0 0
  %5030 = vmatprep.subr.bf16.mxu0 0
  %5031 = vmatpush1.bf16.msra.mxu0 %v2345
  %5032 = vmatprep.subr.bf16.mxu0 0
  %5033 = vmatpush1.bf16.msra.mxu0 %v2217
  %5034 = vmatprep.subr.bf16.mxu0 0
  %5035 = vmatpush2.bf16.msra.mxu0 0
  %5036 = vmatprep.subr.bf16.mxu0 0
  %5037 = vmatpush2.bf16.msra.mxu0 0
  %5038 = vmatprep.subr.bf16.mxu0 0
  %5039 = vmatpush2.bf16.msra.mxu0 0
  %5040 = vmatprep.subr.bf16.mxu0 0
  %5041 = vmatpush2.bf16.msra.mxu0 0
  %5042 = vmatprep.subr.bf16.mxu0 0
  %5043 = vmatpush2.bf16.msra.mxu0 0
  %5044 = vmatprep.subr.bf16.mxu0 0
  %5045 = vmatpush2.bf16.msra.mxu0 0
  %5046 = vmatprep.subr.bf16.mxu0 0
  %5047 = vmatpush2.bf16.msra.mxu0 0
  %5048 = vmatprep.subr.bf16.mxu0 0
  %5049 = vmatpush2.bf16.msra.mxu0 0
  %5050 = vmatprep.mubr.bf16.mxu0 0
  %5051 = vmatmul.mubr.bf16.gmra.mxu0 %v5016
  %v5052 = vpop.f32.mrf.mxu0
  %v5053 = vadd.f32 0.0, %v5052
  %v5054 = vpop.f32.mrf.mxu0
  %v5055 = vpop.f32.mrf.mxu0
  %v5056 = vadd.f32 0.0, %v5055
  %v5057 = vpop.f32.mrf.mxu0
  %5058 = vdwg.mxu0
  %5059 = vxpose.xlu0.c.b16.start [1/8] %v3741, 128
  %5060 = vxpose.xlu0.c.b16.cont [2/8] %v3869, 128
  %5061 = vxpose.xlu0.c.b16.cont [3/8] 0, 128
  %5062 = vxpose.xlu0.c.b16.cont [4/8] 0, 128
  %5063 = vxpose.xlu0.c.b16.cont [5/8] 0, 128
  %5064 = vxpose.xlu0.c.b16.cont [6/8] 0, 128
  %5065 = vxpose.xlu0.c.b16.cont [7/8] 0, 128
  %5066 = vxpose.xlu0.c.b16.end [8/8] 0, 128
  %v5067 = vpop.trf.xlu0
  %v5068 = vpop.trf.xlu0
  %v5069 = vpop.trf.xlu0
  %v5070 = vpop.trf.xlu0
  %v5071 = vpop.trf.xlu0
  %v5072 = vpop.trf.xlu0
  %v5073 = vpop.trf.xlu0
  %v5074 = vpop.trf.xlu0
  %v5076 = vsel %vm242, %v5067, 0
  %5078 = vmatprep.subr.bf16.mxu0 0
  %5079 = vmatpush1.bf16.msra.mxu0 0
  %5080 = vmatprep.subr.bf16.mxu0 0
  %5081 = vmatpush1.bf16.msra.mxu0 0
  %5082 = vmatprep.subr.bf16.mxu0 0
  %5083 = vmatpush1.bf16.msra.mxu0 0
  %5084 = vmatprep.subr.bf16.mxu0 0
  %5085 = vmatpush1.bf16.msra.mxu0 0
  %5086 = vmatprep.subr.bf16.mxu0 0
  %5087 = vmatpush1.bf16.msra.mxu0 0
  %5088 = vmatprep.subr.bf16.mxu0 0
  %5089 = vmatpush1.bf16.msra.mxu0 0
  %5090 = vmatprep.subr.bf16.mxu0 0
  %5091 = vmatpush1.bf16.msra.mxu0 %v2349
  %5092 = vmatprep.subr.bf16.mxu0 0
  %5093 = vmatpush1.bf16.msra.mxu0 %v2221
  %5094 = vmatprep.subr.bf16.mxu0 0
  %5095 = vmatpush2.bf16.msra.mxu0 0
  %5096 = vmatprep.subr.bf16.mxu0 0
  %5097 = vmatpush2.bf16.msra.mxu0 0
  %5098 = vmatprep.subr.bf16.mxu0 0
  %5099 = vmatpush2.bf16.msra.mxu0 0
  %5100 = vmatprep.subr.bf16.mxu0 0
  %5101 = vmatpush2.bf16.msra.mxu0 0
  %5102 = vmatprep.subr.bf16.mxu0 0
  %5103 = vmatpush2.bf16.msra.mxu0 0
  %5104 = vmatprep.subr.bf16.mxu0 0
  %5105 = vmatpush2.bf16.msra.mxu0 0
  %5106 = vmatprep.subr.bf16.mxu0 0
  %5107 = vmatpush2.bf16.msra.mxu0 0
  %5108 = vmatprep.subr.bf16.mxu0 0
  %5109 = vmatpush2.bf16.msra.mxu0 0
  %5110 = vmatprep.mubr.bf16.mxu0 0
  %5111 = vmatmul.mubr.bf16.gmra.mxu0 %v5076
  %v5112 = vpop.f32.mrf.mxu0
  %v5113 = vadd.f32 0.0, %v5112
  %v5114 = vpop.f32.mrf.mxu0
  %v5115 = vpop.f32.mrf.mxu0
  %v5116 = vadd.f32 0.0, %v5115
  %v5117 = vpop.f32.mrf.mxu0
  %5118 = vdwg.mxu0
  %5119 = vxpose.xlu0.c.b16.start [1/8] %v3745, 128
  %5120 = vxpose.xlu0.c.b16.cont [2/8] %v3873, 128
  %5121 = vxpose.xlu0.c.b16.cont [3/8] 0, 128
  %5122 = vxpose.xlu0.c.b16.cont [4/8] 0, 128
  %5123 = vxpose.xlu0.c.b16.cont [5/8] 0, 128
  %5124 = vxpose.xlu0.c.b16.cont [6/8] 0, 128
  %5125 = vxpose.xlu0.c.b16.cont [7/8] 0, 128
  %5126 = vxpose.xlu0.c.b16.end [8/8] 0, 128
  %v5127 = vpop.trf.xlu0
  %v5128 = vpop.trf.xlu0
  %v5129 = vpop.trf.xlu0
  %v5130 = vpop.trf.xlu0
  %v5131 = vpop.trf.xlu0
  %v5132 = vpop.trf.xlu0
  %v5133 = vpop.trf.xlu0
  %v5134 = vpop.trf.xlu0
  %v5136 = vsel %vm242, %v5127, 0
  %5138 = vmatprep.subr.bf16.mxu0 0
  %5139 = vmatpush1.bf16.msra.mxu0 0
  %5140 = vmatprep.subr.bf16.mxu0 0
  %5141 = vmatpush1.bf16.msra.mxu0 0
  %5142 = vmatprep.subr.bf16.mxu0 0
  %5143 = vmatpush1.bf16.msra.mxu0 0
  %5144 = vmatprep.subr.bf16.mxu0 0
  %5145 = vmatpush1.bf16.msra.mxu0 0
  %5146 = vmatprep.subr.bf16.mxu0 0
  %5147 = vmatpush1.bf16.msra.mxu0 0
  %5148 = vmatprep.subr.bf16.mxu0 0
  %5149 = vmatpush1.bf16.msra.mxu0 0
  %5150 = vmatprep.subr.bf16.mxu0 0
  %5151 = vmatpush1.bf16.msra.mxu0 %v2353
  %5152 = vmatprep.subr.bf16.mxu0 0
  %5153 = vmatpush1.bf16.msra.mxu0 %v2225
  %5154 = vmatprep.subr.bf16.mxu0 0
  %5155 = vmatpush2.bf16.msra.mxu0 0
  %5156 = vmatprep.subr.bf16.mxu0 0
  %5157 = vmatpush2.bf16.msra.mxu0 0
  %5158 = vmatprep.subr.bf16.mxu0 0
  %5159 = vmatpush2.bf16.msra.mxu0 0
  %5160 = vmatprep.subr.bf16.mxu0 0
  %5161 = vmatpush2.bf16.msra.mxu0 0
  %5162 = vmatprep.subr.bf16.mxu0 0
  %5163 = vmatpush2.bf16.msra.mxu0 0
  %5164 = vmatprep.subr.bf16.mxu0 0
  %5165 = vmatpush2.bf16.msra.mxu0 0
  %5166 = vmatprep.subr.bf16.mxu0 0
  %5167 = vmatpush2.bf16.msra.mxu0 0
  %5168 = vmatprep.subr.bf16.mxu0 0
  %5169 = vmatpush2.bf16.msra.mxu0 0
  %5170 = vmatprep.mubr.bf16.mxu0 0
  %5171 = vmatmul.mubr.bf16.gmra.mxu0 %v5136
  %v5172 = vpop.f32.mrf.mxu0
  %v5173 = vadd.f32 0.0, %v5172
  %v5174 = vpop.f32.mrf.mxu0
  %v5175 = vpop.f32.mrf.mxu0
  %v5176 = vadd.f32 0.0, %v5175
  %v5177 = vpop.f32.mrf.mxu0
  %5178 = vdwg.mxu0
  %5179 = vxpose.xlu0.c.b16.start [1/8] %v3749, 128
  %5180 = vxpose.xlu0.c.b16.cont [2/8] %v3877, 128
  %5181 = vxpose.xlu0.c.b16.cont [3/8] 0, 128
  %5182 = vxpose.xlu0.c.b16.cont [4/8] 0, 128
  %5183 = vxpose.xlu0.c.b16.cont [5/8] 0, 128
  %5184 = vxpose.xlu0.c.b16.cont [6/8] 0, 128
  %5185 = vxpose.xlu0.c.b16.cont [7/8] 0, 128
  %5186 = vxpose.xlu0.c.b16.end [8/8] 0, 128
  %v5187 = vpop.trf.xlu0
  %v5188 = vpop.trf.xlu0
  %v5189 = vpop.trf.xlu0
  %v5190 = vpop.trf.xlu0
  %v5191 = vpop.trf.xlu0
  %v5192 = vpop.trf.xlu0
  %v5193 = vpop.trf.xlu0
  %v5194 = vpop.trf.xlu0
  %v5196 = vsel %vm242, %v5187, 0
  %5198 = vmatprep.subr.bf16.mxu0 0
  %5199 = vmatpush1.bf16.msra.mxu0 0
  %5200 = vmatprep.subr.bf16.mxu0 0
  %5201 = vmatpush1.bf16.msra.mxu0 0
  %5202 = vmatprep.subr.bf16.mxu0 0
  %5203 = vmatpush1.bf16.msra.mxu0 0
  %5204 = vmatprep.subr.bf16.mxu0 0
  %5205 = vmatpush1.bf16.msra.mxu0 0
  %5206 = vmatprep.subr.bf16.mxu0 0
  %5207 = vmatpush1.bf16.msra.mxu0 0
  %5208 = vmatprep.subr.bf16.mxu0 0
  %5209 = vmatpush1.bf16.msra.mxu0 0
  %5210 = vmatprep.subr.bf16.mxu0 0
  %5211 = vmatpush1.bf16.msra.mxu0 %v2357
  %5212 = vmatprep.subr.bf16.mxu0 0
  %5213 = vmatpush1.bf16.msra.mxu0 %v2229
  %5214 = vmatprep.subr.bf16.mxu0 0
  %5215 = vmatpush2.bf16.msra.mxu0 0
  %5216 = vmatprep.subr.bf16.mxu0 0
  %5217 = vmatpush2.bf16.msra.mxu0 0
  %5218 = vmatprep.subr.bf16.mxu0 0
  %5219 = vmatpush2.bf16.msra.mxu0 0
  %5220 = vmatprep.subr.bf16.mxu0 0
  %5221 = vmatpush2.bf16.msra.mxu0 0
  %5222 = vmatprep.subr.bf16.mxu0 0
  %5223 = vmatpush2.bf16.msra.mxu0 0
  %5224 = vmatprep.subr.bf16.mxu0 0
  %5225 = vmatpush2.bf16.msra.mxu0 0
  %5226 = vmatprep.subr.bf16.mxu0 0
  %5227 = vmatpush2.bf16.msra.mxu0 0
  %5228 = vmatprep.subr.bf16.mxu0 0
  %5229 = vmatpush2.bf16.msra.mxu0 0
  %5230 = vmatprep.mubr.bf16.mxu0 0
  %5231 = vmatmul.mubr.bf16.gmra.mxu0 %v5196
  %v5232 = vpop.f32.mrf.mxu0
  %v5233 = vadd.f32 0.0, %v5232
  %v5234 = vpop.f32.mrf.mxu0
  %v5235 = vpop.f32.mrf.mxu0
  %v5236 = vadd.f32 0.0, %v5235
  %v5237 = vpop.f32.mrf.mxu0
  %5238 = vdwg.mxu0
  %5239 = vxpose.xlu0.c.b16.start [1/8] %v3753, 128
  %5240 = vxpose.xlu0.c.b16.cont [2/8] %v3881, 128
  %5241 = vxpose.xlu0.c.b16.cont [3/8] 0, 128
  %5242 = vxpose.xlu0.c.b16.cont [4/8] 0, 128
  %5243 = vxpose.xlu0.c.b16.cont [5/8] 0, 128
  %5244 = vxpose.xlu0.c.b16.cont [6/8] 0, 128
  %5245 = vxpose.xlu0.c.b16.cont [7/8] 0, 128
  %5246 = vxpose.xlu0.c.b16.end [8/8] 0, 128
  %v5247 = vpop.trf.xlu0
  %v5248 = vpop.trf.xlu0
  %v5249 = vpop.trf.xlu0
  %v5250 = vpop.trf.xlu0
  %v5251 = vpop.trf.xlu0
  %v5252 = vpop.trf.xlu0
  %v5253 = vpop.trf.xlu0
  %v5254 = vpop.trf.xlu0
  %v5256 = vsel %vm242, %v5247, 0
  %5258 = vmatprep.subr.bf16.mxu0 0
  %5259 = vmatpush1.bf16.msra.mxu0 0
  %5260 = vmatprep.subr.bf16.mxu0 0
  %5261 = vmatpush1.bf16.msra.mxu0 0
  %5262 = vmatprep.subr.bf16.mxu0 0
  %5263 = vmatpush1.bf16.msra.mxu0 0
  %5264 = vmatprep.subr.bf16.mxu0 0
  %5265 = vmatpush1.bf16.msra.mxu0 0
  %5266 = vmatprep.subr.bf16.mxu0 0
  %5267 = vmatpush1.bf16.msra.mxu0 0
  %5268 = vmatprep.subr.bf16.mxu0 0
  %5269 = vmatpush1.bf16.msra.mxu0 0
  %5270 = vmatprep.subr.bf16.mxu0 0
  %5271 = vmatpush1.bf16.msra.mxu0 %v2361
  %5272 = vmatprep.subr.bf16.mxu0 0
  %5273 = vmatpush1.bf16.msra.mxu0 %v2233
  %5274 = vmatprep.subr.bf16.mxu0 0
  %5275 = vmatpush2.bf16.msra.mxu0 0
  %5276 = vmatprep.subr.bf16.mxu0 0
  %5277 = vmatpush2.bf16.msra.mxu0 0
  %5278 = vmatprep.subr.bf16.mxu0 0
  %5279 = vmatpush2.bf16.msra.mxu0 0
  %5280 = vmatprep.subr.bf16.mxu0 0
  %5281 = vmatpush2.bf16.msra.mxu0 0
  %5282 = vmatprep.subr.bf16.mxu0 0
  %5283 = vmatpush2.bf16.msra.mxu0 0
  %5284 = vmatprep.subr.bf16.mxu0 0
  %5285 = vmatpush2.bf16.msra.mxu0 0
  %5286 = vmatprep.subr.bf16.mxu0 0
  %5287 = vmatpush2.bf16.msra.mxu0 0
  %5288 = vmatprep.subr.bf16.mxu0 0
  %5289 = vmatpush2.bf16.msra.mxu0 0
  %5290 = vmatprep.mubr.bf16.mxu0 0
  %5291 = vmatmul.mubr.bf16.gmra.mxu0 %v5256
  %v5292 = vpop.f32.mrf.mxu0
  %v5293 = vadd.f32 0.0, %v5292
  %v5294 = vpop.f32.mrf.mxu0
  %v5295 = vpop.f32.mrf.mxu0
  %v5296 = vadd.f32 0.0, %v5295
  %v5297 = vpop.f32.mrf.mxu0
  %5298 = vdwg.mxu0
  %5299 = vxpose.xlu0.c.b16.start [1/8] %v3757, 128
  %5300 = vxpose.xlu0.c.b16.cont [2/8] %v3885, 128
  %5301 = vxpose.xlu0.c.b16.cont [3/8] 0, 128
  %5302 = vxpose.xlu0.c.b16.cont [4/8] 0, 128
  %5303 = vxpose.xlu0.c.b16.cont [5/8] 0, 128
  %5304 = vxpose.xlu0.c.b16.cont [6/8] 0, 128
  %5305 = vxpose.xlu0.c.b16.cont [7/8] 0, 128
  %5306 = vxpose.xlu0.c.b16.end [8/8] 0, 128
  %v5307 = vpop.trf.xlu0
  %v5308 = vpop.trf.xlu0
  %v5309 = vpop.trf.xlu0
  %v5310 = vpop.trf.xlu0
  %v5311 = vpop.trf.xlu0
  %v5312 = vpop.trf.xlu0
  %v5313 = vpop.trf.xlu0
  %v5314 = vpop.trf.xlu0
  %v5316 = vsel %vm242, %v5307, 0
  %5318 = vmatprep.subr.bf16.mxu0 0
  %5319 = vmatpush1.bf16.msra.mxu0 0
  %5320 = vmatprep.subr.bf16.mxu0 0
  %5321 = vmatpush1.bf16.msra.mxu0 0
  %5322 = vmatprep.subr.bf16.mxu0 0
  %5323 = vmatpush1.bf16.msra.mxu0 0
  %5324 = vmatprep.subr.bf16.mxu0 0
  %5325 = vmatpush1.bf16.msra.mxu0 0
  %5326 = vmatprep.subr.bf16.mxu0 0
  %5327 = vmatpush1.bf16.msra.mxu0 0
  %5328 = vmatprep.subr.bf16.mxu0 0
  %5329 = vmatpush1.bf16.msra.mxu0 0
  %5330 = vmatprep.subr.bf16.mxu0 0
  %5331 = vmatpush1.bf16.msra.mxu0 %v2365
  %5332 = vmatprep.subr.bf16.mxu0 0
  %5333 = vmatpush1.bf16.msra.mxu0 %v2237
  %5334 = vmatprep.subr.bf16.mxu0 0
  %5335 = vmatpush2.bf16.msra.mxu0 0
  %5336 = vmatprep.subr.bf16.mxu0 0
  %5337 = vmatpush2.bf16.msra.mxu0 0
  %5338 = vmatprep.subr.bf16.mxu0 0
  %5339 = vmatpush2.bf16.msra.mxu0 0
  %5340 = vmatprep.subr.bf16.mxu0 0
  %5341 = vmatpush2.bf16.msra.mxu0 0
  %5342 = vmatprep.subr.bf16.mxu0 0
  %5343 = vmatpush2.bf16.msra.mxu0 0
  %5344 = vmatprep.subr.bf16.mxu0 0
  %5345 = vmatpush2.bf16.msra.mxu0 0
  %5346 = vmatprep.subr.bf16.mxu0 0
  %5347 = vmatpush2.bf16.msra.mxu0 0
  %5348 = vmatprep.subr.bf16.mxu0 0
  %5349 = vmatpush2.bf16.msra.mxu0 0
  %5350 = vmatprep.mubr.bf16.mxu0 0
  %5351 = vmatmul.mubr.bf16.gmra.mxu0 %v5316
  %v5352 = vpop.f32.mrf.mxu0
  %v5353 = vadd.f32 0.0, %v5352
  %v5354 = vpop.f32.mrf.mxu0
  %v5355 = vpop.f32.mrf.mxu0
  %v5356 = vadd.f32 0.0, %v5355
  %v5357 = vpop.f32.mrf.mxu0
  %5358 = vdwg.mxu0
  %5359 = vxpose.xlu0.c.b16.start [1/8] %v3761, 128
  %5360 = vxpose.xlu0.c.b16.cont [2/8] %v3889, 128
  %5361 = vxpose.xlu0.c.b16.cont [3/8] 0, 128
  %5362 = vxpose.xlu0.c.b16.cont [4/8] 0, 128
  %5363 = vxpose.xlu0.c.b16.cont [5/8] 0, 128
  %5364 = vxpose.xlu0.c.b16.cont [6/8] 0, 128
  %5365 = vxpose.xlu0.c.b16.cont [7/8] 0, 128
  %5366 = vxpose.xlu0.c.b16.end [8/8] 0, 128
  %v5367 = vpop.trf.xlu0
  %v5368 = vpop.trf.xlu0
  %v5369 = vpop.trf.xlu0
  %v5370 = vpop.trf.xlu0
  %v5371 = vpop.trf.xlu0
  %v5372 = vpop.trf.xlu0
  %v5373 = vpop.trf.xlu0
  %v5374 = vpop.trf.xlu0
  %v5376 = vsel %vm242, %v5367, 0
  %5378 = vmatprep.subr.bf16.mxu0 0
  %5379 = vmatpush1.bf16.msra.mxu0 0
  %5380 = vmatprep.subr.bf16.mxu0 0
  %5381 = vmatpush1.bf16.msra.mxu0 0
  %5382 = vmatprep.subr.bf16.mxu0 0
  %5383 = vmatpush1.bf16.msra.mxu0 0
  %5384 = vmatprep.subr.bf16.mxu0 0
  %5385 = vmatpush1.bf16.msra.mxu0 0
  %5386 = vmatprep.subr.bf16.mxu0 0
  %5387 = vmatpush1.bf16.msra.mxu0 0
  %5388 = vmatprep.subr.bf16.mxu0 0
  %5389 = vmatpush1.bf16.msra.mxu0 0
  %5390 = vmatprep.subr.bf16.mxu0 0
  %5391 = vmatpush1.bf16.msra.mxu0 %v2369
  %5392 = vmatprep.subr.bf16.mxu0 0
  %5393 = vmatpush1.bf16.msra.mxu0 %v2241
  %5394 = vmatprep.subr.bf16.mxu0 0
  %5395 = vmatpush2.bf16.msra.mxu0 0
  %5396 = vmatprep.subr.bf16.mxu0 0
  %5397 = vmatpush2.bf16.msra.mxu0 0
  %5398 = vmatprep.subr.bf16.mxu0 0
  %5399 = vmatpush2.bf16.msra.mxu0 0
  %5400 = vmatprep.subr.bf16.mxu0 0
  %5401 = vmatpush2.bf16.msra.mxu0 0
  %5402 = vmatprep.subr.bf16.mxu0 0
  %5403 = vmatpush2.bf16.msra.mxu0 0
  %5404 = vmatprep.subr.bf16.mxu0 0
  %5405 = vmatpush2.bf16.msra.mxu0 0
  %5406 = vmatprep.subr.bf16.mxu0 0
  %5407 = vmatpush2.bf16.msra.mxu0 0
  %5408 = vmatprep.subr.bf16.mxu0 0
  %5409 = vmatpush2.bf16.msra.mxu0 0
  %5410 = vmatprep.mubr.bf16.mxu0 0
  %5411 = vmatmul.mubr.bf16.gmra.mxu0 %v5376
  %v5412 = vpop.f32.mrf.mxu0
  %v5413 = vadd.f32 0.0, %v5412
  %v5414 = vpop.f32.mrf.mxu0
  %v5415 = vpop.f32.mrf.mxu0
  %v5416 = vadd.f32 0.0, %v5415
  %v5417 = vpop.f32.mrf.mxu0
  %5418 = vdwg.mxu0
  %5419 = vxpose.xlu0.c.b16.start [1/8] %v3765, 128
  %5420 = vxpose.xlu0.c.b16.cont [2/8] %v3893, 128
  %5421 = vxpose.xlu0.c.b16.cont [3/8] 0, 128
  %5422 = vxpose.xlu0.c.b16.cont [4/8] 0, 128
  %5423 = vxpose.xlu0.c.b16.cont [5/8] 0, 128
  %5424 = vxpose.xlu0.c.b16.cont [6/8] 0, 128
  %5425 = vxpose.xlu0.c.b16.cont [7/8] 0, 128
  %5426 = vxpose.xlu0.c.b16.end [8/8] 0, 128
  %v5427 = vpop.trf.xlu0
  %v5428 = vpop.trf.xlu0
  %v5429 = vpop.trf.xlu0
  %v5430 = vpop.trf.xlu0
  %v5431 = vpop.trf.xlu0
  %v5432 = vpop.trf.xlu0
  %v5433 = vpop.trf.xlu0
  %v5434 = vpop.trf.xlu0
  %v5436 = vsel %vm242, %v5427, 0
  %5438 = vmatprep.subr.bf16.mxu0 0
  %5439 = vmatpush1.bf16.msra.mxu0 0
  %5440 = vmatprep.subr.bf16.mxu0 0
  %5441 = vmatpush1.bf16.msra.mxu0 0
  %5442 = vmatprep.subr.bf16.mxu0 0
  %5443 = vmatpush1.bf16.msra.mxu0 0
  %5444 = vmatprep.subr.bf16.mxu0 0
  %5445 = vmatpush1.bf16.msra.mxu0 0
  %5446 = vmatprep.subr.bf16.mxu0 0
  %5447 = vmatpush1.bf16.msra.mxu0 0
  %5448 = vmatprep.subr.bf16.mxu0 0
  %5449 = vmatpush1.bf16.msra.mxu0 0
  %5450 = vmatprep.subr.bf16.mxu0 0
  %5451 = vmatpush1.bf16.msra.mxu0 %v2373
  %5452 = vmatprep.subr.bf16.mxu0 0
  %5453 = vmatpush1.bf16.msra.mxu0 %v2245
  %5454 = vmatprep.subr.bf16.mxu0 0
  %5455 = vmatpush2.bf16.msra.mxu0 0
  %5456 = vmatprep.subr.bf16.mxu0 0
  %5457 = vmatpush2.bf16.msra.mxu0 0
  %5458 = vmatprep.subr.bf16.mxu0 0
  %5459 = vmatpush2.bf16.msra.mxu0 0
  %5460 = vmatprep.subr.bf16.mxu0 0
  %5461 = vmatpush2.bf16.msra.mxu0 0
  %5462 = vmatprep.subr.bf16.mxu0 0
  %5463 = vmatpush2.bf16.msra.mxu0 0
  %5464 = vmatprep.subr.bf16.mxu0 0
  %5465 = vmatpush2.bf16.msra.mxu0 0
  %5466 = vmatprep.subr.bf16.mxu0 0
  %5467 = vmatpush2.bf16.msra.mxu0 0
  %5468 = vmatprep.subr.bf16.mxu0 0
  %5469 = vmatpush2.bf16.msra.mxu0 0
  %5470 = vmatprep.mubr.bf16.mxu0 0
  %5471 = vmatmul.mubr.bf16.gmra.mxu0 %v5436
  %v5472 = vpop.f32.mrf.mxu0
  %v5473 = vadd.f32 0.0, %v5472
  %v5474 = vpop.f32.mrf.mxu0
  %v5475 = vpop.f32.mrf.mxu0
  %v5476 = vadd.f32 0.0, %v5475
  %v5477 = vpop.f32.mrf.mxu0
  %5478 = vdwg.mxu0
  %5479 = vxpose.xlu0.c.b16.start [1/8] %v3769, 128
  %5480 = vxpose.xlu0.c.b16.cont [2/8] %v3897, 128
  %5481 = vxpose.xlu0.c.b16.cont [3/8] 0, 128
  %5482 = vxpose.xlu0.c.b16.cont [4/8] 0, 128
  %5483 = vxpose.xlu0.c.b16.cont [5/8] 0, 128
  %5484 = vxpose.xlu0.c.b16.cont [6/8] 0, 128
  %5485 = vxpose.xlu0.c.b16.cont [7/8] 0, 128
  %5486 = vxpose.xlu0.c.b16.end [8/8] 0, 128
  %v5487 = vpop.trf.xlu0
  %v5488 = vpop.trf.xlu0
  %v5489 = vpop.trf.xlu0
  %v5490 = vpop.trf.xlu0
  %v5491 = vpop.trf.xlu0
  %v5492 = vpop.trf.xlu0
  %v5493 = vpop.trf.xlu0
  %v5494 = vpop.trf.xlu0
  %v5496 = vsel %vm242, %v5487, 0
  %5498 = vmatprep.subr.bf16.mxu0 0
  %5499 = vmatpush1.bf16.msra.mxu0 0
  %5500 = vmatprep.subr.bf16.mxu0 0
  %5501 = vmatpush1.bf16.msra.mxu0 0
  %5502 = vmatprep.subr.bf16.mxu0 0
  %5503 = vmatpush1.bf16.msra.mxu0 0
  %5504 = vmatprep.subr.bf16.mxu0 0
  %5505 = vmatpush1.bf16.msra.mxu0 0
  %5506 = vmatprep.subr.bf16.mxu0 0
  %5507 = vmatpush1.bf16.msra.mxu0 0
  %5508 = vmatprep.subr.bf16.mxu0 0
  %5509 = vmatpush1.bf16.msra.mxu0 0
  %5510 = vmatprep.subr.bf16.mxu0 0
  %5511 = vmatpush1.bf16.msra.mxu0 %v2377
  %5512 = vmatprep.subr.bf16.mxu0 0
  %5513 = vmatpush1.bf16.msra.mxu0 %v2249
  %5514 = vmatprep.subr.bf16.mxu0 0
  %5515 = vmatpush2.bf16.msra.mxu0 0
  %5516 = vmatprep.subr.bf16.mxu0 0
  %5517 = vmatpush2.bf16.msra.mxu0 0
  %5518 = vmatprep.subr.bf16.mxu0 0
  %5519 = vmatpush2.bf16.msra.mxu0 0
  %5520 = vmatprep.subr.bf16.mxu0 0
  %5521 = vmatpush2.bf16.msra.mxu0 0
  %5522 = vmatprep.subr.bf16.mxu0 0
  %5523 = vmatpush2.bf16.msra.mxu0 0
  %5524 = vmatprep.subr.bf16.mxu0 0
  %5525 = vmatpush2.bf16.msra.mxu0 0
  %5526 = vmatprep.subr.bf16.mxu0 0
  %5527 = vmatpush2.bf16.msra.mxu0 0
  %5528 = vmatprep.subr.bf16.mxu0 0
  %5529 = vmatpush2.bf16.msra.mxu0 0
  %5530 = vmatprep.mubr.bf16.mxu0 0
  %5531 = vmatmul.mubr.bf16.gmra.mxu0 %v5496
  %v5532 = vpop.f32.mrf.mxu0
  %v5533 = vadd.f32 0.0, %v5532
  %v5534 = vpop.f32.mrf.mxu0
  %v5535 = vpop.f32.mrf.mxu0
  %v5536 = vadd.f32 0.0, %v5535
  %v5537 = vpop.f32.mrf.mxu0
  %5538 = vdwg.mxu0
  %5539 = vxpose.xlu0.c.b16.start [1/8] %v3773, 128
  %5540 = vxpose.xlu0.c.b16.cont [2/8] %v3901, 128
  %5541 = vxpose.xlu0.c.b16.cont [3/8] 0, 128
  %5542 = vxpose.xlu0.c.b16.cont [4/8] 0, 128
  %5543 = vxpose.xlu0.c.b16.cont [5/8] 0, 128
  %5544 = vxpose.xlu0.c.b16.cont [6/8] 0, 128
  %5545 = vxpose.xlu0.c.b16.cont [7/8] 0, 128
  %5546 = vxpose.xlu0.c.b16.end [8/8] 0, 128
  %v5547 = vpop.trf.xlu0
  %v5548 = vpop.trf.xlu0
  %v5549 = vpop.trf.xlu0
  %v5550 = vpop.trf.xlu0
  %v5551 = vpop.trf.xlu0
  %v5552 = vpop.trf.xlu0
  %v5553 = vpop.trf.xlu0
  %v5554 = vpop.trf.xlu0
  %v5556 = vsel %vm242, %v5547, 0
  %5558 = vmatprep.subr.bf16.mxu0 0
  %5559 = vmatpush1.bf16.msra.mxu0 0
  %5560 = vmatprep.subr.bf16.mxu0 0
  %5561 = vmatpush1.bf16.msra.mxu0 0
  %5562 = vmatprep.subr.bf16.mxu0 0
  %5563 = vmatpush1.bf16.msra.mxu0 0
  %5564 = vmatprep.subr.bf16.mxu0 0
  %5565 = vmatpush1.bf16.msra.mxu0 0
  %5566 = vmatprep.subr.bf16.mxu0 0
  %5567 = vmatpush1.bf16.msra.mxu0 0
  %5568 = vmatprep.subr.bf16.mxu0 0
  %5569 = vmatpush1.bf16.msra.mxu0 0
  %5570 = vmatprep.subr.bf16.mxu0 0
  %5571 = vmatpush1.bf16.msra.mxu0 %v2381
  %5572 = vmatprep.subr.bf16.mxu0 0
  %5573 = vmatpush1.bf16.msra.mxu0 %v2253
  %5574 = vmatprep.subr.bf16.mxu0 0
  %5575 = vmatpush2.bf16.msra.mxu0 0
  %5576 = vmatprep.subr.bf16.mxu0 0
  %5577 = vmatpush2.bf16.msra.mxu0 0
  %5578 = vmatprep.subr.bf16.mxu0 0
  %5579 = vmatpush2.bf16.msra.mxu0 0
  %5580 = vmatprep.subr.bf16.mxu0 0
  %5581 = vmatpush2.bf16.msra.mxu0 0
  %5582 = vmatprep.subr.bf16.mxu0 0
  %5583 = vmatpush2.bf16.msra.mxu0 0
  %5584 = vmatprep.subr.bf16.mxu0 0
  %5585 = vmatpush2.bf16.msra.mxu0 0
  %5586 = vmatprep.subr.bf16.mxu0 0
  %5587 = vmatpush2.bf16.msra.mxu0 0
  %5588 = vmatprep.subr.bf16.mxu0 0
  %5589 = vmatpush2.bf16.msra.mxu0 0
  %5590 = vmatprep.mubr.bf16.mxu0 0
  %5591 = vmatmul.mubr.bf16.gmra.mxu0 %v5556
  %v5592 = vpop.f32.mrf.mxu0
  %v5593 = vadd.f32 0.0, %v5592
  %v5594 = vpop.f32.mrf.mxu0
  %v5595 = vpop.f32.mrf.mxu0
  %v5596 = vadd.f32 0.0, %v5595
  %v5597 = vpop.f32.mrf.mxu0
  %5598 = vdwg.mxu0
  %5599 = vxpose.xlu0.c.b16.start [1/8] %v3777, 128
  %5600 = vxpose.xlu0.c.b16.cont [2/8] %v3905, 128
  %5601 = vxpose.xlu0.c.b16.cont [3/8] 0, 128
  %5602 = vxpose.xlu0.c.b16.cont [4/8] 0, 128
  %5603 = vxpose.xlu0.c.b16.cont [5/8] 0, 128
  %5604 = vxpose.xlu0.c.b16.cont [6/8] 0, 128
  %5605 = vxpose.xlu0.c.b16.cont [7/8] 0, 128
  %5606 = vxpose.xlu0.c.b16.end [8/8] 0, 128
  %v5607 = vpop.trf.xlu0
  %v5608 = vpop.trf.xlu0
  %v5609 = vpop.trf.xlu0
  %v5610 = vpop.trf.xlu0
  %v5611 = vpop.trf.xlu0
  %v5612 = vpop.trf.xlu0
  %v5613 = vpop.trf.xlu0
  %v5614 = vpop.trf.xlu0
  %v5616 = vsel %vm242, %v5607, 0
  %5618 = vmatprep.subr.bf16.mxu0 0
  %5619 = vmatpush1.bf16.msra.mxu0 0
  %5620 = vmatprep.subr.bf16.mxu0 0
  %5621 = vmatpush1.bf16.msra.mxu0 0
  %5622 = vmatprep.subr.bf16.mxu0 0
  %5623 = vmatpush1.bf16.msra.mxu0 0
  %5624 = vmatprep.subr.bf16.mxu0 0
  %5625 = vmatpush1.bf16.msra.mxu0 0
  %5626 = vmatprep.subr.bf16.mxu0 0
  %5627 = vmatpush1.bf16.msra.mxu0 0
  %5628 = vmatprep.subr.bf16.mxu0 0
  %5629 = vmatpush1.bf16.msra.mxu0 0
  %5630 = vmatprep.subr.bf16.mxu0 0
  %5631 = vmatpush1.bf16.msra.mxu0 %v2385
  %5632 = vmatprep.subr.bf16.mxu0 0
  %5633 = vmatpush1.bf16.msra.mxu0 %v2257
  %5634 = vmatprep.subr.bf16.mxu0 0
  %5635 = vmatpush2.bf16.msra.mxu0 0
  %5636 = vmatprep.subr.bf16.mxu0 0
  %5637 = vmatpush2.bf16.msra.mxu0 0
  %5638 = vmatprep.subr.bf16.mxu0 0
  %5639 = vmatpush2.bf16.msra.mxu0 0
  %5640 = vmatprep.subr.bf16.mxu0 0
  %5641 = vmatpush2.bf16.msra.mxu0 0
  %5642 = vmatprep.subr.bf16.mxu0 0
  %5643 = vmatpush2.bf16.msra.mxu0 0
  %5644 = vmatprep.subr.bf16.mxu0 0
  %5645 = vmatpush2.bf16.msra.mxu0 0
  %5646 = vmatprep.subr.bf16.mxu0 0
  %5647 = vmatpush2.bf16.msra.mxu0 0
  %5648 = vmatprep.subr.bf16.mxu0 0
  %5649 = vmatpush2.bf16.msra.mxu0 0
  %5650 = vmatprep.mubr.bf16.mxu0 0
  %5651 = vmatmul.mubr.bf16.gmra.mxu0 %v5616
  %v5652 = vpop.f32.mrf.mxu0
  %v5653 = vadd.f32 0.0, %v5652
  %v5654 = vpop.f32.mrf.mxu0
  %v5655 = vpop.f32.mrf.mxu0
  %v5656 = vadd.f32 0.0, %v5655
  %v5657 = vpop.f32.mrf.mxu0
  %5658 = vdwg.mxu0
  %5659 = vxpose.xlu0.c.b16.start [1/8] %v3781, 128
  %5660 = vxpose.xlu0.c.b16.cont [2/8] %v3909, 128
  %5661 = vxpose.xlu0.c.b16.cont [3/8] 0, 128
  %5662 = vxpose.xlu0.c.b16.cont [4/8] 0, 128
  %5663 = vxpose.xlu0.c.b16.cont [5/8] 0, 128
  %5664 = vxpose.xlu0.c.b16.cont [6/8] 0, 128
  %5665 = vxpose.xlu0.c.b16.cont [7/8] 0, 128
  %5666 = vxpose.xlu0.c.b16.end [8/8] 0, 128
  %v5667 = vpop.trf.xlu0
  %v5668 = vpop.trf.xlu0
  %v5669 = vpop.trf.xlu0
  %v5670 = vpop.trf.xlu0
  %v5671 = vpop.trf.xlu0
  %v5672 = vpop.trf.xlu0
  %v5673 = vpop.trf.xlu0
  %v5674 = vpop.trf.xlu0
  %v5676 = vsel %vm242, %v5667, 0
  %5678 = vmatprep.subr.bf16.mxu0 0
  %5679 = vmatpush1.bf16.msra.mxu0 0
  %5680 = vmatprep.subr.bf16.mxu0 0
  %5681 = vmatpush1.bf16.msra.mxu0 0
  %5682 = vmatprep.subr.bf16.mxu0 0
  %5683 = vmatpush1.bf16.msra.mxu0 0
  %5684 = vmatprep.subr.bf16.mxu0 0
  %5685 = vmatpush1.bf16.msra.mxu0 0
  %5686 = vmatprep.subr.bf16.mxu0 0
  %5687 = vmatpush1.bf16.msra.mxu0 0
  %5688 = vmatprep.subr.bf16.mxu0 0
  %5689 = vmatpush1.bf16.msra.mxu0 0
  %5690 = vmatprep.subr.bf16.mxu0 0
  %5691 = vmatpush1.bf16.msra.mxu0 %v2389
  %5692 = vmatprep.subr.bf16.mxu0 0
  %5693 = vmatpush1.bf16.msra.mxu0 %v2261
  %5694 = vmatprep.subr.bf16.mxu0 0
  %5695 = vmatpush2.bf16.msra.mxu0 0
  %5696 = vmatprep.subr.bf16.mxu0 0
  %5697 = vmatpush2.bf16.msra.mxu0 0
  %5698 = vmatprep.subr.bf16.mxu0 0
  %5699 = vmatpush2.bf16.msra.mxu0 0
  %5700 = vmatprep.subr.bf16.mxu0 0
  %5701 = vmatpush2.bf16.msra.mxu0 0
  %5702 = vmatprep.subr.bf16.mxu0 0
  %5703 = vmatpush2.bf16.msra.mxu0 0
  %5704 = vmatprep.subr.bf16.mxu0 0
  %5705 = vmatpush2.bf16.msra.mxu0 0
  %5706 = vmatprep.subr.bf16.mxu0 0
  %5707 = vmatpush2.bf16.msra.mxu0 0
  %5708 = vmatprep.subr.bf16.mxu0 0
  %5709 = vmatpush2.bf16.msra.mxu0 0
  %5710 = vmatprep.mubr.bf16.mxu0 0
  %5711 = vmatmul.mubr.bf16.gmra.mxu0 %v5676
  %v5712 = vpop.f32.mrf.mxu0
  %v5713 = vadd.f32 0.0, %v5712
  %v5714 = vpop.f32.mrf.mxu0
  %v5715 = vpop.f32.mrf.mxu0
  %v5716 = vadd.f32 0.0, %v5715
  %v5717 = vpop.f32.mrf.mxu0
  %5718 = vdwg.mxu0
  %5719 = vxpose.xlu0.c.b16.start [1/8] %v3785, 128
  %5720 = vxpose.xlu0.c.b16.cont [2/8] %v3913, 128
  %5721 = vxpose.xlu0.c.b16.cont [3/8] 0, 128
  %5722 = vxpose.xlu0.c.b16.cont [4/8] 0, 128
  %5723 = vxpose.xlu0.c.b16.cont [5/8] 0, 128
  %5724 = vxpose.xlu0.c.b16.cont [6/8] 0, 128
  %5725 = vxpose.xlu0.c.b16.cont [7/8] 0, 128
  %5726 = vxpose.xlu0.c.b16.end [8/8] 0, 128
  %v5727 = vpop.trf.xlu0
  %v5728 = vpop.trf.xlu0
  %v5729 = vpop.trf.xlu0
  %v5730 = vpop.trf.xlu0
  %v5731 = vpop.trf.xlu0
  %v5732 = vpop.trf.xlu0
  %v5733 = vpop.trf.xlu0
  %v5734 = vpop.trf.xlu0
  %v5736 = vsel %vm242, %v5727, 0
  %5738 = vmatprep.subr.bf16.mxu0 0
  %5739 = vmatpush1.bf16.msra.mxu0 0
  %5740 = vmatprep.subr.bf16.mxu0 0
  %5741 = vmatpush1.bf16.msra.mxu0 0
  %5742 = vmatprep.subr.bf16.mxu0 0
  %5743 = vmatpush1.bf16.msra.mxu0 0
  %5744 = vmatprep.subr.bf16.mxu0 0
  %5745 = vmatpush1.bf16.msra.mxu0 0
  %5746 = vmatprep.subr.bf16.mxu0 0
  %5747 = vmatpush1.bf16.msra.mxu0 0
  %5748 = vmatprep.subr.bf16.mxu0 0
  %5749 = vmatpush1.bf16.msra.mxu0 0
  %5750 = vmatprep.subr.bf16.mxu0 0
  %5751 = vmatpush1.bf16.msra.mxu0 %v2393
  %5752 = vmatprep.subr.bf16.mxu0 0
  %5753 = vmatpush1.bf16.msra.mxu0 %v2265
  %5754 = vmatprep.subr.bf16.mxu0 0
  %5755 = vmatpush2.bf16.msra.mxu0 0
  %5756 = vmatprep.subr.bf16.mxu0 0
  %5757 = vmatpush2.bf16.msra.mxu0 0
  %5758 = vmatprep.subr.bf16.mxu0 0
  %5759 = vmatpush2.bf16.msra.mxu0 0
  %5760 = vmatprep.subr.bf16.mxu0 0
  %5761 = vmatpush2.bf16.msra.mxu0 0
  %5762 = vmatprep.subr.bf16.mxu0 0
  %5763 = vmatpush2.bf16.msra.mxu0 0
  %5764 = vmatprep.subr.bf16.mxu0 0
  %5765 = vmatpush2.bf16.msra.mxu0 0
  %5766 = vmatprep.subr.bf16.mxu0 0
  %5767 = vmatpush2.bf16.msra.mxu0 0
  %5768 = vmatprep.subr.bf16.mxu0 0
  %5769 = vmatpush2.bf16.msra.mxu0 0
  %5770 = vmatprep.mubr.bf16.mxu0 0
  %5771 = vmatmul.mubr.bf16.gmra.mxu0 %v5736
  %v5772 = vpop.f32.mrf.mxu0
  %v5773 = vadd.f32 0.0, %v5772
  %v5774 = vpop.f32.mrf.mxu0
  %v5775 = vpop.f32.mrf.mxu0
  %v5776 = vadd.f32 0.0, %v5775
  %v5777 = vpop.f32.mrf.mxu0
  %5778 = vdwg.mxu0
  %5779 = vxpose.xlu0.c.b16.start [1/8] %v3789, 128
  %5780 = vxpose.xlu0.c.b16.cont [2/8] %v3917, 128
  %5781 = vxpose.xlu0.c.b16.cont [3/8] 0, 128
  %5782 = vxpose.xlu0.c.b16.cont [4/8] 0, 128
  %5783 = vxpose.xlu0.c.b16.cont [5/8] 0, 128
  %5784 = vxpose.xlu0.c.b16.cont [6/8] 0, 128
  %5785 = vxpose.xlu0.c.b16.cont [7/8] 0, 128
  %5786 = vxpose.xlu0.c.b16.end [8/8] 0, 128
  %v5787 = vpop.trf.xlu0
  %v5788 = vpop.trf.xlu0
  %v5789 = vpop.trf.xlu0
  %v5790 = vpop.trf.xlu0
  %v5791 = vpop.trf.xlu0
  %v5792 = vpop.trf.xlu0
  %v5793 = vpop.trf.xlu0
  %v5794 = vpop.trf.xlu0
  %v5796 = vsel %vm242, %v5787, 0
  %5798 = vmatprep.subr.bf16.mxu0 0
  %5799 = vmatpush1.bf16.msra.mxu0 0
  %5800 = vmatprep.subr.bf16.mxu0 0
  %5801 = vmatpush1.bf16.msra.mxu0 0
  %5802 = vmatprep.subr.bf16.mxu0 0
  %5803 = vmatpush1.bf16.msra.mxu0 0
  %5804 = vmatprep.subr.bf16.mxu0 0
  %5805 = vmatpush1.bf16.msra.mxu0 0
  %5806 = vmatprep.subr.bf16.mxu0 0
  %5807 = vmatpush1.bf16.msra.mxu0 0
  %5808 = vmatprep.subr.bf16.mxu0 0
  %5809 = vmatpush1.bf16.msra.mxu0 0
  %5810 = vmatprep.subr.bf16.mxu0 0
  %5811 = vmatpush1.bf16.msra.mxu0 %v2397
  %5812 = vmatprep.subr.bf16.mxu0 0
  %5813 = vmatpush1.bf16.msra.mxu0 %v2269
  %5814 = vmatprep.subr.bf16.mxu0 0
  %5815 = vmatpush2.bf16.msra.mxu0 0
  %5816 = vmatprep.subr.bf16.mxu0 0
  %5817 = vmatpush2.bf16.msra.mxu0 0
  %5818 = vmatprep.subr.bf16.mxu0 0
  %5819 = vmatpush2.bf16.msra.mxu0 0
  %5820 = vmatprep.subr.bf16.mxu0 0
  %5821 = vmatpush2.bf16.msra.mxu0 0
  %5822 = vmatprep.subr.bf16.mxu0 0
  %5823 = vmatpush2.bf16.msra.mxu0 0
  %5824 = vmatprep.subr.bf16.mxu0 0
  %5825 = vmatpush2.bf16.msra.mxu0 0
  %5826 = vmatprep.subr.bf16.mxu0 0
  %5827 = vmatpush2.bf16.msra.mxu0 0
  %5828 = vmatprep.subr.bf16.mxu0 0
  %5829 = vmatpush2.bf16.msra.mxu0 0
  %5830 = vmatprep.mubr.bf16.mxu0 0
  %5831 = vmatmul.mubr.bf16.gmra.mxu0 %v5796
  %v5832 = vpop.f32.mrf.mxu0
  %v5833 = vadd.f32 0.0, %v5832
  %v5834 = vpop.f32.mrf.mxu0
  %v5835 = vpop.f32.mrf.mxu0
  %v5836 = vadd.f32 0.0, %v5835
  %v5837 = vpop.f32.mrf.mxu0
  %5838 = vdwg.mxu0
  %v5839 = vcombine.low %v3973, %v4093
  %v5840 = vcombine.high %v3973, %v4093
  %v5842 = vunpack.c.l.s4 1983009808
  %v5843 = vunpack.c.0.s8 %v5842
  %v5844 = vlaneseq
  %v5845 = vshrl.u32 %v5844, 7
  %v5846 = vsub.s32 %v5843, %v5845
  %v5847 = vrot.slane %v5839, %v5846
  %v5849 = vunpack.c.l.s4 1983009808
  %v5850 = vunpack.c.0.s8 %v5849
  %v5851 = vlaneseq
  %v5852 = vshrl.u32 %v5851, 7
  %v5853 = vsub.s32 %v5850, %v5852
  %v5854 = vrot.slane %v5840, %v5853
  %v5855 = vcombine.low %v4033, %v4153
  %v5856 = vcombine.high %v4033, %v4153
  %v5858 = vunpack.c.l.s4 1983009808
  %v5859 = vunpack.c.0.s8 %v5858
  %v5860 = vlaneseq
  %v5861 = vshrl.u32 %v5860, 7
  %v5862 = vsub.s32 %v5859, %v5861
  %v5863 = vrot.slane %v5855, %v5862
  %v5865 = vunpack.c.l.s4 1983009808
  %v5866 = vunpack.c.0.s8 %v5865
  %v5867 = vlaneseq
  %v5868 = vshrl.u32 %v5867, 7
  %v5869 = vsub.s32 %v5866, %v5868
  %v5870 = vrot.slane %v5856, %v5869
  %v5871 = vcombine.low %v4213, %v4333
  %v5872 = vcombine.high %v4213, %v4333
  %v5874 = vunpack.c.l.s4 1983009808
  %v5875 = vunpack.c.0.s8 %v5874
  %v5876 = vlaneseq
  %v5877 = vshrl.u32 %v5876, 7
  %v5878 = vsub.s32 %v5875, %v5877
  %v5879 = vrot.slane %v5871, %v5878
  %v5881 = vunpack.c.l.s4 1983009808
  %v5882 = vunpack.c.0.s8 %v5881
  %v5883 = vlaneseq
  %v5884 = vshrl.u32 %v5883, 7
  %v5885 = vsub.s32 %v5882, %v5884
  %v5886 = vrot.slane %v5872, %v5885
  %v5887 = vcombine.low %v4273, %v4393
  %v5888 = vcombine.high %v4273, %v4393
  %v5890 = vunpack.c.l.s4 1983009808
  %v5891 = vunpack.c.0.s8 %v5890
  %v5892 = vlaneseq
  %v5893 = vshrl.u32 %v5892, 7
  %v5894 = vsub.s32 %v5891, %v5893
  %v5895 = vrot.slane %v5887, %v5894
  %v5897 = vunpack.c.l.s4 1983009808
  %v5898 = vunpack.c.0.s8 %v5897
  %v5899 = vlaneseq
  %v5900 = vshrl.u32 %v5899, 7
  %v5901 = vsub.s32 %v5898, %v5900
  %v5902 = vrot.slane %v5888, %v5901
  %v5903 = vcombine.low %v5847, %v5863
  %v5904 = vcombine.high %v5847, %v5863
  %v5906 = vunpack.c.l.s4 1934713408
  %v5907 = vunpack.c.0.s8 %v5906
  %v5908 = vlaneseq
  %v5909 = vshrl.u32 %v5908, 7
  %v5910 = vsub.s32 %v5907, %v5909
  %v5911 = vrot.slane %v5903, %v5910
  %v5913 = vunpack.c.l.s4 1934713408
  %v5914 = vunpack.c.0.s8 %v5913
  %v5915 = vlaneseq
  %v5916 = vshrl.u32 %v5915, 7
  %v5917 = vsub.s32 %v5914, %v5916
  %v5918 = vrot.slane %v5904, %v5917
  %v5919 = vcombine.low %v5854, %v5870
  %v5920 = vcombine.high %v5854, %v5870
  %v5922 = vunpack.c.l.s4 1934713408
  %v5923 = vunpack.c.0.s8 %v5922
  %v5924 = vlaneseq
  %v5925 = vshrl.u32 %v5924, 7
  %v5926 = vsub.s32 %v5923, %v5925
  %v5927 = vrot.slane %v5919, %v5926
  %v5929 = vunpack.c.l.s4 1934713408
  %v5930 = vunpack.c.0.s8 %v5929
  %v5931 = vlaneseq
  %v5932 = vshrl.u32 %v5931, 7
  %v5933 = vsub.s32 %v5930, %v5932
  %v5934 = vrot.slane %v5920, %v5933
  %v5935 = vcombine.low %v5879, %v5895
  %v5936 = vcombine.high %v5879, %v5895
  %v5938 = vunpack.c.l.s4 1934713408
  %v5939 = vunpack.c.0.s8 %v5938
  %v5940 = vlaneseq
  %v5941 = vshrl.u32 %v5940, 7
  %v5942 = vsub.s32 %v5939, %v5941
  %v5943 = vrot.slane %v5935, %v5942
  %v5945 = vunpack.c.l.s4 1934713408
  %v5946 = vunpack.c.0.s8 %v5945
  %v5947 = vlaneseq
  %v5948 = vshrl.u32 %v5947, 7
  %v5949 = vsub.s32 %v5946, %v5948
  %v5950 = vrot.slane %v5936, %v5949
  %v5951 = vcombine.low %v5886, %v5902
  %v5952 = vcombine.high %v5886, %v5902
  %v5954 = vunpack.c.l.s4 1934713408
  %v5955 = vunpack.c.0.s8 %v5954
  %v5956 = vlaneseq
  %v5957 = vshrl.u32 %v5956, 7
  %v5958 = vsub.s32 %v5955, %v5957
  %v5959 = vrot.slane %v5951, %v5958
  %v5961 = vunpack.c.l.s4 1934713408
  %v5962 = vunpack.c.0.s8 %v5961
  %v5963 = vlaneseq
  %v5964 = vshrl.u32 %v5963, 7
  %v5965 = vsub.s32 %v5962, %v5964
  %v5966 = vrot.slane %v5952, %v5965
  %v5967 = vcombine.low %v5911, %v5943
  %v5968 = vcombine.high %v5911, %v5943
  %v5969 = vcombine.low %v5918, %v5950
  %v5970 = vcombine.high %v5918, %v5950
  %v5971 = vcombine.low %v5927, %v5959
  %v5972 = vcombine.high %v5927, %v5959
  %v5973 = vcombine.low %v5934, %v5966
  %v5974 = vcombine.high %v5934, %v5966
  %v5975 = vcombine.low %v4453, %v4573
  %v5976 = vcombine.high %v4453, %v4573
  %v5978 = vunpack.c.l.s4 1983009808
  %v5979 = vunpack.c.0.s8 %v5978
  %v5980 = vlaneseq
  %v5981 = vshrl.u32 %v5980, 7
  %v5982 = vsub.s32 %v5979, %v5981
  %v5983 = vrot.slane %v5975, %v5982
  %v5985 = vunpack.c.l.s4 1983009808
  %v5986 = vunpack.c.0.s8 %v5985
  %v5987 = vlaneseq
  %v5988 = vshrl.u32 %v5987, 7
  %v5989 = vsub.s32 %v5986, %v5988
  %v5990 = vrot.slane %v5976, %v5989
  %v5991 = vcombine.low %v4513, %v4633
  %v5992 = vcombine.high %v4513, %v4633
  %v5994 = vunpack.c.l.s4 1983009808
  %v5995 = vunpack.c.0.s8 %v5994
  %v5996 = vlaneseq
  %v5997 = vshrl.u32 %v5996, 7
  %v5998 = vsub.s32 %v5995, %v5997
  %v5999 = vrot.slane %v5991, %v5998
  %v6001 = vunpack.c.l.s4 1983009808
  %v6002 = vunpack.c.0.s8 %v6001
  %v6003 = vlaneseq
  %v6004 = vshrl.u32 %v6003, 7
  %v6005 = vsub.s32 %v6002, %v6004
  %v6006 = vrot.slane %v5992, %v6005
  %v6007 = vcombine.low %v4693, %v4813
  %v6008 = vcombine.high %v4693, %v4813
  %v6010 = vunpack.c.l.s4 1983009808
  %v6011 = vunpack.c.0.s8 %v6010
  %v6012 = vlaneseq
  %v6013 = vshrl.u32 %v6012, 7
  %v6014 = vsub.s32 %v6011, %v6013
  %v6015 = vrot.slane %v6007, %v6014
  %v6017 = vunpack.c.l.s4 1983009808
  %v6018 = vunpack.c.0.s8 %v6017
  %v6019 = vlaneseq
  %v6020 = vshrl.u32 %v6019, 7
  %v6021 = vsub.s32 %v6018, %v6020
  %v6022 = vrot.slane %v6008, %v6021
  %v6023 = vcombine.low %v4753, %v4873
  %v6024 = vcombine.high %v4753, %v4873
  %v6026 = vunpack.c.l.s4 1983009808
  %v6027 = vunpack.c.0.s8 %v6026
  %v6028 = vlaneseq
  %v6029 = vshrl.u32 %v6028, 7
  %v6030 = vsub.s32 %v6027, %v6029
  %v6031 = vrot.slane %v6023, %v6030
  %v6033 = vunpack.c.l.s4 1983009808
  %v6034 = vunpack.c.0.s8 %v6033
  %v6035 = vlaneseq
  %v6036 = vshrl.u32 %v6035, 7
  %v6037 = vsub.s32 %v6034, %v6036
  %v6038 = vrot.slane %v6024, %v6037
  %v6039 = vcombine.low %v5983, %v5999
  %v6040 = vcombine.high %v5983, %v5999
  %v6042 = vunpack.c.l.s4 1934713408
  %v6043 = vunpack.c.0.s8 %v6042
  %v6044 = vlaneseq
  %v6045 = vshrl.u32 %v6044, 7
  %v6046 = vsub.s32 %v6043, %v6045
  %v6047 = vrot.slane %v6039, %v6046
  %v6049 = vunpack.c.l.s4 1934713408
  %v6050 = vunpack.c.0.s8 %v6049
  %v6051 = vlaneseq
  %v6052 = vshrl.u32 %v6051, 7
  %v6053 = vsub.s32 %v6050, %v6052
  %v6054 = vrot.slane %v6040, %v6053
  %v6055 = vcombine.low %v5990, %v6006
  %v6056 = vcombine.high %v5990, %v6006
  %v6058 = vunpack.c.l.s4 1934713408
  %v6059 = vunpack.c.0.s8 %v6058
  %v6060 = vlaneseq
  %v6061 = vshrl.u32 %v6060, 7
  %v6062 = vsub.s32 %v6059, %v6061
  %v6063 = vrot.slane %v6055, %v6062
  %v6065 = vunpack.c.l.s4 1934713408
  %v6066 = vunpack.c.0.s8 %v6065
  %v6067 = vlaneseq
  %v6068 = vshrl.u32 %v6067, 7
  %v6069 = vsub.s32 %v6066, %v6068
  %v6070 = vrot.slane %v6056, %v6069
  %v6071 = vcombine.low %v6015, %v6031
  %v6072 = vcombine.high %v6015, %v6031
  %v6074 = vunpack.c.l.s4 1934713408
  %v6075 = vunpack.c.0.s8 %v6074
  %v6076 = vlaneseq
  %v6077 = vshrl.u32 %v6076, 7
  %v6078 = vsub.s32 %v6075, %v6077
  %v6079 = vrot.slane %v6071, %v6078
  %v6081 = vunpack.c.l.s4 1934713408
  %v6082 = vunpack.c.0.s8 %v6081
  %v6083 = vlaneseq
  %v6084 = vshrl.u32 %v6083, 7
  %v6085 = vsub.s32 %v6082, %v6084
  %v6086 = vrot.slane %v6072, %v6085
  %v6087 = vcombine.low %v6022, %v6038
  %v6088 = vcombine.high %v6022, %v6038
  %v6090 = vunpack.c.l.s4 1934713408
  %v6091 = vunpack.c.0.s8 %v6090
  %v6092 = vlaneseq
  %v6093 = vshrl.u32 %v6092, 7
  %v6094 = vsub.s32 %v6091, %v6093
  %v6095 = vrot.slane %v6087, %v6094
  %v6097 = vunpack.c.l.s4 1934713408
  %v6098 = vunpack.c.0.s8 %v6097
  %v6099 = vlaneseq
  %v6100 = vshrl.u32 %v6099, 7
  %v6101 = vsub.s32 %v6098, %v6100
  %v6102 = vrot.slane %v6088, %v6101
  %v6103 = vcombine.low %v6047, %v6079
  %v6104 = vcombine.high %v6047, %v6079
  %v6105 = vcombine.low %v6054, %v6086
  %v6106 = vcombine.high %v6054, %v6086
  %v6107 = vcombine.low %v6063, %v6095
  %v6108 = vcombine.high %v6063, %v6095
  %v6109 = vcombine.low %v6070, %v6102
  %v6110 = vcombine.high %v6070, %v6102
  %v6111 = vcombine.low %v4933, %v5053
  %v6112 = vcombine.high %v4933, %v5053
  %v6114 = vunpack.c.l.s4 1983009808
  %v6115 = vunpack.c.0.s8 %v6114
  %v6116 = vlaneseq
  %v6117 = vshrl.u32 %v6116, 7
  %v6118 = vsub.s32 %v6115, %v6117
  %v6119 = vrot.slane %v6111, %v6118
  %v6121 = vunpack.c.l.s4 1983009808
  %v6122 = vunpack.c.0.s8 %v6121
  %v6123 = vlaneseq
  %v6124 = vshrl.u32 %v6123, 7
  %v6125 = vsub.s32 %v6122, %v6124
  %v6126 = vrot.slane %v6112, %v6125
  %v6127 = vcombine.low %v4993, %v5113
  %v6128 = vcombine.high %v4993, %v5113
  %v6130 = vunpack.c.l.s4 1983009808
  %v6131 = vunpack.c.0.s8 %v6130
  %v6132 = vlaneseq
  %v6133 = vshrl.u32 %v6132, 7
  %v6134 = vsub.s32 %v6131, %v6133
  %v6135 = vrot.slane %v6127, %v6134
  %v6137 = vunpack.c.l.s4 1983009808
  %v6138 = vunpack.c.0.s8 %v6137
  %v6139 = vlaneseq
  %v6140 = vshrl.u32 %v6139, 7
  %v6141 = vsub.s32 %v6138, %v6140
  %v6142 = vrot.slane %v6128, %v6141
  %v6143 = vcombine.low %v5173, %v5293
  %v6144 = vcombine.high %v5173, %v5293
  %v6146 = vunpack.c.l.s4 1983009808
  %v6147 = vunpack.c.0.s8 %v6146
  %v6148 = vlaneseq
  %v6149 = vshrl.u32 %v6148, 7
  %v6150 = vsub.s32 %v6147, %v6149
  %v6151 = vrot.slane %v6143, %v6150
  %v6153 = vunpack.c.l.s4 1983009808
  %v6154 = vunpack.c.0.s8 %v6153
  %v6155 = vlaneseq
  %v6156 = vshrl.u32 %v6155, 7
  %v6157 = vsub.s32 %v6154, %v6156
  %v6158 = vrot.slane %v6144, %v6157
  %v6159 = vcombine.low %v5233, %v5353
  %v6160 = vcombine.high %v5233, %v5353
  %v6162 = vunpack.c.l.s4 1983009808
  %v6163 = vunpack.c.0.s8 %v6162
  %v6164 = vlaneseq
  %v6165 = vshrl.u32 %v6164, 7
  %v6166 = vsub.s32 %v6163, %v6165
  %v6167 = vrot.slane %v6159, %v6166
  %v6169 = vunpack.c.l.s4 1983009808
  %v6170 = vunpack.c.0.s8 %v6169
  %v6171 = vlaneseq
  %v6172 = vshrl.u32 %v6171, 7
  %v6173 = vsub.s32 %v6170, %v6172
  %v6174 = vrot.slane %v6160, %v6173
  %v6175 = vcombine.low %v6119, %v6135
  %v6176 = vcombine.high %v6119, %v6135
  %v6178 = vunpack.c.l.s4 1934713408
  %v6179 = vunpack.c.0.s8 %v6178
  %v6180 = vlaneseq
  %v6181 = vshrl.u32 %v6180, 7
  %v6182 = vsub.s32 %v6179, %v6181
  %v6183 = vrot.slane %v6175, %v6182
  %v6185 = vunpack.c.l.s4 1934713408
  %v6186 = vunpack.c.0.s8 %v6185
  %v6187 = vlaneseq
  %v6188 = vshrl.u32 %v6187, 7
  %v6189 = vsub.s32 %v6186, %v6188
  %v6190 = vrot.slane %v6176, %v6189
  %v6191 = vcombine.low %v6126, %v6142
  %v6192 = vcombine.high %v6126, %v6142
  %v6194 = vunpack.c.l.s4 1934713408
  %v6195 = vunpack.c.0.s8 %v6194
  %v6196 = vlaneseq
  %v6197 = vshrl.u32 %v6196, 7
  %v6198 = vsub.s32 %v6195, %v6197
  %v6199 = vrot.slane %v6191, %v6198
  %v6201 = vunpack.c.l.s4 1934713408
  %v6202 = vunpack.c.0.s8 %v6201
  %v6203 = vlaneseq
  %v6204 = vshrl.u32 %v6203, 7
  %v6205 = vsub.s32 %v6202, %v6204
  %v6206 = vrot.slane %v6192, %v6205
  %v6207 = vcombine.low %v6151, %v6167
  %v6208 = vcombine.high %v6151, %v6167
  %v6210 = vunpack.c.l.s4 1934713408
  %v6211 = vunpack.c.0.s8 %v6210
  %v6212 = vlaneseq
  %v6213 = vshrl.u32 %v6212, 7
  %v6214 = vsub.s32 %v6211, %v6213
  %v6215 = vrot.slane %v6207, %v6214
  %v6217 = vunpack.c.l.s4 1934713408
  %v6218 = vunpack.c.0.s8 %v6217
  %v6219 = vlaneseq
  %v6220 = vshrl.u32 %v6219, 7
  %v6221 = vsub.s32 %v6218, %v6220
  %v6222 = vrot.slane %v6208, %v6221
  %v6223 = vcombine.low %v6158, %v6174
  %v6224 = vcombine.high %v6158, %v6174
  %v6226 = vunpack.c.l.s4 1934713408
  %v6227 = vunpack.c.0.s8 %v6226
  %v6228 = vlaneseq
  %v6229 = vshrl.u32 %v6228, 7
  %v6230 = vsub.s32 %v6227, %v6229
  %v6231 = vrot.slane %v6223, %v6230
  %v6233 = vunpack.c.l.s4 1934713408
  %v6234 = vunpack.c.0.s8 %v6233
  %v6235 = vlaneseq
  %v6236 = vshrl.u32 %v6235, 7
  %v6237 = vsub.s32 %v6234, %v6236
  %v6238 = vrot.slane %v6224, %v6237
  %v6239 = vcombine.low %v6183, %v6215
  %v6240 = vcombine.high %v6183, %v6215
  %v6241 = vcombine.low %v6190, %v6222
  %v6242 = vcombine.high %v6190, %v6222
  %v6243 = vcombine.low %v6199, %v6231
  %v6244 = vcombine.high %v6199, %v6231
  %v6245 = vcombine.low %v6206, %v6238
  %v6246 = vcombine.high %v6206, %v6238
  %v6247 = vcombine.low %v5413, %v5533
  %v6248 = vcombine.high %v5413, %v5533
  %v6250 = vunpack.c.l.s4 1983009808
  %v6251 = vunpack.c.0.s8 %v6250
  %v6252 = vlaneseq
  %v6253 = vshrl.u32 %v6252, 7
  %v6254 = vsub.s32 %v6251, %v6253
  %v6255 = vrot.slane %v6247, %v6254
  %v6257 = vunpack.c.l.s4 1983009808
  %v6258 = vunpack.c.0.s8 %v6257
  %v6259 = vlaneseq
  %v6260 = vshrl.u32 %v6259, 7
  %v6261 = vsub.s32 %v6258, %v6260
  %v6262 = vrot.slane %v6248, %v6261
  %v6263 = vcombine.low %v5473, %v5593
  %v6264 = vcombine.high %v5473, %v5593
  %v6266 = vunpack.c.l.s4 1983009808
  %v6267 = vunpack.c.0.s8 %v6266
  %v6268 = vlaneseq
  %v6269 = vshrl.u32 %v6268, 7
  %v6270 = vsub.s32 %v6267, %v6269
  %v6271 = vrot.slane %v6263, %v6270
  %v6273 = vunpack.c.l.s4 1983009808
  %v6274 = vunpack.c.0.s8 %v6273
  %v6275 = vlaneseq
  %v6276 = vshrl.u32 %v6275, 7
  %v6277 = vsub.s32 %v6274, %v6276
  %v6278 = vrot.slane %v6264, %v6277
  %v6279 = vcombine.low %v5653, %v5773
  %v6280 = vcombine.high %v5653, %v5773
  %v6282 = vunpack.c.l.s4 1983009808
  %v6283 = vunpack.c.0.s8 %v6282
  %v6284 = vlaneseq
  %v6285 = vshrl.u32 %v6284, 7
  %v6286 = vsub.s32 %v6283, %v6285
  %v6287 = vrot.slane %v6279, %v6286
  %v6289 = vunpack.c.l.s4 1983009808
  %v6290 = vunpack.c.0.s8 %v6289
  %v6291 = vlaneseq
  %v6292 = vshrl.u32 %v6291, 7
  %v6293 = vsub.s32 %v6290, %v6292
  %v6294 = vrot.slane %v6280, %v6293
  %v6295 = vcombine.low %v5713, %v5833
  %v6296 = vcombine.high %v5713, %v5833
  %v6298 = vunpack.c.l.s4 1983009808
  %v6299 = vunpack.c.0.s8 %v6298
  %v6300 = vlaneseq
  %v6301 = vshrl.u32 %v6300, 7
  %v6302 = vsub.s32 %v6299, %v6301
  %v6303 = vrot.slane %v6295, %v6302
  %v6305 = vunpack.c.l.s4 1983009808
  %v6306 = vunpack.c.0.s8 %v6305
  %v6307 = vlaneseq
  %v6308 = vshrl.u32 %v6307, 7
  %v6309 = vsub.s32 %v6306, %v6308
  %v6310 = vrot.slane %v6296, %v6309
  %v6311 = vcombine.low %v6255, %v6271
  %v6312 = vcombine.high %v6255, %v6271
  %v6314 = vunpack.c.l.s4 1934713408
  %v6315 = vunpack.c.0.s8 %v6314
  %v6316 = vlaneseq
  %v6317 = vshrl.u32 %v6316, 7
  %v6318 = vsub.s32 %v6315, %v6317
  %v6319 = vrot.slane %v6311, %v6318
  %v6321 = vunpack.c.l.s4 1934713408
  %v6322 = vunpack.c.0.s8 %v6321
  %v6323 = vlaneseq
  %v6324 = vshrl.u32 %v6323, 7
  %v6325 = vsub.s32 %v6322, %v6324
  %v6326 = vrot.slane %v6312, %v6325
  %v6327 = vcombine.low %v6262, %v6278
  %v6328 = vcombine.high %v6262, %v6278
  %v6330 = vunpack.c.l.s4 1934713408
  %v6331 = vunpack.c.0.s8 %v6330
  %v6332 = vlaneseq
  %v6333 = vshrl.u32 %v6332, 7
  %v6334 = vsub.s32 %v6331, %v6333
  %v6335 = vrot.slane %v6327, %v6334
  %v6337 = vunpack.c.l.s4 1934713408
  %v6338 = vunpack.c.0.s8 %v6337
  %v6339 = vlaneseq
  %v6340 = vshrl.u32 %v6339, 7
  %v6341 = vsub.s32 %v6338, %v6340
  %v6342 = vrot.slane %v6328, %v6341
  %v6343 = vcombine.low %v6287, %v6303
  %v6344 = vcombine.high %v6287, %v6303
  %v6346 = vunpack.c.l.s4 1934713408
  %v6347 = vunpack.c.0.s8 %v6346
  %v6348 = vlaneseq
  %v6349 = vshrl.u32 %v6348, 7
  %v6350 = vsub.s32 %v6347, %v6349
  %v6351 = vrot.slane %v6343, %v6350
  %v6353 = vunpack.c.l.s4 1934713408
  %v6354 = vunpack.c.0.s8 %v6353
  %v6355 = vlaneseq
  %v6356 = vshrl.u32 %v6355, 7
  %v6357 = vsub.s32 %v6354, %v6356
  %v6358 = vrot.slane %v6344, %v6357
  %v6359 = vcombine.low %v6294, %v6310
  %v6360 = vcombine.high %v6294, %v6310
  %v6362 = vunpack.c.l.s4 1934713408
  %v6363 = vunpack.c.0.s8 %v6362
  %v6364 = vlaneseq
  %v6365 = vshrl.u32 %v6364, 7
  %v6366 = vsub.s32 %v6363, %v6365
  %v6367 = vrot.slane %v6359, %v6366
  %v6369 = vunpack.c.l.s4 1934713408
  %v6370 = vunpack.c.0.s8 %v6369
  %v6371 = vlaneseq
  %v6372 = vshrl.u32 %v6371, 7
  %v6373 = vsub.s32 %v6370, %v6372
  %v6374 = vrot.slane %v6360, %v6373
  %v6375 = vcombine.low %v6319, %v6351
  %v6376 = vcombine.high %v6319, %v6351
  %v6377 = vcombine.low %v6326, %v6358
  %v6378 = vcombine.high %v6326, %v6358
  %v6379 = vcombine.low %v6335, %v6367
  %v6380 = vcombine.high %v6335, %v6367
  %v6381 = vcombine.low %v6342, %v6374
  %v6382 = vcombine.high %v6342, %v6374
  %v6383 = vcombine.low %v3976, %v4096
  %v6384 = vcombine.high %v3976, %v4096
  %v6386 = vunpack.c.l.s4 1983009808
  %v6387 = vunpack.c.0.s8 %v6386
  %v6388 = vlaneseq
  %v6389 = vshrl.u32 %v6388, 7
  %v6390 = vsub.s32 %v6387, %v6389
  %v6391 = vrot.slane %v6383, %v6390
  %v6393 = vunpack.c.l.s4 1983009808
  %v6394 = vunpack.c.0.s8 %v6393
  %v6395 = vlaneseq
  %v6396 = vshrl.u32 %v6395, 7
  %v6397 = vsub.s32 %v6394, %v6396
  %v6398 = vrot.slane %v6384, %v6397
  %v6399 = vcombine.low %v4036, %v4156
  %v6400 = vcombine.high %v4036, %v4156
  %v6402 = vunpack.c.l.s4 1983009808
  %v6403 = vunpack.c.0.s8 %v6402
  %v6404 = vlaneseq
  %v6405 = vshrl.u32 %v6404, 7
  %v6406 = vsub.s32 %v6403, %v6405
  %v6407 = vrot.slane %v6399, %v6406
  %v6409 = vunpack.c.l.s4 1983009808
  %v6410 = vunpack.c.0.s8 %v6409
  %v6411 = vlaneseq
  %v6412 = vshrl.u32 %v6411, 7
  %v6413 = vsub.s32 %v6410, %v6412
  %v6414 = vrot.slane %v6400, %v6413
  %v6415 = vcombine.low %v4216, %v4336
  %v6416 = vcombine.high %v4216, %v4336
  %v6418 = vunpack.c.l.s4 1983009808
  %v6419 = vunpack.c.0.s8 %v6418
  %v6420 = vlaneseq
  %v6421 = vshrl.u32 %v6420, 7
  %v6422 = vsub.s32 %v6419, %v6421
  %v6423 = vrot.slane %v6415, %v6422
  %v6425 = vunpack.c.l.s4 1983009808
  %v6426 = vunpack.c.0.s8 %v6425
  %v6427 = vlaneseq
  %v6428 = vshrl.u32 %v6427, 7
  %v6429 = vsub.s32 %v6426, %v6428
  %v6430 = vrot.slane %v6416, %v6429
  %v6431 = vcombine.low %v4276, %v4396
  %v6432 = vcombine.high %v4276, %v4396
  %v6434 = vunpack.c.l.s4 1983009808
  %v6435 = vunpack.c.0.s8 %v6434
  %v6436 = vlaneseq
  %v6437 = vshrl.u32 %v6436, 7
  %v6438 = vsub.s32 %v6435, %v6437
  %v6439 = vrot.slane %v6431, %v6438
  %v6441 = vunpack.c.l.s4 1983009808
  %v6442 = vunpack.c.0.s8 %v6441
  %v6443 = vlaneseq
  %v6444 = vshrl.u32 %v6443, 7
  %v6445 = vsub.s32 %v6442, %v6444
  %v6446 = vrot.slane %v6432, %v6445
  %v6447 = vcombine.low %v6391, %v6407
  %v6448 = vcombine.high %v6391, %v6407
  %v6450 = vunpack.c.l.s4 1934713408
  %v6451 = vunpack.c.0.s8 %v6450
  %v6452 = vlaneseq
  %v6453 = vshrl.u32 %v6452, 7
  %v6454 = vsub.s32 %v6451, %v6453
  %v6455 = vrot.slane %v6447, %v6454
  %v6457 = vunpack.c.l.s4 1934713408
  %v6458 = vunpack.c.0.s8 %v6457
  %v6459 = vlaneseq
  %v6460 = vshrl.u32 %v6459, 7
  %v6461 = vsub.s32 %v6458, %v6460
  %v6462 = vrot.slane %v6448, %v6461
  %v6463 = vcombine.low %v6398, %v6414
  %v6464 = vcombine.high %v6398, %v6414
  %v6466 = vunpack.c.l.s4 1934713408
  %v6467 = vunpack.c.0.s8 %v6466
  %v6468 = vlaneseq
  %v6469 = vshrl.u32 %v6468, 7
  %v6470 = vsub.s32 %v6467, %v6469
  %v6471 = vrot.slane %v6463, %v6470
  %v6473 = vunpack.c.l.s4 1934713408
  %v6474 = vunpack.c.0.s8 %v6473
  %v6475 = vlaneseq
  %v6476 = vshrl.u32 %v6475, 7
  %v6477 = vsub.s32 %v6474, %v6476
  %v6478 = vrot.slane %v6464, %v6477
  %v6479 = vcombine.low %v6423, %v6439
  %v6480 = vcombine.high %v6423, %v6439
  %v6482 = vunpack.c.l.s4 1934713408
  %v6483 = vunpack.c.0.s8 %v6482
  %v6484 = vlaneseq
  %v6485 = vshrl.u32 %v6484, 7
  %v6486 = vsub.s32 %v6483, %v6485
  %v6487 = vrot.slane %v6479, %v6486
  %v6489 = vunpack.c.l.s4 1934713408
  %v6490 = vunpack.c.0.s8 %v6489
  %v6491 = vlaneseq
  %v6492 = vshrl.u32 %v6491, 7
  %v6493 = vsub.s32 %v6490, %v6492
  %v6494 = vrot.slane %v6480, %v6493
  %v6495 = vcombine.low %v6430, %v6446
  %v6496 = vcombine.high %v6430, %v6446
  %v6498 = vunpack.c.l.s4 1934713408
  %v6499 = vunpack.c.0.s8 %v6498
  %v6500 = vlaneseq
  %v6501 = vshrl.u32 %v6500, 7
  %v6502 = vsub.s32 %v6499, %v6501
  %v6503 = vrot.slane %v6495, %v6502
  %v6505 = vunpack.c.l.s4 1934713408
  %v6506 = vunpack.c.0.s8 %v6505
  %v6507 = vlaneseq
  %v6508 = vshrl.u32 %v6507, 7
  %v6509 = vsub.s32 %v6506, %v6508
  %v6510 = vrot.slane %v6496, %v6509
  %v6511 = vcombine.low %v6455, %v6487
  %v6512 = vcombine.high %v6455, %v6487
  %v6513 = vcombine.low %v6462, %v6494
  %v6514 = vcombine.high %v6462, %v6494
  %v6515 = vcombine.low %v6471, %v6503
  %v6516 = vcombine.high %v6471, %v6503
  %v6517 = vcombine.low %v6478, %v6510
  %v6518 = vcombine.high %v6478, %v6510
  %v6519 = vcombine.low %v4456, %v4576
  %v6520 = vcombine.high %v4456, %v4576
  %v6522 = vunpack.c.l.s4 1983009808
  %v6523 = vunpack.c.0.s8 %v6522
  %v6524 = vlaneseq
  %v6525 = vshrl.u32 %v6524, 7
  %v6526 = vsub.s32 %v6523, %v6525
  %v6527 = vrot.slane %v6519, %v6526
  %v6529 = vunpack.c.l.s4 1983009808
  %v6530 = vunpack.c.0.s8 %v6529
  %v6531 = vlaneseq
  %v6532 = vshrl.u32 %v6531, 7
  %v6533 = vsub.s32 %v6530, %v6532
  %v6534 = vrot.slane %v6520, %v6533
  %v6535 = vcombine.low %v4516, %v4636
  %v6536 = vcombine.high %v4516, %v4636
  %v6538 = vunpack.c.l.s4 1983009808
  %v6539 = vunpack.c.0.s8 %v6538
  %v6540 = vlaneseq
  %v6541 = vshrl.u32 %v6540, 7
  %v6542 = vsub.s32 %v6539, %v6541
  %v6543 = vrot.slane %v6535, %v6542
  %v6545 = vunpack.c.l.s4 1983009808
  %v6546 = vunpack.c.0.s8 %v6545
  %v6547 = vlaneseq
  %v6548 = vshrl.u32 %v6547, 7
  %v6549 = vsub.s32 %v6546, %v6548
  %v6550 = vrot.slane %v6536, %v6549
  %v6551 = vcombine.low %v4696, %v4816
  %v6552 = vcombine.high %v4696, %v4816
  %v6554 = vunpack.c.l.s4 1983009808
  %v6555 = vunpack.c.0.s8 %v6554
  %v6556 = vlaneseq
  %v6557 = vshrl.u32 %v6556, 7
  %v6558 = vsub.s32 %v6555, %v6557
  %v6559 = vrot.slane %v6551, %v6558
  %v6561 = vunpack.c.l.s4 1983009808
  %v6562 = vunpack.c.0.s8 %v6561
  %v6563 = vlaneseq
  %v6564 = vshrl.u32 %v6563, 7
  %v6565 = vsub.s32 %v6562, %v6564
  %v6566 = vrot.slane %v6552, %v6565
  %v6567 = vcombine.low %v4756, %v4876
  %v6568 = vcombine.high %v4756, %v4876
  %v6570 = vunpack.c.l.s4 1983009808
  %v6571 = vunpack.c.0.s8 %v6570
  %v6572 = vlaneseq
  %v6573 = vshrl.u32 %v6572, 7
  %v6574 = vsub.s32 %v6571, %v6573
  %v6575 = vrot.slane %v6567, %v6574
  %v6577 = vunpack.c.l.s4 1983009808
  %v6578 = vunpack.c.0.s8 %v6577
  %v6579 = vlaneseq
  %v6580 = vshrl.u32 %v6579, 7
  %v6581 = vsub.s32 %v6578, %v6580
  %v6582 = vrot.slane %v6568, %v6581
  %v6583 = vcombine.low %v6527, %v6543
  %v6584 = vcombine.high %v6527, %v6543
  %v6586 = vunpack.c.l.s4 1934713408
  %v6587 = vunpack.c.0.s8 %v6586
  %v6588 = vlaneseq
  %v6589 = vshrl.u32 %v6588, 7
  %v6590 = vsub.s32 %v6587, %v6589
  %v6591 = vrot.slane %v6583, %v6590
  %v6593 = vunpack.c.l.s4 1934713408
  %v6594 = vunpack.c.0.s8 %v6593
  %v6595 = vlaneseq
  %v6596 = vshrl.u32 %v6595, 7
  %v6597 = vsub.s32 %v6594, %v6596
  %v6598 = vrot.slane %v6584, %v6597
  %v6599 = vcombine.low %v6534, %v6550
  %v6600 = vcombine.high %v6534, %v6550
  %v6602 = vunpack.c.l.s4 1934713408
  %v6603 = vunpack.c.0.s8 %v6602
  %v6604 = vlaneseq
  %v6605 = vshrl.u32 %v6604, 7
  %v6606 = vsub.s32 %v6603, %v6605
  %v6607 = vrot.slane %v6599, %v6606
  %v6609 = vunpack.c.l.s4 1934713408
  %v6610 = vunpack.c.0.s8 %v6609
  %v6611 = vlaneseq
  %v6612 = vshrl.u32 %v6611, 7
  %v6613 = vsub.s32 %v6610, %v6612
  %v6614 = vrot.slane %v6600, %v6613
  %v6615 = vcombine.low %v6559, %v6575
  %v6616 = vcombine.high %v6559, %v6575
  %v6618 = vunpack.c.l.s4 1934713408
  %v6619 = vunpack.c.0.s8 %v6618
  %v6620 = vlaneseq
  %v6621 = vshrl.u32 %v6620, 7
  %v6622 = vsub.s32 %v6619, %v6621
  %v6623 = vrot.slane %v6615, %v6622
  %v6625 = vunpack.c.l.s4 1934713408
  %v6626 = vunpack.c.0.s8 %v6625
  %v6627 = vlaneseq
  %v6628 = vshrl.u32 %v6627, 7
  %v6629 = vsub.s32 %v6626, %v6628
  %v6630 = vrot.slane %v6616, %v6629
  %v6631 = vcombine.low %v6566, %v6582
  %v6632 = vcombine.high %v6566, %v6582
  %v6634 = vunpack.c.l.s4 1934713408
  %v6635 = vunpack.c.0.s8 %v6634
  %v6636 = vlaneseq
  %v6637 = vshrl.u32 %v6636, 7
  %v6638 = vsub.s32 %v6635, %v6637
  %v6639 = vrot.slane %v6631, %v6638
  %v6641 = vunpack.c.l.s4 1934713408
  %v6642 = vunpack.c.0.s8 %v6641
  %v6643 = vlaneseq
  %v6644 = vshrl.u32 %v6643, 7
  %v6645 = vsub.s32 %v6642, %v6644
  %v6646 = vrot.slane %v6632, %v6645
  %v6647 = vcombine.low %v6591, %v6623
  %v6648 = vcombine.high %v6591, %v6623
  %v6649 = vcombine.low %v6598, %v6630
  %v6650 = vcombine.high %v6598, %v6630
  %v6651 = vcombine.low %v6607, %v6639
  %v6652 = vcombine.high %v6607, %v6639
  %v6653 = vcombine.low %v6614, %v6646
  %v6654 = vcombine.high %v6614, %v6646
  %v6655 = vcombine.low %v4936, %v5056
  %v6656 = vcombine.high %v4936, %v5056
  %v6658 = vunpack.c.l.s4 1983009808
  %v6659 = vunpack.c.0.s8 %v6658
  %v6660 = vlaneseq
  %v6661 = vshrl.u32 %v6660, 7
  %v6662 = vsub.s32 %v6659, %v6661
  %v6663 = vrot.slane %v6655, %v6662
  %v6665 = vunpack.c.l.s4 1983009808
  %v6666 = vunpack.c.0.s8 %v6665
  %v6667 = vlaneseq
  %v6668 = vshrl.u32 %v6667, 7
  %v6669 = vsub.s32 %v6666, %v6668
  %v6670 = vrot.slane %v6656, %v6669
  %v6671 = vcombine.low %v4996, %v5116
  %v6672 = vcombine.high %v4996, %v5116
  %v6674 = vunpack.c.l.s4 1983009808
  %v6675 = vunpack.c.0.s8 %v6674
  %v6676 = vlaneseq
  %v6677 = vshrl.u32 %v6676, 7
  %v6678 = vsub.s32 %v6675, %v6677
  %v6679 = vrot.slane %v6671, %v6678
  %v6681 = vunpack.c.l.s4 1983009808
  %v6682 = vunpack.c.0.s8 %v6681
  %v6683 = vlaneseq
  %v6684 = vshrl.u32 %v6683, 7
  %v6685 = vsub.s32 %v6682, %v6684
  %v6686 = vrot.slane %v6672, %v6685
  %v6687 = vcombine.low %v5176, %v5296
  %v6688 = vcombine.high %v5176, %v5296
  %v6690 = vunpack.c.l.s4 1983009808
  %v6691 = vunpack.c.0.s8 %v6690
  %v6692 = vlaneseq
  %v6693 = vshrl.u32 %v6692, 7
  %v6694 = vsub.s32 %v6691, %v6693
  %v6695 = vrot.slane %v6687, %v6694
  %v6697 = vunpack.c.l.s4 1983009808
  %v6698 = vunpack.c.0.s8 %v6697
  %v6699 = vlaneseq
  %v6700 = vshrl.u32 %v6699, 7
  %v6701 = vsub.s32 %v6698, %v6700
  %v6702 = vrot.slane %v6688, %v6701
  %v6703 = vcombine.low %v5236, %v5356
  %v6704 = vcombine.high %v5236, %v5356
  %v6706 = vunpack.c.l.s4 1983009808
  %v6707 = vunpack.c.0.s8 %v6706
  %v6708 = vlaneseq
  %v6709 = vshrl.u32 %v6708, 7
  %v6710 = vsub.s32 %v6707, %v6709
  %v6711 = vrot.slane %v6703, %v6710
  %v6713 = vunpack.c.l.s4 1983009808
  %v6714 = vunpack.c.0.s8 %v6713
  %v6715 = vlaneseq
  %v6716 = vshrl.u32 %v6715, 7
  %v6717 = vsub.s32 %v6714, %v6716
  %v6718 = vrot.slane %v6704, %v6717
  %v6719 = vcombine.low %v6663, %v6679
  %v6720 = vcombine.high %v6663, %v6679
  %v6722 = vunpack.c.l.s4 1934713408
  %v6723 = vunpack.c.0.s8 %v6722
  %v6724 = vlaneseq
  %v6725 = vshrl.u32 %v6724, 7
  %v6726 = vsub.s32 %v6723, %v6725
  %v6727 = vrot.slane %v6719, %v6726
  %v6729 = vunpack.c.l.s4 1934713408
  %v6730 = vunpack.c.0.s8 %v6729
  %v6731 = vlaneseq
  %v6732 = vshrl.u32 %v6731, 7
  %v6733 = vsub.s32 %v6730, %v6732
  %v6734 = vrot.slane %v6720, %v6733
  %v6735 = vcombine.low %v6670, %v6686
  %v6736 = vcombine.high %v6670, %v6686
  %v6738 = vunpack.c.l.s4 1934713408
  %v6739 = vunpack.c.0.s8 %v6738
  %v6740 = vlaneseq
  %v6741 = vshrl.u32 %v6740, 7
  %v6742 = vsub.s32 %v6739, %v6741
  %v6743 = vrot.slane %v6735, %v6742
  %v6745 = vunpack.c.l.s4 1934713408
  %v6746 = vunpack.c.0.s8 %v6745
  %v6747 = vlaneseq
  %v6748 = vshrl.u32 %v6747, 7
  %v6749 = vsub.s32 %v6746, %v6748
  %v6750 = vrot.slane %v6736, %v6749
  %v6751 = vcombine.low %v6695, %v6711
  %v6752 = vcombine.high %v6695, %v6711
  %v6754 = vunpack.c.l.s4 1934713408
  %v6755 = vunpack.c.0.s8 %v6754
  %v6756 = vlaneseq
  %v6757 = vshrl.u32 %v6756, 7
  %v6758 = vsub.s32 %v6755, %v6757
  %v6759 = vrot.slane %v6751, %v6758
  %v6761 = vunpack.c.l.s4 1934713408
  %v6762 = vunpack.c.0.s8 %v6761
  %v6763 = vlaneseq
  %v6764 = vshrl.u32 %v6763, 7
  %v6765 = vsub.s32 %v6762, %v6764
  %v6766 = vrot.slane %v6752, %v6765
  %v6767 = vcombine.low %v6702, %v6718
  %v6768 = vcombine.high %v6702, %v6718
  %v6770 = vunpack.c.l.s4 1934713408
  %v6771 = vunpack.c.0.s8 %v6770
  %v6772 = vlaneseq
  %v6773 = vshrl.u32 %v6772, 7
  %v6774 = vsub.s32 %v6771, %v6773
  %v6775 = vrot.slane %v6767, %v6774
  %v6777 = vunpack.c.l.s4 1934713408
  %v6778 = vunpack.c.0.s8 %v6777
  %v6779 = vlaneseq
  %v6780 = vshrl.u32 %v6779, 7
  %v6781 = vsub.s32 %v6778, %v6780
  %v6782 = vrot.slane %v6768, %v6781
  %v6783 = vcombine.low %v6727, %v6759
  %v6784 = vcombine.high %v6727, %v6759
  %v6785 = vcombine.low %v6734, %v6766
  %v6786 = vcombine.high %v6734, %v6766
  %v6787 = vcombine.low %v6743, %v6775
  %v6788 = vcombine.high %v6743, %v6775
  %v6789 = vcombine.low %v6750, %v6782
  %v6790 = vcombine.high %v6750, %v6782
  %v6791 = vcombine.low %v5416, %v5536
  %v6792 = vcombine.high %v5416, %v5536
  %v6794 = vunpack.c.l.s4 1983009808
  %v6795 = vunpack.c.0.s8 %v6794
  %v6796 = vlaneseq
  %v6797 = vshrl.u32 %v6796, 7
  %v6798 = vsub.s32 %v6795, %v6797
  %v6799 = vrot.slane %v6791, %v6798
  %v6801 = vunpack.c.l.s4 1983009808
  %v6802 = vunpack.c.0.s8 %v6801
  %v6803 = vlaneseq
  %v6804 = vshrl.u32 %v6803, 7
  %v6805 = vsub.s32 %v6802, %v6804
  %v6806 = vrot.slane %v6792, %v6805
  %v6807 = vcombine.low %v5476, %v5596
  %v6808 = vcombine.high %v5476, %v5596
  %v6810 = vunpack.c.l.s4 1983009808
  %v6811 = vunpack.c.0.s8 %v6810
  %v6812 = vlaneseq
  %v6813 = vshrl.u32 %v6812, 7
  %v6814 = vsub.s32 %v6811, %v6813
  %v6815 = vrot.slane %v6807, %v6814
  %v6817 = vunpack.c.l.s4 1983009808
  %v6818 = vunpack.c.0.s8 %v6817
  %v6819 = vlaneseq
  %v6820 = vshrl.u32 %v6819, 7
  %v6821 = vsub.s32 %v6818, %v6820
  %v6822 = vrot.slane %v6808, %v6821
  %v6823 = vcombine.low %v5656, %v5776
  %v6824 = vcombine.high %v5656, %v5776
  %v6826 = vunpack.c.l.s4 1983009808
  %v6827 = vunpack.c.0.s8 %v6826
  %v6828 = vlaneseq
  %v6829 = vshrl.u32 %v6828, 7
  %v6830 = vsub.s32 %v6827, %v6829
  %v6831 = vrot.slane %v6823, %v6830
  %v6833 = vunpack.c.l.s4 1983009808
  %v6834 = vunpack.c.0.s8 %v6833
  %v6835 = vlaneseq
  %v6836 = vshrl.u32 %v6835, 7
  %v6837 = vsub.s32 %v6834, %v6836
  %v6838 = vrot.slane %v6824, %v6837
  %v6839 = vcombine.low %v5716, %v5836
  %v6840 = vcombine.high %v5716, %v5836
  %v6842 = vunpack.c.l.s4 1983009808
  %v6843 = vunpack.c.0.s8 %v6842
  %v6844 = vlaneseq
  %v6845 = vshrl.u32 %v6844, 7
  %v6846 = vsub.s32 %v6843, %v6845
  %v6847 = vrot.slane %v6839, %v6846
  %v6849 = vunpack.c.l.s4 1983009808
  %v6850 = vunpack.c.0.s8 %v6849
  %v6851 = vlaneseq
  %v6852 = vshrl.u32 %v6851, 7
  %v6853 = vsub.s32 %v6850, %v6852
  %v6854 = vrot.slane %v6840, %v6853
  %v6855 = vcombine.low %v6799, %v6815
  %v6856 = vcombine.high %v6799, %v6815
  %v6858 = vunpack.c.l.s4 1934713408
  %v6859 = vunpack.c.0.s8 %v6858
  %v6860 = vlaneseq
  %v6861 = vshrl.u32 %v6860, 7
  %v6862 = vsub.s32 %v6859, %v6861
  %v6863 = vrot.slane %v6855, %v6862
  %v6865 = vunpack.c.l.s4 1934713408
  %v6866 = vunpack.c.0.s8 %v6865
  %v6867 = vlaneseq
  %v6868 = vshrl.u32 %v6867, 7
  %v6869 = vsub.s32 %v6866, %v6868
  %v6870 = vrot.slane %v6856, %v6869
  %v6871 = vcombine.low %v6806, %v6822
  %v6872 = vcombine.high %v6806, %v6822
  %v6874 = vunpack.c.l.s4 1934713408
  %v6875 = vunpack.c.0.s8 %v6874
  %v6876 = vlaneseq
  %v6877 = vshrl.u32 %v6876, 7
  %v6878 = vsub.s32 %v6875, %v6877
  %v6879 = vrot.slane %v6871, %v6878
  %v6881 = vunpack.c.l.s4 1934713408
  %v6882 = vunpack.c.0.s8 %v6881
  %v6883 = vlaneseq
  %v6884 = vshrl.u32 %v6883, 7
  %v6885 = vsub.s32 %v6882, %v6884
  %v6886 = vrot.slane %v6872, %v6885
  %v6887 = vcombine.low %v6831, %v6847
  %v6888 = vcombine.high %v6831, %v6847
  %v6890 = vunpack.c.l.s4 1934713408
  %v6891 = vunpack.c.0.s8 %v6890
  %v6892 = vlaneseq
  %v6893 = vshrl.u32 %v6892, 7
  %v6894 = vsub.s32 %v6891, %v6893
  %v6895 = vrot.slane %v6887, %v6894
  %v6897 = vunpack.c.l.s4 1934713408
  %v6898 = vunpack.c.0.s8 %v6897
  %v6899 = vlaneseq
  %v6900 = vshrl.u32 %v6899, 7
  %v6901 = vsub.s32 %v6898, %v6900
  %v6902 = vrot.slane %v6888, %v6901
  %v6903 = vcombine.low %v6838, %v6854
  %v6904 = vcombine.high %v6838, %v6854
  %v6906 = vunpack.c.l.s4 1934713408
  %v6907 = vunpack.c.0.s8 %v6906
  %v6908 = vlaneseq
  %v6909 = vshrl.u32 %v6908, 7
  %v6910 = vsub.s32 %v6907, %v6909
  %v6911 = vrot.slane %v6903, %v6910
  %v6913 = vunpack.c.l.s4 1934713408
  %v6914 = vunpack.c.0.s8 %v6913
  %v6915 = vlaneseq
  %v6916 = vshrl.u32 %v6915, 7
  %v6917 = vsub.s32 %v6914, %v6916
  %v6918 = vrot.slane %v6904, %v6917
  %v6919 = vcombine.low %v6863, %v6895
  %v6920 = vcombine.high %v6863, %v6895
  %v6921 = vcombine.low %v6870, %v6902
  %v6922 = vcombine.high %v6870, %v6902
  %v6923 = vcombine.low %v6879, %v6911
  %v6924 = vcombine.high %v6879, %v6911
  %v6925 = vcombine.low %v6886, %v6918
  %v6926 = vcombine.high %v6886, %v6918
  %6931 = vrot.lane.b32.xlu0 %v5968, 16
  %v6932 = vpop.permute.xlu0 %6931
  %6933 = vrot.lane.b32.xlu0 %v6104, 16
  %v6934 = vpop.permute.xlu0 %6933
  %6935 = vrot.lane.b32.xlu0 %v6240, 16
  %v6936 = vpop.permute.xlu0 %6935
  %6937 = vrot.lane.b32.xlu0 %v6376, 16
  %v6938 = vpop.permute.xlu0 %6937
  %6947 = vrot.lane.b32.xlu0 %v5969, 32
  %v6948 = vpop.permute.xlu0 %6947
  %6949 = vrot.lane.b32.xlu0 %v6105, 32
  %v6950 = vpop.permute.xlu0 %6949
  %6951 = vrot.lane.b32.xlu0 %v6241, 32
  %v6952 = vpop.permute.xlu0 %6951
  %6953 = vrot.lane.b32.xlu0 %v6377, 32
  %v6954 = vpop.permute.xlu0 %6953
  %6963 = vrot.lane.b32.xlu0 %v5970, 48
  %v6964 = vpop.permute.xlu0 %6963
  %6965 = vrot.lane.b32.xlu0 %v6106, 48
  %v6966 = vpop.permute.xlu0 %6965
  %6967 = vrot.lane.b32.xlu0 %v6242, 48
  %v6968 = vpop.permute.xlu0 %6967
  %6969 = vrot.lane.b32.xlu0 %v6378, 48
  %v6970 = vpop.permute.xlu0 %6969
  %6979 = vrot.lane.b32.xlu0 %v5971, 64
  %v6980 = vpop.permute.xlu0 %6979
  %6981 = vrot.lane.b32.xlu0 %v6107, 64
  %v6982 = vpop.permute.xlu0 %6981
  %6983 = vrot.lane.b32.xlu0 %v6243, 64
  %v6984 = vpop.permute.xlu0 %6983
  %6985 = vrot.lane.b32.xlu0 %v6379, 64
  %v6986 = vpop.permute.xlu0 %6985
  %6995 = vrot.lane.b32.xlu0 %v5972, 80
  %v6996 = vpop.permute.xlu0 %6995
  %6997 = vrot.lane.b32.xlu0 %v6108, 80
  %v6998 = vpop.permute.xlu0 %6997
  %6999 = vrot.lane.b32.xlu0 %v6244, 80
  %v7000 = vpop.permute.xlu0 %6999
  %7001 = vrot.lane.b32.xlu0 %v6380, 80
  %v7002 = vpop.permute.xlu0 %7001
  %7011 = vrot.lane.b32.xlu0 %v5973, 96
  %v7012 = vpop.permute.xlu0 %7011
  %7013 = vrot.lane.b32.xlu0 %v6109, 96
  %v7014 = vpop.permute.xlu0 %7013
  %7015 = vrot.lane.b32.xlu0 %v6245, 96
  %v7016 = vpop.permute.xlu0 %7015
  %7017 = vrot.lane.b32.xlu0 %v6381, 96
  %v7018 = vpop.permute.xlu0 %7017
  %7027 = vrot.lane.b32.xlu0 %v5974, 112
  %v7028 = vpop.permute.xlu0 %7027
  %7029 = vrot.lane.b32.xlu0 %v6110, 112
  %v7030 = vpop.permute.xlu0 %7029
  %7031 = vrot.lane.b32.xlu0 %v6246, 112
  %v7032 = vpop.permute.xlu0 %7031
  %7033 = vrot.lane.b32.xlu0 %v6382, 112
  %v7034 = vpop.permute.xlu0 %7033
  %7043 = vrot.lane.b32.xlu0 %v6512, 16
  %v7044 = vpop.permute.xlu0 %7043
  %7045 = vrot.lane.b32.xlu0 %v6648, 16
  %v7046 = vpop.permute.xlu0 %7045
  %7047 = vrot.lane.b32.xlu0 %v6784, 16
  %v7048 = vpop.permute.xlu0 %7047
  %7049 = vrot.lane.b32.xlu0 %v6920, 16
  %v7050 = vpop.permute.xlu0 %7049
  %7059 = vrot.lane.b32.xlu0 %v6513, 32
  %v7060 = vpop.permute.xlu0 %7059
  %7061 = vrot.lane.b32.xlu0 %v6649, 32
  %v7062 = vpop.permute.xlu0 %7061
  %7063 = vrot.lane.b32.xlu0 %v6785, 32
  %v7064 = vpop.permute.xlu0 %7063
  %7065 = vrot.lane.b32.xlu0 %v6921, 32
  %v7066 = vpop.permute.xlu0 %7065
  %7075 = vrot.lane.b32.xlu0 %v6514, 48
  %v7076 = vpop.permute.xlu0 %7075
  %7077 = vrot.lane.b32.xlu0 %v6650, 48
  %v7078 = vpop.permute.xlu0 %7077
  %7079 = vrot.lane.b32.xlu0 %v6786, 48
  %v7080 = vpop.permute.xlu0 %7079
  %7081 = vrot.lane.b32.xlu0 %v6922, 48
  %v7082 = vpop.permute.xlu0 %7081
  %7091 = vrot.lane.b32.xlu0 %v6515, 64
  %v7092 = vpop.permute.xlu0 %7091
  %7093 = vrot.lane.b32.xlu0 %v6651, 64
  %v7094 = vpop.permute.xlu0 %7093
  %7095 = vrot.lane.b32.xlu0 %v6787, 64
  %v7096 = vpop.permute.xlu0 %7095
  %7097 = vrot.lane.b32.xlu0 %v6923, 64
  %v7098 = vpop.permute.xlu0 %7097
  %7107 = vrot.lane.b32.xlu0 %v6516, 80
  %v7108 = vpop.permute.xlu0 %7107
  %7109 = vrot.lane.b32.xlu0 %v6652, 80
  %v7110 = vpop.permute.xlu0 %7109
  %7111 = vrot.lane.b32.xlu0 %v6788, 80
  %v7112 = vpop.permute.xlu0 %7111
  %7113 = vrot.lane.b32.xlu0 %v6924, 80
  %v7114 = vpop.permute.xlu0 %7113
  %7123 = vrot.lane.b32.xlu0 %v6517, 96
  %v7124 = vpop.permute.xlu0 %7123
  %7125 = vrot.lane.b32.xlu0 %v6653, 96
  %v7126 = vpop.permute.xlu0 %7125
  %7127 = vrot.lane.b32.xlu0 %v6789, 96
  %v7128 = vpop.permute.xlu0 %7127
  %7129 = vrot.lane.b32.xlu0 %v6925, 96
  %v7130 = vpop.permute.xlu0 %7129
  %7139 = vrot.lane.b32.xlu0 %v6518, 112
  %v7140 = vpop.permute.xlu0 %7139
  %7141 = vrot.lane.b32.xlu0 %v6654, 112
  %v7142 = vpop.permute.xlu0 %7141
  %7143 = vrot.lane.b32.xlu0 %v6790, 112
  %v7144 = vpop.permute.xlu0 %7143
  %7145 = vrot.lane.b32.xlu0 %v6926, 112
  %v7146 = vpop.permute.xlu0 %7145
  %v7151 = vsel %vm709, %v5967, %v6932
  %v7152 = vsel %vm709, %v6103, %v6934
  %v7153 = vsel %vm709, %v6239, %v6936
  %v7154 = vsel %vm709, %v6375, %v6938
  %v7155 = vsel %vm242, %v7151, %v6948
  %v7156 = vsel %vm242, %v7152, %v6950
  %v7157 = vsel %vm242, %v7153, %v6952
  %v7158 = vsel %vm242, %v7154, %v6954
  %v7159 = vsel %vm712, %v7155, %v6964
  %v7160 = vsel %vm712, %v7156, %v6966
  %v7161 = vsel %vm712, %v7157, %v6968
  %v7162 = vsel %vm712, %v7158, %v6970
  %v7163 = vsel %vm714, %v7159, %v6980
  %v7164 = vsel %vm714, %v7160, %v6982
  %v7165 = vsel %vm714, %v7161, %v6984
  %v7166 = vsel %vm714, %v7162, %v6986
  %v7167 = vsel %vm716, %v7163, %v6996
  %v7168 = vsel %vm716, %v7164, %v6998
  %v7169 = vsel %vm716, %v7165, %v7000
  %v7170 = vsel %vm716, %v7166, %v7002
  %v7171 = vsel %vm718, %v7167, %v7012
  %v7172 = vsel %vm718, %v7168, %v7014
  %v7173 = vsel %vm718, %v7169, %v7016
  %v7174 = vsel %vm718, %v7170, %v7018
  %v7175 = vsel %vm720, %v7171, %v7028
  %v7176 = vsel %vm720, %v7172, %v7030
  %v7177 = vsel %vm720, %v7173, %v7032
  %v7178 = vsel %vm720, %v7174, %v7034
  %v7179 = vsel %vm709, %v6511, %v7044
  %v7180 = vsel %vm709, %v6647, %v7046
  %v7181 = vsel %vm709, %v6783, %v7048
  %v7182 = vsel %vm709, %v6919, %v7050
  %v7183 = vsel %vm242, %v7179, %v7060
  %v7184 = vsel %vm242, %v7180, %v7062
  %v7185 = vsel %vm242, %v7181, %v7064
  %v7186 = vsel %vm242, %v7182, %v7066
  %v7187 = vsel %vm712, %v7183, %v7076
  %v7188 = vsel %vm712, %v7184, %v7078
  %v7189 = vsel %vm712, %v7185, %v7080
  %v7190 = vsel %vm712, %v7186, %v7082
  %v7191 = vsel %vm714, %v7187, %v7092
  %v7192 = vsel %vm714, %v7188, %v7094
  %v7193 = vsel %vm714, %v7189, %v7096
  %v7194 = vsel %vm714, %v7190, %v7098
  %v7195 = vsel %vm716, %v7191, %v7108
  %v7196 = vsel %vm716, %v7192, %v7110
  %v7197 = vsel %vm716, %v7193, %v7112
  %v7198 = vsel %vm716, %v7194, %v7114
  %v7199 = vsel %vm718, %v7195, %v7124
  %v7200 = vsel %vm718, %v7196, %v7126
  %v7201 = vsel %vm718, %v7197, %v7128
  %v7202 = vsel %vm718, %v7198, %v7130
  %v7203 = vsel %vm720, %v7199, %v7140
  %v7204 = vsel %vm720, %v7200, %v7142
  %v7205 = vsel %vm720, %v7201, %v7144
  %v7206 = vsel %vm720, %v7202, %v7146
  %v7207 = vxor.u32 %v7175, 2147483648
  %v7208 = vxor.u32 %v7203, 2147483648
  %v7209 = vxor.u32 %v7176, 2147483648
  %v7210 = vxor.u32 %v7204, 2147483648
  %v7211 = vxor.u32 %v7177, 2147483648
  %v7212 = vxor.u32 %v7205, 2147483648
  %v7213 = vxor.u32 %v7178, 2147483648
  %v7214 = vxor.u32 %v7206, 2147483648
  %v7215 = vmul.f32 %v7207, 1.442695
  %v7216 = vpow.pop %v7215
  %v7217 = vmul.f32 %v7208, 1.442695
  %v7218 = vpow.pop %v7217
  %v7219 = vmul.f32 %v7209, 1.442695
  %v7220 = vpow.pop %v7219
  %v7221 = vmul.f32 %v7210, 1.442695
  %v7222 = vpow.pop %v7221
  %v7223 = vmul.f32 %v7211, 1.442695
  %v7224 = vpow.pop %v7223
  %v7225 = vmul.f32 %v7212, 1.442695
  %v7226 = vpow.pop %v7225
  %v7227 = vmul.f32 %v7213, 1.442695
  %v7228 = vpow.pop %v7227
  %v7229 = vmul.f32 %v7214, 1.442695
  %v7230 = vpow.pop %v7229
  %v7231 = vadd.f32 %v7216, 1.0
  %v7232 = vadd.f32 %v7218, 1.0
  %v7233 = vadd.f32 %v7220, 1.0
  %v7234 = vadd.f32 %v7222, 1.0
  %v7235 = vadd.f32 %v7224, 1.0
  %v7236 = vadd.f32 %v7226, 1.0
  %v7237 = vadd.f32 %v7228, 1.0
  %v7238 = vadd.f32 %v7230, 1.0
  %v7239 = vrcp.pop %v7231
  %v7240 = vmul.f32 1.0, %v7239
  %v7241 = vrcp.pop %v7232
  %v7242 = vmul.f32 1.0, %v7241
  %v7243 = vrcp.pop %v7233
  %v7244 = vmul.f32 1.0, %v7243
  %v7245 = vrcp.pop %v7234
  %v7246 = vmul.f32 1.0, %v7245
  %v7247 = vrcp.pop %v7235
  %v7248 = vmul.f32 1.0, %v7247
  %v7249 = vrcp.pop %v7236
  %v7250 = vmul.f32 1.0, %v7249
  %v7251 = vrcp.pop %v7237
  %v7252 = vmul.f32 1.0, %v7251
  %v7253 = vrcp.pop %v7238
  %v7254 = vmul.f32 1.0, %v7253
  %v7255 = vmul.f32 %v7240, %v174
  %v7256 = vmul.f32 %v7242, %v175
  %v7257 = vmul.f32 %v7244, %v176
  %v7258 = vmul.f32 %v7246, %v177
  %v7259 = vmul.f32 %v7248, %v178
  %v7260 = vmul.f32 %v7250, %v179
  %v7261 = vmul.f32 %v7252, %v180
  %v7262 = vmul.f32 %v7254, %v181
  %7263 = vst [vmem:[%s7] sm:$0xff] %v7255
  %7264 = vst [vmem:[%s7 + $0x8] sm:$0xff] %v7256
  %7265 = vst [vmem:[%s7 + $0x10] sm:$0xff] %v7257
  %7266 = vst [vmem:[%s7 + $0x18] sm:$0xff] %v7258
  %7267 = vst [vmem:[%s7 + $0x20] sm:$0xff] %v7259
  %7268 = vst [vmem:[%s7 + $0x28] sm:$0xff] %v7260
  %7269 = vst [vmem:[%s7 + $0x30] sm:$0xff] %v7261
  %7270 = vst [vmem:[%s7 + $0x38] sm:$0xff] %v7262
  %s7271 = scalar_lea.vmem %s0, 64
  %v7272 = vld [vmem:[%s7271] sm:$0xff]
  %v7273 = vld [vmem:[%s7271 + $0x8] sm:$0xff]
  %v7274 = vld [vmem:[%s7271 + $0x10] sm:$0xff]
  %v7275 = vld [vmem:[%s7271 + $0x18] sm:$0xff]
  %v7276 = vld [vmem:[%s7271 + $0x20] sm:$0xff]
  %v7277 = vld [vmem:[%s7271 + $0x28] sm:$0xff]
  %v7278 = vld [vmem:[%s7271 + $0x30] sm:$0xff]
  %v7279 = vld [vmem:[%s7271 + $0x38] sm:$0xff]
  %s7280 = scalar_lea.vmem %s1, 64
  %v7281 = vld [vmem:[%s7280] sm:$0xff]
  %v7282 = vld [vmem:[%s7280 + $0x8] sm:$0xff]
  %v7283 = vld [vmem:[%s7280 + $0x10] sm:$0xff]
  %v7284 = vld [vmem:[%s7280 + $0x18] sm:$0xff]
  %v7285 = vld [vmem:[%s7280 + $0x20] sm:$0xff]
  %v7286 = vld [vmem:[%s7280 + $0x28] sm:$0xff]
  %v7287 = vld [vmem:[%s7280 + $0x30] sm:$0xff]
  %v7288 = vld [vmem:[%s7280 + $0x38] sm:$0xff]
  %v7289 = vadd.f32 %v7272, %v7273
  %7290 = vadd.xlane.f32.xlu0 %v7289
  %v7291 = vpop.xlane.xlu0 %7290
  %v7292 = vadd.f32 %v7274, %v7275
  %7293 = vadd.xlane.f32.xlu0 %v7292
  %v7294 = vpop.xlane.xlu0 %7293
  %v7295 = vadd.f32 %v7276, %v7277
  %7296 = vadd.xlane.f32.xlu0 %v7295
  %v7297 = vpop.xlane.xlu0 %7296
  %v7298 = vadd.f32 %v7278, %v7279
  %7299 = vadd.xlane.f32.xlu0 %v7298
  %v7300 = vpop.xlane.xlu0 %7299
  %v7301 = vmul.f32 %v7291, %v79
  %v7302 = vmul.f32 %v7294, %v79
  %v7303 = vmul.f32 %v7297, %v79
  %v7304 = vmul.f32 %v7300, %v79
  %v7305 = vmax.f32 %v7272, %v7273
  %7306 = vmax.xlane.f32.xlu0 %v7305
  %v7307 = vpop.xlane.xlu0 %7306
  %v7308 = vmax.f32 %v7274, %v7275
  %7309 = vmax.xlane.f32.xlu0 %v7308
  %v7310 = vpop.xlane.xlu0 %7309
  %v7311 = vmax.f32 %v7276, %v7277
  %7312 = vmax.xlane.f32.xlu0 %v7311
  %v7313 = vpop.xlane.xlu0 %7312
  %v7314 = vmax.f32 %v7278, %v7279
  %7315 = vmax.xlane.f32.xlu0 %v7314
  %v7316 = vpop.xlane.xlu0 %7315
  %v7317 = vmul.f32 %v27, %v7301
  %v7318 = vmul.f32 %v28, %v7302
  %v7319 = vmul.f32 %v29, %v7303
  %v7320 = vmul.f32 %v30, %v7304
  %v7321 = vsel %vm100, %v7317, 0.0
  %v7322 = vsel %vm100, %v7318, 0.0
  %v7323 = vadd.f32 %v7321, %v7322
  %v7324 = vsel %vm100, %v7319, 0.0
  %v7325 = vadd.f32 %v7323, %v7324
  %v7326 = vsel %vm100, %v7320, 0.0
  %v7327 = vadd.f32 %v7325, %v7326
  %v7328 = vrot.slane %v7327, 4
  %v7329 = vadd.f32 %v7327, %v7328
  %v7330 = vrot.slane %v7329, 2
  %v7331 = vadd.f32 %v7329, %v7330
  %v7332 = vrot.slane %v7331, 1
  %v7333 = vadd.f32 %v7331, %v7332
  %v7334 = vmax.f32 %v7333, 0.0
  %v7335 = vmul.f32 %v27, %v7307
  %v7336 = vmul.f32 %v28, %v7310
  %v7337 = vmul.f32 %v29, %v7313
  %v7338 = vmul.f32 %v30, %v7316
  %v7339 = vsel %vm100, %v7335, 0.0
  %v7340 = vsel %vm100, %v7336, 0.0
  %v7341 = vadd.f32 %v7339, %v7340
  %v7342 = vsel %vm100, %v7337, 0.0
  %v7343 = vadd.f32 %v7341, %v7342
  %v7344 = vsel %vm100, %v7338, 0.0
  %v7345 = vadd.f32 %v7343, %v7344
  %v7346 = vrot.slane %v7345, 4
  %v7347 = vadd.f32 %v7345, %v7346
  %v7348 = vrot.slane %v7347, 2
  %v7349 = vadd.f32 %v7347, %v7348
  %v7350 = vrot.slane %v7349, 1
  %v7351 = vadd.f32 %v7349, %v7350
  %v7352 = vmax.f32 %v7351, 0.0
  %v7353 = vadd.f32 %v7334, %v7352
  %v7354 = vmul.f32 %v31, %v7353
  %v7355 = vmul.f32 %v32, %v7353
  %v7356 = vmul.f32 %v33, %v7353
  %v7357 = vmul.f32 %v34, %v7353
  %v7358 = vsel %vm100, %v7354, 0.0
  %7359 = vadd.xlane.f32.xlu0 %v7358
  %v7360 = vpop.xlane.xlu0 %7359
  %v7361 = vsel %vm100, %v7355, 0.0
  %7362 = vadd.xlane.f32.xlu0 %v7361
  %v7363 = vpop.xlane.xlu0 %7362
  %v7364 = vsel %vm100, %v7356, 0.0
  %7365 = vadd.xlane.f32.xlu0 %v7364
  %v7366 = vpop.xlane.xlu0 %7365
  %v7367 = vsel %vm100, %v7357, 0.0
  %7368 = vadd.xlane.f32.xlu0 %v7367
  %v7369 = vpop.xlane.xlu0 %7368
  %v7370 = vxor.u32 %v7360, 2147483648
  %v7371 = vxor.u32 %v7363, 2147483648
  %v7372 = vxor.u32 %v7366, 2147483648
  %v7373 = vxor.u32 %v7369, 2147483648
  %v7374 = vmul.f32 %v7370, 1.442695
  %v7375 = vpow.pop %v7374
  %v7376 = vmul.f32 %v7371, 1.442695
  %v7377 = vpow.pop %v7376
  %v7378 = vmul.f32 %v7372, 1.442695
  %v7379 = vpow.pop %v7378
  %v7380 = vmul.f32 %v7373, 1.442695
  %v7381 = vpow.pop %v7380
  %v7382 = vadd.f32 %v7375, 1.0
  %v7383 = vadd.f32 %v7377, 1.0
  %v7384 = vadd.f32 %v7379, 1.0
  %v7385 = vadd.f32 %v7381, 1.0
  %v7386 = vrcp.pop %v7382
  %v7387 = vmul.f32 1.0, %v7386
  %v7388 = vrcp.pop %v7383
  %v7389 = vmul.f32 1.0, %v7388
  %v7390 = vrcp.pop %v7384
  %v7391 = vmul.f32 1.0, %v7390
  %v7392 = vrcp.pop %v7385
  %v7393 = vmul.f32 1.0, %v7392
  %v7394 = vmul.f32 %v7272, %v7387
  %v7395 = vmul.f32 %v7273, %v7387
  %v7396 = vmul.f32 %v7274, %v7389
  %v7397 = vmul.f32 %v7275, %v7389
  %v7398 = vmul.f32 %v7276, %v7391
  %v7399 = vmul.f32 %v7277, %v7391
  %v7400 = vmul.f32 %v7278, %v7393
  %v7401 = vmul.f32 %v7279, %v7393
  %v7410 = vunpack.c.l.b16 %v7281
  %v7411 = vunpack.c.h.b16 %v7281
  %v7412 = vunpack.c.l.b16 %v7282
  %v7413 = vunpack.c.h.b16 %v7282
  %v7414 = vunpack.c.l.b16 %v7283
  %v7415 = vunpack.c.h.b16 %v7283
  %v7416 = vunpack.c.l.b16 %v7284
  %v7417 = vunpack.c.h.b16 %v7284
  %v7418 = vunpack.c.l.b16 %v7285
  %v7419 = vunpack.c.h.b16 %v7285
  %v7420 = vunpack.c.l.b16 %v7286
  %v7421 = vunpack.c.h.b16 %v7286
  %v7422 = vunpack.c.l.b16 %v7287
  %v7423 = vunpack.c.h.b16 %v7287
  %v7424 = vunpack.c.l.b16 %v7288
  %v7425 = vunpack.c.h.b16 %v7288
  %v7426 = vpack.c.b16 %v7414, %v7410
  %v7427 = vpack.c.b16 %v7415, %v7411
  %v7428 = vpack.c.b16 %v7416, %v7412
  %v7429 = vpack.c.b16 %v7417, %v7413
  %v7430 = vpack.c.b16 %v7422, %v7418
  %v7431 = vpack.c.b16 %v7423, %v7419
  %v7432 = vpack.c.b16 %v7424, %v7420
  %v7433 = vpack.c.b16 %v7425, %v7421
  %7442 = vmatprep.subr.bf16.mxu0 0
  %7443 = vmatpush1.bf16.msra.mxu0 0
  %7444 = vmatprep.subr.bf16.mxu0 0
  %7445 = vmatpush1.bf16.msra.mxu0 0
  %7446 = vmatprep.subr.bf16.mxu0 0
  %7447 = vmatpush1.bf16.msra.mxu0 0
  %7448 = vmatprep.subr.bf16.mxu0 0
  %7449 = vmatpush1.bf16.msra.mxu0 0
  %7450 = vmatprep.subr.bf16.mxu0 0
  %7451 = vmatpush1.bf16.msra.mxu0 0
  %7452 = vmatprep.subr.bf16.mxu0 0
  %7453 = vmatpush1.bf16.msra.mxu0 0
  %7454 = vmatprep.subr.bf16.mxu0 %v7431
  %7455 = vmatpush1.bf16.msra.mxu0 %v7430
  %7456 = vmatprep.subr.bf16.mxu0 %v7427
  %7457 = vmatpush1.bf16.msra.mxu0 %v7426
  %7458 = vmatprep.subr.bf16.mxu0 0
  %7459 = vmatpush2.bf16.msra.mxu0 0
  %7460 = vmatprep.subr.bf16.mxu0 0
  %7461 = vmatpush2.bf16.msra.mxu0 0
  %7462 = vmatprep.subr.bf16.mxu0 0
  %7463 = vmatpush2.bf16.msra.mxu0 0
  %7464 = vmatprep.subr.bf16.mxu0 0
  %7465 = vmatpush2.bf16.msra.mxu0 0
  %7466 = vmatprep.subr.bf16.mxu0 0
  %7467 = vmatpush2.bf16.msra.mxu0 0
  %7468 = vmatprep.subr.bf16.mxu0 0
  %7469 = vmatpush2.bf16.msra.mxu0 0
  %7470 = vmatprep.subr.bf16.mxu0 0
  %7471 = vmatpush2.bf16.msra.mxu0 0
  %7472 = vmatprep.subr.bf16.mxu0 0
  %7473 = vmatpush2.bf16.msra.mxu0 0
  %7474 = vmatprep.mubr.bf16.mxu0 0
  %7475 = vmatmul.mubr.bf16.gmra.mxu0 %v244
  %v7476 = vpop.f32.mrf.mxu0
  %v7477 = vadd.f32 0.0, %v7476
  %v7478 = vpop.f32.mrf.mxu0
  %v7479 = vadd.f32 0.0, %v7478
  %v7480 = vpop.f32.mrf.mxu0
  %v7481 = vadd.f32 0.0, %v7480
  %v7482 = vpop.f32.mrf.mxu0
  %v7483 = vadd.f32 0.0, %v7482
  %7484 = vmatprep.mubr.bf16.mxu0 0
  %7485 = vmatmul.mubr.bf16.gmra.mxu0 %v247
  %v7486 = vpop.f32.mrf.mxu0
  %v7487 = vadd.f32 0.0, %v7486
  %v7488 = vpop.f32.mrf.mxu0
  %v7489 = vadd.f32 0.0, %v7488
  %v7490 = vpop.f32.mrf.mxu0
  %v7491 = vadd.f32 0.0, %v7490
  %v7492 = vpop.f32.mrf.mxu0
  %v7493 = vadd.f32 0.0, %v7492
  %7494 = vmatprep.mubr.bf16.mxu0 0
  %7495 = vmatmul.mubr.bf16.gmra.mxu0 %v250
  %v7496 = vpop.f32.mrf.mxu0
  %v7497 = vadd.f32 0.0, %v7496
  %v7498 = vpop.f32.mrf.mxu0
  %v7499 = vadd.f32 0.0, %v7498
  %v7500 = vpop.f32.mrf.mxu0
  %v7501 = vadd.f32 0.0, %v7500
  %v7502 = vpop.f32.mrf.mxu0
  %v7503 = vadd.f32 0.0, %v7502
  %7504 = vmatprep.mubr.bf16.mxu0 0
  %7505 = vmatmul.mubr.bf16.gmra.mxu0 %v253
  %v7506 = vpop.f32.mrf.mxu0
  %v7507 = vadd.f32 0.0, %v7506
  %v7508 = vpop.f32.mrf.mxu0
  %v7509 = vadd.f32 0.0, %v7508
  %v7510 = vpop.f32.mrf.mxu0
  %v7511 = vadd.f32 0.0, %v7510
  %v7512 = vpop.f32.mrf.mxu0
  %v7513 = vadd.f32 0.0, %v7512
  %7514 = vdwg.mxu0
  %7515 = vmatprep.subr.bf16.mxu0 0
  %7516 = vmatpush1.bf16.msra.mxu0 0
  %7517 = vmatprep.subr.bf16.mxu0 0
  %7518 = vmatpush1.bf16.msra.mxu0 0
  %7519 = vmatprep.subr.bf16.mxu0 0
  %7520 = vmatpush1.bf16.msra.mxu0 0
  %7521 = vmatprep.subr.bf16.mxu0 0
  %7522 = vmatpush1.bf16.msra.mxu0 0
  %7523 = vmatprep.subr.bf16.mxu0 0
  %7524 = vmatpush1.bf16.msra.mxu0 0
  %7525 = vmatprep.subr.bf16.mxu0 0
  %7526 = vmatpush1.bf16.msra.mxu0 0
  %7527 = vmatprep.subr.bf16.mxu0 %v7433
  %7528 = vmatpush1.bf16.msra.mxu0 %v7432
  %7529 = vmatprep.subr.bf16.mxu0 %v7429
  %7530 = vmatpush1.bf16.msra.mxu0 %v7428
  %7531 = vmatprep.subr.bf16.mxu0 0
  %7532 = vmatpush2.bf16.msra.mxu0 0
  %7533 = vmatprep.subr.bf16.mxu0 0
  %7534 = vmatpush2.bf16.msra.mxu0 0
  %7535 = vmatprep.subr.bf16.mxu0 0
  %7536 = vmatpush2.bf16.msra.mxu0 0
  %7537 = vmatprep.subr.bf16.mxu0 0
  %7538 = vmatpush2.bf16.msra.mxu0 0
  %7539 = vmatprep.subr.bf16.mxu0 0
  %7540 = vmatpush2.bf16.msra.mxu0 0
  %7541 = vmatprep.subr.bf16.mxu0 0
  %7542 = vmatpush2.bf16.msra.mxu0 0
  %7543 = vmatprep.subr.bf16.mxu0 0
  %7544 = vmatpush2.bf16.msra.mxu0 0
  %7545 = vmatprep.subr.bf16.mxu0 0
  %7546 = vmatpush2.bf16.msra.mxu0 0
  %7547 = vmatprep.mubr.bf16.mxu0 0
  %7548 = vmatmul.mubr.bf16.gmra.mxu0 %v244
  %v7549 = vpop.f32.mrf.mxu0
  %v7550 = vadd.f32 0.0, %v7549
  %v7551 = vpop.f32.mrf.mxu0
  %v7552 = vadd.f32 0.0, %v7551
  %v7553 = vpop.f32.mrf.mxu0
  %v7554 = vadd.f32 0.0, %v7553
  %v7555 = vpop.f32.mrf.mxu0
  %v7556 = vadd.f32 0.0, %v7555
  %7557 = vmatprep.mubr.bf16.mxu0 0
  %7558 = vmatmul.mubr.bf16.gmra.mxu0 %v247
  %v7559 = vpop.f32.mrf.mxu0
  %v7560 = vadd.f32 0.0, %v7559
  %v7561 = vpop.f32.mrf.mxu0
  %v7562 = vadd.f32 0.0, %v7561
  %v7563 = vpop.f32.mrf.mxu0
  %v7564 = vadd.f32 0.0, %v7563
  %v7565 = vpop.f32.mrf.mxu0
  %v7566 = vadd.f32 0.0, %v7565
  %7567 = vmatprep.mubr.bf16.mxu0 0
  %7568 = vmatmul.mubr.bf16.gmra.mxu0 %v250
  %v7569 = vpop.f32.mrf.mxu0
  %v7570 = vadd.f32 0.0, %v7569
  %v7571 = vpop.f32.mrf.mxu0
  %v7572 = vadd.f32 0.0, %v7571
  %v7573 = vpop.f32.mrf.mxu0
  %v7574 = vadd.f32 0.0, %v7573
  %v7575 = vpop.f32.mrf.mxu0
  %v7576 = vadd.f32 0.0, %v7575
  %7577 = vmatprep.mubr.bf16.mxu0 0
  %7578 = vmatmul.mubr.bf16.gmra.mxu0 %v253
  %v7579 = vpop.f32.mrf.mxu0
  %v7580 = vadd.f32 0.0, %v7579
  %v7581 = vpop.f32.mrf.mxu0
  %v7582 = vadd.f32 0.0, %v7581
  %v7583 = vpop.f32.mrf.mxu0
  %v7584 = vadd.f32 0.0, %v7583
  %v7585 = vpop.f32.mrf.mxu0
  %v7586 = vadd.f32 0.0, %v7585
  %7587 = vdwg.mxu0
  %v7588 = vcombine.high %v7387, 0.0
  %v7590 = vunpack.c.l.s4 1983009808
  %v7591 = vunpack.c.0.s8 %v7590
  %v7592 = vlaneseq
  %v7593 = vshrl.u32 %v7592, 7
  %v7594 = vsub.s32 %v7591, %v7593
  %v7595 = vrot.slane %v7387, %v7594
  %v7597 = vunpack.c.l.s4 1983009808
  %v7598 = vunpack.c.0.s8 %v7597
  %v7599 = vlaneseq
  %v7600 = vshrl.u32 %v7599, 7
  %v7601 = vsub.s32 %v7598, %v7600
  %v7602 = vrot.slane %v7588, %v7601
  %v7603 = vcombine.high %v7595, 0.0
  %v7605 = vunpack.c.l.s4 1934713408
  %v7606 = vunpack.c.0.s8 %v7605
  %v7607 = vlaneseq
  %v7608 = vshrl.u32 %v7607, 7
  %v7609 = vsub.s32 %v7606, %v7608
  %v7610 = vrot.slane %v7595, %v7609
  %v7612 = vunpack.c.l.s4 1934713408
  %v7613 = vunpack.c.0.s8 %v7612
  %v7614 = vlaneseq
  %v7615 = vshrl.u32 %v7614, 7
  %v7616 = vsub.s32 %v7613, %v7615
  %v7617 = vrot.slane %v7603, %v7616
  %v7618 = vcombine.high %v7602, 0.0
  %v7620 = vunpack.c.l.s4 1934713408
  %v7621 = vunpack.c.0.s8 %v7620
  %v7622 = vlaneseq
  %v7623 = vshrl.u32 %v7622, 7
  %v7624 = vsub.s32 %v7621, %v7623
  %v7625 = vrot.slane %v7602, %v7624
  %v7627 = vunpack.c.l.s4 1934713408
  %v7628 = vunpack.c.0.s8 %v7627
  %v7629 = vlaneseq
  %v7630 = vshrl.u32 %v7629, 7
  %v7631 = vsub.s32 %v7628, %v7630
  %v7632 = vrot.slane %v7618, %v7631
  %v7633 = vcombine.high %v7610, 0.0
  %v7634 = vcombine.high %v7617, 0.0
  %v7635 = vcombine.high %v7625, 0.0
  %v7636 = vcombine.high %v7632, 0.0
  %v7637 = vcombine.high %v7389, 0.0
  %v7639 = vunpack.c.l.s4 1983009808
  %v7640 = vunpack.c.0.s8 %v7639
  %v7641 = vlaneseq
  %v7642 = vshrl.u32 %v7641, 7
  %v7643 = vsub.s32 %v7640, %v7642
  %v7644 = vrot.slane %v7389, %v7643
  %v7646 = vunpack.c.l.s4 1983009808
  %v7647 = vunpack.c.0.s8 %v7646
  %v7648 = vlaneseq
  %v7649 = vshrl.u32 %v7648, 7
  %v7650 = vsub.s32 %v7647, %v7649
  %v7651 = vrot.slane %v7637, %v7650
  %v7652 = vcombine.high %v7644, 0.0
  %v7654 = vunpack.c.l.s4 1934713408
  %v7655 = vunpack.c.0.s8 %v7654
  %v7656 = vlaneseq
  %v7657 = vshrl.u32 %v7656, 7
  %v7658 = vsub.s32 %v7655, %v7657
  %v7659 = vrot.slane %v7644, %v7658
  %v7661 = vunpack.c.l.s4 1934713408
  %v7662 = vunpack.c.0.s8 %v7661
  %v7663 = vlaneseq
  %v7664 = vshrl.u32 %v7663, 7
  %v7665 = vsub.s32 %v7662, %v7664
  %v7666 = vrot.slane %v7652, %v7665
  %v7667 = vcombine.high %v7651, 0.0
  %v7669 = vunpack.c.l.s4 1934713408
  %v7670 = vunpack.c.0.s8 %v7669
  %v7671 = vlaneseq
  %v7672 = vshrl.u32 %v7671, 7
  %v7673 = vsub.s32 %v7670, %v7672
  %v7674 = vrot.slane %v7651, %v7673
  %v7676 = vunpack.c.l.s4 1934713408
  %v7677 = vunpack.c.0.s8 %v7676
  %v7678 = vlaneseq
  %v7679 = vshrl.u32 %v7678, 7
  %v7680 = vsub.s32 %v7677, %v7679
  %v7681 = vrot.slane %v7667, %v7680
  %v7682 = vcombine.high %v7659, 0.0
  %v7683 = vcombine.high %v7666, 0.0
  %v7684 = vcombine.high %v7674, 0.0
  %v7685 = vcombine.high %v7681, 0.0
  %v7686 = vcombine.high %v7391, 0.0
  %v7688 = vunpack.c.l.s4 1983009808
  %v7689 = vunpack.c.0.s8 %v7688
  %v7690 = vlaneseq
  %v7691 = vshrl.u32 %v7690, 7
  %v7692 = vsub.s32 %v7689, %v7691
  %v7693 = vrot.slane %v7391, %v7692
  %v7695 = vunpack.c.l.s4 1983009808
  %v7696 = vunpack.c.0.s8 %v7695
  %v7697 = vlaneseq
  %v7698 = vshrl.u32 %v7697, 7
  %v7699 = vsub.s32 %v7696, %v7698
  %v7700 = vrot.slane %v7686, %v7699
  %v7701 = vcombine.high %v7693, 0.0
  %v7703 = vunpack.c.l.s4 1934713408
  %v7704 = vunpack.c.0.s8 %v7703
  %v7705 = vlaneseq
  %v7706 = vshrl.u32 %v7705, 7
  %v7707 = vsub.s32 %v7704, %v7706
  %v7708 = vrot.slane %v7693, %v7707
  %v7710 = vunpack.c.l.s4 1934713408
  %v7711 = vunpack.c.0.s8 %v7710
  %v7712 = vlaneseq
  %v7713 = vshrl.u32 %v7712, 7
  %v7714 = vsub.s32 %v7711, %v7713
  %v7715 = vrot.slane %v7701, %v7714
  %v7716 = vcombine.high %v7700, 0.0
  %v7718 = vunpack.c.l.s4 1934713408
  %v7719 = vunpack.c.0.s8 %v7718
  %v7720 = vlaneseq
  %v7721 = vshrl.u32 %v7720, 7
  %v7722 = vsub.s32 %v7719, %v7721
  %v7723 = vrot.slane %v7700, %v7722
  %v7725 = vunpack.c.l.s4 1934713408
  %v7726 = vunpack.c.0.s8 %v7725
  %v7727 = vlaneseq
  %v7728 = vshrl.u32 %v7727, 7
  %v7729 = vsub.s32 %v7726, %v7728
  %v7730 = vrot.slane %v7716, %v7729
  %v7731 = vcombine.high %v7708, 0.0
  %v7732 = vcombine.high %v7715, 0.0
  %v7733 = vcombine.high %v7723, 0.0
  %v7734 = vcombine.high %v7730, 0.0
  %v7735 = vcombine.high %v7393, 0.0
  %v7737 = vunpack.c.l.s4 1983009808
  %v7738 = vunpack.c.0.s8 %v7737
  %v7739 = vlaneseq
  %v7740 = vshrl.u32 %v7739, 7
  %v7741 = vsub.s32 %v7738, %v7740
  %v7742 = vrot.slane %v7393, %v7741
  %v7744 = vunpack.c.l.s4 1983009808
  %v7745 = vunpack.c.0.s8 %v7744
  %v7746 = vlaneseq
  %v7747 = vshrl.u32 %v7746, 7
  %v7748 = vsub.s32 %v7745, %v7747
  %v7749 = vrot.slane %v7735, %v7748
  %v7750 = vcombine.high %v7742, 0.0
  %v7752 = vunpack.c.l.s4 1934713408
  %v7753 = vunpack.c.0.s8 %v7752
  %v7754 = vlaneseq
  %v7755 = vshrl.u32 %v7754, 7
  %v7756 = vsub.s32 %v7753, %v7755
  %v7757 = vrot.slane %v7742, %v7756
  %v7759 = vunpack.c.l.s4 1934713408
  %v7760 = vunpack.c.0.s8 %v7759
  %v7761 = vlaneseq
  %v7762 = vshrl.u32 %v7761, 7
  %v7763 = vsub.s32 %v7760, %v7762
  %v7764 = vrot.slane %v7750, %v7763
  %v7765 = vcombine.high %v7749, 0.0
  %v7767 = vunpack.c.l.s4 1934713408
  %v7768 = vunpack.c.0.s8 %v7767
  %v7769 = vlaneseq
  %v7770 = vshrl.u32 %v7769, 7
  %v7771 = vsub.s32 %v7768, %v7770
  %v7772 = vrot.slane %v7749, %v7771
  %v7774 = vunpack.c.l.s4 1934713408
  %v7775 = vunpack.c.0.s8 %v7774
  %v7776 = vlaneseq
  %v7777 = vshrl.u32 %v7776, 7
  %v7778 = vsub.s32 %v7775, %v7777
  %v7779 = vrot.slane %v7765, %v7778
  %v7780 = vcombine.high %v7757, 0.0
  %v7781 = vcombine.high %v7764, 0.0
  %v7782 = vcombine.high %v7772, 0.0
  %v7783 = vcombine.high %v7779, 0.0
  %7785 = vrot.lane.b32.xlu0 %v7633, 16
  %v7786 = vpop.permute.xlu0 %7785
  %7789 = vrot.lane.b32.xlu0 %v7617, 32
  %v7790 = vpop.permute.xlu0 %7789
  %7793 = vrot.lane.b32.xlu0 %v7634, 48
  %v7794 = vpop.permute.xlu0 %7793
  %7797 = vrot.lane.b32.xlu0 %v7625, 64
  %v7798 = vpop.permute.xlu0 %7797
  %7801 = vrot.lane.b32.xlu0 %v7635, 80
  %v7802 = vpop.permute.xlu0 %7801
  %7805 = vrot.lane.b32.xlu0 %v7632, 96
  %v7806 = vpop.permute.xlu0 %7805
  %7809 = vrot.lane.b32.xlu0 %v7636, 112
  %v7810 = vpop.permute.xlu0 %7809
  %7813 = vrot.lane.b32.xlu0 %v7682, 16
  %v7814 = vpop.permute.xlu0 %7813
  %7817 = vrot.lane.b32.xlu0 %v7666, 32
  %v7818 = vpop.permute.xlu0 %7817
  %7821 = vrot.lane.b32.xlu0 %v7683, 48
  %v7822 = vpop.permute.xlu0 %7821
  %7825 = vrot.lane.b32.xlu0 %v7674, 64
  %v7826 = vpop.permute.xlu0 %7825
  %7829 = vrot.lane.b32.xlu0 %v7684, 80
  %v7830 = vpop.permute.xlu0 %7829
  %7833 = vrot.lane.b32.xlu0 %v7681, 96
  %v7834 = vpop.permute.xlu0 %7833
  %7837 = vrot.lane.b32.xlu0 %v7685, 112
  %v7838 = vpop.permute.xlu0 %7837
  %7841 = vrot.lane.b32.xlu0 %v7731, 16
  %v7842 = vpop.permute.xlu0 %7841
  %7845 = vrot.lane.b32.xlu0 %v7715, 32
  %v7846 = vpop.permute.xlu0 %7845
  %7849 = vrot.lane.b32.xlu0 %v7732, 48
  %v7850 = vpop.permute.xlu0 %7849
  %7853 = vrot.lane.b32.xlu0 %v7723, 64
  %v7854 = vpop.permute.xlu0 %7853
  %7857 = vrot.lane.b32.xlu0 %v7733, 80
  %v7858 = vpop.permute.xlu0 %7857
  %7861 = vrot.lane.b32.xlu0 %v7730, 96
  %v7862 = vpop.permute.xlu0 %7861
  %7865 = vrot.lane.b32.xlu0 %v7734, 112
  %v7866 = vpop.permute.xlu0 %7865
  %7869 = vrot.lane.b32.xlu0 %v7780, 16
  %v7870 = vpop.permute.xlu0 %7869
  %7873 = vrot.lane.b32.xlu0 %v7764, 32
  %v7874 = vpop.permute.xlu0 %7873
  %7877 = vrot.lane.b32.xlu0 %v7781, 48
  %v7878 = vpop.permute.xlu0 %7877
  %7881 = vrot.lane.b32.xlu0 %v7772, 64
  %v7882 = vpop.permute.xlu0 %7881
  %7885 = vrot.lane.b32.xlu0 %v7782, 80
  %v7886 = vpop.permute.xlu0 %7885
  %7889 = vrot.lane.b32.xlu0 %v7779, 96
  %v7890 = vpop.permute.xlu0 %7889
  %7893 = vrot.lane.b32.xlu0 %v7783, 112
  %v7894 = vpop.permute.xlu0 %7893
  %v7896 = vsel %vm709, %v7610, %v7786
  %v7897 = vsel %vm242, %v7896, %v7790
  %v7898 = vsel %vm712, %v7897, %v7794
  %v7899 = vsel %vm714, %v7898, %v7798
  %v7900 = vsel %vm716, %v7899, %v7802
  %v7901 = vsel %vm718, %v7900, %v7806
  %v7902 = vsel %vm720, %v7901, %v7810
  %v7903 = vsel %vm709, %v7659, %v7814
  %v7904 = vsel %vm242, %v7903, %v7818
  %v7905 = vsel %vm712, %v7904, %v7822
  %v7906 = vsel %vm714, %v7905, %v7826
  %v7907 = vsel %vm716, %v7906, %v7830
  %v7908 = vsel %vm718, %v7907, %v7834
  %v7909 = vsel %vm720, %v7908, %v7838
  %v7910 = vsel %vm709, %v7708, %v7842
  %v7911 = vsel %vm242, %v7910, %v7846
  %v7912 = vsel %vm712, %v7911, %v7850
  %v7913 = vsel %vm714, %v7912, %v7854
  %v7914 = vsel %vm716, %v7913, %v7858
  %v7915 = vsel %vm718, %v7914, %v7862
  %v7916 = vsel %vm720, %v7915, %v7866
  %v7917 = vsel %vm709, %v7757, %v7870
  %v7918 = vsel %vm242, %v7917, %v7874
  %v7919 = vsel %vm712, %v7918, %v7878
  %v7920 = vsel %vm714, %v7919, %v7882
  %v7921 = vsel %vm716, %v7920, %v7886
  %v7922 = vsel %vm718, %v7921, %v7890
  %v7923 = vsel %vm720, %v7922, %v7894
  %v7924 = vlaneseq
  %v7925 = vshrl.u32 %v7924, 7
  %v7926 = vsub.s32 0, %v7925
  %v7927 = vrot.slane %v7902, %v7926
  %v7928 = vlaneseq
  %v7929 = vshrl.u32 %v7928, 7
  %v7930 = vsub.s32 0, %v7929
  %v7931 = vrot.slane %v7909, %v7930
  %v7932 = vlaneseq
  %v7933 = vshrl.u32 %v7932, 7
  %v7934 = vsub.s32 0, %v7933
  %v7935 = vrot.slane %v7916, %v7934
  %v7936 = vlaneseq
  %v7937 = vshrl.u32 %v7936, 7
  %v7938 = vsub.s32 0, %v7937
  %v7939 = vrot.slane %v7923, %v7938
  %v7940 = vmul.f32 %v7477, %v7927
  %v7941 = vmul.f32 %v7479, %v7931
  %v7942 = vmul.f32 %v7550, %v7935
  %v7943 = vmul.f32 %v7552, %v7939
  %v7944 = vmul.f32 %v7481, %v7927
  %v7945 = vmul.f32 %v7483, %v7931
  %v7946 = vmul.f32 %v7554, %v7935
  %v7947 = vmul.f32 %v7556, %v7939
  %v7948 = vmul.f32 %v7487, %v7927
  %v7949 = vmul.f32 %v7489, %v7931
  %v7950 = vmul.f32 %v7560, %v7935
  %v7951 = vmul.f32 %v7562, %v7939
  %v7952 = vmul.f32 %v7491, %v7927
  %v7953 = vmul.f32 %v7493, %v7931
  %v7954 = vmul.f32 %v7564, %v7935
  %v7955 = vmul.f32 %v7566, %v7939
  %v7956 = vadd.f32 %v7940, %v778
  %v7957 = vadd.f32 %v7941, %v778
  %v7958 = vadd.f32 %v7942, %v778
  %v7959 = vadd.f32 %v7943, %v778
  %v7960 = vadd.f32 %v7944, %v783
  %v7961 = vadd.f32 %v7945, %v783
  %v7962 = vadd.f32 %v7946, %v783
  %v7963 = vadd.f32 %v7947, %v783
  %v7964 = vadd.f32 %v7948, %v788
  %v7965 = vadd.f32 %v7949, %v788
  %v7966 = vadd.f32 %v7950, %v788
  %v7967 = vadd.f32 %v7951, %v788
  %v7968 = vadd.f32 %v7952, %v793
  %v7969 = vadd.f32 %v7953, %v793
  %v7970 = vadd.f32 %v7954, %v793
  %v7971 = vadd.f32 %v7955, %v793
  %v7972 = vpack.c.bf16 %v7960, %v7956
  %v7973 = vpack.c.bf16 %v7961, %v7957
  %v7974 = vpack.c.bf16 %v7962, %v7958
  %v7975 = vpack.c.bf16 %v7963, %v7959
  %v7976 = vpack.c.bf16 %v7968, %v7964
  %v7977 = vpack.c.bf16 %v7969, %v7965
  %v7978 = vpack.c.bf16 %v7970, %v7966
  %v7979 = vpack.c.bf16 %v7971, %v7967
  %v7980 = vmul.f32 %v7497, %v7927
  %v7981 = vmul.f32 %v7499, %v7931
  %v7982 = vmul.f32 %v7570, %v7935
  %v7983 = vmul.f32 %v7572, %v7939
  %v7984 = vmul.f32 %v7501, %v7927
  %v7985 = vmul.f32 %v7503, %v7931
  %v7986 = vmul.f32 %v7574, %v7935
  %v7987 = vmul.f32 %v7576, %v7939
  %v7988 = vmul.f32 %v7507, %v7927
  %v7989 = vmul.f32 %v7509, %v7931
  %v7990 = vmul.f32 %v7580, %v7935
  %v7991 = vmul.f32 %v7582, %v7939
  %v7992 = vmul.f32 %v7511, %v7927
  %v7993 = vmul.f32 %v7513, %v7931
  %v7994 = vmul.f32 %v7584, %v7935
  %v7995 = vmul.f32 %v7586, %v7939
  %v7996 = vadd.f32 %v7980, %v838
  %v7997 = vadd.f32 %v7981, %v838
  %v7998 = vadd.f32 %v7982, %v838
  %v7999 = vadd.f32 %v7983, %v838
  %v8000 = vadd.f32 %v7984, %v843
  %v8001 = vadd.f32 %v7985, %v843
  %v8002 = vadd.f32 %v7986, %v843
  %v8003 = vadd.f32 %v7987, %v843
  %v8004 = vadd.f32 %v7988, %v848
  %v8005 = vadd.f32 %v7989, %v848
  %v8006 = vadd.f32 %v7990, %v848
  %v8007 = vadd.f32 %v7991, %v848
  %v8008 = vadd.f32 %v7992, %v853
  %v8009 = vadd.f32 %v7993, %v853
  %v8010 = vadd.f32 %v7994, %v853
  %v8011 = vadd.f32 %v7995, %v853
  %v8012 = vpack.c.bf16 %v8000, %v7996
  %v8013 = vpack.c.bf16 %v8001, %v7997
  %v8014 = vpack.c.bf16 %v8002, %v7998
  %v8015 = vpack.c.bf16 %v8003, %v7999
  %v8016 = vpack.c.bf16 %v8008, %v8004
  %v8017 = vpack.c.bf16 %v8009, %v8005
  %v8018 = vpack.c.bf16 %v8010, %v8006
  %v8019 = vpack.c.bf16 %v8011, %v8007
  %8022 = vrot.lane.b32.xlu0 %v7972, 112
  %v8023 = vpop.permute.xlu0 %8022
  %8024 = vrot.lane.b32.xlu0 %v7976, 112
  %v8025 = vpop.permute.xlu0 %8024
  %8028 = vrot.lane.b32.xlu0 %v7972, 96
  %v8029 = vpop.permute.xlu0 %8028
  %8030 = vrot.lane.b32.xlu0 %v7976, 96
  %v8031 = vpop.permute.xlu0 %8030
  %8034 = vrot.lane.b32.xlu0 %v7972, 80
  %v8035 = vpop.permute.xlu0 %8034
  %8036 = vrot.lane.b32.xlu0 %v7976, 80
  %v8037 = vpop.permute.xlu0 %8036
  %8040 = vrot.lane.b32.xlu0 %v7972, 64
  %v8041 = vpop.permute.xlu0 %8040
  %8042 = vrot.lane.b32.xlu0 %v7976, 64
  %v8043 = vpop.permute.xlu0 %8042
  %8046 = vrot.lane.b32.xlu0 %v7972, 48
  %v8047 = vpop.permute.xlu0 %8046
  %8048 = vrot.lane.b32.xlu0 %v7976, 48
  %v8049 = vpop.permute.xlu0 %8048
  %8052 = vrot.lane.b32.xlu0 %v7972, 32
  %v8053 = vpop.permute.xlu0 %8052
  %8054 = vrot.lane.b32.xlu0 %v7976, 32
  %v8055 = vpop.permute.xlu0 %8054
  %8058 = vrot.lane.b32.xlu0 %v7972, 16
  %v8059 = vpop.permute.xlu0 %8058
  %8060 = vrot.lane.b32.xlu0 %v7976, 16
  %v8061 = vpop.permute.xlu0 %8060
  %8066 = vrot.lane.b32.xlu0 %v7973, 112
  %v8067 = vpop.permute.xlu0 %8066
  %8068 = vrot.lane.b32.xlu0 %v7977, 112
  %v8069 = vpop.permute.xlu0 %8068
  %8072 = vrot.lane.b32.xlu0 %v7973, 96
  %v8073 = vpop.permute.xlu0 %8072
  %8074 = vrot.lane.b32.xlu0 %v7977, 96
  %v8075 = vpop.permute.xlu0 %8074
  %8078 = vrot.lane.b32.xlu0 %v7973, 80
  %v8079 = vpop.permute.xlu0 %8078
  %8080 = vrot.lane.b32.xlu0 %v7977, 80
  %v8081 = vpop.permute.xlu0 %8080
  %8084 = vrot.lane.b32.xlu0 %v7973, 64
  %v8085 = vpop.permute.xlu0 %8084
  %8086 = vrot.lane.b32.xlu0 %v7977, 64
  %v8087 = vpop.permute.xlu0 %8086
  %8090 = vrot.lane.b32.xlu0 %v7973, 48
  %v8091 = vpop.permute.xlu0 %8090
  %8092 = vrot.lane.b32.xlu0 %v7977, 48
  %v8093 = vpop.permute.xlu0 %8092
  %8096 = vrot.lane.b32.xlu0 %v7973, 32
  %v8097 = vpop.permute.xlu0 %8096
  %8098 = vrot.lane.b32.xlu0 %v7977, 32
  %v8099 = vpop.permute.xlu0 %8098
  %8102 = vrot.lane.b32.xlu0 %v7973, 16
  %v8103 = vpop.permute.xlu0 %8102
  %8104 = vrot.lane.b32.xlu0 %v7977, 16
  %v8105 = vpop.permute.xlu0 %8104
  %8110 = vrot.lane.b32.xlu0 %v7974, 112
  %v8111 = vpop.permute.xlu0 %8110
  %8112 = vrot.lane.b32.xlu0 %v7978, 112
  %v8113 = vpop.permute.xlu0 %8112
  %8116 = vrot.lane.b32.xlu0 %v7974, 96
  %v8117 = vpop.permute.xlu0 %8116
  %8118 = vrot.lane.b32.xlu0 %v7978, 96
  %v8119 = vpop.permute.xlu0 %8118
  %8122 = vrot.lane.b32.xlu0 %v7974, 80
  %v8123 = vpop.permute.xlu0 %8122
  %8124 = vrot.lane.b32.xlu0 %v7978, 80
  %v8125 = vpop.permute.xlu0 %8124
  %8128 = vrot.lane.b32.xlu0 %v7974, 64
  %v8129 = vpop.permute.xlu0 %8128
  %8130 = vrot.lane.b32.xlu0 %v7978, 64
  %v8131 = vpop.permute.xlu0 %8130
  %8134 = vrot.lane.b32.xlu0 %v7974, 48
  %v8135 = vpop.permute.xlu0 %8134
  %8136 = vrot.lane.b32.xlu0 %v7978, 48
  %v8137 = vpop.permute.xlu0 %8136
  %8140 = vrot.lane.b32.xlu0 %v7974, 32
  %v8141 = vpop.permute.xlu0 %8140
  %8142 = vrot.lane.b32.xlu0 %v7978, 32
  %v8143 = vpop.permute.xlu0 %8142
  %8146 = vrot.lane.b32.xlu0 %v7974, 16
  %v8147 = vpop.permute.xlu0 %8146
  %8148 = vrot.lane.b32.xlu0 %v7978, 16
  %v8149 = vpop.permute.xlu0 %8148
  %8154 = vrot.lane.b32.xlu0 %v7975, 112
  %v8155 = vpop.permute.xlu0 %8154
  %8156 = vrot.lane.b32.xlu0 %v7979, 112
  %v8157 = vpop.permute.xlu0 %8156
  %8160 = vrot.lane.b32.xlu0 %v7975, 96
  %v8161 = vpop.permute.xlu0 %8160
  %8162 = vrot.lane.b32.xlu0 %v7979, 96
  %v8163 = vpop.permute.xlu0 %8162
  %8166 = vrot.lane.b32.xlu0 %v7975, 80
  %v8167 = vpop.permute.xlu0 %8166
  %8168 = vrot.lane.b32.xlu0 %v7979, 80
  %v8169 = vpop.permute.xlu0 %8168
  %8172 = vrot.lane.b32.xlu0 %v7975, 64
  %v8173 = vpop.permute.xlu0 %8172
  %8174 = vrot.lane.b32.xlu0 %v7979, 64
  %v8175 = vpop.permute.xlu0 %8174
  %8178 = vrot.lane.b32.xlu0 %v7975, 48
  %v8179 = vpop.permute.xlu0 %8178
  %8180 = vrot.lane.b32.xlu0 %v7979, 48
  %v8181 = vpop.permute.xlu0 %8180
  %8184 = vrot.lane.b32.xlu0 %v7975, 32
  %v8185 = vpop.permute.xlu0 %8184
  %8186 = vrot.lane.b32.xlu0 %v7979, 32
  %v8187 = vpop.permute.xlu0 %8186
  %8190 = vrot.lane.b32.xlu0 %v7975, 16
  %v8191 = vpop.permute.xlu0 %8190
  %8192 = vrot.lane.b32.xlu0 %v7979, 16
  %v8193 = vpop.permute.xlu0 %8192
  %v8196 = vcombine.low %v7972, %v8041
  %v8197 = vcombine.high %v7972, %v8041
  %v8199 = vunpack.c.l.s4 1983009808
  %v8200 = vunpack.c.0.s8 %v8199
  %v8201 = vlaneseq
  %v8202 = vshrl.u32 %v8201, 7
  %v8203 = vsub.s32 %v8200, %v8202
  %v8204 = vrot.slane %v8196, %v8203
  %v8206 = vunpack.c.l.s4 1983009808
  %v8207 = vunpack.c.0.s8 %v8206
  %v8208 = vlaneseq
  %v8209 = vshrl.u32 %v8208, 7
  %v8210 = vsub.s32 %v8207, %v8209
  %v8211 = vrot.slane %v8197, %v8210
  %v8212 = vcombine.low %v8029, %v8053
  %v8213 = vcombine.high %v8029, %v8053
  %v8215 = vunpack.c.l.s4 1983009808
  %v8216 = vunpack.c.0.s8 %v8215
  %v8217 = vlaneseq
  %v8218 = vshrl.u32 %v8217, 7
  %v8219 = vsub.s32 %v8216, %v8218
  %v8220 = vrot.slane %v8212, %v8219
  %v8222 = vunpack.c.l.s4 1983009808
  %v8223 = vunpack.c.0.s8 %v8222
  %v8224 = vlaneseq
  %v8225 = vshrl.u32 %v8224, 7
  %v8226 = vsub.s32 %v8223, %v8225
  %v8227 = vrot.slane %v8213, %v8226
  %v8228 = vcombine.low %v7973, %v8085
  %v8229 = vcombine.high %v7973, %v8085
  %v8231 = vunpack.c.l.s4 1983009808
  %v8232 = vunpack.c.0.s8 %v8231
  %v8233 = vlaneseq
  %v8234 = vshrl.u32 %v8233, 7
  %v8235 = vsub.s32 %v8232, %v8234
  %v8236 = vrot.slane %v8228, %v8235
  %v8238 = vunpack.c.l.s4 1983009808
  %v8239 = vunpack.c.0.s8 %v8238
  %v8240 = vlaneseq
  %v8241 = vshrl.u32 %v8240, 7
  %v8242 = vsub.s32 %v8239, %v8241
  %v8243 = vrot.slane %v8229, %v8242
  %v8244 = vcombine.low %v8073, %v8097
  %v8245 = vcombine.high %v8073, %v8097
  %v8247 = vunpack.c.l.s4 1983009808
  %v8248 = vunpack.c.0.s8 %v8247
  %v8249 = vlaneseq
  %v8250 = vshrl.u32 %v8249, 7
  %v8251 = vsub.s32 %v8248, %v8250
  %v8252 = vrot.slane %v8244, %v8251
  %v8254 = vunpack.c.l.s4 1983009808
  %v8255 = vunpack.c.0.s8 %v8254
  %v8256 = vlaneseq
  %v8257 = vshrl.u32 %v8256, 7
  %v8258 = vsub.s32 %v8255, %v8257
  %v8259 = vrot.slane %v8245, %v8258
  %v8260 = vcombine.low %v8204, %v8220
  %v8261 = vcombine.high %v8204, %v8220
  %v8263 = vunpack.c.l.s4 1934713408
  %v8264 = vunpack.c.0.s8 %v8263
  %v8265 = vlaneseq
  %v8266 = vshrl.u32 %v8265, 7
  %v8267 = vsub.s32 %v8264, %v8266
  %v8268 = vrot.slane %v8260, %v8267
  %v8270 = vunpack.c.l.s4 1934713408
  %v8271 = vunpack.c.0.s8 %v8270
  %v8272 = vlaneseq
  %v8273 = vshrl.u32 %v8272, 7
  %v8274 = vsub.s32 %v8271, %v8273
  %v8275 = vrot.slane %v8261, %v8274
  %v8276 = vcombine.low %v8211, %v8227
  %v8277 = vcombine.high %v8211, %v8227
  %v8279 = vunpack.c.l.s4 1934713408
  %v8280 = vunpack.c.0.s8 %v8279
  %v8281 = vlaneseq
  %v8282 = vshrl.u32 %v8281, 7
  %v8283 = vsub.s32 %v8280, %v8282
  %v8284 = vrot.slane %v8276, %v8283
  %v8286 = vunpack.c.l.s4 1934713408
  %v8287 = vunpack.c.0.s8 %v8286
  %v8288 = vlaneseq
  %v8289 = vshrl.u32 %v8288, 7
  %v8290 = vsub.s32 %v8287, %v8289
  %v8291 = vrot.slane %v8277, %v8290
  %v8292 = vcombine.low %v8236, %v8252
  %v8293 = vcombine.high %v8236, %v8252
  %v8295 = vunpack.c.l.s4 1934713408
  %v8296 = vunpack.c.0.s8 %v8295
  %v8297 = vlaneseq
  %v8298 = vshrl.u32 %v8297, 7
  %v8299 = vsub.s32 %v8296, %v8298
  %v8300 = vrot.slane %v8292, %v8299
  %v8302 = vunpack.c.l.s4 1934713408
  %v8303 = vunpack.c.0.s8 %v8302
  %v8304 = vlaneseq
  %v8305 = vshrl.u32 %v8304, 7
  %v8306 = vsub.s32 %v8303, %v8305
  %v8307 = vrot.slane %v8293, %v8306
  %v8308 = vcombine.low %v8243, %v8259
  %v8309 = vcombine.high %v8243, %v8259
  %v8311 = vunpack.c.l.s4 1934713408
  %v8312 = vunpack.c.0.s8 %v8311
  %v8313 = vlaneseq
  %v8314 = vshrl.u32 %v8313, 7
  %v8315 = vsub.s32 %v8312, %v8314
  %v8316 = vrot.slane %v8308, %v8315
  %v8318 = vunpack.c.l.s4 1934713408
  %v8319 = vunpack.c.0.s8 %v8318
  %v8320 = vlaneseq
  %v8321 = vshrl.u32 %v8320, 7
  %v8322 = vsub.s32 %v8319, %v8321
  %v8323 = vrot.slane %v8309, %v8322
  %v8324 = vcombine.low %v8268, %v8300
  %v8325 = vcombine.high %v8268, %v8300
  %v8326 = vcombine.low %v8275, %v8307
  %v8327 = vcombine.high %v8275, %v8307
  %v8328 = vcombine.low %v8284, %v8316
  %v8329 = vcombine.high %v8284, %v8316
  %v8330 = vcombine.low %v8291, %v8323
  %v8331 = vcombine.high %v8291, %v8323
  %v8332 = vcombine.low %v8023, %v8047
  %v8333 = vcombine.high %v8023, %v8047
  %v8335 = vunpack.c.l.s4 1983009808
  %v8336 = vunpack.c.0.s8 %v8335
  %v8337 = vlaneseq
  %v8338 = vshrl.u32 %v8337, 7
  %v8339 = vsub.s32 %v8336, %v8338
  %v8340 = vrot.slane %v8332, %v8339
  %v8342 = vunpack.c.l.s4 1983009808
  %v8343 = vunpack.c.0.s8 %v8342
  %v8344 = vlaneseq
  %v8345 = vshrl.u32 %v8344, 7
  %v8346 = vsub.s32 %v8343, %v8345
  %v8347 = vrot.slane %v8333, %v8346
  %v8348 = vcombine.low %v8035, %v8059
  %v8349 = vcombine.high %v8035, %v8059
  %v8351 = vunpack.c.l.s4 1983009808
  %v8352 = vunpack.c.0.s8 %v8351
  %v8353 = vlaneseq
  %v8354 = vshrl.u32 %v8353, 7
  %v8355 = vsub.s32 %v8352, %v8354
  %v8356 = vrot.slane %v8348, %v8355
  %v8358 = vunpack.c.l.s4 1983009808
  %v8359 = vunpack.c.0.s8 %v8358
  %v8360 = vlaneseq
  %v8361 = vshrl.u32 %v8360, 7
  %v8362 = vsub.s32 %v8359, %v8361
  %v8363 = vrot.slane %v8349, %v8362
  %v8364 = vcombine.low %v8067, %v8091
  %v8365 = vcombine.high %v8067, %v8091
  %v8367 = vunpack.c.l.s4 1983009808
  %v8368 = vunpack.c.0.s8 %v8367
  %v8369 = vlaneseq
  %v8370 = vshrl.u32 %v8369, 7
  %v8371 = vsub.s32 %v8368, %v8370
  %v8372 = vrot.slane %v8364, %v8371
  %v8374 = vunpack.c.l.s4 1983009808
  %v8375 = vunpack.c.0.s8 %v8374
  %v8376 = vlaneseq
  %v8377 = vshrl.u32 %v8376, 7
  %v8378 = vsub.s32 %v8375, %v8377
  %v8379 = vrot.slane %v8365, %v8378
  %v8380 = vcombine.low %v8079, %v8103
  %v8381 = vcombine.high %v8079, %v8103
  %v8383 = vunpack.c.l.s4 1983009808
  %v8384 = vunpack.c.0.s8 %v8383
  %v8385 = vlaneseq
  %v8386 = vshrl.u32 %v8385, 7
  %v8387 = vsub.s32 %v8384, %v8386
  %v8388 = vrot.slane %v8380, %v8387
  %v8390 = vunpack.c.l.s4 1983009808
  %v8391 = vunpack.c.0.s8 %v8390
  %v8392 = vlaneseq
  %v8393 = vshrl.u32 %v8392, 7
  %v8394 = vsub.s32 %v8391, %v8393
  %v8395 = vrot.slane %v8381, %v8394
  %v8396 = vcombine.low %v8340, %v8356
  %v8397 = vcombine.high %v8340, %v8356
  %v8399 = vunpack.c.l.s4 1934713408
  %v8400 = vunpack.c.0.s8 %v8399
  %v8401 = vlaneseq
  %v8402 = vshrl.u32 %v8401, 7
  %v8403 = vsub.s32 %v8400, %v8402
  %v8404 = vrot.slane %v8396, %v8403
  %v8406 = vunpack.c.l.s4 1934713408
  %v8407 = vunpack.c.0.s8 %v8406
  %v8408 = vlaneseq
  %v8409 = vshrl.u32 %v8408, 7
  %v8410 = vsub.s32 %v8407, %v8409
  %v8411 = vrot.slane %v8397, %v8410
  %v8412 = vcombine.low %v8347, %v8363
  %v8413 = vcombine.high %v8347, %v8363
  %v8415 = vunpack.c.l.s4 1934713408
  %v8416 = vunpack.c.0.s8 %v8415
  %v8417 = vlaneseq
  %v8418 = vshrl.u32 %v8417, 7
  %v8419 = vsub.s32 %v8416, %v8418
  %v8420 = vrot.slane %v8412, %v8419
  %v8422 = vunpack.c.l.s4 1934713408
  %v8423 = vunpack.c.0.s8 %v8422
  %v8424 = vlaneseq
  %v8425 = vshrl.u32 %v8424, 7
  %v8426 = vsub.s32 %v8423, %v8425
  %v8427 = vrot.slane %v8413, %v8426
  %v8428 = vcombine.low %v8372, %v8388
  %v8429 = vcombine.high %v8372, %v8388
  %v8431 = vunpack.c.l.s4 1934713408
  %v8432 = vunpack.c.0.s8 %v8431
  %v8433 = vlaneseq
  %v8434 = vshrl.u32 %v8433, 7
  %v8435 = vsub.s32 %v8432, %v8434
  %v8436 = vrot.slane %v8428, %v8435
  %v8438 = vunpack.c.l.s4 1934713408
  %v8439 = vunpack.c.0.s8 %v8438
  %v8440 = vlaneseq
  %v8441 = vshrl.u32 %v8440, 7
  %v8442 = vsub.s32 %v8439, %v8441
  %v8443 = vrot.slane %v8429, %v8442
  %v8444 = vcombine.low %v8379, %v8395
  %v8445 = vcombine.high %v8379, %v8395
  %v8447 = vunpack.c.l.s4 1934713408
  %v8448 = vunpack.c.0.s8 %v8447
  %v8449 = vlaneseq
  %v8450 = vshrl.u32 %v8449, 7
  %v8451 = vsub.s32 %v8448, %v8450
  %v8452 = vrot.slane %v8444, %v8451
  %v8454 = vunpack.c.l.s4 1934713408
  %v8455 = vunpack.c.0.s8 %v8454
  %v8456 = vlaneseq
  %v8457 = vshrl.u32 %v8456, 7
  %v8458 = vsub.s32 %v8455, %v8457
  %v8459 = vrot.slane %v8445, %v8458
  %v8460 = vcombine.low %v8404, %v8436
  %v8461 = vcombine.high %v8404, %v8436
  %v8462 = vcombine.low %v8411, %v8443
  %v8463 = vcombine.high %v8411, %v8443
  %v8464 = vcombine.low %v8420, %v8452
  %v8465 = vcombine.high %v8420, %v8452
  %v8466 = vcombine.low %v8427, %v8459
  %v8467 = vcombine.high %v8427, %v8459
  %v8468 = vcombine.low %v7974, %v8129
  %v8469 = vcombine.high %v7974, %v8129
  %v8471 = vunpack.c.l.s4 1983009808
  %v8472 = vunpack.c.0.s8 %v8471
  %v8473 = vlaneseq
  %v8474 = vshrl.u32 %v8473, 7
  %v8475 = vsub.s32 %v8472, %v8474
  %v8476 = vrot.slane %v8468, %v8475
  %v8478 = vunpack.c.l.s4 1983009808
  %v8479 = vunpack.c.0.s8 %v8478
  %v8480 = vlaneseq
  %v8481 = vshrl.u32 %v8480, 7
  %v8482 = vsub.s32 %v8479, %v8481
  %v8483 = vrot.slane %v8469, %v8482
  %v8484 = vcombine.low %v8117, %v8141
  %v8485 = vcombine.high %v8117, %v8141
  %v8487 = vunpack.c.l.s4 1983009808
  %v8488 = vunpack.c.0.s8 %v8487
  %v8489 = vlaneseq
  %v8490 = vshrl.u32 %v8489, 7
  %v8491 = vsub.s32 %v8488, %v8490
  %v8492 = vrot.slane %v8484, %v8491
  %v8494 = vunpack.c.l.s4 1983009808
  %v8495 = vunpack.c.0.s8 %v8494
  %v8496 = vlaneseq
  %v8497 = vshrl.u32 %v8496, 7
  %v8498 = vsub.s32 %v8495, %v8497
  %v8499 = vrot.slane %v8485, %v8498
  %v8500 = vcombine.low %v7975, %v8173
  %v8501 = vcombine.high %v7975, %v8173
  %v8503 = vunpack.c.l.s4 1983009808
  %v8504 = vunpack.c.0.s8 %v8503
  %v8505 = vlaneseq
  %v8506 = vshrl.u32 %v8505, 7
  %v8507 = vsub.s32 %v8504, %v8506
  %v8508 = vrot.slane %v8500, %v8507
  %v8510 = vunpack.c.l.s4 1983009808
  %v8511 = vunpack.c.0.s8 %v8510
  %v8512 = vlaneseq
  %v8513 = vshrl.u32 %v8512, 7
  %v8514 = vsub.s32 %v8511, %v8513
  %v8515 = vrot.slane %v8501, %v8514
  %v8516 = vcombine.low %v8161, %v8185
  %v8517 = vcombine.high %v8161, %v8185
  %v8519 = vunpack.c.l.s4 1983009808
  %v8520 = vunpack.c.0.s8 %v8519
  %v8521 = vlaneseq
  %v8522 = vshrl.u32 %v8521, 7
  %v8523 = vsub.s32 %v8520, %v8522
  %v8524 = vrot.slane %v8516, %v8523
  %v8526 = vunpack.c.l.s4 1983009808
  %v8527 = vunpack.c.0.s8 %v8526
  %v8528 = vlaneseq
  %v8529 = vshrl.u32 %v8528, 7
  %v8530 = vsub.s32 %v8527, %v8529
  %v8531 = vrot.slane %v8517, %v8530
  %v8532 = vcombine.low %v8476, %v8492
  %v8533 = vcombine.high %v8476, %v8492
  %v8535 = vunpack.c.l.s4 1934713408
  %v8536 = vunpack.c.0.s8 %v8535
  %v8537 = vlaneseq
  %v8538 = vshrl.u32 %v8537, 7
  %v8539 = vsub.s32 %v8536, %v8538
  %v8540 = vrot.slane %v8532, %v8539
  %v8542 = vunpack.c.l.s4 1934713408
  %v8543 = vunpack.c.0.s8 %v8542
  %v8544 = vlaneseq
  %v8545 = vshrl.u32 %v8544, 7
  %v8546 = vsub.s32 %v8543, %v8545
  %v8547 = vrot.slane %v8533, %v8546
  %v8548 = vcombine.low %v8483, %v8499
  %v8549 = vcombine.high %v8483, %v8499
  %v8551 = vunpack.c.l.s4 1934713408
  %v8552 = vunpack.c.0.s8 %v8551
  %v8553 = vlaneseq
  %v8554 = vshrl.u32 %v8553, 7
  %v8555 = vsub.s32 %v8552, %v8554
  %v8556 = vrot.slane %v8548, %v8555
  %v8558 = vunpack.c.l.s4 1934713408
  %v8559 = vunpack.c.0.s8 %v8558
  %v8560 = vlaneseq
  %v8561 = vshrl.u32 %v8560, 7
  %v8562 = vsub.s32 %v8559, %v8561
  %v8563 = vrot.slane %v8549, %v8562
  %v8564 = vcombine.low %v8508, %v8524
  %v8565 = vcombine.high %v8508, %v8524
  %v8567 = vunpack.c.l.s4 1934713408
  %v8568 = vunpack.c.0.s8 %v8567
  %v8569 = vlaneseq
  %v8570 = vshrl.u32 %v8569, 7
  %v8571 = vsub.s32 %v8568, %v8570
  %v8572 = vrot.slane %v8564, %v8571
  %v8574 = vunpack.c.l.s4 1934713408
  %v8575 = vunpack.c.0.s8 %v8574
  %v8576 = vlaneseq
  %v8577 = vshrl.u32 %v8576, 7
  %v8578 = vsub.s32 %v8575, %v8577
  %v8579 = vrot.slane %v8565, %v8578
  %v8580 = vcombine.low %v8515, %v8531
  %v8581 = vcombine.high %v8515, %v8531
  %v8583 = vunpack.c.l.s4 1934713408
  %v8584 = vunpack.c.0.s8 %v8583
  %v8585 = vlaneseq
  %v8586 = vshrl.u32 %v8585, 7
  %v8587 = vsub.s32 %v8584, %v8586
  %v8588 = vrot.slane %v8580, %v8587
  %v8590 = vunpack.c.l.s4 1934713408
  %v8591 = vunpack.c.0.s8 %v8590
  %v8592 = vlaneseq
  %v8593 = vshrl.u32 %v8592, 7
  %v8594 = vsub.s32 %v8591, %v8593
  %v8595 = vrot.slane %v8581, %v8594
  %v8596 = vcombine.low %v8540, %v8572
  %v8597 = vcombine.high %v8540, %v8572
  %v8598 = vcombine.low %v8547, %v8579
  %v8599 = vcombine.high %v8547, %v8579
  %v8600 = vcombine.low %v8556, %v8588
  %v8601 = vcombine.high %v8556, %v8588
  %v8602 = vcombine.low %v8563, %v8595
  %v8603 = vcombine.high %v8563, %v8595
  %v8604 = vcombine.low %v8111, %v8135
  %v8605 = vcombine.high %v8111, %v8135
  %v8607 = vunpack.c.l.s4 1983009808
  %v8608 = vunpack.c.0.s8 %v8607
  %v8609 = vlaneseq
  %v8610 = vshrl.u32 %v8609, 7
  %v8611 = vsub.s32 %v8608, %v8610
  %v8612 = vrot.slane %v8604, %v8611
  %v8614 = vunpack.c.l.s4 1983009808
  %v8615 = vunpack.c.0.s8 %v8614
  %v8616 = vlaneseq
  %v8617 = vshrl.u32 %v8616, 7
  %v8618 = vsub.s32 %v8615, %v8617
  %v8619 = vrot.slane %v8605, %v8618
  %v8620 = vcombine.low %v8123, %v8147
  %v8621 = vcombine.high %v8123, %v8147
  %v8623 = vunpack.c.l.s4 1983009808
  %v8624 = vunpack.c.0.s8 %v8623
  %v8625 = vlaneseq
  %v8626 = vshrl.u32 %v8625, 7
  %v8627 = vsub.s32 %v8624, %v8626
  %v8628 = vrot.slane %v8620, %v8627
  %v8630 = vunpack.c.l.s4 1983009808
  %v8631 = vunpack.c.0.s8 %v8630
  %v8632 = vlaneseq
  %v8633 = vshrl.u32 %v8632, 7
  %v8634 = vsub.s32 %v8631, %v8633
  %v8635 = vrot.slane %v8621, %v8634
  %v8636 = vcombine.low %v8155, %v8179
  %v8637 = vcombine.high %v8155, %v8179
  %v8639 = vunpack.c.l.s4 1983009808
  %v8640 = vunpack.c.0.s8 %v8639
  %v8641 = vlaneseq
  %v8642 = vshrl.u32 %v8641, 7
  %v8643 = vsub.s32 %v8640, %v8642
  %v8644 = vrot.slane %v8636, %v8643
  %v8646 = vunpack.c.l.s4 1983009808
  %v8647 = vunpack.c.0.s8 %v8646
  %v8648 = vlaneseq
  %v8649 = vshrl.u32 %v8648, 7
  %v8650 = vsub.s32 %v8647, %v8649
  %v8651 = vrot.slane %v8637, %v8650
  %v8652 = vcombine.low %v8167, %v8191
  %v8653 = vcombine.high %v8167, %v8191
  %v8655 = vunpack.c.l.s4 1983009808
  %v8656 = vunpack.c.0.s8 %v8655
  %v8657 = vlaneseq
  %v8658 = vshrl.u32 %v8657, 7
  %v8659 = vsub.s32 %v8656, %v8658
  %v8660 = vrot.slane %v8652, %v8659
  %v8662 = vunpack.c.l.s4 1983009808
  %v8663 = vunpack.c.0.s8 %v8662
  %v8664 = vlaneseq
  %v8665 = vshrl.u32 %v8664, 7
  %v8666 = vsub.s32 %v8663, %v8665
  %v8667 = vrot.slane %v8653, %v8666
  %v8668 = vcombine.low %v8612, %v8628
  %v8669 = vcombine.high %v8612, %v8628
  %v8671 = vunpack.c.l.s4 1934713408
  %v8672 = vunpack.c.0.s8 %v8671
  %v8673 = vlaneseq
  %v8674 = vshrl.u32 %v8673, 7
  %v8675 = vsub.s32 %v8672, %v8674
  %v8676 = vrot.slane %v8668, %v8675
  %v8678 = vunpack.c.l.s4 1934713408
  %v8679 = vunpack.c.0.s8 %v8678
  %v8680 = vlaneseq
  %v8681 = vshrl.u32 %v8680, 7
  %v8682 = vsub.s32 %v8679, %v8681
  %v8683 = vrot.slane %v8669, %v8682
  %v8684 = vcombine.low %v8619, %v8635
  %v8685 = vcombine.high %v8619, %v8635
  %v8687 = vunpack.c.l.s4 1934713408
  %v8688 = vunpack.c.0.s8 %v8687
  %v8689 = vlaneseq
  %v8690 = vshrl.u32 %v8689, 7
  %v8691 = vsub.s32 %v8688, %v8690
  %v8692 = vrot.slane %v8684, %v8691
  %v8694 = vunpack.c.l.s4 1934713408
  %v8695 = vunpack.c.0.s8 %v8694
  %v8696 = vlaneseq
  %v8697 = vshrl.u32 %v8696, 7
  %v8698 = vsub.s32 %v8695, %v8697
  %v8699 = vrot.slane %v8685, %v8698
  %v8700 = vcombine.low %v8644, %v8660
  %v8701 = vcombine.high %v8644, %v8660
  %v8703 = vunpack.c.l.s4 1934713408
  %v8704 = vunpack.c.0.s8 %v8703
  %v8705 = vlaneseq
  %v8706 = vshrl.u32 %v8705, 7
  %v8707 = vsub.s32 %v8704, %v8706
  %v8708 = vrot.slane %v8700, %v8707
  %v8710 = vunpack.c.l.s4 1934713408
  %v8711 = vunpack.c.0.s8 %v8710
  %v8712 = vlaneseq
  %v8713 = vshrl.u32 %v8712, 7
  %v8714 = vsub.s32 %v8711, %v8713
  %v8715 = vrot.slane %v8701, %v8714
  %v8716 = vcombine.low %v8651, %v8667
  %v8717 = vcombine.high %v8651, %v8667
  %v8719 = vunpack.c.l.s4 1934713408
  %v8720 = vunpack.c.0.s8 %v8719
  %v8721 = vlaneseq
  %v8722 = vshrl.u32 %v8721, 7
  %v8723 = vsub.s32 %v8720, %v8722
  %v8724 = vrot.slane %v8716, %v8723
  %v8726 = vunpack.c.l.s4 1934713408
  %v8727 = vunpack.c.0.s8 %v8726
  %v8728 = vlaneseq
  %v8729 = vshrl.u32 %v8728, 7
  %v8730 = vsub.s32 %v8727, %v8729
  %v8731 = vrot.slane %v8717, %v8730
  %v8732 = vcombine.low %v8676, %v8708
  %v8733 = vcombine.high %v8676, %v8708
  %v8734 = vcombine.low %v8683, %v8715
  %v8735 = vcombine.high %v8683, %v8715
  %v8736 = vcombine.low %v8692, %v8724
  %v8737 = vcombine.high %v8692, %v8724
  %v8738 = vcombine.low %v8699, %v8731
  %v8739 = vcombine.high %v8699, %v8731
  %v8740 = vcombine.low %v7976, %v8043
  %v8741 = vcombine.high %v7976, %v8043
  %v8743 = vunpack.c.l.s4 1983009808
  %v8744 = vunpack.c.0.s8 %v8743
  %v8745 = vlaneseq
  %v8746 = vshrl.u32 %v8745, 7
  %v8747 = vsub.s32 %v8744, %v8746
  %v8748 = vrot.slane %v8740, %v8747
  %v8750 = vunpack.c.l.s4 1983009808
  %v8751 = vunpack.c.0.s8 %v8750
  %v8752 = vlaneseq
  %v8753 = vshrl.u32 %v8752, 7
  %v8754 = vsub.s32 %v8751, %v8753
  %v8755 = vrot.slane %v8741, %v8754
  %v8756 = vcombine.low %v8031, %v8055
  %v8757 = vcombine.high %v8031, %v8055
  %v8759 = vunpack.c.l.s4 1983009808
  %v8760 = vunpack.c.0.s8 %v8759
  %v8761 = vlaneseq
  %v8762 = vshrl.u32 %v8761, 7
  %v8763 = vsub.s32 %v8760, %v8762
  %v8764 = vrot.slane %v8756, %v8763
  %v8766 = vunpack.c.l.s4 1983009808
  %v8767 = vunpack.c.0.s8 %v8766
  %v8768 = vlaneseq
  %v8769 = vshrl.u32 %v8768, 7
  %v8770 = vsub.s32 %v8767, %v8769
  %v8771 = vrot.slane %v8757, %v8770
  %v8772 = vcombine.low %v7977, %v8087
  %v8773 = vcombine.high %v7977, %v8087
  %v8775 = vunpack.c.l.s4 1983009808
  %v8776 = vunpack.c.0.s8 %v8775
  %v8777 = vlaneseq
  %v8778 = vshrl.u32 %v8777, 7
  %v8779 = vsub.s32 %v8776, %v8778
  %v8780 = vrot.slane %v8772, %v8779
  %v8782 = vunpack.c.l.s4 1983009808
  %v8783 = vunpack.c.0.s8 %v8782
  %v8784 = vlaneseq
  %v8785 = vshrl.u32 %v8784, 7
  %v8786 = vsub.s32 %v8783, %v8785
  %v8787 = vrot.slane %v8773, %v8786
  %v8788 = vcombine.low %v8075, %v8099
  %v8789 = vcombine.high %v8075, %v8099
  %v8791 = vunpack.c.l.s4 1983009808
  %v8792 = vunpack.c.0.s8 %v8791
  %v8793 = vlaneseq
  %v8794 = vshrl.u32 %v8793, 7
  %v8795 = vsub.s32 %v8792, %v8794
  %v8796 = vrot.slane %v8788, %v8795
  %v8798 = vunpack.c.l.s4 1983009808
  %v8799 = vunpack.c.0.s8 %v8798
  %v8800 = vlaneseq
  %v8801 = vshrl.u32 %v8800, 7
  %v8802 = vsub.s32 %v8799, %v8801
  %v8803 = vrot.slane %v8789, %v8802
  %v8804 = vcombine.low %v8748, %v8764
  %v8805 = vcombine.high %v8748, %v8764
  %v8807 = vunpack.c.l.s4 1934713408
  %v8808 = vunpack.c.0.s8 %v8807
  %v8809 = vlaneseq
  %v8810 = vshrl.u32 %v8809, 7
  %v8811 = vsub.s32 %v8808, %v8810
  %v8812 = vrot.slane %v8804, %v8811
  %v8814 = vunpack.c.l.s4 1934713408
  %v8815 = vunpack.c.0.s8 %v8814
  %v8816 = vlaneseq
  %v8817 = vshrl.u32 %v8816, 7
  %v8818 = vsub.s32 %v8815, %v8817
  %v8819 = vrot.slane %v8805, %v8818
  %v8820 = vcombine.low %v8755, %v8771
  %v8821 = vcombine.high %v8755, %v8771
  %v8823 = vunpack.c.l.s4 1934713408
  %v8824 = vunpack.c.0.s8 %v8823
  %v8825 = vlaneseq
  %v8826 = vshrl.u32 %v8825, 7
  %v8827 = vsub.s32 %v8824, %v8826
  %v8828 = vrot.slane %v8820, %v8827
  %v8830 = vunpack.c.l.s4 1934713408
  %v8831 = vunpack.c.0.s8 %v8830
  %v8832 = vlaneseq
  %v8833 = vshrl.u32 %v8832, 7
  %v8834 = vsub.s32 %v8831, %v8833
  %v8835 = vrot.slane %v8821, %v8834
  %v8836 = vcombine.low %v8780, %v8796
  %v8837 = vcombine.high %v8780, %v8796
  %v8839 = vunpack.c.l.s4 1934713408
  %v8840 = vunpack.c.0.s8 %v8839
  %v8841 = vlaneseq
  %v8842 = vshrl.u32 %v8841, 7
  %v8843 = vsub.s32 %v8840, %v8842
  %v8844 = vrot.slane %v8836, %v8843
  %v8846 = vunpack.c.l.s4 1934713408
  %v8847 = vunpack.c.0.s8 %v8846
  %v8848 = vlaneseq
  %v8849 = vshrl.u32 %v8848, 7
  %v8850 = vsub.s32 %v8847, %v8849
  %v8851 = vrot.slane %v8837, %v8850
  %v8852 = vcombine.low %v8787, %v8803
  %v8853 = vcombine.high %v8787, %v8803
  %v8855 = vunpack.c.l.s4 1934713408
  %v8856 = vunpack.c.0.s8 %v8855
  %v8857 = vlaneseq
  %v8858 = vshrl.u32 %v8857, 7
  %v8859 = vsub.s32 %v8856, %v8858
  %v8860 = vrot.slane %v8852, %v8859
  %v8862 = vunpack.c.l.s4 1934713408
  %v8863 = vunpack.c.0.s8 %v8862
  %v8864 = vlaneseq
  %v8865 = vshrl.u32 %v8864, 7
  %v8866 = vsub.s32 %v8863, %v8865
  %v8867 = vrot.slane %v8853, %v8866
  %v8868 = vcombine.low %v8812, %v8844
  %v8869 = vcombine.high %v8812, %v8844
  %v8870 = vcombine.low %v8819, %v8851
  %v8871 = vcombine.high %v8819, %v8851
  %v8872 = vcombine.low %v8828, %v8860
  %v8873 = vcombine.high %v8828, %v8860
  %v8874 = vcombine.low %v8835, %v8867
  %v8875 = vcombine.high %v8835, %v8867
  %v8876 = vcombine.low %v8025, %v8049
  %v8877 = vcombine.high %v8025, %v8049
  %v8879 = vunpack.c.l.s4 1983009808
  %v8880 = vunpack.c.0.s8 %v8879
  %v8881 = vlaneseq
  %v8882 = vshrl.u32 %v8881, 7
  %v8883 = vsub.s32 %v8880, %v8882
  %v8884 = vrot.slane %v8876, %v8883
  %v8886 = vunpack.c.l.s4 1983009808
  %v8887 = vunpack.c.0.s8 %v8886
  %v8888 = vlaneseq
  %v8889 = vshrl.u32 %v8888, 7
  %v8890 = vsub.s32 %v8887, %v8889
  %v8891 = vrot.slane %v8877, %v8890
  %v8892 = vcombine.low %v8037, %v8061
  %v8893 = vcombine.high %v8037, %v8061
  %v8895 = vunpack.c.l.s4 1983009808
  %v8896 = vunpack.c.0.s8 %v8895
  %v8897 = vlaneseq
  %v8898 = vshrl.u32 %v8897, 7
  %v8899 = vsub.s32 %v8896, %v8898
  %v8900 = vrot.slane %v8892, %v8899
  %v8902 = vunpack.c.l.s4 1983009808
  %v8903 = vunpack.c.0.s8 %v8902
  %v8904 = vlaneseq
  %v8905 = vshrl.u32 %v8904, 7
  %v8906 = vsub.s32 %v8903, %v8905
  %v8907 = vrot.slane %v8893, %v8906
  %v8908 = vcombine.low %v8069, %v8093
  %v8909 = vcombine.high %v8069, %v8093
  %v8911 = vunpack.c.l.s4 1983009808
  %v8912 = vunpack.c.0.s8 %v8911
  %v8913 = vlaneseq
  %v8914 = vshrl.u32 %v8913, 7
  %v8915 = vsub.s32 %v8912, %v8914
  %v8916 = vrot.slane %v8908, %v8915
  %v8918 = vunpack.c.l.s4 1983009808
  %v8919 = vunpack.c.0.s8 %v8918
  %v8920 = vlaneseq
  %v8921 = vshrl.u32 %v8920, 7
  %v8922 = vsub.s32 %v8919, %v8921
  %v8923 = vrot.slane %v8909, %v8922
  %v8924 = vcombine.low %v8081, %v8105
  %v8925 = vcombine.high %v8081, %v8105
  %v8927 = vunpack.c.l.s4 1983009808
  %v8928 = vunpack.c.0.s8 %v8927
  %v8929 = vlaneseq
  %v8930 = vshrl.u32 %v8929, 7
  %v8931 = vsub.s32 %v8928, %v8930
  %v8932 = vrot.slane %v8924, %v8931
  %v8934 = vunpack.c.l.s4 1983009808
  %v8935 = vunpack.c.0.s8 %v8934
  %v8936 = vlaneseq
  %v8937 = vshrl.u32 %v8936, 7
  %v8938 = vsub.s32 %v8935, %v8937
  %v8939 = vrot.slane %v8925, %v8938
  %v8940 = vcombine.low %v8884, %v8900
  %v8941 = vcombine.high %v8884, %v8900
  %v8943 = vunpack.c.l.s4 1934713408
  %v8944 = vunpack.c.0.s8 %v8943
  %v8945 = vlaneseq
  %v8946 = vshrl.u32 %v8945, 7
  %v8947 = vsub.s32 %v8944, %v8946
  %v8948 = vrot.slane %v8940, %v8947
  %v8950 = vunpack.c.l.s4 1934713408
  %v8951 = vunpack.c.0.s8 %v8950
  %v8952 = vlaneseq
  %v8953 = vshrl.u32 %v8952, 7
  %v8954 = vsub.s32 %v8951, %v8953
  %v8955 = vrot.slane %v8941, %v8954
  %v8956 = vcombine.low %v8891, %v8907
  %v8957 = vcombine.high %v8891, %v8907
  %v8959 = vunpack.c.l.s4 1934713408
  %v8960 = vunpack.c.0.s8 %v8959
  %v8961 = vlaneseq
  %v8962 = vshrl.u32 %v8961, 7
  %v8963 = vsub.s32 %v8960, %v8962
  %v8964 = vrot.slane %v8956, %v8963
  %v8966 = vunpack.c.l.s4 1934713408
  %v8967 = vunpack.c.0.s8 %v8966
  %v8968 = vlaneseq
  %v8969 = vshrl.u32 %v8968, 7
  %v8970 = vsub.s32 %v8967, %v8969
  %v8971 = vrot.slane %v8957, %v8970
  %v8972 = vcombine.low %v8916, %v8932
  %v8973 = vcombine.high %v8916, %v8932
  %v8975 = vunpack.c.l.s4 1934713408
  %v8976 = vunpack.c.0.s8 %v8975
  %v8977 = vlaneseq
  %v8978 = vshrl.u32 %v8977, 7
  %v8979 = vsub.s32 %v8976, %v8978
  %v8980 = vrot.slane %v8972, %v8979
  %v8982 = vunpack.c.l.s4 1934713408
  %v8983 = vunpack.c.0.s8 %v8982
  %v8984 = vlaneseq
  %v8985 = vshrl.u32 %v8984, 7
  %v8986 = vsub.s32 %v8983, %v8985
  %v8987 = vrot.slane %v8973, %v8986
  %v8988 = vcombine.low %v8923, %v8939
  %v8989 = vcombine.high %v8923, %v8939
  %v8991 = vunpack.c.l.s4 1934713408
  %v8992 = vunpack.c.0.s8 %v8991
  %v8993 = vlaneseq
  %v8994 = vshrl.u32 %v8993, 7
  %v8995 = vsub.s32 %v8992, %v8994
  %v8996 = vrot.slane %v8988, %v8995
  %v8998 = vunpack.c.l.s4 1934713408
  %v8999 = vunpack.c.0.s8 %v8998
  %v9000 = vlaneseq
  %v9001 = vshrl.u32 %v9000, 7
  %v9002 = vsub.s32 %v8999, %v9001
  %v9003 = vrot.slane %v8989, %v9002
  %v9004 = vcombine.low %v8948, %v8980
  %v9005 = vcombine.high %v8948, %v8980
  %v9006 = vcombine.low %v8955, %v8987
  %v9007 = vcombine.high %v8955, %v8987
  %v9008 = vcombine.low %v8964, %v8996
  %v9009 = vcombine.high %v8964, %v8996
  %v9010 = vcombine.low %v8971, %v9003
  %v9011 = vcombine.high %v8971, %v9003
  %v9012 = vcombine.low %v7978, %v8131
  %v9013 = vcombine.high %v7978, %v8131
  %v9015 = vunpack.c.l.s4 1983009808
  %v9016 = vunpack.c.0.s8 %v9015
  %v9017 = vlaneseq
  %v9018 = vshrl.u32 %v9017, 7
  %v9019 = vsub.s32 %v9016, %v9018
  %v9020 = vrot.slane %v9012, %v9019
  %v9022 = vunpack.c.l.s4 1983009808
  %v9023 = vunpack.c.0.s8 %v9022
  %v9024 = vlaneseq
  %v9025 = vshrl.u32 %v9024, 7
  %v9026 = vsub.s32 %v9023, %v9025
  %v9027 = vrot.slane %v9013, %v9026
  %v9028 = vcombine.low %v8119, %v8143
  %v9029 = vcombine.high %v8119, %v8143
  %v9031 = vunpack.c.l.s4 1983009808
  %v9032 = vunpack.c.0.s8 %v9031
  %v9033 = vlaneseq
  %v9034 = vshrl.u32 %v9033, 7
  %v9035 = vsub.s32 %v9032, %v9034
  %v9036 = vrot.slane %v9028, %v9035
  %v9038 = vunpack.c.l.s4 1983009808
  %v9039 = vunpack.c.0.s8 %v9038
  %v9040 = vlaneseq
  %v9041 = vshrl.u32 %v9040, 7
  %v9042 = vsub.s32 %v9039, %v9041
  %v9043 = vrot.slane %v9029, %v9042
  %v9044 = vcombine.low %v7979, %v8175
  %v9045 = vcombine.high %v7979, %v8175
  %v9047 = vunpack.c.l.s4 1983009808
  %v9048 = vunpack.c.0.s8 %v9047
  %v9049 = vlaneseq
  %v9050 = vshrl.u32 %v9049, 7
  %v9051 = vsub.s32 %v9048, %v9050
  %v9052 = vrot.slane %v9044, %v9051
  %v9054 = vunpack.c.l.s4 1983009808
  %v9055 = vunpack.c.0.s8 %v9054
  %v9056 = vlaneseq
  %v9057 = vshrl.u32 %v9056, 7
  %v9058 = vsub.s32 %v9055, %v9057
  %v9059 = vrot.slane %v9045, %v9058
  %v9060 = vcombine.low %v8163, %v8187
  %v9061 = vcombine.high %v8163, %v8187
  %v9063 = vunpack.c.l.s4 1983009808
  %v9064 = vunpack.c.0.s8 %v9063
  %v9065 = vlaneseq
  %v9066 = vshrl.u32 %v9065, 7
  %v9067 = vsub.s32 %v9064, %v9066
  %v9068 = vrot.slane %v9060, %v9067
  %v9070 = vunpack.c.l.s4 1983009808
  %v9071 = vunpack.c.0.s8 %v9070
  %v9072 = vlaneseq
  %v9073 = vshrl.u32 %v9072, 7
  %v9074 = vsub.s32 %v9071, %v9073
  %v9075 = vrot.slane %v9061, %v9074
  %v9076 = vcombine.low %v9020, %v9036
  %v9077 = vcombine.high %v9020, %v9036
  %v9079 = vunpack.c.l.s4 1934713408
  %v9080 = vunpack.c.0.s8 %v9079
  %v9081 = vlaneseq
  %v9082 = vshrl.u32 %v9081, 7
  %v9083 = vsub.s32 %v9080, %v9082
  %v9084 = vrot.slane %v9076, %v9083
  %v9086 = vunpack.c.l.s4 1934713408
  %v9087 = vunpack.c.0.s8 %v9086
  %v9088 = vlaneseq
  %v9089 = vshrl.u32 %v9088, 7
  %v9090 = vsub.s32 %v9087, %v9089
  %v9091 = vrot.slane %v9077, %v9090
  %v9092 = vcombine.low %v9027, %v9043
  %v9093 = vcombine.high %v9027, %v9043
  %v9095 = vunpack.c.l.s4 1934713408
  %v9096 = vunpack.c.0.s8 %v9095
  %v9097 = vlaneseq
  %v9098 = vshrl.u32 %v9097, 7
  %v9099 = vsub.s32 %v9096, %v9098
  %v9100 = vrot.slane %v9092, %v9099
  %v9102 = vunpack.c.l.s4 1934713408
  %v9103 = vunpack.c.0.s8 %v9102
  %v9104 = vlaneseq
  %v9105 = vshrl.u32 %v9104, 7
  %v9106 = vsub.s32 %v9103, %v9105
  %v9107 = vrot.slane %v9093, %v9106
  %v9108 = vcombine.low %v9052, %v9068
  %v9109 = vcombine.high %v9052, %v9068
  %v9111 = vunpack.c.l.s4 1934713408
  %v9112 = vunpack.c.0.s8 %v9111
  %v9113 = vlaneseq
  %v9114 = vshrl.u32 %v9113, 7
  %v9115 = vsub.s32 %v9112, %v9114
  %v9116 = vrot.slane %v9108, %v9115
  %v9118 = vunpack.c.l.s4 1934713408
  %v9119 = vunpack.c.0.s8 %v9118
  %v9120 = vlaneseq
  %v9121 = vshrl.u32 %v9120, 7
  %v9122 = vsub.s32 %v9119, %v9121
  %v9123 = vrot.slane %v9109, %v9122
  %v9124 = vcombine.low %v9059, %v9075
  %v9125 = vcombine.high %v9059, %v9075
  %v9127 = vunpack.c.l.s4 1934713408
  %v9128 = vunpack.c.0.s8 %v9127
  %v9129 = vlaneseq
  %v9130 = vshrl.u32 %v9129, 7
  %v9131 = vsub.s32 %v9128, %v9130
  %v9132 = vrot.slane %v9124, %v9131
  %v9134 = vunpack.c.l.s4 1934713408
  %v9135 = vunpack.c.0.s8 %v9134
  %v9136 = vlaneseq
  %v9137 = vshrl.u32 %v9136, 7
  %v9138 = vsub.s32 %v9135, %v9137
  %v9139 = vrot.slane %v9125, %v9138
  %v9140 = vcombine.low %v9084, %v9116
  %v9141 = vcombine.high %v9084, %v9116
  %v9142 = vcombine.low %v9091, %v9123
  %v9143 = vcombine.high %v9091, %v9123
  %v9144 = vcombine.low %v9100, %v9132
  %v9145 = vcombine.high %v9100, %v9132
  %v9146 = vcombine.low %v9107, %v9139
  %v9147 = vcombine.high %v9107, %v9139
  %v9148 = vcombine.low %v8113, %v8137
  %v9149 = vcombine.high %v8113, %v8137
  %v9151 = vunpack.c.l.s4 1983009808
  %v9152 = vunpack.c.0.s8 %v9151
  %v9153 = vlaneseq
  %v9154 = vshrl.u32 %v9153, 7
  %v9155 = vsub.s32 %v9152, %v9154
  %v9156 = vrot.slane %v9148, %v9155
  %v9158 = vunpack.c.l.s4 1983009808
  %v9159 = vunpack.c.0.s8 %v9158
  %v9160 = vlaneseq
  %v9161 = vshrl.u32 %v9160, 7
  %v9162 = vsub.s32 %v9159, %v9161
  %v9163 = vrot.slane %v9149, %v9162
  %v9164 = vcombine.low %v8125, %v8149
  %v9165 = vcombine.high %v8125, %v8149
  %v9167 = vunpack.c.l.s4 1983009808
  %v9168 = vunpack.c.0.s8 %v9167
  %v9169 = vlaneseq
  %v9170 = vshrl.u32 %v9169, 7
  %v9171 = vsub.s32 %v9168, %v9170
  %v9172 = vrot.slane %v9164, %v9171
  %v9174 = vunpack.c.l.s4 1983009808
  %v9175 = vunpack.c.0.s8 %v9174
  %v9176 = vlaneseq
  %v9177 = vshrl.u32 %v9176, 7
  %v9178 = vsub.s32 %v9175, %v9177
  %v9179 = vrot.slane %v9165, %v9178
  %v9180 = vcombine.low %v8157, %v8181
  %v9181 = vcombine.high %v8157, %v8181
  %v9183 = vunpack.c.l.s4 1983009808
  %v9184 = vunpack.c.0.s8 %v9183
  %v9185 = vlaneseq
  %v9186 = vshrl.u32 %v9185, 7
  %v9187 = vsub.s32 %v9184, %v9186
  %v9188 = vrot.slane %v9180, %v9187
  %v9190 = vunpack.c.l.s4 1983009808
  %v9191 = vunpack.c.0.s8 %v9190
  %v9192 = vlaneseq
  %v9193 = vshrl.u32 %v9192, 7
  %v9194 = vsub.s32 %v9191, %v9193
  %v9195 = vrot.slane %v9181, %v9194
  %v9196 = vcombine.low %v8169, %v8193
  %v9197 = vcombine.high %v8169, %v8193
  %v9199 = vunpack.c.l.s4 1983009808
  %v9200 = vunpack.c.0.s8 %v9199
  %v9201 = vlaneseq
  %v9202 = vshrl.u32 %v9201, 7
  %v9203 = vsub.s32 %v9200, %v9202
  %v9204 = vrot.slane %v9196, %v9203
  %v9206 = vunpack.c.l.s4 1983009808
  %v9207 = vunpack.c.0.s8 %v9206
  %v9208 = vlaneseq
  %v9209 = vshrl.u32 %v9208, 7
  %v9210 = vsub.s32 %v9207, %v9209
  %v9211 = vrot.slane %v9197, %v9210
  %v9212 = vcombine.low %v9156, %v9172
  %v9213 = vcombine.high %v9156, %v9172
  %v9215 = vunpack.c.l.s4 1934713408
  %v9216 = vunpack.c.0.s8 %v9215
  %v9217 = vlaneseq
  %v9218 = vshrl.u32 %v9217, 7
  %v9219 = vsub.s32 %v9216, %v9218
  %v9220 = vrot.slane %v9212, %v9219
  %v9222 = vunpack.c.l.s4 1934713408
  %v9223 = vunpack.c.0.s8 %v9222
  %v9224 = vlaneseq
  %v9225 = vshrl.u32 %v9224, 7
  %v9226 = vsub.s32 %v9223, %v9225
  %v9227 = vrot.slane %v9213, %v9226
  %v9228 = vcombine.low %v9163, %v9179
  %v9229 = vcombine.high %v9163, %v9179
  %v9231 = vunpack.c.l.s4 1934713408
  %v9232 = vunpack.c.0.s8 %v9231
  %v9233 = vlaneseq
  %v9234 = vshrl.u32 %v9233, 7
  %v9235 = vsub.s32 %v9232, %v9234
  %v9236 = vrot.slane %v9228, %v9235
  %v9238 = vunpack.c.l.s4 1934713408
  %v9239 = vunpack.c.0.s8 %v9238
  %v9240 = vlaneseq
  %v9241 = vshrl.u32 %v9240, 7
  %v9242 = vsub.s32 %v9239, %v9241
  %v9243 = vrot.slane %v9229, %v9242
  %v9244 = vcombine.low %v9188, %v9204
  %v9245 = vcombine.high %v9188, %v9204
  %v9247 = vunpack.c.l.s4 1934713408
  %v9248 = vunpack.c.0.s8 %v9247
  %v9249 = vlaneseq
  %v9250 = vshrl.u32 %v9249, 7
  %v9251 = vsub.s32 %v9248, %v9250
  %v9252 = vrot.slane %v9244, %v9251
  %v9254 = vunpack.c.l.s4 1934713408
  %v9255 = vunpack.c.0.s8 %v9254
  %v9256 = vlaneseq
  %v9257 = vshrl.u32 %v9256, 7
  %v9258 = vsub.s32 %v9255, %v9257
  %v9259 = vrot.slane %v9245, %v9258
  %v9260 = vcombine.low %v9195, %v9211
  %v9261 = vcombine.high %v9195, %v9211
  %v9263 = vunpack.c.l.s4 1934713408
  %v9264 = vunpack.c.0.s8 %v9263
  %v9265 = vlaneseq
  %v9266 = vshrl.u32 %v9265, 7
  %v9267 = vsub.s32 %v9264, %v9266
  %v9268 = vrot.slane %v9260, %v9267
  %v9270 = vunpack.c.l.s4 1934713408
  %v9271 = vunpack.c.0.s8 %v9270
  %v9272 = vlaneseq
  %v9273 = vshrl.u32 %v9272, 7
  %v9274 = vsub.s32 %v9271, %v9273
  %v9275 = vrot.slane %v9261, %v9274
  %v9276 = vcombine.low %v9220, %v9252
  %v9277 = vcombine.high %v9220, %v9252
  %v9278 = vcombine.low %v9227, %v9259
  %v9279 = vcombine.high %v9227, %v9259
  %v9280 = vcombine.low %v9236, %v9268
  %v9281 = vcombine.high %v9236, %v9268
  %v9282 = vcombine.low %v9243, %v9275
  %v9283 = vcombine.high %v9243, %v9275
  %v9286 = vpack.i.b16 %v8460, %v8324
  %v9288 = vshrl.u32 %v8324, 16
  %v9289 = vshrl.u32 %v8460, 16
  %v9290 = vpack.i.b16 %v9289, %v9288
  %v9294 = vpack.i.b16 %v8461, %v8325
  %v9296 = vshrl.u32 %v8325, 16
  %v9297 = vshrl.u32 %v8461, 16
  %v9298 = vpack.i.b16 %v9297, %v9296
  %v9302 = vpack.i.b16 %v8462, %v8326
  %v9304 = vshrl.u32 %v8326, 16
  %v9305 = vshrl.u32 %v8462, 16
  %v9306 = vpack.i.b16 %v9305, %v9304
  %v9310 = vpack.i.b16 %v8463, %v8327
  %v9312 = vshrl.u32 %v8327, 16
  %v9313 = vshrl.u32 %v8463, 16
  %v9314 = vpack.i.b16 %v9313, %v9312
  %v9318 = vpack.i.b16 %v8464, %v8328
  %v9320 = vshrl.u32 %v8328, 16
  %v9321 = vshrl.u32 %v8464, 16
  %v9322 = vpack.i.b16 %v9321, %v9320
  %v9326 = vpack.i.b16 %v8465, %v8329
  %v9328 = vshrl.u32 %v8329, 16
  %v9329 = vshrl.u32 %v8465, 16
  %v9330 = vpack.i.b16 %v9329, %v9328
  %v9334 = vpack.i.b16 %v8466, %v8330
  %v9336 = vshrl.u32 %v8330, 16
  %v9337 = vshrl.u32 %v8466, 16
  %v9338 = vpack.i.b16 %v9337, %v9336
  %v9342 = vpack.i.b16 %v8467, %v8331
  %v9344 = vshrl.u32 %v8331, 16
  %v9345 = vshrl.u32 %v8467, 16
  %v9346 = vpack.i.b16 %v9345, %v9344
  %v9350 = vpack.i.b16 %v9004, %v8868
  %v9352 = vshrl.u32 %v8868, 16
  %v9353 = vshrl.u32 %v9004, 16
  %v9354 = vpack.i.b16 %v9353, %v9352
  %v9358 = vpack.i.b16 %v9005, %v8869
  %v9360 = vshrl.u32 %v8869, 16
  %v9361 = vshrl.u32 %v9005, 16
  %v9362 = vpack.i.b16 %v9361, %v9360
  %v9366 = vpack.i.b16 %v9006, %v8870
  %v9368 = vshrl.u32 %v8870, 16
  %v9369 = vshrl.u32 %v9006, 16
  %v9370 = vpack.i.b16 %v9369, %v9368
  %v9374 = vpack.i.b16 %v9007, %v8871
  %v9376 = vshrl.u32 %v8871, 16
  %v9377 = vshrl.u32 %v9007, 16
  %v9378 = vpack.i.b16 %v9377, %v9376
  %v9382 = vpack.i.b16 %v9008, %v8872
  %v9384 = vshrl.u32 %v8872, 16
  %v9385 = vshrl.u32 %v9008, 16
  %v9386 = vpack.i.b16 %v9385, %v9384
  %v9390 = vpack.i.b16 %v9009, %v8873
  %v9392 = vshrl.u32 %v8873, 16
  %v9393 = vshrl.u32 %v9009, 16
  %v9394 = vpack.i.b16 %v9393, %v9392
  %v9398 = vpack.i.b16 %v9010, %v8874
  %v9400 = vshrl.u32 %v8874, 16
  %v9401 = vshrl.u32 %v9010, 16
  %v9402 = vpack.i.b16 %v9401, %v9400
  %v9406 = vpack.i.b16 %v9011, %v8875
  %v9408 = vshrl.u32 %v8875, 16
  %v9409 = vshrl.u32 %v9011, 16
  %v9410 = vpack.i.b16 %v9409, %v9408
  %v9414 = vpack.i.b16 %v8732, %v8596
  %v9416 = vshrl.u32 %v8596, 16
  %v9417 = vshrl.u32 %v8732, 16
  %v9418 = vpack.i.b16 %v9417, %v9416
  %v9422 = vpack.i.b16 %v8733, %v8597
  %v9424 = vshrl.u32 %v8597, 16
  %v9425 = vshrl.u32 %v8733, 16
  %v9426 = vpack.i.b16 %v9425, %v9424
  %v9430 = vpack.i.b16 %v8734, %v8598
  %v9432 = vshrl.u32 %v8598, 16
  %v9433 = vshrl.u32 %v8734, 16
  %v9434 = vpack.i.b16 %v9433, %v9432
  %v9438 = vpack.i.b16 %v8735, %v8599
  %v9440 = vshrl.u32 %v8599, 16
  %v9441 = vshrl.u32 %v8735, 16
  %v9442 = vpack.i.b16 %v9441, %v9440
  %v9446 = vpack.i.b16 %v8736, %v8600
  %v9448 = vshrl.u32 %v8600, 16
  %v9449 = vshrl.u32 %v8736, 16
  %v9450 = vpack.i.b16 %v9449, %v9448
  %v9454 = vpack.i.b16 %v8737, %v8601
  %v9456 = vshrl.u32 %v8601, 16
  %v9457 = vshrl.u32 %v8737, 16
  %v9458 = vpack.i.b16 %v9457, %v9456
  %v9462 = vpack.i.b16 %v8738, %v8602
  %v9464 = vshrl.u32 %v8602, 16
  %v9465 = vshrl.u32 %v8738, 16
  %v9466 = vpack.i.b16 %v9465, %v9464
  %v9470 = vpack.i.b16 %v8739, %v8603
  %v9472 = vshrl.u32 %v8603, 16
  %v9473 = vshrl.u32 %v8739, 16
  %v9474 = vpack.i.b16 %v9473, %v9472
  %v9478 = vpack.i.b16 %v9276, %v9140
  %v9480 = vshrl.u32 %v9140, 16
  %v9481 = vshrl.u32 %v9276, 16
  %v9482 = vpack.i.b16 %v9481, %v9480
  %v9486 = vpack.i.b16 %v9277, %v9141
  %v9488 = vshrl.u32 %v9141, 16
  %v9489 = vshrl.u32 %v9277, 16
  %v9490 = vpack.i.b16 %v9489, %v9488
  %v9494 = vpack.i.b16 %v9278, %v9142
  %v9496 = vshrl.u32 %v9142, 16
  %v9497 = vshrl.u32 %v9278, 16
  %v9498 = vpack.i.b16 %v9497, %v9496
  %v9502 = vpack.i.b16 %v9279, %v9143
  %v9504 = vshrl.u32 %v9143, 16
  %v9505 = vshrl.u32 %v9279, 16
  %v9506 = vpack.i.b16 %v9505, %v9504
  %v9510 = vpack.i.b16 %v9280, %v9144
  %v9512 = vshrl.u32 %v9144, 16
  %v9513 = vshrl.u32 %v9280, 16
  %v9514 = vpack.i.b16 %v9513, %v9512
  %v9518 = vpack.i.b16 %v9281, %v9145
  %v9520 = vshrl.u32 %v9145, 16
  %v9521 = vshrl.u32 %v9281, 16
  %v9522 = vpack.i.b16 %v9521, %v9520
  %v9526 = vpack.i.b16 %v9282, %v9146
  %v9528 = vshrl.u32 %v9146, 16
  %v9529 = vshrl.u32 %v9282, 16
  %v9530 = vpack.i.b16 %v9529, %v9528
  %v9534 = vpack.i.b16 %v9283, %v9147
  %v9536 = vshrl.u32 %v9147, 16
  %v9537 = vshrl.u32 %v9283, 16
  %v9538 = vpack.i.b16 %v9537, %v9536
  %9542 = vrot.lane.b32.xlu0 %v8012, 112
  %v9543 = vpop.permute.xlu0 %9542
  %9544 = vrot.lane.b32.xlu0 %v8016, 112
  %v9545 = vpop.permute.xlu0 %9544
  %9548 = vrot.lane.b32.xlu0 %v8012, 96
  %v9549 = vpop.permute.xlu0 %9548
  %9550 = vrot.lane.b32.xlu0 %v8016, 96
  %v9551 = vpop.permute.xlu0 %9550
  %9554 = vrot.lane.b32.xlu0 %v8012, 80
  %v9555 = vpop.permute.xlu0 %9554
  %9556 = vrot.lane.b32.xlu0 %v8016, 80
  %v9557 = vpop.permute.xlu0 %9556
  %9560 = vrot.lane.b32.xlu0 %v8012, 64
  %v9561 = vpop.permute.xlu0 %9560
  %9562 = vrot.lane.b32.xlu0 %v8016, 64
  %v9563 = vpop.permute.xlu0 %9562
  %9566 = vrot.lane.b32.xlu0 %v8012, 48
  %v9567 = vpop.permute.xlu0 %9566
  %9568 = vrot.lane.b32.xlu0 %v8016, 48
  %v9569 = vpop.permute.xlu0 %9568
  %9572 = vrot.lane.b32.xlu0 %v8012, 32
  %v9573 = vpop.permute.xlu0 %9572
  %9574 = vrot.lane.b32.xlu0 %v8016, 32
  %v9575 = vpop.permute.xlu0 %9574
  %9578 = vrot.lane.b32.xlu0 %v8012, 16
  %v9579 = vpop.permute.xlu0 %9578
  %9580 = vrot.lane.b32.xlu0 %v8016, 16
  %v9581 = vpop.permute.xlu0 %9580
  %9586 = vrot.lane.b32.xlu0 %v8013, 112
  %v9587 = vpop.permute.xlu0 %9586
  %9588 = vrot.lane.b32.xlu0 %v8017, 112
  %v9589 = vpop.permute.xlu0 %9588
  %9592 = vrot.lane.b32.xlu0 %v8013, 96
  %v9593 = vpop.permute.xlu0 %9592
  %9594 = vrot.lane.b32.xlu0 %v8017, 96
  %v9595 = vpop.permute.xlu0 %9594
  %9598 = vrot.lane.b32.xlu0 %v8013, 80
  %v9599 = vpop.permute.xlu0 %9598
  %9600 = vrot.lane.b32.xlu0 %v8017, 80
  %v9601 = vpop.permute.xlu0 %9600
  %9604 = vrot.lane.b32.xlu0 %v8013, 64
  %v9605 = vpop.permute.xlu0 %9604
  %9606 = vrot.lane.b32.xlu0 %v8017, 64
  %v9607 = vpop.permute.xlu0 %9606
  %9610 = vrot.lane.b32.xlu0 %v8013, 48
  %v9611 = vpop.permute.xlu0 %9610
  %9612 = vrot.lane.b32.xlu0 %v8017, 48
  %v9613 = vpop.permute.xlu0 %9612
  %9616 = vrot.lane.b32.xlu0 %v8013, 32
  %v9617 = vpop.permute.xlu0 %9616
  %9618 = vrot.lane.b32.xlu0 %v8017, 32
  %v9619 = vpop.permute.xlu0 %9618
  %9622 = vrot.lane.b32.xlu0 %v8013, 16
  %v9623 = vpop.permute.xlu0 %9622
  %9624 = vrot.lane.b32.xlu0 %v8017, 16
  %v9625 = vpop.permute.xlu0 %9624
  %9630 = vrot.lane.b32.xlu0 %v8014, 112
  %v9631 = vpop.permute.xlu0 %9630
  %9632 = vrot.lane.b32.xlu0 %v8018, 112
  %v9633 = vpop.permute.xlu0 %9632
  %9636 = vrot.lane.b32.xlu0 %v8014, 96
  %v9637 = vpop.permute.xlu0 %9636
  %9638 = vrot.lane.b32.xlu0 %v8018, 96
  %v9639 = vpop.permute.xlu0 %9638
  %9642 = vrot.lane.b32.xlu0 %v8014, 80
  %v9643 = vpop.permute.xlu0 %9642
  %9644 = vrot.lane.b32.xlu0 %v8018, 80
  %v9645 = vpop.permute.xlu0 %9644
  %9648 = vrot.lane.b32.xlu0 %v8014, 64
  %v9649 = vpop.permute.xlu0 %9648
  %9650 = vrot.lane.b32.xlu0 %v8018, 64
  %v9651 = vpop.permute.xlu0 %9650
  %9654 = vrot.lane.b32.xlu0 %v8014, 48
  %v9655 = vpop.permute.xlu0 %9654
  %9656 = vrot.lane.b32.xlu0 %v8018, 48
  %v9657 = vpop.permute.xlu0 %9656
  %9660 = vrot.lane.b32.xlu0 %v8014, 32
  %v9661 = vpop.permute.xlu0 %9660
  %9662 = vrot.lane.b32.xlu0 %v8018, 32
  %v9663 = vpop.permute.xlu0 %9662
  %9666 = vrot.lane.b32.xlu0 %v8014, 16
  %v9667 = vpop.permute.xlu0 %9666
  %9668 = vrot.lane.b32.xlu0 %v8018, 16
  %v9669 = vpop.permute.xlu0 %9668
  %9674 = vrot.lane.b32.xlu0 %v8015, 112
  %v9675 = vpop.permute.xlu0 %9674
  %9676 = vrot.lane.b32.xlu0 %v8019, 112
  %v9677 = vpop.permute.xlu0 %9676
  %9680 = vrot.lane.b32.xlu0 %v8015, 96
  %v9681 = vpop.permute.xlu0 %9680
  %9682 = vrot.lane.b32.xlu0 %v8019, 96
  %v9683 = vpop.permute.xlu0 %9682
  %9686 = vrot.lane.b32.xlu0 %v8015, 80
  %v9687 = vpop.permute.xlu0 %9686
  %9688 = vrot.lane.b32.xlu0 %v8019, 80
  %v9689 = vpop.permute.xlu0 %9688
  %9692 = vrot.lane.b32.xlu0 %v8015, 64
  %v9693 = vpop.permute.xlu0 %9692
  %9694 = vrot.lane.b32.xlu0 %v8019, 64
  %v9695 = vpop.permute.xlu0 %9694
  %9698 = vrot.lane.b32.xlu0 %v8015, 48
  %v9699 = vpop.permute.xlu0 %9698
  %9700 = vrot.lane.b32.xlu0 %v8019, 48
  %v9701 = vpop.permute.xlu0 %9700
  %9704 = vrot.lane.b32.xlu0 %v8015, 32
  %v9705 = vpop.permute.xlu0 %9704
  %9706 = vrot.lane.b32.xlu0 %v8019, 32
  %v9707 = vpop.permute.xlu0 %9706
  %9710 = vrot.lane.b32.xlu0 %v8015, 16
  %v9711 = vpop.permute.xlu0 %9710
  %9712 = vrot.lane.b32.xlu0 %v8019, 16
  %v9713 = vpop.permute.xlu0 %9712
  %v9716 = vcombine.low %v8012, %v9561
  %v9717 = vcombine.high %v8012, %v9561
  %v9719 = vunpack.c.l.s4 1983009808
  %v9720 = vunpack.c.0.s8 %v9719
  %v9721 = vlaneseq
  %v9722 = vshrl.u32 %v9721, 7
  %v9723 = vsub.s32 %v9720, %v9722
  %v9724 = vrot.slane %v9716, %v9723
  %v9726 = vunpack.c.l.s4 1983009808
  %v9727 = vunpack.c.0.s8 %v9726
  %v9728 = vlaneseq
  %v9729 = vshrl.u32 %v9728, 7
  %v9730 = vsub.s32 %v9727, %v9729
  %v9731 = vrot.slane %v9717, %v9730
  %v9732 = vcombine.low %v9549, %v9573
  %v9733 = vcombine.high %v9549, %v9573
  %v9735 = vunpack.c.l.s4 1983009808
  %v9736 = vunpack.c.0.s8 %v9735
  %v9737 = vlaneseq
  %v9738 = vshrl.u32 %v9737, 7
  %v9739 = vsub.s32 %v9736, %v9738
  %v9740 = vrot.slane %v9732, %v9739
  %v9742 = vunpack.c.l.s4 1983009808
  %v9743 = vunpack.c.0.s8 %v9742
  %v9744 = vlaneseq
  %v9745 = vshrl.u32 %v9744, 7
  %v9746 = vsub.s32 %v9743, %v9745
  %v9747 = vrot.slane %v9733, %v9746
  %v9748 = vcombine.low %v8013, %v9605
  %v9749 = vcombine.high %v8013, %v9605
  %v9751 = vunpack.c.l.s4 1983009808
  %v9752 = vunpack.c.0.s8 %v9751
  %v9753 = vlaneseq
  %v9754 = vshrl.u32 %v9753, 7
  %v9755 = vsub.s32 %v9752, %v9754
  %v9756 = vrot.slane %v9748, %v9755
  %v9758 = vunpack.c.l.s4 1983009808
  %v9759 = vunpack.c.0.s8 %v9758
  %v9760 = vlaneseq
  %v9761 = vshrl.u32 %v9760, 7
  %v9762 = vsub.s32 %v9759, %v9761
  %v9763 = vrot.slane %v9749, %v9762
  %v9764 = vcombine.low %v9593, %v9617
  %v9765 = vcombine.high %v9593, %v9617
  %v9767 = vunpack.c.l.s4 1983009808
  %v9768 = vunpack.c.0.s8 %v9767
  %v9769 = vlaneseq
  %v9770 = vshrl.u32 %v9769, 7
  %v9771 = vsub.s32 %v9768, %v9770
  %v9772 = vrot.slane %v9764, %v9771
  %v9774 = vunpack.c.l.s4 1983009808
  %v9775 = vunpack.c.0.s8 %v9774
  %v9776 = vlaneseq
  %v9777 = vshrl.u32 %v9776, 7
  %v9778 = vsub.s32 %v9775, %v9777
  %v9779 = vrot.slane %v9765, %v9778
  %v9780 = vcombine.low %v9724, %v9740
  %v9781 = vcombine.high %v9724, %v9740
  %v9783 = vunpack.c.l.s4 1934713408
  %v9784 = vunpack.c.0.s8 %v9783
  %v9785 = vlaneseq
  %v9786 = vshrl.u32 %v9785, 7
  %v9787 = vsub.s32 %v9784, %v9786
  %v9788 = vrot.slane %v9780, %v9787
  %v9790 = vunpack.c.l.s4 1934713408
  %v9791 = vunpack.c.0.s8 %v9790
  %v9792 = vlaneseq
  %v9793 = vshrl.u32 %v9792, 7
  %v9794 = vsub.s32 %v9791, %v9793
  %v9795 = vrot.slane %v9781, %v9794
  %v9796 = vcombine.low %v9731, %v9747
  %v9797 = vcombine.high %v9731, %v9747
  %v9799 = vunpack.c.l.s4 1934713408
  %v9800 = vunpack.c.0.s8 %v9799
  %v9801 = vlaneseq
  %v9802 = vshrl.u32 %v9801, 7
  %v9803 = vsub.s32 %v9800, %v9802
  %v9804 = vrot.slane %v9796, %v9803
  %v9806 = vunpack.c.l.s4 1934713408
  %v9807 = vunpack.c.0.s8 %v9806
  %v9808 = vlaneseq
  %v9809 = vshrl.u32 %v9808, 7
  %v9810 = vsub.s32 %v9807, %v9809
  %v9811 = vrot.slane %v9797, %v9810
  %v9812 = vcombine.low %v9756, %v9772
  %v9813 = vcombine.high %v9756, %v9772
  %v9815 = vunpack.c.l.s4 1934713408
  %v9816 = vunpack.c.0.s8 %v9815
  %v9817 = vlaneseq
  %v9818 = vshrl.u32 %v9817, 7
  %v9819 = vsub.s32 %v9816, %v9818
  %v9820 = vrot.slane %v9812, %v9819
  %v9822 = vunpack.c.l.s4 1934713408
  %v9823 = vunpack.c.0.s8 %v9822
  %v9824 = vlaneseq
  %v9825 = vshrl.u32 %v9824, 7
  %v9826 = vsub.s32 %v9823, %v9825
  %v9827 = vrot.slane %v9813, %v9826
  %v9828 = vcombine.low %v9763, %v9779
  %v9829 = vcombine.high %v9763, %v9779
  %v9831 = vunpack.c.l.s4 1934713408
  %v9832 = vunpack.c.0.s8 %v9831
  %v9833 = vlaneseq
  %v9834 = vshrl.u32 %v9833, 7
  %v9835 = vsub.s32 %v9832, %v9834
  %v9836 = vrot.slane %v9828, %v9835
  %v9838 = vunpack.c.l.s4 1934713408
  %v9839 = vunpack.c.0.s8 %v9838
  %v9840 = vlaneseq
  %v9841 = vshrl.u32 %v9840, 7
  %v9842 = vsub.s32 %v9839, %v9841
  %v9843 = vrot.slane %v9829, %v9842
  %v9844 = vcombine.low %v9788, %v9820
  %v9845 = vcombine.high %v9788, %v9820
  %v9846 = vcombine.low %v9795, %v9827
  %v9847 = vcombine.high %v9795, %v9827
  %v9848 = vcombine.low %v9804, %v9836
  %v9849 = vcombine.high %v9804, %v9836
  %v9850 = vcombine.low %v9811, %v9843
  %v9851 = vcombine.high %v9811, %v9843
  %v9852 = vcombine.low %v9543, %v9567
  %v9853 = vcombine.high %v9543, %v9567
  %v9855 = vunpack.c.l.s4 1983009808
  %v9856 = vunpack.c.0.s8 %v9855
  %v9857 = vlaneseq
  %v9858 = vshrl.u32 %v9857, 7
  %v9859 = vsub.s32 %v9856, %v9858
  %v9860 = vrot.slane %v9852, %v9859
  %v9862 = vunpack.c.l.s4 1983009808
  %v9863 = vunpack.c.0.s8 %v9862
  %v9864 = vlaneseq
  %v9865 = vshrl.u32 %v9864, 7
  %v9866 = vsub.s32 %v9863, %v9865
  %v9867 = vrot.slane %v9853, %v9866
  %v9868 = vcombine.low %v9555, %v9579
  %v9869 = vcombine.high %v9555, %v9579
  %v9871 = vunpack.c.l.s4 1983009808
  %v9872 = vunpack.c.0.s8 %v9871
  %v9873 = vlaneseq
  %v9874 = vshrl.u32 %v9873, 7
  %v9875 = vsub.s32 %v9872, %v9874
  %v9876 = vrot.slane %v9868, %v9875
  %v9878 = vunpack.c.l.s4 1983009808
  %v9879 = vunpack.c.0.s8 %v9878
  %v9880 = vlaneseq
  %v9881 = vshrl.u32 %v9880, 7
  %v9882 = vsub.s32 %v9879, %v9881
  %v9883 = vrot.slane %v9869, %v9882
  %v9884 = vcombine.low %v9587, %v9611
  %v9885 = vcombine.high %v9587, %v9611
  %v9887 = vunpack.c.l.s4 1983009808
  %v9888 = vunpack.c.0.s8 %v9887
  %v9889 = vlaneseq
  %v9890 = vshrl.u32 %v9889, 7
  %v9891 = vsub.s32 %v9888, %v9890
  %v9892 = vrot.slane %v9884, %v9891
  %v9894 = vunpack.c.l.s4 1983009808
  %v9895 = vunpack.c.0.s8 %v9894
  %v9896 = vlaneseq
  %v9897 = vshrl.u32 %v9896, 7
  %v9898 = vsub.s32 %v9895, %v9897
  %v9899 = vrot.slane %v9885, %v9898
  %v9900 = vcombine.low %v9599, %v9623
  %v9901 = vcombine.high %v9599, %v9623
  %v9903 = vunpack.c.l.s4 1983009808
  %v9904 = vunpack.c.0.s8 %v9903
  %v9905 = vlaneseq
  %v9906 = vshrl.u32 %v9905, 7
  %v9907 = vsub.s32 %v9904, %v9906
  %v9908 = vrot.slane %v9900, %v9907
  %v9910 = vunpack.c.l.s4 1983009808
  %v9911 = vunpack.c.0.s8 %v9910
  %v9912 = vlaneseq
  %v9913 = vshrl.u32 %v9912, 7
  %v9914 = vsub.s32 %v9911, %v9913
  %v9915 = vrot.slane %v9901, %v9914
  %v9916 = vcombine.low %v9860, %v9876
  %v9917 = vcombine.high %v9860, %v9876
  %v9919 = vunpack.c.l.s4 1934713408
  %v9920 = vunpack.c.0.s8 %v9919
  %v9921 = vlaneseq
  %v9922 = vshrl.u32 %v9921, 7
  %v9923 = vsub.s32 %v9920, %v9922
  %v9924 = vrot.slane %v9916, %v9923
  %v9926 = vunpack.c.l.s4 1934713408
  %v9927 = vunpack.c.0.s8 %v9926
  %v9928 = vlaneseq
  %v9929 = vshrl.u32 %v9928, 7
  %v9930 = vsub.s32 %v9927, %v9929
  %v9931 = vrot.slane %v9917, %v9930
  %v9932 = vcombine.low %v9867, %v9883
  %v9933 = vcombine.high %v9867, %v9883
  %v9935 = vunpack.c.l.s4 1934713408
  %v9936 = vunpack.c.0.s8 %v9935
  %v9937 = vlaneseq
  %v9938 = vshrl.u32 %v9937, 7
  %v9939 = vsub.s32 %v9936, %v9938
  %v9940 = vrot.slane %v9932, %v9939
  %v9942 = vunpack.c.l.s4 1934713408
  %v9943 = vunpack.c.0.s8 %v9942
  %v9944 = vlaneseq
  %v9945 = vshrl.u32 %v9944, 7
  %v9946 = vsub.s32 %v9943, %v9945
  %v9947 = vrot.slane %v9933, %v9946
  %v9948 = vcombine.low %v9892, %v9908
  %v9949 = vcombine.high %v9892, %v9908
  %v9951 = vunpack.c.l.s4 1934713408
  %v9952 = vunpack.c.0.s8 %v9951
  %v9953 = vlaneseq
  %v9954 = vshrl.u32 %v9953, 7
  %v9955 = vsub.s32 %v9952, %v9954
  %v9956 = vrot.slane %v9948, %v9955
  %v9958 = vunpack.c.l.s4 1934713408
  %v9959 = vunpack.c.0.s8 %v9958
  %v9960 = vlaneseq
  %v9961 = vshrl.u32 %v9960, 7
  %v9962 = vsub.s32 %v9959, %v9961
  %v9963 = vrot.slane %v9949, %v9962
  %v9964 = vcombine.low %v9899, %v9915
  %v9965 = vcombine.high %v9899, %v9915
  %v9967 = vunpack.c.l.s4 1934713408
  %v9968 = vunpack.c.0.s8 %v9967
  %v9969 = vlaneseq
  %v9970 = vshrl.u32 %v9969, 7
  %v9971 = vsub.s32 %v9968, %v9970
  %v9972 = vrot.slane %v9964, %v9971
  %v9974 = vunpack.c.l.s4 1934713408
  %v9975 = vunpack.c.0.s8 %v9974
  %v9976 = vlaneseq
  %v9977 = vshrl.u32 %v9976, 7
  %v9978 = vsub.s32 %v9975, %v9977
  %v9979 = vrot.slane %v9965, %v9978
  %v9980 = vcombine.low %v9924, %v9956
  %v9981 = vcombine.high %v9924, %v9956
  %v9982 = vcombine.low %v9931, %v9963
  %v9983 = vcombine.high %v9931, %v9963
  %v9984 = vcombine.low %v9940, %v9972
  %v9985 = vcombine.high %v9940, %v9972
  %v9986 = vcombine.low %v9947, %v9979
  %v9987 = vcombine.high %v9947, %v9979
  %v9988 = vcombine.low %v8014, %v9649
  %v9989 = vcombine.high %v8014, %v9649
  %v9991 = vunpack.c.l.s4 1983009808
  %v9992 = vunpack.c.0.s8 %v9991
  %v9993 = vlaneseq
  %v9994 = vshrl.u32 %v9993, 7
  %v9995 = vsub.s32 %v9992, %v9994
  %v9996 = vrot.slane %v9988, %v9995
  %v9998 = vunpack.c.l.s4 1983009808
  %v9999 = vunpack.c.0.s8 %v9998
  %v10000 = vlaneseq
  %v10001 = vshrl.u32 %v10000, 7
  %v10002 = vsub.s32 %v9999, %v10001
  %v10003 = vrot.slane %v9989, %v10002
  %v10004 = vcombine.low %v9637, %v9661
  %v10005 = vcombine.high %v9637, %v9661
  %v10007 = vunpack.c.l.s4 1983009808
  %v10008 = vunpack.c.0.s8 %v10007
  %v10009 = vlaneseq
  %v10010 = vshrl.u32 %v10009, 7
  %v10011 = vsub.s32 %v10008, %v10010
  %v10012 = vrot.slane %v10004, %v10011
  %v10014 = vunpack.c.l.s4 1983009808
  %v10015 = vunpack.c.0.s8 %v10014
  %v10016 = vlaneseq
  %v10017 = vshrl.u32 %v10016, 7
  %v10018 = vsub.s32 %v10015, %v10017
  %v10019 = vrot.slane %v10005, %v10018
  %v10020 = vcombine.low %v8015, %v9693
  %v10021 = vcombine.high %v8015, %v9693
  %v10023 = vunpack.c.l.s4 1983009808
  %v10024 = vunpack.c.0.s8 %v10023
  %v10025 = vlaneseq
  %v10026 = vshrl.u32 %v10025, 7
  %v10027 = vsub.s32 %v10024, %v10026
  %v10028 = vrot.slane %v10020, %v10027
  %v10030 = vunpack.c.l.s4 1983009808
  %v10031 = vunpack.c.0.s8 %v10030
  %v10032 = vlaneseq
  %v10033 = vshrl.u32 %v10032, 7
  %v10034 = vsub.s32 %v10031, %v10033
  %v10035 = vrot.slane %v10021, %v10034
  %v10036 = vcombine.low %v9681, %v9705
  %v10037 = vcombine.high %v9681, %v9705
  %v10039 = vunpack.c.l.s4 1983009808
  %v10040 = vunpack.c.0.s8 %v10039
  %v10041 = vlaneseq
  %v10042 = vshrl.u32 %v10041, 7
  %v10043 = vsub.s32 %v10040, %v10042
  %v10044 = vrot.slane %v10036, %v10043
  %v10046 = vunpack.c.l.s4 1983009808
  %v10047 = vunpack.c.0.s8 %v10046
  %v10048 = vlaneseq
  %v10049 = vshrl.u32 %v10048, 7
  %v10050 = vsub.s32 %v10047, %v10049
  %v10051 = vrot.slane %v10037, %v10050
  %v10052 = vcombine.low %v9996, %v10012
  %v10053 = vcombine.high %v9996, %v10012
  %v10055 = vunpack.c.l.s4 1934713408
  %v10056 = vunpack.c.0.s8 %v10055
  %v10057 = vlaneseq
  %v10058 = vshrl.u32 %v10057, 7
  %v10059 = vsub.s32 %v10056, %v10058
  %v10060 = vrot.slane %v10052, %v10059
  %v10062 = vunpack.c.l.s4 1934713408
  %v10063 = vunpack.c.0.s8 %v10062
  %v10064 = vlaneseq
  %v10065 = vshrl.u32 %v10064, 7
  %v10066 = vsub.s32 %v10063, %v10065
  %v10067 = vrot.slane %v10053, %v10066
  %v10068 = vcombine.low %v10003, %v10019
  %v10069 = vcombine.high %v10003, %v10019
  %v10071 = vunpack.c.l.s4 1934713408
  %v10072 = vunpack.c.0.s8 %v10071
  %v10073 = vlaneseq
  %v10074 = vshrl.u32 %v10073, 7
  %v10075 = vsub.s32 %v10072, %v10074
  %v10076 = vrot.slane %v10068, %v10075
  %v10078 = vunpack.c.l.s4 1934713408
  %v10079 = vunpack.c.0.s8 %v10078
  %v10080 = vlaneseq
  %v10081 = vshrl.u32 %v10080, 7
  %v10082 = vsub.s32 %v10079, %v10081
  %v10083 = vrot.slane %v10069, %v10082
  %v10084 = vcombine.low %v10028, %v10044
  %v10085 = vcombine.high %v10028, %v10044
  %v10087 = vunpack.c.l.s4 1934713408
  %v10088 = vunpack.c.0.s8 %v10087
  %v10089 = vlaneseq
  %v10090 = vshrl.u32 %v10089, 7
  %v10091 = vsub.s32 %v10088, %v10090
  %v10092 = vrot.slane %v10084, %v10091
  %v10094 = vunpack.c.l.s4 1934713408
  %v10095 = vunpack.c.0.s8 %v10094
  %v10096 = vlaneseq
  %v10097 = vshrl.u32 %v10096, 7
  %v10098 = vsub.s32 %v10095, %v10097
  %v10099 = vrot.slane %v10085, %v10098
  %v10100 = vcombine.low %v10035, %v10051
  %v10101 = vcombine.high %v10035, %v10051
  %v10103 = vunpack.c.l.s4 1934713408
  %v10104 = vunpack.c.0.s8 %v10103
  %v10105 = vlaneseq
  %v10106 = vshrl.u32 %v10105, 7
  %v10107 = vsub.s32 %v10104, %v10106
  %v10108 = vrot.slane %v10100, %v10107
  %v10110 = vunpack.c.l.s4 1934713408
  %v10111 = vunpack.c.0.s8 %v10110
  %v10112 = vlaneseq
  %v10113 = vshrl.u32 %v10112, 7
  %v10114 = vsub.s32 %v10111, %v10113
  %v10115 = vrot.slane %v10101, %v10114
  %v10116 = vcombine.low %v10060, %v10092
  %v10117 = vcombine.high %v10060, %v10092
  %v10118 = vcombine.low %v10067, %v10099
  %v10119 = vcombine.high %v10067, %v10099
  %v10120 = vcombine.low %v10076, %v10108
  %v10121 = vcombine.high %v10076, %v10108
  %v10122 = vcombine.low %v10083, %v10115
  %v10123 = vcombine.high %v10083, %v10115
  %v10124 = vcombine.low %v9631, %v9655
  %v10125 = vcombine.high %v9631, %v9655
  %v10127 = vunpack.c.l.s4 1983009808
  %v10128 = vunpack.c.0.s8 %v10127
  %v10129 = vlaneseq
  %v10130 = vshrl.u32 %v10129, 7
  %v10131 = vsub.s32 %v10128, %v10130
  %v10132 = vrot.slane %v10124, %v10131
  %v10134 = vunpack.c.l.s4 1983009808
  %v10135 = vunpack.c.0.s8 %v10134
  %v10136 = vlaneseq
  %v10137 = vshrl.u32 %v10136, 7
  %v10138 = vsub.s32 %v10135, %v10137
  %v10139 = vrot.slane %v10125, %v10138
  %v10140 = vcombine.low %v9643, %v9667
  %v10141 = vcombine.high %v9643, %v9667
  %v10143 = vunpack.c.l.s4 1983009808
  %v10144 = vunpack.c.0.s8 %v10143
  %v10145 = vlaneseq
  %v10146 = vshrl.u32 %v10145, 7
  %v10147 = vsub.s32 %v10144, %v10146
  %v10148 = vrot.slane %v10140, %v10147
  %v10150 = vunpack.c.l.s4 1983009808
  %v10151 = vunpack.c.0.s8 %v10150
  %v10152 = vlaneseq
  %v10153 = vshrl.u32 %v10152, 7
  %v10154 = vsub.s32 %v10151, %v10153
  %v10155 = vrot.slane %v10141, %v10154
  %v10156 = vcombine.low %v9675, %v9699
  %v10157 = vcombine.high %v9675, %v9699
  %v10159 = vunpack.c.l.s4 1983009808
  %v10160 = vunpack.c.0.s8 %v10159
  %v10161 = vlaneseq
  %v10162 = vshrl.u32 %v10161, 7
  %v10163 = vsub.s32 %v10160, %v10162
  %v10164 = vrot.slane %v10156, %v10163
  %v10166 = vunpack.c.l.s4 1983009808
  %v10167 = vunpack.c.0.s8 %v10166
  %v10168 = vlaneseq
  %v10169 = vshrl.u32 %v10168, 7
  %v10170 = vsub.s32 %v10167, %v10169
  %v10171 = vrot.slane %v10157, %v10170
  %v10172 = vcombine.low %v9687, %v9711
  %v10173 = vcombine.high %v9687, %v9711
  %v10175 = vunpack.c.l.s4 1983009808
  %v10176 = vunpack.c.0.s8 %v10175
  %v10177 = vlaneseq
  %v10178 = vshrl.u32 %v10177, 7
  %v10179 = vsub.s32 %v10176, %v10178
  %v10180 = vrot.slane %v10172, %v10179
  %v10182 = vunpack.c.l.s4 1983009808
  %v10183 = vunpack.c.0.s8 %v10182
  %v10184 = vlaneseq
  %v10185 = vshrl.u32 %v10184, 7
  %v10186 = vsub.s32 %v10183, %v10185
  %v10187 = vrot.slane %v10173, %v10186
  %v10188 = vcombine.low %v10132, %v10148
  %v10189 = vcombine.high %v10132, %v10148
  %v10191 = vunpack.c.l.s4 1934713408
  %v10192 = vunpack.c.0.s8 %v10191
  %v10193 = vlaneseq
  %v10194 = vshrl.u32 %v10193, 7
  %v10195 = vsub.s32 %v10192, %v10194
  %v10196 = vrot.slane %v10188, %v10195
  %v10198 = vunpack.c.l.s4 1934713408
  %v10199 = vunpack.c.0.s8 %v10198
  %v10200 = vlaneseq
  %v10201 = vshrl.u32 %v10200, 7
  %v10202 = vsub.s32 %v10199, %v10201
  %v10203 = vrot.slane %v10189, %v10202
  %v10204 = vcombine.low %v10139, %v10155
  %v10205 = vcombine.high %v10139, %v10155
  %v10207 = vunpack.c.l.s4 1934713408
  %v10208 = vunpack.c.0.s8 %v10207
  %v10209 = vlaneseq
  %v10210 = vshrl.u32 %v10209, 7
  %v10211 = vsub.s32 %v10208, %v10210
  %v10212 = vrot.slane %v10204, %v10211
  %v10214 = vunpack.c.l.s4 1934713408
  %v10215 = vunpack.c.0.s8 %v10214
  %v10216 = vlaneseq
  %v10217 = vshrl.u32 %v10216, 7
  %v10218 = vsub.s32 %v10215, %v10217
  %v10219 = vrot.slane %v10205, %v10218
  %v10220 = vcombine.low %v10164, %v10180
  %v10221 = vcombine.high %v10164, %v10180
  %v10223 = vunpack.c.l.s4 1934713408
  %v10224 = vunpack.c.0.s8 %v10223
  %v10225 = vlaneseq
  %v10226 = vshrl.u32 %v10225, 7
  %v10227 = vsub.s32 %v10224, %v10226
  %v10228 = vrot.slane %v10220, %v10227
  %v10230 = vunpack.c.l.s4 1934713408
  %v10231 = vunpack.c.0.s8 %v10230
  %v10232 = vlaneseq
  %v10233 = vshrl.u32 %v10232, 7
  %v10234 = vsub.s32 %v10231, %v10233
  %v10235 = vrot.slane %v10221, %v10234
  %v10236 = vcombine.low %v10171, %v10187
  %v10237 = vcombine.high %v10171, %v10187
  %v10239 = vunpack.c.l.s4 1934713408
  %v10240 = vunpack.c.0.s8 %v10239
  %v10241 = vlaneseq
  %v10242 = vshrl.u32 %v10241, 7
  %v10243 = vsub.s32 %v10240, %v10242
  %v10244 = vrot.slane %v10236, %v10243
  %v10246 = vunpack.c.l.s4 1934713408
  %v10247 = vunpack.c.0.s8 %v10246
  %v10248 = vlaneseq
  %v10249 = vshrl.u32 %v10248, 7
  %v10250 = vsub.s32 %v10247, %v10249
  %v10251 = vrot.slane %v10237, %v10250
  %v10252 = vcombine.low %v10196, %v10228
  %v10253 = vcombine.high %v10196, %v10228
  %v10254 = vcombine.low %v10203, %v10235
  %v10255 = vcombine.high %v10203, %v10235
  %v10256 = vcombine.low %v10212, %v10244
  %v10257 = vcombine.high %v10212, %v10244
  %v10258 = vcombine.low %v10219, %v10251
  %v10259 = vcombine.high %v10219, %v10251
  %v10260 = vcombine.low %v8016, %v9563
  %v10261 = vcombine.high %v8016, %v9563
  %v10263 = vunpack.c.l.s4 1983009808
  %v10264 = vunpack.c.0.s8 %v10263
  %v10265 = vlaneseq
  %v10266 = vshrl.u32 %v10265, 7
  %v10267 = vsub.s32 %v10264, %v10266
  %v10268 = vrot.slane %v10260, %v10267
  %v10270 = vunpack.c.l.s4 1983009808
  %v10271 = vunpack.c.0.s8 %v10270
  %v10272 = vlaneseq
  %v10273 = vshrl.u32 %v10272, 7
  %v10274 = vsub.s32 %v10271, %v10273
  %v10275 = vrot.slane %v10261, %v10274
  %v10276 = vcombine.low %v9551, %v9575
  %v10277 = vcombine.high %v9551, %v9575
  %v10279 = vunpack.c.l.s4 1983009808
  %v10280 = vunpack.c.0.s8 %v10279
  %v10281 = vlaneseq
  %v10282 = vshrl.u32 %v10281, 7
  %v10283 = vsub.s32 %v10280, %v10282
  %v10284 = vrot.slane %v10276, %v10283
  %v10286 = vunpack.c.l.s4 1983009808
  %v10287 = vunpack.c.0.s8 %v10286
  %v10288 = vlaneseq
  %v10289 = vshrl.u32 %v10288, 7
  %v10290 = vsub.s32 %v10287, %v10289
  %v10291 = vrot.slane %v10277, %v10290
  %v10292 = vcombine.low %v8017, %v9607
  %v10293 = vcombine.high %v8017, %v9607
  %v10295 = vunpack.c.l.s4 1983009808
  %v10296 = vunpack.c.0.s8 %v10295
  %v10297 = vlaneseq
  %v10298 = vshrl.u32 %v10297, 7
  %v10299 = vsub.s32 %v10296, %v10298
  %v10300 = vrot.slane %v10292, %v10299
  %v10302 = vunpack.c.l.s4 1983009808
  %v10303 = vunpack.c.0.s8 %v10302
  %v10304 = vlaneseq
  %v10305 = vshrl.u32 %v10304, 7
  %v10306 = vsub.s32 %v10303, %v10305
  %v10307 = vrot.slane %v10293, %v10306
  %v10308 = vcombine.low %v9595, %v9619
  %v10309 = vcombine.high %v9595, %v9619
  %v10311 = vunpack.c.l.s4 1983009808
  %v10312 = vunpack.c.0.s8 %v10311
  %v10313 = vlaneseq
  %v10314 = vshrl.u32 %v10313, 7
  %v10315 = vsub.s32 %v10312, %v10314
  %v10316 = vrot.slane %v10308, %v10315
  %v10318 = vunpack.c.l.s4 1983009808
  %v10319 = vunpack.c.0.s8 %v10318
  %v10320 = vlaneseq
  %v10321 = vshrl.u32 %v10320, 7
  %v10322 = vsub.s32 %v10319, %v10321
  %v10323 = vrot.slane %v10309, %v10322
  %v10324 = vcombine.low %v10268, %v10284
  %v10325 = vcombine.high %v10268, %v10284
  %v10327 = vunpack.c.l.s4 1934713408
  %v10328 = vunpack.c.0.s8 %v10327
  %v10329 = vlaneseq
  %v10330 = vshrl.u32 %v10329, 7
  %v10331 = vsub.s32 %v10328, %v10330
  %v10332 = vrot.slane %v10324, %v10331
  %v10334 = vunpack.c.l.s4 1934713408
  %v10335 = vunpack.c.0.s8 %v10334
  %v10336 = vlaneseq
  %v10337 = vshrl.u32 %v10336, 7
  %v10338 = vsub.s32 %v10335, %v10337
  %v10339 = vrot.slane %v10325, %v10338
  %v10340 = vcombine.low %v10275, %v10291
  %v10341 = vcombine.high %v10275, %v10291
  %v10343 = vunpack.c.l.s4 1934713408
  %v10344 = vunpack.c.0.s8 %v10343
  %v10345 = vlaneseq
  %v10346 = vshrl.u32 %v10345, 7
  %v10347 = vsub.s32 %v10344, %v10346
  %v10348 = vrot.slane %v10340, %v10347
  %v10350 = vunpack.c.l.s4 1934713408
  %v10351 = vunpack.c.0.s8 %v10350
  %v10352 = vlaneseq
  %v10353 = vshrl.u32 %v10352, 7
  %v10354 = vsub.s32 %v10351, %v10353
  %v10355 = vrot.slane %v10341, %v10354
  %v10356 = vcombine.low %v10300, %v10316
  %v10357 = vcombine.high %v10300, %v10316
  %v10359 = vunpack.c.l.s4 1934713408
  %v10360 = vunpack.c.0.s8 %v10359
  %v10361 = vlaneseq
  %v10362 = vshrl.u32 %v10361, 7
  %v10363 = vsub.s32 %v10360, %v10362
  %v10364 = vrot.slane %v10356, %v10363
  %v10366 = vunpack.c.l.s4 1934713408
  %v10367 = vunpack.c.0.s8 %v10366
  %v10368 = vlaneseq
  %v10369 = vshrl.u32 %v10368, 7
  %v10370 = vsub.s32 %v10367, %v10369
  %v10371 = vrot.slane %v10357, %v10370
  %v10372 = vcombine.low %v10307, %v10323
  %v10373 = vcombine.high %v10307, %v10323
  %v10375 = vunpack.c.l.s4 1934713408
  %v10376 = vunpack.c.0.s8 %v10375
  %v10377 = vlaneseq
  %v10378 = vshrl.u32 %v10377, 7
  %v10379 = vsub.s32 %v10376, %v10378
  %v10380 = vrot.slane %v10372, %v10379
  %v10382 = vunpack.c.l.s4 1934713408
  %v10383 = vunpack.c.0.s8 %v10382
  %v10384 = vlaneseq
  %v10385 = vshrl.u32 %v10384, 7
  %v10386 = vsub.s32 %v10383, %v10385
  %v10387 = vrot.slane %v10373, %v10386
  %v10388 = vcombine.low %v10332, %v10364
  %v10389 = vcombine.high %v10332, %v10364
  %v10390 = vcombine.low %v10339, %v10371
  %v10391 = vcombine.high %v10339, %v10371
  %v10392 = vcombine.low %v10348, %v10380
  %v10393 = vcombine.high %v10348, %v10380
  %v10394 = vcombine.low %v10355, %v10387
  %v10395 = vcombine.high %v10355, %v10387
  %v10396 = vcombine.low %v9545, %v9569
  %v10397 = vcombine.high %v9545, %v9569
  %v10399 = vunpack.c.l.s4 1983009808
  %v10400 = vunpack.c.0.s8 %v10399
  %v10401 = vlaneseq
  %v10402 = vshrl.u32 %v10401, 7
  %v10403 = vsub.s32 %v10400, %v10402
  %v10404 = vrot.slane %v10396, %v10403
  %v10406 = vunpack.c.l.s4 1983009808
  %v10407 = vunpack.c.0.s8 %v10406
  %v10408 = vlaneseq
  %v10409 = vshrl.u32 %v10408, 7
  %v10410 = vsub.s32 %v10407, %v10409
  %v10411 = vrot.slane %v10397, %v10410
  %v10412 = vcombine.low %v9557, %v9581
  %v10413 = vcombine.high %v9557, %v9581
  %v10415 = vunpack.c.l.s4 1983009808
  %v10416 = vunpack.c.0.s8 %v10415
  %v10417 = vlaneseq
  %v10418 = vshrl.u32 %v10417, 7
  %v10419 = vsub.s32 %v10416, %v10418
  %v10420 = vrot.slane %v10412, %v10419
  %v10422 = vunpack.c.l.s4 1983009808
  %v10423 = vunpack.c.0.s8 %v10422
  %v10424 = vlaneseq
  %v10425 = vshrl.u32 %v10424, 7
  %v10426 = vsub.s32 %v10423, %v10425
  %v10427 = vrot.slane %v10413, %v10426
  %v10428 = vcombine.low %v9589, %v9613
  %v10429 = vcombine.high %v9589, %v9613
  %v10431 = vunpack.c.l.s4 1983009808
  %v10432 = vunpack.c.0.s8 %v10431
  %v10433 = vlaneseq
  %v10434 = vshrl.u32 %v10433, 7
  %v10435 = vsub.s32 %v10432, %v10434
  %v10436 = vrot.slane %v10428, %v10435
  %v10438 = vunpack.c.l.s4 1983009808
  %v10439 = vunpack.c.0.s8 %v10438
  %v10440 = vlaneseq
  %v10441 = vshrl.u32 %v10440, 7
  %v10442 = vsub.s32 %v10439, %v10441
  %v10443 = vrot.slane %v10429, %v10442
  %v10444 = vcombine.low %v9601, %v9625
  %v10445 = vcombine.high %v9601, %v9625
  %v10447 = vunpack.c.l.s4 1983009808
  %v10448 = vunpack.c.0.s8 %v10447
  %v10449 = vlaneseq
  %v10450 = vshrl.u32 %v10449, 7
  %v10451 = vsub.s32 %v10448, %v10450
  %v10452 = vrot.slane %v10444, %v10451
  %v10454 = vunpack.c.l.s4 1983009808
  %v10455 = vunpack.c.0.s8 %v10454
  %v10456 = vlaneseq
  %v10457 = vshrl.u32 %v10456, 7
  %v10458 = vsub.s32 %v10455, %v10457
  %v10459 = vrot.slane %v10445, %v10458
  %v10460 = vcombine.low %v10404, %v10420
  %v10461 = vcombine.high %v10404, %v10420
  %v10463 = vunpack.c.l.s4 1934713408
  %v10464 = vunpack.c.0.s8 %v10463
  %v10465 = vlaneseq
  %v10466 = vshrl.u32 %v10465, 7
  %v10467 = vsub.s32 %v10464, %v10466
  %v10468 = vrot.slane %v10460, %v10467
  %v10470 = vunpack.c.l.s4 1934713408
  %v10471 = vunpack.c.0.s8 %v10470
  %v10472 = vlaneseq
  %v10473 = vshrl.u32 %v10472, 7
  %v10474 = vsub.s32 %v10471, %v10473
  %v10475 = vrot.slane %v10461, %v10474
  %v10476 = vcombine.low %v10411, %v10427
  %v10477 = vcombine.high %v10411, %v10427
  %v10479 = vunpack.c.l.s4 1934713408
  %v10480 = vunpack.c.0.s8 %v10479
  %v10481 = vlaneseq
  %v10482 = vshrl.u32 %v10481, 7
  %v10483 = vsub.s32 %v10480, %v10482
  %v10484 = vrot.slane %v10476, %v10483
  %v10486 = vunpack.c.l.s4 1934713408
  %v10487 = vunpack.c.0.s8 %v10486
  %v10488 = vlaneseq
  %v10489 = vshrl.u32 %v10488, 7
  %v10490 = vsub.s32 %v10487, %v10489
  %v10491 = vrot.slane %v10477, %v10490
  %v10492 = vcombine.low %v10436, %v10452
  %v10493 = vcombine.high %v10436, %v10452
  %v10495 = vunpack.c.l.s4 1934713408
  %v10496 = vunpack.c.0.s8 %v10495
  %v10497 = vlaneseq
  %v10498 = vshrl.u32 %v10497, 7
  %v10499 = vsub.s32 %v10496, %v10498
  %v10500 = vrot.slane %v10492, %v10499
  %v10502 = vunpack.c.l.s4 1934713408
  %v10503 = vunpack.c.0.s8 %v10502
  %v10504 = vlaneseq
  %v10505 = vshrl.u32 %v10504, 7
  %v10506 = vsub.s32 %v10503, %v10505
  %v10507 = vrot.slane %v10493, %v10506
  %v10508 = vcombine.low %v10443, %v10459
  %v10509 = vcombine.high %v10443, %v10459
  %v10511 = vunpack.c.l.s4 1934713408
  %v10512 = vunpack.c.0.s8 %v10511
  %v10513 = vlaneseq
  %v10514 = vshrl.u32 %v10513, 7
  %v10515 = vsub.s32 %v10512, %v10514
  %v10516 = vrot.slane %v10508, %v10515
  %v10518 = vunpack.c.l.s4 1934713408
  %v10519 = vunpack.c.0.s8 %v10518
  %v10520 = vlaneseq
  %v10521 = vshrl.u32 %v10520, 7
  %v10522 = vsub.s32 %v10519, %v10521
  %v10523 = vrot.slane %v10509, %v10522
  %v10524 = vcombine.low %v10468, %v10500
  %v10525 = vcombine.high %v10468, %v10500
  %v10526 = vcombine.low %v10475, %v10507
  %v10527 = vcombine.high %v10475, %v10507
  %v10528 = vcombine.low %v10484, %v10516
  %v10529 = vcombine.high %v10484, %v10516
  %v10530 = vcombine.low %v10491, %v10523
  %v10531 = vcombine.high %v10491, %v10523
  %v10532 = vcombine.low %v8018, %v9651
  %v10533 = vcombine.high %v8018, %v9651
  %v10535 = vunpack.c.l.s4 1983009808
  %v10536 = vunpack.c.0.s8 %v10535
  %v10537 = vlaneseq
  %v10538 = vshrl.u32 %v10537, 7
  %v10539 = vsub.s32 %v10536, %v10538
  %v10540 = vrot.slane %v10532, %v10539
  %v10542 = vunpack.c.l.s4 1983009808
  %v10543 = vunpack.c.0.s8 %v10542
  %v10544 = vlaneseq
  %v10545 = vshrl.u32 %v10544, 7
  %v10546 = vsub.s32 %v10543, %v10545
  %v10547 = vrot.slane %v10533, %v10546
  %v10548 = vcombine.low %v9639, %v9663
  %v10549 = vcombine.high %v9639, %v9663
  %v10551 = vunpack.c.l.s4 1983009808
  %v10552 = vunpack.c.0.s8 %v10551
  %v10553 = vlaneseq
  %v10554 = vshrl.u32 %v10553, 7
  %v10555 = vsub.s32 %v10552, %v10554
  %v10556 = vrot.slane %v10548, %v10555
  %v10558 = vunpack.c.l.s4 1983009808
  %v10559 = vunpack.c.0.s8 %v10558
  %v10560 = vlaneseq
  %v10561 = vshrl.u32 %v10560, 7
  %v10562 = vsub.s32 %v10559, %v10561
  %v10563 = vrot.slane %v10549, %v10562
  %v10564 = vcombine.low %v8019, %v9695
  %v10565 = vcombine.high %v8019, %v9695
  %v10567 = vunpack.c.l.s4 1983009808
  %v10568 = vunpack.c.0.s8 %v10567
  %v10569 = vlaneseq
  %v10570 = vshrl.u32 %v10569, 7
  %v10571 = vsub.s32 %v10568, %v10570
  %v10572 = vrot.slane %v10564, %v10571
  %v10574 = vunpack.c.l.s4 1983009808
  %v10575 = vunpack.c.0.s8 %v10574
  %v10576 = vlaneseq
  %v10577 = vshrl.u32 %v10576, 7
  %v10578 = vsub.s32 %v10575, %v10577
  %v10579 = vrot.slane %v10565, %v10578
  %v10580 = vcombine.low %v9683, %v9707
  %v10581 = vcombine.high %v9683, %v9707
  %v10583 = vunpack.c.l.s4 1983009808
  %v10584 = vunpack.c.0.s8 %v10583
  %v10585 = vlaneseq
  %v10586 = vshrl.u32 %v10585, 7
  %v10587 = vsub.s32 %v10584, %v10586
  %v10588 = vrot.slane %v10580, %v10587
  %v10590 = vunpack.c.l.s4 1983009808
  %v10591 = vunpack.c.0.s8 %v10590
  %v10592 = vlaneseq
  %v10593 = vshrl.u32 %v10592, 7
  %v10594 = vsub.s32 %v10591, %v10593
  %v10595 = vrot.slane %v10581, %v10594
  %v10596 = vcombine.low %v10540, %v10556
  %v10597 = vcombine.high %v10540, %v10556
  %v10599 = vunpack.c.l.s4 1934713408
  %v10600 = vunpack.c.0.s8 %v10599
  %v10601 = vlaneseq
  %v10602 = vshrl.u32 %v10601, 7
  %v10603 = vsub.s32 %v10600, %v10602
  %v10604 = vrot.slane %v10596, %v10603
  %v10606 = vunpack.c.l.s4 1934713408
  %v10607 = vunpack.c.0.s8 %v10606
  %v10608 = vlaneseq
  %v10609 = vshrl.u32 %v10608, 7
  %v10610 = vsub.s32 %v10607, %v10609
  %v10611 = vrot.slane %v10597, %v10610
  %v10612 = vcombine.low %v10547, %v10563
  %v10613 = vcombine.high %v10547, %v10563
  %v10615 = vunpack.c.l.s4 1934713408
  %v10616 = vunpack.c.0.s8 %v10615
  %v10617 = vlaneseq
  %v10618 = vshrl.u32 %v10617, 7
  %v10619 = vsub.s32 %v10616, %v10618
  %v10620 = vrot.slane %v10612, %v10619
  %v10622 = vunpack.c.l.s4 1934713408
  %v10623 = vunpack.c.0.s8 %v10622
  %v10624 = vlaneseq
  %v10625 = vshrl.u32 %v10624, 7
  %v10626 = vsub.s32 %v10623, %v10625
  %v10627 = vrot.slane %v10613, %v10626
  %v10628 = vcombine.low %v10572, %v10588
  %v10629 = vcombine.high %v10572, %v10588
  %v10631 = vunpack.c.l.s4 1934713408
  %v10632 = vunpack.c.0.s8 %v10631
  %v10633 = vlaneseq
  %v10634 = vshrl.u32 %v10633, 7
  %v10635 = vsub.s32 %v10632, %v10634
  %v10636 = vrot.slane %v10628, %v10635
  %v10638 = vunpack.c.l.s4 1934713408
  %v10639 = vunpack.c.0.s8 %v10638
  %v10640 = vlaneseq
  %v10641 = vshrl.u32 %v10640, 7
  %v10642 = vsub.s32 %v10639, %v10641
  %v10643 = vrot.slane %v10629, %v10642
  %v10644 = vcombine.low %v10579, %v10595
  %v10645 = vcombine.high %v10579, %v10595
  %v10647 = vunpack.c.l.s4 1934713408
  %v10648 = vunpack.c.0.s8 %v10647
  %v10649 = vlaneseq
  %v10650 = vshrl.u32 %v10649, 7
  %v10651 = vsub.s32 %v10648, %v10650
  %v10652 = vrot.slane %v10644, %v10651
  %v10654 = vunpack.c.l.s4 1934713408
  %v10655 = vunpack.c.0.s8 %v10654
  %v10656 = vlaneseq
  %v10657 = vshrl.u32 %v10656, 7
  %v10658 = vsub.s32 %v10655, %v10657
  %v10659 = vrot.slane %v10645, %v10658
  %v10660 = vcombine.low %v10604, %v10636
  %v10661 = vcombine.high %v10604, %v10636
  %v10662 = vcombine.low %v10611, %v10643
  %v10663 = vcombine.high %v10611, %v10643
  %v10664 = vcombine.low %v10620, %v10652
  %v10665 = vcombine.high %v10620, %v10652
  %v10666 = vcombine.low %v10627, %v10659
  %v10667 = vcombine.high %v10627, %v10659
  %v10668 = vcombine.low %v9633, %v9657
  %v10669 = vcombine.high %v9633, %v9657
  %v10671 = vunpack.c.l.s4 1983009808
  %v10672 = vunpack.c.0.s8 %v10671
  %v10673 = vlaneseq
  %v10674 = vshrl.u32 %v10673, 7
  %v10675 = vsub.s32 %v10672, %v10674
  %v10676 = vrot.slane %v10668, %v10675
  %v10678 = vunpack.c.l.s4 1983009808
  %v10679 = vunpack.c.0.s8 %v10678
  %v10680 = vlaneseq
  %v10681 = vshrl.u32 %v10680, 7
  %v10682 = vsub.s32 %v10679, %v10681
  %v10683 = vrot.slane %v10669, %v10682
  %v10684 = vcombine.low %v9645, %v9669
  %v10685 = vcombine.high %v9645, %v9669
  %v10687 = vunpack.c.l.s4 1983009808
  %v10688 = vunpack.c.0.s8 %v10687
  %v10689 = vlaneseq
  %v10690 = vshrl.u32 %v10689, 7
  %v10691 = vsub.s32 %v10688, %v10690
  %v10692 = vrot.slane %v10684, %v10691
  %v10694 = vunpack.c.l.s4 1983009808
  %v10695 = vunpack.c.0.s8 %v10694
  %v10696 = vlaneseq
  %v10697 = vshrl.u32 %v10696, 7
  %v10698 = vsub.s32 %v10695, %v10697
  %v10699 = vrot.slane %v10685, %v10698
  %v10700 = vcombine.low %v9677, %v9701
  %v10701 = vcombine.high %v9677, %v9701
  %v10703 = vunpack.c.l.s4 1983009808
  %v10704 = vunpack.c.0.s8 %v10703
  %v10705 = vlaneseq
  %v10706 = vshrl.u32 %v10705, 7
  %v10707 = vsub.s32 %v10704, %v10706
  %v10708 = vrot.slane %v10700, %v10707
  %v10710 = vunpack.c.l.s4 1983009808
  %v10711 = vunpack.c.0.s8 %v10710
  %v10712 = vlaneseq
  %v10713 = vshrl.u32 %v10712, 7
  %v10714 = vsub.s32 %v10711, %v10713
  %v10715 = vrot.slane %v10701, %v10714
  %v10716 = vcombine.low %v9689, %v9713
  %v10717 = vcombine.high %v9689, %v9713
  %v10719 = vunpack.c.l.s4 1983009808
  %v10720 = vunpack.c.0.s8 %v10719
  %v10721 = vlaneseq
  %v10722 = vshrl.u32 %v10721, 7
  %v10723 = vsub.s32 %v10720, %v10722
  %v10724 = vrot.slane %v10716, %v10723
  %v10726 = vunpack.c.l.s4 1983009808
  %v10727 = vunpack.c.0.s8 %v10726
  %v10728 = vlaneseq
  %v10729 = vshrl.u32 %v10728, 7
  %v10730 = vsub.s32 %v10727, %v10729
  %v10731 = vrot.slane %v10717, %v10730
  %v10732 = vcombine.low %v10676, %v10692
  %v10733 = vcombine.high %v10676, %v10692
  %v10735 = vunpack.c.l.s4 1934713408
  %v10736 = vunpack.c.0.s8 %v10735
  %v10737 = vlaneseq
  %v10738 = vshrl.u32 %v10737, 7
  %v10739 = vsub.s32 %v10736, %v10738
  %v10740 = vrot.slane %v10732, %v10739
  %v10742 = vunpack.c.l.s4 1934713408
  %v10743 = vunpack.c.0.s8 %v10742
  %v10744 = vlaneseq
  %v10745 = vshrl.u32 %v10744, 7
  %v10746 = vsub.s32 %v10743, %v10745
  %v10747 = vrot.slane %v10733, %v10746
  %v10748 = vcombine.low %v10683, %v10699
  %v10749 = vcombine.high %v10683, %v10699
  %v10751 = vunpack.c.l.s4 1934713408
  %v10752 = vunpack.c.0.s8 %v10751
  %v10753 = vlaneseq
  %v10754 = vshrl.u32 %v10753, 7
  %v10755 = vsub.s32 %v10752, %v10754
  %v10756 = vrot.slane %v10748, %v10755
  %v10758 = vunpack.c.l.s4 1934713408
  %v10759 = vunpack.c.0.s8 %v10758
  %v10760 = vlaneseq
  %v10761 = vshrl.u32 %v10760, 7
  %v10762 = vsub.s32 %v10759, %v10761
  %v10763 = vrot.slane %v10749, %v10762
  %v10764 = vcombine.low %v10708, %v10724
  %v10765 = vcombine.high %v10708, %v10724
  %v10767 = vunpack.c.l.s4 1934713408
  %v10768 = vunpack.c.0.s8 %v10767
  %v10769 = vlaneseq
  %v10770 = vshrl.u32 %v10769, 7
  %v10771 = vsub.s32 %v10768, %v10770
  %v10772 = vrot.slane %v10764, %v10771
  %v10774 = vunpack.c.l.s4 1934713408
  %v10775 = vunpack.c.0.s8 %v10774
  %v10776 = vlaneseq
  %v10777 = vshrl.u32 %v10776, 7
  %v10778 = vsub.s32 %v10775, %v10777
  %v10779 = vrot.slane %v10765, %v10778
  %v10780 = vcombine.low %v10715, %v10731
  %v10781 = vcombine.high %v10715, %v10731
  %v10783 = vunpack.c.l.s4 1934713408
  %v10784 = vunpack.c.0.s8 %v10783
  %v10785 = vlaneseq
  %v10786 = vshrl.u32 %v10785, 7
  %v10787 = vsub.s32 %v10784, %v10786
  %v10788 = vrot.slane %v10780, %v10787
  %v10790 = vunpack.c.l.s4 1934713408
  %v10791 = vunpack.c.0.s8 %v10790
  %v10792 = vlaneseq
  %v10793 = vshrl.u32 %v10792, 7
  %v10794 = vsub.s32 %v10791, %v10793
  %v10795 = vrot.slane %v10781, %v10794
  %v10796 = vcombine.low %v10740, %v10772
  %v10797 = vcombine.high %v10740, %v10772
  %v10798 = vcombine.low %v10747, %v10779
  %v10799 = vcombine.high %v10747, %v10779
  %v10800 = vcombine.low %v10756, %v10788
  %v10801 = vcombine.high %v10756, %v10788
  %v10802 = vcombine.low %v10763, %v10795
  %v10803 = vcombine.high %v10763, %v10795
  %v10806 = vpack.i.b16 %v9980, %v9844
  %v10808 = vshrl.u32 %v9844, 16
  %v10809 = vshrl.u32 %v9980, 16
  %v10810 = vpack.i.b16 %v10809, %v10808
  %v10814 = vpack.i.b16 %v9981, %v9845
  %v10816 = vshrl.u32 %v9845, 16
  %v10817 = vshrl.u32 %v9981, 16
  %v10818 = vpack.i.b16 %v10817, %v10816
  %v10822 = vpack.i.b16 %v9982, %v9846
  %v10824 = vshrl.u32 %v9846, 16
  %v10825 = vshrl.u32 %v9982, 16
  %v10826 = vpack.i.b16 %v10825, %v10824
  %v10830 = vpack.i.b16 %v9983, %v9847
  %v10832 = vshrl.u32 %v9847, 16
  %v10833 = vshrl.u32 %v9983, 16
  %v10834 = vpack.i.b16 %v10833, %v10832
  %v10838 = vpack.i.b16 %v9984, %v9848
  %v10840 = vshrl.u32 %v9848, 16
  %v10841 = vshrl.u32 %v9984, 16
  %v10842 = vpack.i.b16 %v10841, %v10840
  %v10846 = vpack.i.b16 %v9985, %v9849
  %v10848 = vshrl.u32 %v9849, 16
  %v10849 = vshrl.u32 %v9985, 16
  %v10850 = vpack.i.b16 %v10849, %v10848
  %v10854 = vpack.i.b16 %v9986, %v9850
  %v10856 = vshrl.u32 %v9850, 16
  %v10857 = vshrl.u32 %v9986, 16
  %v10858 = vpack.i.b16 %v10857, %v10856
  %v10862 = vpack.i.b16 %v9987, %v9851
  %v10864 = vshrl.u32 %v9851, 16
  %v10865 = vshrl.u32 %v9987, 16
  %v10866 = vpack.i.b16 %v10865, %v10864
  %v10870 = vpack.i.b16 %v10524, %v10388
  %v10872 = vshrl.u32 %v10388, 16
  %v10873 = vshrl.u32 %v10524, 16
  %v10874 = vpack.i.b16 %v10873, %v10872
  %v10878 = vpack.i.b16 %v10525, %v10389
  %v10880 = vshrl.u32 %v10389, 16
  %v10881 = vshrl.u32 %v10525, 16
  %v10882 = vpack.i.b16 %v10881, %v10880
  %v10886 = vpack.i.b16 %v10526, %v10390
  %v10888 = vshrl.u32 %v10390, 16
  %v10889 = vshrl.u32 %v10526, 16
  %v10890 = vpack.i.b16 %v10889, %v10888
  %v10894 = vpack.i.b16 %v10527, %v10391
  %v10896 = vshrl.u32 %v10391, 16
  %v10897 = vshrl.u32 %v10527, 16
  %v10898 = vpack.i.b16 %v10897, %v10896
  %v10902 = vpack.i.b16 %v10528, %v10392
  %v10904 = vshrl.u32 %v10392, 16
  %v10905 = vshrl.u32 %v10528, 16
  %v10906 = vpack.i.b16 %v10905, %v10904
  %v10910 = vpack.i.b16 %v10529, %v10393
  %v10912 = vshrl.u32 %v10393, 16
  %v10913 = vshrl.u32 %v10529, 16
  %v10914 = vpack.i.b16 %v10913, %v10912
  %v10918 = vpack.i.b16 %v10530, %v10394
  %v10920 = vshrl.u32 %v10394, 16
  %v10921 = vshrl.u32 %v10530, 16
  %v10922 = vpack.i.b16 %v10921, %v10920
  %v10926 = vpack.i.b16 %v10531, %v10395
  %v10928 = vshrl.u32 %v10395, 16
  %v10929 = vshrl.u32 %v10531, 16
  %v10930 = vpack.i.b16 %v10929, %v10928
  %v10934 = vpack.i.b16 %v10252, %v10116
  %v10936 = vshrl.u32 %v10116, 16
  %v10937 = vshrl.u32 %v10252, 16
  %v10938 = vpack.i.b16 %v10937, %v10936
  %v10942 = vpack.i.b16 %v10253, %v10117
  %v10944 = vshrl.u32 %v10117, 16
  %v10945 = vshrl.u32 %v10253, 16
  %v10946 = vpack.i.b16 %v10945, %v10944
  %v10950 = vpack.i.b16 %v10254, %v10118
  %v10952 = vshrl.u32 %v10118, 16
  %v10953 = vshrl.u32 %v10254, 16
  %v10954 = vpack.i.b16 %v10953, %v10952
  %v10958 = vpack.i.b16 %v10255, %v10119
  %v10960 = vshrl.u32 %v10119, 16
  %v10961 = vshrl.u32 %v10255, 16
  %v10962 = vpack.i.b16 %v10961, %v10960
  %v10966 = vpack.i.b16 %v10256, %v10120
  %v10968 = vshrl.u32 %v10120, 16
  %v10969 = vshrl.u32 %v10256, 16
  %v10970 = vpack.i.b16 %v10969, %v10968
  %v10974 = vpack.i.b16 %v10257, %v10121
  %v10976 = vshrl.u32 %v10121, 16
  %v10977 = vshrl.u32 %v10257, 16
  %v10978 = vpack.i.b16 %v10977, %v10976
  %v10982 = vpack.i.b16 %v10258, %v10122
  %v10984 = vshrl.u32 %v10122, 16
  %v10985 = vshrl.u32 %v10258, 16
  %v10986 = vpack.i.b16 %v10985, %v10984
  %v10990 = vpack.i.b16 %v10259, %v10123
  %v10992 = vshrl.u32 %v10123, 16
  %v10993 = vshrl.u32 %v10259, 16
  %v10994 = vpack.i.b16 %v10993, %v10992
  %v10998 = vpack.i.b16 %v10796, %v10660
  %v11000 = vshrl.u32 %v10660, 16
  %v11001 = vshrl.u32 %v10796, 16
  %v11002 = vpack.i.b16 %v11001, %v11000
  %v11006 = vpack.i.b16 %v10797, %v10661
  %v11008 = vshrl.u32 %v10661, 16
  %v11009 = vshrl.u32 %v10797, 16
  %v11010 = vpack.i.b16 %v11009, %v11008
  %v11014 = vpack.i.b16 %v10798, %v10662
  %v11016 = vshrl.u32 %v10662, 16
  %v11017 = vshrl.u32 %v10798, 16
  %v11018 = vpack.i.b16 %v11017, %v11016
  %v11022 = vpack.i.b16 %v10799, %v10663
  %v11024 = vshrl.u32 %v10663, 16
  %v11025 = vshrl.u32 %v10799, 16
  %v11026 = vpack.i.b16 %v11025, %v11024
  %v11030 = vpack.i.b16 %v10800, %v10664
  %v11032 = vshrl.u32 %v10664, 16
  %v11033 = vshrl.u32 %v10800, 16
  %v11034 = vpack.i.b16 %v11033, %v11032
  %v11038 = vpack.i.b16 %v10801, %v10665
  %v11040 = vshrl.u32 %v10665, 16
  %v11041 = vshrl.u32 %v10801, 16
  %v11042 = vpack.i.b16 %v11041, %v11040
  %v11046 = vpack.i.b16 %v10802, %v10666
  %v11048 = vshrl.u32 %v10666, 16
  %v11049 = vshrl.u32 %v10802, 16
  %v11050 = vpack.i.b16 %v11049, %v11048
  %v11054 = vpack.i.b16 %v10803, %v10667
  %v11056 = vshrl.u32 %v10667, 16
  %v11057 = vshrl.u32 %v10803, 16
  %v11058 = vpack.i.b16 %v11057, %v11056
  %11060 = vxpose.xlu0.c.b16.start [1/8] %v10806, 128
  %11061 = vxpose.xlu0.c.b16.cont [2/8] %v10934, 128
  %11062 = vxpose.xlu0.c.b16.cont [3/8] 0, 128
  %11063 = vxpose.xlu0.c.b16.cont [4/8] 0, 128
  %11064 = vxpose.xlu0.c.b16.cont [5/8] 0, 128
  %11065 = vxpose.xlu0.c.b16.cont [6/8] 0, 128
  %11066 = vxpose.xlu0.c.b16.cont [7/8] 0, 128
  %11067 = vxpose.xlu0.c.b16.end [8/8] 0, 128
  %v11068 = vpop.trf.xlu0
  %v11069 = vpop.trf.xlu0
  %v11070 = vpop.trf.xlu0
  %v11071 = vpop.trf.xlu0
  %v11072 = vpop.trf.xlu0
  %v11073 = vpop.trf.xlu0
  %v11074 = vpop.trf.xlu0
  %v11075 = vpop.trf.xlu0
  %v11077 = vsel %vm242, %v11068, 0
  %11079 = vmatprep.subr.bf16.mxu0 0
  %11080 = vmatpush1.bf16.msra.mxu0 0
  %11081 = vmatprep.subr.bf16.mxu0 0
  %11082 = vmatpush1.bf16.msra.mxu0 0
  %11083 = vmatprep.subr.bf16.mxu0 0
  %11084 = vmatpush1.bf16.msra.mxu0 0
  %11085 = vmatprep.subr.bf16.mxu0 0
  %11086 = vmatpush1.bf16.msra.mxu0 0
  %11087 = vmatprep.subr.bf16.mxu0 0
  %11088 = vmatpush1.bf16.msra.mxu0 0
  %11089 = vmatprep.subr.bf16.mxu0 0
  %11090 = vmatpush1.bf16.msra.mxu0 0
  %11091 = vmatprep.subr.bf16.mxu0 0
  %11092 = vmatpush1.bf16.msra.mxu0 %v9414
  %11093 = vmatprep.subr.bf16.mxu0 0
  %11094 = vmatpush1.bf16.msra.mxu0 %v9286
  %11095 = vmatprep.subr.bf16.mxu0 0
  %11096 = vmatpush2.bf16.msra.mxu0 0
  %11097 = vmatprep.subr.bf16.mxu0 0
  %11098 = vmatpush2.bf16.msra.mxu0 0
  %11099 = vmatprep.subr.bf16.mxu0 0
  %11100 = vmatpush2.bf16.msra.mxu0 0
  %11101 = vmatprep.subr.bf16.mxu0 0
  %11102 = vmatpush2.bf16.msra.mxu0 0
  %11103 = vmatprep.subr.bf16.mxu0 0
  %11104 = vmatpush2.bf16.msra.mxu0 0
  %11105 = vmatprep.subr.bf16.mxu0 0
  %11106 = vmatpush2.bf16.msra.mxu0 0
  %11107 = vmatprep.subr.bf16.mxu0 0
  %11108 = vmatpush2.bf16.msra.mxu0 0
  %11109 = vmatprep.subr.bf16.mxu0 0
  %11110 = vmatpush2.bf16.msra.mxu0 0
  %11111 = vmatprep.mubr.bf16.mxu0 0
  %11112 = vmatmul.mubr.bf16.gmra.mxu0 %v11077
  %v11113 = vpop.f32.mrf.mxu0
  %v11114 = vadd.f32 0.0, %v11113
  %v11115 = vpop.f32.mrf.mxu0
  %v11116 = vpop.f32.mrf.mxu0
  %v11117 = vadd.f32 0.0, %v11116
  %v11118 = vpop.f32.mrf.mxu0
  %11119 = vdwg.mxu0
  %11120 = vxpose.xlu0.c.b16.start [1/8] %v10810, 128
  %11121 = vxpose.xlu0.c.b16.cont [2/8] %v10938, 128
  %11122 = vxpose.xlu0.c.b16.cont [3/8] 0, 128
  %11123 = vxpose.xlu0.c.b16.cont [4/8] 0, 128
  %11124 = vxpose.xlu0.c.b16.cont [5/8] 0, 128
  %11125 = vxpose.xlu0.c.b16.cont [6/8] 0, 128
  %11126 = vxpose.xlu0.c.b16.cont [7/8] 0, 128
  %11127 = vxpose.xlu0.c.b16.end [8/8] 0, 128
  %v11128 = vpop.trf.xlu0
  %v11129 = vpop.trf.xlu0
  %v11130 = vpop.trf.xlu0
  %v11131 = vpop.trf.xlu0
  %v11132 = vpop.trf.xlu0
  %v11133 = vpop.trf.xlu0
  %v11134 = vpop.trf.xlu0
  %v11135 = vpop.trf.xlu0
  %v11137 = vsel %vm242, %v11128, 0
  %11139 = vmatprep.subr.bf16.mxu0 0
  %11140 = vmatpush1.bf16.msra.mxu0 0
  %11141 = vmatprep.subr.bf16.mxu0 0
  %11142 = vmatpush1.bf16.msra.mxu0 0
  %11143 = vmatprep.subr.bf16.mxu0 0
  %11144 = vmatpush1.bf16.msra.mxu0 0
  %11145 = vmatprep.subr.bf16.mxu0 0
  %11146 = vmatpush1.bf16.msra.mxu0 0
  %11147 = vmatprep.subr.bf16.mxu0 0
  %11148 = vmatpush1.bf16.msra.mxu0 0
  %11149 = vmatprep.subr.bf16.mxu0 0
  %11150 = vmatpush1.bf16.msra.mxu0 0
  %11151 = vmatprep.subr.bf16.mxu0 0
  %11152 = vmatpush1.bf16.msra.mxu0 %v9418
  %11153 = vmatprep.subr.bf16.mxu0 0
  %11154 = vmatpush1.bf16.msra.mxu0 %v9290
  %11155 = vmatprep.subr.bf16.mxu0 0
  %11156 = vmatpush2.bf16.msra.mxu0 0
  %11157 = vmatprep.subr.bf16.mxu0 0
  %11158 = vmatpush2.bf16.msra.mxu0 0
  %11159 = vmatprep.subr.bf16.mxu0 0
  %11160 = vmatpush2.bf16.msra.mxu0 0
  %11161 = vmatprep.subr.bf16.mxu0 0
  %11162 = vmatpush2.bf16.msra.mxu0 0
  %11163 = vmatprep.subr.bf16.mxu0 0
  %11164 = vmatpush2.bf16.msra.mxu0 0
  %11165 = vmatprep.subr.bf16.mxu0 0
  %11166 = vmatpush2.bf16.msra.mxu0 0
  %11167 = vmatprep.subr.bf16.mxu0 0
  %11168 = vmatpush2.bf16.msra.mxu0 0
  %11169 = vmatprep.subr.bf16.mxu0 0
  %11170 = vmatpush2.bf16.msra.mxu0 0
  %11171 = vmatprep.mubr.bf16.mxu0 0
  %11172 = vmatmul.mubr.bf16.gmra.mxu0 %v11137
  %v11173 = vpop.f32.mrf.mxu0
  %v11174 = vadd.f32 0.0, %v11173
  %v11175 = vpop.f32.mrf.mxu0
  %v11176 = vpop.f32.mrf.mxu0
  %v11177 = vadd.f32 0.0, %v11176
  %v11178 = vpop.f32.mrf.mxu0
  %11179 = vdwg.mxu0
  %11180 = vxpose.xlu0.c.b16.start [1/8] %v10814, 128
  %11181 = vxpose.xlu0.c.b16.cont [2/8] %v10942, 128
  %11182 = vxpose.xlu0.c.b16.cont [3/8] 0, 128
  %11183 = vxpose.xlu0.c.b16.cont [4/8] 0, 128
  %11184 = vxpose.xlu0.c.b16.cont [5/8] 0, 128
  %11185 = vxpose.xlu0.c.b16.cont [6/8] 0, 128
  %11186 = vxpose.xlu0.c.b16.cont [7/8] 0, 128
  %11187 = vxpose.xlu0.c.b16.end [8/8] 0, 128
  %v11188 = vpop.trf.xlu0
  %v11189 = vpop.trf.xlu0
  %v11190 = vpop.trf.xlu0
  %v11191 = vpop.trf.xlu0
  %v11192 = vpop.trf.xlu0
  %v11193 = vpop.trf.xlu0
  %v11194 = vpop.trf.xlu0
  %v11195 = vpop.trf.xlu0
  %v11197 = vsel %vm242, %v11188, 0
  %11199 = vmatprep.subr.bf16.mxu0 0
  %11200 = vmatpush1.bf16.msra.mxu0 0
  %11201 = vmatprep.subr.bf16.mxu0 0
  %11202 = vmatpush1.bf16.msra.mxu0 0
  %11203 = vmatprep.subr.bf16.mxu0 0
  %11204 = vmatpush1.bf16.msra.mxu0 0
  %11205 = vmatprep.subr.bf16.mxu0 0
  %11206 = vmatpush1.bf16.msra.mxu0 0
  %11207 = vmatprep.subr.bf16.mxu0 0
  %11208 = vmatpush1.bf16.msra.mxu0 0
  %11209 = vmatprep.subr.bf16.mxu0 0
  %11210 = vmatpush1.bf16.msra.mxu0 0
  %11211 = vmatprep.subr.bf16.mxu0 0
  %11212 = vmatpush1.bf16.msra.mxu0 %v9422
  %11213 = vmatprep.subr.bf16.mxu0 0
  %11214 = vmatpush1.bf16.msra.mxu0 %v9294
  %11215 = vmatprep.subr.bf16.mxu0 0
  %11216 = vmatpush2.bf16.msra.mxu0 0
  %11217 = vmatprep.subr.bf16.mxu0 0
  %11218 = vmatpush2.bf16.msra.mxu0 0
  %11219 = vmatprep.subr.bf16.mxu0 0
  %11220 = vmatpush2.bf16.msra.mxu0 0
  %11221 = vmatprep.subr.bf16.mxu0 0
  %11222 = vmatpush2.bf16.msra.mxu0 0
  %11223 = vmatprep.subr.bf16.mxu0 0
  %11224 = vmatpush2.bf16.msra.mxu0 0
  %11225 = vmatprep.subr.bf16.mxu0 0
  %11226 = vmatpush2.bf16.msra.mxu0 0
  %11227 = vmatprep.subr.bf16.mxu0 0
  %11228 = vmatpush2.bf16.msra.mxu0 0
  %11229 = vmatprep.subr.bf16.mxu0 0
  %11230 = vmatpush2.bf16.msra.mxu0 0
  %11231 = vmatprep.mubr.bf16.mxu0 0
  %11232 = vmatmul.mubr.bf16.gmra.mxu0 %v11197
  %v11233 = vpop.f32.mrf.mxu0
  %v11234 = vadd.f32 0.0, %v11233
  %v11235 = vpop.f32.mrf.mxu0
  %v11236 = vpop.f32.mrf.mxu0
  %v11237 = vadd.f32 0.0, %v11236
  %v11238 = vpop.f32.mrf.mxu0
  %11239 = vdwg.mxu0
  %11240 = vxpose.xlu0.c.b16.start [1/8] %v10818, 128
  %11241 = vxpose.xlu0.c.b16.cont [2/8] %v10946, 128
  %11242 = vxpose.xlu0.c.b16.cont [3/8] 0, 128
  %11243 = vxpose.xlu0.c.b16.cont [4/8] 0, 128
  %11244 = vxpose.xlu0.c.b16.cont [5/8] 0, 128
  %11245 = vxpose.xlu0.c.b16.cont [6/8] 0, 128
  %11246 = vxpose.xlu0.c.b16.cont [7/8] 0, 128
  %11247 = vxpose.xlu0.c.b16.end [8/8] 0, 128
  %v11248 = vpop.trf.xlu0
  %v11249 = vpop.trf.xlu0
  %v11250 = vpop.trf.xlu0
  %v11251 = vpop.trf.xlu0
  %v11252 = vpop.trf.xlu0
  %v11253 = vpop.trf.xlu0
  %v11254 = vpop.trf.xlu0
  %v11255 = vpop.trf.xlu0
  %v11257 = vsel %vm242, %v11248, 0
  %11259 = vmatprep.subr.bf16.mxu0 0
  %11260 = vmatpush1.bf16.msra.mxu0 0
  %11261 = vmatprep.subr.bf16.mxu0 0
  %11262 = vmatpush1.bf16.msra.mxu0 0
  %11263 = vmatprep.subr.bf16.mxu0 0
  %11264 = vmatpush1.bf16.msra.mxu0 0
  %11265 = vmatprep.subr.bf16.mxu0 0
  %11266 = vmatpush1.bf16.msra.mxu0 0
  %11267 = vmatprep.subr.bf16.mxu0 0
  %11268 = vmatpush1.bf16.msra.mxu0 0
  %11269 = vmatprep.subr.bf16.mxu0 0
  %11270 = vmatpush1.bf16.msra.mxu0 0
  %11271 = vmatprep.subr.bf16.mxu0 0
  %11272 = vmatpush1.bf16.msra.mxu0 %v9426
  %11273 = vmatprep.subr.bf16.mxu0 0
  %11274 = vmatpush1.bf16.msra.mxu0 %v9298
  %11275 = vmatprep.subr.bf16.mxu0 0
  %11276 = vmatpush2.bf16.msra.mxu0 0
  %11277 = vmatprep.subr.bf16.mxu0 0
  %11278 = vmatpush2.bf16.msra.mxu0 0
  %11279 = vmatprep.subr.bf16.mxu0 0
  %11280 = vmatpush2.bf16.msra.mxu0 0
  %11281 = vmatprep.subr.bf16.mxu0 0
  %11282 = vmatpush2.bf16.msra.mxu0 0
  %11283 = vmatprep.subr.bf16.mxu0 0
  %11284 = vmatpush2.bf16.msra.mxu0 0
  %11285 = vmatprep.subr.bf16.mxu0 0
  %11286 = vmatpush2.bf16.msra.mxu0 0
  %11287 = vmatprep.subr.bf16.mxu0 0
  %11288 = vmatpush2.bf16.msra.mxu0 0
  %11289 = vmatprep.subr.bf16.mxu0 0
  %11290 = vmatpush2.bf16.msra.mxu0 0
  %11291 = vmatprep.mubr.bf16.mxu0 0
  %11292 = vmatmul.mubr.bf16.gmra.mxu0 %v11257
  %v11293 = vpop.f32.mrf.mxu0
  %v11294 = vadd.f32 0.0, %v11293
  %v11295 = vpop.f32.mrf.mxu0
  %v11296 = vpop.f32.mrf.mxu0
  %v11297 = vadd.f32 0.0, %v11296
  %v11298 = vpop.f32.mrf.mxu0
  %11299 = vdwg.mxu0
  %11300 = vxpose.xlu0.c.b16.start [1/8] %v10822, 128
  %11301 = vxpose.xlu0.c.b16.cont [2/8] %v10950, 128
  %11302 = vxpose.xlu0.c.b16.cont [3/8] 0, 128
  %11303 = vxpose.xlu0.c.b16.cont [4/8] 0, 128
  %11304 = vxpose.xlu0.c.b16.cont [5/8] 0, 128
  %11305 = vxpose.xlu0.c.b16.cont [6/8] 0, 128
  %11306 = vxpose.xlu0.c.b16.cont [7/8] 0, 128
  %11307 = vxpose.xlu0.c.b16.end [8/8] 0, 128
  %v11308 = vpop.trf.xlu0
  %v11309 = vpop.trf.xlu0
  %v11310 = vpop.trf.xlu0
  %v11311 = vpop.trf.xlu0
  %v11312 = vpop.trf.xlu0
  %v11313 = vpop.trf.xlu0
  %v11314 = vpop.trf.xlu0
  %v11315 = vpop.trf.xlu0
  %v11317 = vsel %vm242, %v11308, 0
  %11319 = vmatprep.subr.bf16.mxu0 0
  %11320 = vmatpush1.bf16.msra.mxu0 0
  %11321 = vmatprep.subr.bf16.mxu0 0
  %11322 = vmatpush1.bf16.msra.mxu0 0
  %11323 = vmatprep.subr.bf16.mxu0 0
  %11324 = vmatpush1.bf16.msra.mxu0 0
  %11325 = vmatprep.subr.bf16.mxu0 0
  %11326 = vmatpush1.bf16.msra.mxu0 0
  %11327 = vmatprep.subr.bf16.mxu0 0
  %11328 = vmatpush1.bf16.msra.mxu0 0
  %11329 = vmatprep.subr.bf16.mxu0 0
  %11330 = vmatpush1.bf16.msra.mxu0 0
  %11331 = vmatprep.subr.bf16.mxu0 0
  %11332 = vmatpush1.bf16.msra.mxu0 %v9430
  %11333 = vmatprep.subr.bf16.mxu0 0
  %11334 = vmatpush1.bf16.msra.mxu0 %v9302
  %11335 = vmatprep.subr.bf16.mxu0 0
  %11336 = vmatpush2.bf16.msra.mxu0 0
  %11337 = vmatprep.subr.bf16.mxu0 0
  %11338 = vmatpush2.bf16.msra.mxu0 0
  %11339 = vmatprep.subr.bf16.mxu0 0
  %11340 = vmatpush2.bf16.msra.mxu0 0
  %11341 = vmatprep.subr.bf16.mxu0 0
  %11342 = vmatpush2.bf16.msra.mxu0 0
  %11343 = vmatprep.subr.bf16.mxu0 0
  %11344 = vmatpush2.bf16.msra.mxu0 0
  %11345 = vmatprep.subr.bf16.mxu0 0
  %11346 = vmatpush2.bf16.msra.mxu0 0
  %11347 = vmatprep.subr.bf16.mxu0 0
  %11348 = vmatpush2.bf16.msra.mxu0 0
  %11349 = vmatprep.subr.bf16.mxu0 0
  %11350 = vmatpush2.bf16.msra.mxu0 0
  %11351 = vmatprep.mubr.bf16.mxu0 0
  %11352 = vmatmul.mubr.bf16.gmra.mxu0 %v11317
  %v11353 = vpop.f32.mrf.mxu0
  %v11354 = vadd.f32 0.0, %v11353
  %v11355 = vpop.f32.mrf.mxu0
  %v11356 = vpop.f32.mrf.mxu0
  %v11357 = vadd.f32 0.0, %v11356
  %v11358 = vpop.f32.mrf.mxu0
  %11359 = vdwg.mxu0
  %11360 = vxpose.xlu0.c.b16.start [1/8] %v10826, 128
  %11361 = vxpose.xlu0.c.b16.cont [2/8] %v10954, 128
  %11362 = vxpose.xlu0.c.b16.cont [3/8] 0, 128
  %11363 = vxpose.xlu0.c.b16.cont [4/8] 0, 128
  %11364 = vxpose.xlu0.c.b16.cont [5/8] 0, 128
  %11365 = vxpose.xlu0.c.b16.cont [6/8] 0, 128
  %11366 = vxpose.xlu0.c.b16.cont [7/8] 0, 128
  %11367 = vxpose.xlu0.c.b16.end [8/8] 0, 128
  %v11368 = vpop.trf.xlu0
  %v11369 = vpop.trf.xlu0
  %v11370 = vpop.trf.xlu0
  %v11371 = vpop.trf.xlu0
  %v11372 = vpop.trf.xlu0
  %v11373 = vpop.trf.xlu0
  %v11374 = vpop.trf.xlu0
  %v11375 = vpop.trf.xlu0
  %v11377 = vsel %vm242, %v11368, 0
  %11379 = vmatprep.subr.bf16.mxu0 0
  %11380 = vmatpush1.bf16.msra.mxu0 0
  %11381 = vmatprep.subr.bf16.mxu0 0
  %11382 = vmatpush1.bf16.msra.mxu0 0
  %11383 = vmatprep.subr.bf16.mxu0 0
  %11384 = vmatpush1.bf16.msra.mxu0 0
  %11385 = vmatprep.subr.bf16.mxu0 0
  %11386 = vmatpush1.bf16.msra.mxu0 0
  %11387 = vmatprep.subr.bf16.mxu0 0
  %11388 = vmatpush1.bf16.msra.mxu0 0
  %11389 = vmatprep.subr.bf16.mxu0 0
  %11390 = vmatpush1.bf16.msra.mxu0 0
  %11391 = vmatprep.subr.bf16.mxu0 0
  %11392 = vmatpush1.bf16.msra.mxu0 %v9434
  %11393 = vmatprep.subr.bf16.mxu0 0
  %11394 = vmatpush1.bf16.msra.mxu0 %v9306
  %11395 = vmatprep.subr.bf16.mxu0 0
  %11396 = vmatpush2.bf16.msra.mxu0 0
  %11397 = vmatprep.subr.bf16.mxu0 0
  %11398 = vmatpush2.bf16.msra.mxu0 0
  %11399 = vmatprep.subr.bf16.mxu0 0
  %11400 = vmatpush2.bf16.msra.mxu0 0
  %11401 = vmatprep.subr.bf16.mxu0 0
  %11402 = vmatpush2.bf16.msra.mxu0 0
  %11403 = vmatprep.subr.bf16.mxu0 0
  %11404 = vmatpush2.bf16.msra.mxu0 0
  %11405 = vmatprep.subr.bf16.mxu0 0
  %11406 = vmatpush2.bf16.msra.mxu0 0
  %11407 = vmatprep.subr.bf16.mxu0 0
  %11408 = vmatpush2.bf16.msra.mxu0 0
  %11409 = vmatprep.subr.bf16.mxu0 0
  %11410 = vmatpush2.bf16.msra.mxu0 0
  %11411 = vmatprep.mubr.bf16.mxu0 0
  %11412 = vmatmul.mubr.bf16.gmra.mxu0 %v11377
  %v11413 = vpop.f32.mrf.mxu0
  %v11414 = vadd.f32 0.0, %v11413
  %v11415 = vpop.f32.mrf.mxu0
  %v11416 = vpop.f32.mrf.mxu0
  %v11417 = vadd.f32 0.0, %v11416
  %v11418 = vpop.f32.mrf.mxu0
  %11419 = vdwg.mxu0
  %11420 = vxpose.xlu0.c.b16.start [1/8] %v10830, 128
  %11421 = vxpose.xlu0.c.b16.cont [2/8] %v10958, 128
  %11422 = vxpose.xlu0.c.b16.cont [3/8] 0, 128
  %11423 = vxpose.xlu0.c.b16.cont [4/8] 0, 128
  %11424 = vxpose.xlu0.c.b16.cont [5/8] 0, 128
  %11425 = vxpose.xlu0.c.b16.cont [6/8] 0, 128
  %11426 = vxpose.xlu0.c.b16.cont [7/8] 0, 128
  %11427 = vxpose.xlu0.c.b16.end [8/8] 0, 128
  %v11428 = vpop.trf.xlu0
  %v11429 = vpop.trf.xlu0
  %v11430 = vpop.trf.xlu0
  %v11431 = vpop.trf.xlu0
  %v11432 = vpop.trf.xlu0
  %v11433 = vpop.trf.xlu0
  %v11434 = vpop.trf.xlu0
  %v11435 = vpop.trf.xlu0
  %v11437 = vsel %vm242, %v11428, 0
  %11439 = vmatprep.subr.bf16.mxu0 0
  %11440 = vmatpush1.bf16.msra.mxu0 0
  %11441 = vmatprep.subr.bf16.mxu0 0
  %11442 = vmatpush1.bf16.msra.mxu0 0
  %11443 = vmatprep.subr.bf16.mxu0 0
  %11444 = vmatpush1.bf16.msra.mxu0 0
  %11445 = vmatprep.subr.bf16.mxu0 0
  %11446 = vmatpush1.bf16.msra.mxu0 0
  %11447 = vmatprep.subr.bf16.mxu0 0
  %11448 = vmatpush1.bf16.msra.mxu0 0
  %11449 = vmatprep.subr.bf16.mxu0 0
  %11450 = vmatpush1.bf16.msra.mxu0 0
  %11451 = vmatprep.subr.bf16.mxu0 0
  %11452 = vmatpush1.bf16.msra.mxu0 %v9438
  %11453 = vmatprep.subr.bf16.mxu0 0
  %11454 = vmatpush1.bf16.msra.mxu0 %v9310
  %11455 = vmatprep.subr.bf16.mxu0 0
  %11456 = vmatpush2.bf16.msra.mxu0 0
  %11457 = vmatprep.subr.bf16.mxu0 0
  %11458 = vmatpush2.bf16.msra.mxu0 0
  %11459 = vmatprep.subr.bf16.mxu0 0
  %11460 = vmatpush2.bf16.msra.mxu0 0
  %11461 = vmatprep.subr.bf16.mxu0 0
  %11462 = vmatpush2.bf16.msra.mxu0 0
  %11463 = vmatprep.subr.bf16.mxu0 0
  %11464 = vmatpush2.bf16.msra.mxu0 0
  %11465 = vmatprep.subr.bf16.mxu0 0
  %11466 = vmatpush2.bf16.msra.mxu0 0
  %11467 = vmatprep.subr.bf16.mxu0 0
  %11468 = vmatpush2.bf16.msra.mxu0 0
  %11469 = vmatprep.subr.bf16.mxu0 0
  %11470 = vmatpush2.bf16.msra.mxu0 0
  %11471 = vmatprep.mubr.bf16.mxu0 0
  %11472 = vmatmul.mubr.bf16.gmra.mxu0 %v11437
  %v11473 = vpop.f32.mrf.mxu0
  %v11474 = vadd.f32 0.0, %v11473
  %v11475 = vpop.f32.mrf.mxu0
  %v11476 = vpop.f32.mrf.mxu0
  %v11477 = vadd.f32 0.0, %v11476
  %v11478 = vpop.f32.mrf.mxu0
  %11479 = vdwg.mxu0
  %11480 = vxpose.xlu0.c.b16.start [1/8] %v10834, 128
  %11481 = vxpose.xlu0.c.b16.cont [2/8] %v10962, 128
  %11482 = vxpose.xlu0.c.b16.cont [3/8] 0, 128
  %11483 = vxpose.xlu0.c.b16.cont [4/8] 0, 128
  %11484 = vxpose.xlu0.c.b16.cont [5/8] 0, 128
  %11485 = vxpose.xlu0.c.b16.cont [6/8] 0, 128
  %11486 = vxpose.xlu0.c.b16.cont [7/8] 0, 128
  %11487 = vxpose.xlu0.c.b16.end [8/8] 0, 128
  %v11488 = vpop.trf.xlu0
  %v11489 = vpop.trf.xlu0
  %v11490 = vpop.trf.xlu0
  %v11491 = vpop.trf.xlu0
  %v11492 = vpop.trf.xlu0
  %v11493 = vpop.trf.xlu0
  %v11494 = vpop.trf.xlu0
  %v11495 = vpop.trf.xlu0
  %v11497 = vsel %vm242, %v11488, 0
  %11499 = vmatprep.subr.bf16.mxu0 0
  %11500 = vmatpush1.bf16.msra.mxu0 0
  %11501 = vmatprep.subr.bf16.mxu0 0
  %11502 = vmatpush1.bf16.msra.mxu0 0
  %11503 = vmatprep.subr.bf16.mxu0 0
  %11504 = vmatpush1.bf16.msra.mxu0 0
  %11505 = vmatprep.subr.bf16.mxu0 0
  %11506 = vmatpush1.bf16.msra.mxu0 0
  %11507 = vmatprep.subr.bf16.mxu0 0
  %11508 = vmatpush1.bf16.msra.mxu0 0
  %11509 = vmatprep.subr.bf16.mxu0 0
  %11510 = vmatpush1.bf16.msra.mxu0 0
  %11511 = vmatprep.subr.bf16.mxu0 0
  %11512 = vmatpush1.bf16.msra.mxu0 %v9442
  %11513 = vmatprep.subr.bf16.mxu0 0
  %11514 = vmatpush1.bf16.msra.mxu0 %v9314
  %11515 = vmatprep.subr.bf16.mxu0 0
  %11516 = vmatpush2.bf16.msra.mxu0 0
  %11517 = vmatprep.subr.bf16.mxu0 0
  %11518 = vmatpush2.bf16.msra.mxu0 0
  %11519 = vmatprep.subr.bf16.mxu0 0
  %11520 = vmatpush2.bf16.msra.mxu0 0
  %11521 = vmatprep.subr.bf16.mxu0 0
  %11522 = vmatpush2.bf16.msra.mxu0 0
  %11523 = vmatprep.subr.bf16.mxu0 0
  %11524 = vmatpush2.bf16.msra.mxu0 0
  %11525 = vmatprep.subr.bf16.mxu0 0
  %11526 = vmatpush2.bf16.msra.mxu0 0
  %11527 = vmatprep.subr.bf16.mxu0 0
  %11528 = vmatpush2.bf16.msra.mxu0 0
  %11529 = vmatprep.subr.bf16.mxu0 0
  %11530 = vmatpush2.bf16.msra.mxu0 0
  %11531 = vmatprep.mubr.bf16.mxu0 0
  %11532 = vmatmul.mubr.bf16.gmra.mxu0 %v11497
  %v11533 = vpop.f32.mrf.mxu0
  %v11534 = vadd.f32 0.0, %v11533
  %v11535 = vpop.f32.mrf.mxu0
  %v11536 = vpop.f32.mrf.mxu0
  %v11537 = vadd.f32 0.0, %v11536
  %v11538 = vpop.f32.mrf.mxu0
  %11539 = vdwg.mxu0
  %11540 = vxpose.xlu0.c.b16.start [1/8] %v10838, 128
  %11541 = vxpose.xlu0.c.b16.cont [2/8] %v10966, 128
  %11542 = vxpose.xlu0.c.b16.cont [3/8] 0, 128
  %11543 = vxpose.xlu0.c.b16.cont [4/8] 0, 128
  %11544 = vxpose.xlu0.c.b16.cont [5/8] 0, 128
  %11545 = vxpose.xlu0.c.b16.cont [6/8] 0, 128
  %11546 = vxpose.xlu0.c.b16.cont [7/8] 0, 128
  %11547 = vxpose.xlu0.c.b16.end [8/8] 0, 128
  %v11548 = vpop.trf.xlu0
  %v11549 = vpop.trf.xlu0
  %v11550 = vpop.trf.xlu0
  %v11551 = vpop.trf.xlu0
  %v11552 = vpop.trf.xlu0
  %v11553 = vpop.trf.xlu0
  %v11554 = vpop.trf.xlu0
  %v11555 = vpop.trf.xlu0
  %v11557 = vsel %vm242, %v11548, 0
  %11559 = vmatprep.subr.bf16.mxu0 0
  %11560 = vmatpush1.bf16.msra.mxu0 0
  %11561 = vmatprep.subr.bf16.mxu0 0
  %11562 = vmatpush1.bf16.msra.mxu0 0
  %11563 = vmatprep.subr.bf16.mxu0 0
  %11564 = vmatpush1.bf16.msra.mxu0 0
  %11565 = vmatprep.subr.bf16.mxu0 0
  %11566 = vmatpush1.bf16.msra.mxu0 0
  %11567 = vmatprep.subr.bf16.mxu0 0
  %11568 = vmatpush1.bf16.msra.mxu0 0
  %11569 = vmatprep.subr.bf16.mxu0 0
  %11570 = vmatpush1.bf16.msra.mxu0 0
  %11571 = vmatprep.subr.bf16.mxu0 0
  %11572 = vmatpush1.bf16.msra.mxu0 %v9446
  %11573 = vmatprep.subr.bf16.mxu0 0
  %11574 = vmatpush1.bf16.msra.mxu0 %v9318
  %11575 = vmatprep.subr.bf16.mxu0 0
  %11576 = vmatpush2.bf16.msra.mxu0 0
  %11577 = vmatprep.subr.bf16.mxu0 0
  %11578 = vmatpush2.bf16.msra.mxu0 0
  %11579 = vmatprep.subr.bf16.mxu0 0
  %11580 = vmatpush2.bf16.msra.mxu0 0
  %11581 = vmatprep.subr.bf16.mxu0 0
  %11582 = vmatpush2.bf16.msra.mxu0 0
  %11583 = vmatprep.subr.bf16.mxu0 0
  %11584 = vmatpush2.bf16.msra.mxu0 0
  %11585 = vmatprep.subr.bf16.mxu0 0
  %11586 = vmatpush2.bf16.msra.mxu0 0
  %11587 = vmatprep.subr.bf16.mxu0 0
  %11588 = vmatpush2.bf16.msra.mxu0 0
  %11589 = vmatprep.subr.bf16.mxu0 0
  %11590 = vmatpush2.bf16.msra.mxu0 0
  %11591 = vmatprep.mubr.bf16.mxu0 0
  %11592 = vmatmul.mubr.bf16.gmra.mxu0 %v11557
  %v11593 = vpop.f32.mrf.mxu0
  %v11594 = vadd.f32 0.0, %v11593
  %v11595 = vpop.f32.mrf.mxu0
  %v11596 = vpop.f32.mrf.mxu0
  %v11597 = vadd.f32 0.0, %v11596
  %v11598 = vpop.f32.mrf.mxu0
  %11599 = vdwg.mxu0
  %11600 = vxpose.xlu0.c.b16.start [1/8] %v10842, 128
  %11601 = vxpose.xlu0.c.b16.cont [2/8] %v10970, 128
  %11602 = vxpose.xlu0.c.b16.cont [3/8] 0, 128
  %11603 = vxpose.xlu0.c.b16.cont [4/8] 0, 128
  %11604 = vxpose.xlu0.c.b16.cont [5/8] 0, 128
  %11605 = vxpose.xlu0.c.b16.cont [6/8] 0, 128
  %11606 = vxpose.xlu0.c.b16.cont [7/8] 0, 128
  %11607 = vxpose.xlu0.c.b16.end [8/8] 0, 128
  %v11608 = vpop.trf.xlu0
  %v11609 = vpop.trf.xlu0
  %v11610 = vpop.trf.xlu0
  %v11611 = vpop.trf.xlu0
  %v11612 = vpop.trf.xlu0
  %v11613 = vpop.trf.xlu0
  %v11614 = vpop.trf.xlu0
  %v11615 = vpop.trf.xlu0
  %v11617 = vsel %vm242, %v11608, 0
  %11619 = vmatprep.subr.bf16.mxu0 0
  %11620 = vmatpush1.bf16.msra.mxu0 0
  %11621 = vmatprep.subr.bf16.mxu0 0
  %11622 = vmatpush1.bf16.msra.mxu0 0
  %11623 = vmatprep.subr.bf16.mxu0 0
  %11624 = vmatpush1.bf16.msra.mxu0 0
  %11625 = vmatprep.subr.bf16.mxu0 0
  %11626 = vmatpush1.bf16.msra.mxu0 0
  %11627 = vmatprep.subr.bf16.mxu0 0
  %11628 = vmatpush1.bf16.msra.mxu0 0
  %11629 = vmatprep.subr.bf16.mxu0 0
  %11630 = vmatpush1.bf16.msra.mxu0 0
  %11631 = vmatprep.subr.bf16.mxu0 0
  %11632 = vmatpush1.bf16.msra.mxu0 %v9450
  %11633 = vmatprep.subr.bf16.mxu0 0
  %11634 = vmatpush1.bf16.msra.mxu0 %v9322
  %11635 = vmatprep.subr.bf16.mxu0 0
  %11636 = vmatpush2.bf16.msra.mxu0 0
  %11637 = vmatprep.subr.bf16.mxu0 0
  %11638 = vmatpush2.bf16.msra.mxu0 0
  %11639 = vmatprep.subr.bf16.mxu0 0
  %11640 = vmatpush2.bf16.msra.mxu0 0
  %11641 = vmatprep.subr.bf16.mxu0 0
  %11642 = vmatpush2.bf16.msra.mxu0 0
  %11643 = vmatprep.subr.bf16.mxu0 0
  %11644 = vmatpush2.bf16.msra.mxu0 0
  %11645 = vmatprep.subr.bf16.mxu0 0
  %11646 = vmatpush2.bf16.msra.mxu0 0
  %11647 = vmatprep.subr.bf16.mxu0 0
  %11648 = vmatpush2.bf16.msra.mxu0 0
  %11649 = vmatprep.subr.bf16.mxu0 0
  %11650 = vmatpush2.bf16.msra.mxu0 0
  %11651 = vmatprep.mubr.bf16.mxu0 0
  %11652 = vmatmul.mubr.bf16.gmra.mxu0 %v11617
  %v11653 = vpop.f32.mrf.mxu0
  %v11654 = vadd.f32 0.0, %v11653
  %v11655 = vpop.f32.mrf.mxu0
  %v11656 = vpop.f32.mrf.mxu0
  %v11657 = vadd.f32 0.0, %v11656
  %v11658 = vpop.f32.mrf.mxu0
  %11659 = vdwg.mxu0
  %11660 = vxpose.xlu0.c.b16.start [1/8] %v10846, 128
  %11661 = vxpose.xlu0.c.b16.cont [2/8] %v10974, 128
  %11662 = vxpose.xlu0.c.b16.cont [3/8] 0, 128
  %11663 = vxpose.xlu0.c.b16.cont [4/8] 0, 128
  %11664 = vxpose.xlu0.c.b16.cont [5/8] 0, 128
  %11665 = vxpose.xlu0.c.b16.cont [6/8] 0, 128
  %11666 = vxpose.xlu0.c.b16.cont [7/8] 0, 128
  %11667 = vxpose.xlu0.c.b16.end [8/8] 0, 128
  %v11668 = vpop.trf.xlu0
  %v11669 = vpop.trf.xlu0
  %v11670 = vpop.trf.xlu0
  %v11671 = vpop.trf.xlu0
  %v11672 = vpop.trf.xlu0
  %v11673 = vpop.trf.xlu0
  %v11674 = vpop.trf.xlu0
  %v11675 = vpop.trf.xlu0
  %v11677 = vsel %vm242, %v11668, 0
  %11679 = vmatprep.subr.bf16.mxu0 0
  %11680 = vmatpush1.bf16.msra.mxu0 0
  %11681 = vmatprep.subr.bf16.mxu0 0
  %11682 = vmatpush1.bf16.msra.mxu0 0
  %11683 = vmatprep.subr.bf16.mxu0 0
  %11684 = vmatpush1.bf16.msra.mxu0 0
  %11685 = vmatprep.subr.bf16.mxu0 0
  %11686 = vmatpush1.bf16.msra.mxu0 0
  %11687 = vmatprep.subr.bf16.mxu0 0
  %11688 = vmatpush1.bf16.msra.mxu0 0
  %11689 = vmatprep.subr.bf16.mxu0 0
  %11690 = vmatpush1.bf16.msra.mxu0 0
  %11691 = vmatprep.subr.bf16.mxu0 0
  %11692 = vmatpush1.bf16.msra.mxu0 %v9454
  %11693 = vmatprep.subr.bf16.mxu0 0
  %11694 = vmatpush1.bf16.msra.mxu0 %v9326
  %11695 = vmatprep.subr.bf16.mxu0 0
  %11696 = vmatpush2.bf16.msra.mxu0 0
  %11697 = vmatprep.subr.bf16.mxu0 0
  %11698 = vmatpush2.bf16.msra.mxu0 0
  %11699 = vmatprep.subr.bf16.mxu0 0
  %11700 = vmatpush2.bf16.msra.mxu0 0
  %11701 = vmatprep.subr.bf16.mxu0 0
  %11702 = vmatpush2.bf16.msra.mxu0 0
  %11703 = vmatprep.subr.bf16.mxu0 0
  %11704 = vmatpush2.bf16.msra.mxu0 0
  %11705 = vmatprep.subr.bf16.mxu0 0
  %11706 = vmatpush2.bf16.msra.mxu0 0
  %11707 = vmatprep.subr.bf16.mxu0 0
  %11708 = vmatpush2.bf16.msra.mxu0 0
  %11709 = vmatprep.subr.bf16.mxu0 0
  %11710 = vmatpush2.bf16.msra.mxu0 0
  %11711 = vmatprep.mubr.bf16.mxu0 0
  %11712 = vmatmul.mubr.bf16.gmra.mxu0 %v11677
  %v11713 = vpop.f32.mrf.mxu0
  %v11714 = vadd.f32 0.0, %v11713
  %v11715 = vpop.f32.mrf.mxu0
  %v11716 = vpop.f32.mrf.mxu0
  %v11717 = vadd.f32 0.0, %v11716
  %v11718 = vpop.f32.mrf.mxu0
  %11719 = vdwg.mxu0
  %11720 = vxpose.xlu0.c.b16.start [1/8] %v10850, 128
  %11721 = vxpose.xlu0.c.b16.cont [2/8] %v10978, 128
  %11722 = vxpose.xlu0.c.b16.cont [3/8] 0, 128
  %11723 = vxpose.xlu0.c.b16.cont [4/8] 0, 128
  %11724 = vxpose.xlu0.c.b16.cont [5/8] 0, 128
  %11725 = vxpose.xlu0.c.b16.cont [6/8] 0, 128
  %11726 = vxpose.xlu0.c.b16.cont [7/8] 0, 128
  %11727 = vxpose.xlu0.c.b16.end [8/8] 0, 128
  %v11728 = vpop.trf.xlu0
  %v11729 = vpop.trf.xlu0
  %v11730 = vpop.trf.xlu0
  %v11731 = vpop.trf.xlu0
  %v11732 = vpop.trf.xlu0
  %v11733 = vpop.trf.xlu0
  %v11734 = vpop.trf.xlu0
  %v11735 = vpop.trf.xlu0
  %v11737 = vsel %vm242, %v11728, 0
  %11739 = vmatprep.subr.bf16.mxu0 0
  %11740 = vmatpush1.bf16.msra.mxu0 0
  %11741 = vmatprep.subr.bf16.mxu0 0
  %11742 = vmatpush1.bf16.msra.mxu0 0
  %11743 = vmatprep.subr.bf16.mxu0 0
  %11744 = vmatpush1.bf16.msra.mxu0 0
  %11745 = vmatprep.subr.bf16.mxu0 0
  %11746 = vmatpush1.bf16.msra.mxu0 0
  %11747 = vmatprep.subr.bf16.mxu0 0
  %11748 = vmatpush1.bf16.msra.mxu0 0
  %11749 = vmatprep.subr.bf16.mxu0 0
  %11750 = vmatpush1.bf16.msra.mxu0 0
  %11751 = vmatprep.subr.bf16.mxu0 0
  %11752 = vmatpush1.bf16.msra.mxu0 %v9458
  %11753 = vmatprep.subr.bf16.mxu0 0
  %11754 = vmatpush1.bf16.msra.mxu0 %v9330
  %11755 = vmatprep.subr.bf16.mxu0 0
  %11756 = vmatpush2.bf16.msra.mxu0 0
  %11757 = vmatprep.subr.bf16.mxu0 0
  %11758 = vmatpush2.bf16.msra.mxu0 0
  %11759 = vmatprep.subr.bf16.mxu0 0
  %11760 = vmatpush2.bf16.msra.mxu0 0
  %11761 = vmatprep.subr.bf16.mxu0 0
  %11762 = vmatpush2.bf16.msra.mxu0 0
  %11763 = vmatprep.subr.bf16.mxu0 0
  %11764 = vmatpush2.bf16.msra.mxu0 0
  %11765 = vmatprep.subr.bf16.mxu0 0
  %11766 = vmatpush2.bf16.msra.mxu0 0
  %11767 = vmatprep.subr.bf16.mxu0 0
  %11768 = vmatpush2.bf16.msra.mxu0 0
  %11769 = vmatprep.subr.bf16.mxu0 0
  %11770 = vmatpush2.bf16.msra.mxu0 0
  %11771 = vmatprep.mubr.bf16.mxu0 0
  %11772 = vmatmul.mubr.bf16.gmra.mxu0 %v11737
  %v11773 = vpop.f32.mrf.mxu0
  %v11774 = vadd.f32 0.0, %v11773
  %v11775 = vpop.f32.mrf.mxu0
  %v11776 = vpop.f32.mrf.mxu0
  %v11777 = vadd.f32 0.0, %v11776
  %v11778 = vpop.f32.mrf.mxu0
  %11779 = vdwg.mxu0
  %11780 = vxpose.xlu0.c.b16.start [1/8] %v10854, 128
  %11781 = vxpose.xlu0.c.b16.cont [2/8] %v10982, 128
  %11782 = vxpose.xlu0.c.b16.cont [3/8] 0, 128
  %11783 = vxpose.xlu0.c.b16.cont [4/8] 0, 128
  %11784 = vxpose.xlu0.c.b16.cont [5/8] 0, 128
  %11785 = vxpose.xlu0.c.b16.cont [6/8] 0, 128
  %11786 = vxpose.xlu0.c.b16.cont [7/8] 0, 128
  %11787 = vxpose.xlu0.c.b16.end [8/8] 0, 128
  %v11788 = vpop.trf.xlu0
  %v11789 = vpop.trf.xlu0
  %v11790 = vpop.trf.xlu0
  %v11791 = vpop.trf.xlu0
  %v11792 = vpop.trf.xlu0
  %v11793 = vpop.trf.xlu0
  %v11794 = vpop.trf.xlu0
  %v11795 = vpop.trf.xlu0
  %v11797 = vsel %vm242, %v11788, 0
  %11799 = vmatprep.subr.bf16.mxu0 0
  %11800 = vmatpush1.bf16.msra.mxu0 0
  %11801 = vmatprep.subr.bf16.mxu0 0
  %11802 = vmatpush1.bf16.msra.mxu0 0
  %11803 = vmatprep.subr.bf16.mxu0 0
  %11804 = vmatpush1.bf16.msra.mxu0 0
  %11805 = vmatprep.subr.bf16.mxu0 0
  %11806 = vmatpush1.bf16.msra.mxu0 0
  %11807 = vmatprep.subr.bf16.mxu0 0
  %11808 = vmatpush1.bf16.msra.mxu0 0
  %11809 = vmatprep.subr.bf16.mxu0 0
  %11810 = vmatpush1.bf16.msra.mxu0 0
  %11811 = vmatprep.subr.bf16.mxu0 0
  %11812 = vmatpush1.bf16.msra.mxu0 %v9462
  %11813 = vmatprep.subr.bf16.mxu0 0
  %11814 = vmatpush1.bf16.msra.mxu0 %v9334
  %11815 = vmatprep.subr.bf16.mxu0 0
  %11816 = vmatpush2.bf16.msra.mxu0 0
  %11817 = vmatprep.subr.bf16.mxu0 0
  %11818 = vmatpush2.bf16.msra.mxu0 0
  %11819 = vmatprep.subr.bf16.mxu0 0
  %11820 = vmatpush2.bf16.msra.mxu0 0
  %11821 = vmatprep.subr.bf16.mxu0 0
  %11822 = vmatpush2.bf16.msra.mxu0 0
  %11823 = vmatprep.subr.bf16.mxu0 0
  %11824 = vmatpush2.bf16.msra.mxu0 0
  %11825 = vmatprep.subr.bf16.mxu0 0
  %11826 = vmatpush2.bf16.msra.mxu0 0
  %11827 = vmatprep.subr.bf16.mxu0 0
  %11828 = vmatpush2.bf16.msra.mxu0 0
  %11829 = vmatprep.subr.bf16.mxu0 0
  %11830 = vmatpush2.bf16.msra.mxu0 0
  %11831 = vmatprep.mubr.bf16.mxu0 0
  %11832 = vmatmul.mubr.bf16.gmra.mxu0 %v11797
  %v11833 = vpop.f32.mrf.mxu0
  %v11834 = vadd.f32 0.0, %v11833
  %v11835 = vpop.f32.mrf.mxu0
  %v11836 = vpop.f32.mrf.mxu0
  %v11837 = vadd.f32 0.0, %v11836
  %v11838 = vpop.f32.mrf.mxu0
  %11839 = vdwg.mxu0
  %11840 = vxpose.xlu0.c.b16.start [1/8] %v10858, 128
  %11841 = vxpose.xlu0.c.b16.cont [2/8] %v10986, 128
  %11842 = vxpose.xlu0.c.b16.cont [3/8] 0, 128
  %11843 = vxpose.xlu0.c.b16.cont [4/8] 0, 128
  %11844 = vxpose.xlu0.c.b16.cont [5/8] 0, 128
  %11845 = vxpose.xlu0.c.b16.cont [6/8] 0, 128
  %11846 = vxpose.xlu0.c.b16.cont [7/8] 0, 128
  %11847 = vxpose.xlu0.c.b16.end [8/8] 0, 128
  %v11848 = vpop.trf.xlu0
  %v11849 = vpop.trf.xlu0
  %v11850 = vpop.trf.xlu0
  %v11851 = vpop.trf.xlu0
  %v11852 = vpop.trf.xlu0
  %v11853 = vpop.trf.xlu0
  %v11854 = vpop.trf.xlu0
  %v11855 = vpop.trf.xlu0
  %v11857 = vsel %vm242, %v11848, 0
  %11859 = vmatprep.subr.bf16.mxu0 0
  %11860 = vmatpush1.bf16.msra.mxu0 0
  %11861 = vmatprep.subr.bf16.mxu0 0
  %11862 = vmatpush1.bf16.msra.mxu0 0
  %11863 = vmatprep.subr.bf16.mxu0 0
  %11864 = vmatpush1.bf16.msra.mxu0 0
  %11865 = vmatprep.subr.bf16.mxu0 0
  %11866 = vmatpush1.bf16.msra.mxu0 0
  %11867 = vmatprep.subr.bf16.mxu0 0
  %11868 = vmatpush1.bf16.msra.mxu0 0
  %11869 = vmatprep.subr.bf16.mxu0 0
  %11870 = vmatpush1.bf16.msra.mxu0 0
  %11871 = vmatprep.subr.bf16.mxu0 0
  %11872 = vmatpush1.bf16.msra.mxu0 %v9466
  %11873 = vmatprep.subr.bf16.mxu0 0
  %11874 = vmatpush1.bf16.msra.mxu0 %v9338
  %11875 = vmatprep.subr.bf16.mxu0 0
  %11876 = vmatpush2.bf16.msra.mxu0 0
  %11877 = vmatprep.subr.bf16.mxu0 0
  %11878 = vmatpush2.bf16.msra.mxu0 0
  %11879 = vmatprep.subr.bf16.mxu0 0
  %11880 = vmatpush2.bf16.msra.mxu0 0
  %11881 = vmatprep.subr.bf16.mxu0 0
  %11882 = vmatpush2.bf16.msra.mxu0 0
  %11883 = vmatprep.subr.bf16.mxu0 0
  %11884 = vmatpush2.bf16.msra.mxu0 0
  %11885 = vmatprep.subr.bf16.mxu0 0
  %11886 = vmatpush2.bf16.msra.mxu0 0
  %11887 = vmatprep.subr.bf16.mxu0 0
  %11888 = vmatpush2.bf16.msra.mxu0 0
  %11889 = vmatprep.subr.bf16.mxu0 0
  %11890 = vmatpush2.bf16.msra.mxu0 0
  %11891 = vmatprep.mubr.bf16.mxu0 0
  %11892 = vmatmul.mubr.bf16.gmra.mxu0 %v11857
  %v11893 = vpop.f32.mrf.mxu0
  %v11894 = vadd.f32 0.0, %v11893
  %v11895 = vpop.f32.mrf.mxu0
  %v11896 = vpop.f32.mrf.mxu0
  %v11897 = vadd.f32 0.0, %v11896
  %v11898 = vpop.f32.mrf.mxu0
  %11899 = vdwg.mxu0
  %11900 = vxpose.xlu0.c.b16.start [1/8] %v10862, 128
  %11901 = vxpose.xlu0.c.b16.cont [2/8] %v10990, 128
  %11902 = vxpose.xlu0.c.b16.cont [3/8] 0, 128
  %11903 = vxpose.xlu0.c.b16.cont [4/8] 0, 128
  %11904 = vxpose.xlu0.c.b16.cont [5/8] 0, 128
  %11905 = vxpose.xlu0.c.b16.cont [6/8] 0, 128
  %11906 = vxpose.xlu0.c.b16.cont [7/8] 0, 128
  %11907 = vxpose.xlu0.c.b16.end [8/8] 0, 128
  %v11908 = vpop.trf.xlu0
  %v11909 = vpop.trf.xlu0
  %v11910 = vpop.trf.xlu0
  %v11911 = vpop.trf.xlu0
  %v11912 = vpop.trf.xlu0
  %v11913 = vpop.trf.xlu0
  %v11914 = vpop.trf.xlu0
  %v11915 = vpop.trf.xlu0
  %v11917 = vsel %vm242, %v11908, 0
  %11919 = vmatprep.subr.bf16.mxu0 0
  %11920 = vmatpush1.bf16.msra.mxu0 0
  %11921 = vmatprep.subr.bf16.mxu0 0
  %11922 = vmatpush1.bf16.msra.mxu0 0
  %11923 = vmatprep.subr.bf16.mxu0 0
  %11924 = vmatpush1.bf16.msra.mxu0 0
  %11925 = vmatprep.subr.bf16.mxu0 0
  %11926 = vmatpush1.bf16.msra.mxu0 0
  %11927 = vmatprep.subr.bf16.mxu0 0
  %11928 = vmatpush1.bf16.msra.mxu0 0
  %11929 = vmatprep.subr.bf16.mxu0 0
  %11930 = vmatpush1.bf16.msra.mxu0 0
  %11931 = vmatprep.subr.bf16.mxu0 0
  %11932 = vmatpush1.bf16.msra.mxu0 %v9470
  %11933 = vmatprep.subr.bf16.mxu0 0
  %11934 = vmatpush1.bf16.msra.mxu0 %v9342
  %11935 = vmatprep.subr.bf16.mxu0 0
  %11936 = vmatpush2.bf16.msra.mxu0 0
  %11937 = vmatprep.subr.bf16.mxu0 0
  %11938 = vmatpush2.bf16.msra.mxu0 0
  %11939 = vmatprep.subr.bf16.mxu0 0
  %11940 = vmatpush2.bf16.msra.mxu0 0
  %11941 = vmatprep.subr.bf16.mxu0 0
  %11942 = vmatpush2.bf16.msra.mxu0 0
  %11943 = vmatprep.subr.bf16.mxu0 0
  %11944 = vmatpush2.bf16.msra.mxu0 0
  %11945 = vmatprep.subr.bf16.mxu0 0
  %11946 = vmatpush2.bf16.msra.mxu0 0
  %11947 = vmatprep.subr.bf16.mxu0 0
  %11948 = vmatpush2.bf16.msra.mxu0 0
  %11949 = vmatprep.subr.bf16.mxu0 0
  %11950 = vmatpush2.bf16.msra.mxu0 0
  %11951 = vmatprep.mubr.bf16.mxu0 0
  %11952 = vmatmul.mubr.bf16.gmra.mxu0 %v11917
  %v11953 = vpop.f32.mrf.mxu0
  %v11954 = vadd.f32 0.0, %v11953
  %v11955 = vpop.f32.mrf.mxu0
  %v11956 = vpop.f32.mrf.mxu0
  %v11957 = vadd.f32 0.0, %v11956
  %v11958 = vpop.f32.mrf.mxu0
  %11959 = vdwg.mxu0
  %11960 = vxpose.xlu0.c.b16.start [1/8] %v10866, 128
  %11961 = vxpose.xlu0.c.b16.cont [2/8] %v10994, 128
  %11962 = vxpose.xlu0.c.b16.cont [3/8] 0, 128
  %11963 = vxpose.xlu0.c.b16.cont [4/8] 0, 128
  %11964 = vxpose.xlu0.c.b16.cont [5/8] 0, 128
  %11965 = vxpose.xlu0.c.b16.cont [6/8] 0, 128
  %11966 = vxpose.xlu0.c.b16.cont [7/8] 0, 128
  %11967 = vxpose.xlu0.c.b16.end [8/8] 0, 128
  %v11968 = vpop.trf.xlu0
  %v11969 = vpop.trf.xlu0
  %v11970 = vpop.trf.xlu0
  %v11971 = vpop.trf.xlu0
  %v11972 = vpop.trf.xlu0
  %v11973 = vpop.trf.xlu0
  %v11974 = vpop.trf.xlu0
  %v11975 = vpop.trf.xlu0
  %v11977 = vsel %vm242, %v11968, 0
  %11979 = vmatprep.subr.bf16.mxu0 0
  %11980 = vmatpush1.bf16.msra.mxu0 0
  %11981 = vmatprep.subr.bf16.mxu0 0
  %11982 = vmatpush1.bf16.msra.mxu0 0
  %11983 = vmatprep.subr.bf16.mxu0 0
  %11984 = vmatpush1.bf16.msra.mxu0 0
  %11985 = vmatprep.subr.bf16.mxu0 0
  %11986 = vmatpush1.bf16.msra.mxu0 0
  %11987 = vmatprep.subr.bf16.mxu0 0
  %11988 = vmatpush1.bf16.msra.mxu0 0
  %11989 = vmatprep.subr.bf16.mxu0 0
  %11990 = vmatpush1.bf16.msra.mxu0 0
  %11991 = vmatprep.subr.bf16.mxu0 0
  %11992 = vmatpush1.bf16.msra.mxu0 %v9474
  %11993 = vmatprep.subr.bf16.mxu0 0
  %11994 = vmatpush1.bf16.msra.mxu0 %v9346
  %11995 = vmatprep.subr.bf16.mxu0 0
  %11996 = vmatpush2.bf16.msra.mxu0 0
  %11997 = vmatprep.subr.bf16.mxu0 0
  %11998 = vmatpush2.bf16.msra.mxu0 0
  %11999 = vmatprep.subr.bf16.mxu0 0
  %12000 = vmatpush2.bf16.msra.mxu0 0
  %12001 = vmatprep.subr.bf16.mxu0 0
  %12002 = vmatpush2.bf16.msra.mxu0 0
  %12003 = vmatprep.subr.bf16.mxu0 0
  %12004 = vmatpush2.bf16.msra.mxu0 0
  %12005 = vmatprep.subr.bf16.mxu0 0
  %12006 = vmatpush2.bf16.msra.mxu0 0
  %12007 = vmatprep.subr.bf16.mxu0 0
  %12008 = vmatpush2.bf16.msra.mxu0 0
  %12009 = vmatprep.subr.bf16.mxu0 0
  %12010 = vmatpush2.bf16.msra.mxu0 0
  %12011 = vmatprep.mubr.bf16.mxu0 0
  %12012 = vmatmul.mubr.bf16.gmra.mxu0 %v11977
  %v12013 = vpop.f32.mrf.mxu0
  %v12014 = vadd.f32 0.0, %v12013
  %v12015 = vpop.f32.mrf.mxu0
  %v12016 = vpop.f32.mrf.mxu0
  %v12017 = vadd.f32 0.0, %v12016
  %v12018 = vpop.f32.mrf.mxu0
  %12019 = vdwg.mxu0
  %12020 = vxpose.xlu0.c.b16.start [1/8] %v10870, 128
  %12021 = vxpose.xlu0.c.b16.cont [2/8] %v10998, 128
  %12022 = vxpose.xlu0.c.b16.cont [3/8] 0, 128
  %12023 = vxpose.xlu0.c.b16.cont [4/8] 0, 128
  %12024 = vxpose.xlu0.c.b16.cont [5/8] 0, 128
  %12025 = vxpose.xlu0.c.b16.cont [6/8] 0, 128
  %12026 = vxpose.xlu0.c.b16.cont [7/8] 0, 128
  %12027 = vxpose.xlu0.c.b16.end [8/8] 0, 128
  %v12028 = vpop.trf.xlu0
  %v12029 = vpop.trf.xlu0
  %v12030 = vpop.trf.xlu0
  %v12031 = vpop.trf.xlu0
  %v12032 = vpop.trf.xlu0
  %v12033 = vpop.trf.xlu0
  %v12034 = vpop.trf.xlu0
  %v12035 = vpop.trf.xlu0
  %v12037 = vsel %vm242, %v12028, 0
  %12039 = vmatprep.subr.bf16.mxu0 0
  %12040 = vmatpush1.bf16.msra.mxu0 0
  %12041 = vmatprep.subr.bf16.mxu0 0
  %12042 = vmatpush1.bf16.msra.mxu0 0
  %12043 = vmatprep.subr.bf16.mxu0 0
  %12044 = vmatpush1.bf16.msra.mxu0 0
  %12045 = vmatprep.subr.bf16.mxu0 0
  %12046 = vmatpush1.bf16.msra.mxu0 0
  %12047 = vmatprep.subr.bf16.mxu0 0
  %12048 = vmatpush1.bf16.msra.mxu0 0
  %12049 = vmatprep.subr.bf16.mxu0 0
  %12050 = vmatpush1.bf16.msra.mxu0 0
  %12051 = vmatprep.subr.bf16.mxu0 0
  %12052 = vmatpush1.bf16.msra.mxu0 %v9478
  %12053 = vmatprep.subr.bf16.mxu0 0
  %12054 = vmatpush1.bf16.msra.mxu0 %v9350
  %12055 = vmatprep.subr.bf16.mxu0 0
  %12056 = vmatpush2.bf16.msra.mxu0 0
  %12057 = vmatprep.subr.bf16.mxu0 0
  %12058 = vmatpush2.bf16.msra.mxu0 0
  %12059 = vmatprep.subr.bf16.mxu0 0
  %12060 = vmatpush2.bf16.msra.mxu0 0
  %12061 = vmatprep.subr.bf16.mxu0 0
  %12062 = vmatpush2.bf16.msra.mxu0 0
  %12063 = vmatprep.subr.bf16.mxu0 0
  %12064 = vmatpush2.bf16.msra.mxu0 0
  %12065 = vmatprep.subr.bf16.mxu0 0
  %12066 = vmatpush2.bf16.msra.mxu0 0
  %12067 = vmatprep.subr.bf16.mxu0 0
  %12068 = vmatpush2.bf16.msra.mxu0 0
  %12069 = vmatprep.subr.bf16.mxu0 0
  %12070 = vmatpush2.bf16.msra.mxu0 0
  %12071 = vmatprep.mubr.bf16.mxu0 0
  %12072 = vmatmul.mubr.bf16.gmra.mxu0 %v12037
  %v12073 = vpop.f32.mrf.mxu0
  %v12074 = vadd.f32 0.0, %v12073
  %v12075 = vpop.f32.mrf.mxu0
  %v12076 = vpop.f32.mrf.mxu0
  %v12077 = vadd.f32 0.0, %v12076
  %v12078 = vpop.f32.mrf.mxu0
  %12079 = vdwg.mxu0
  %12080 = vxpose.xlu0.c.b16.start [1/8] %v10874, 128
  %12081 = vxpose.xlu0.c.b16.cont [2/8] %v11002, 128
  %12082 = vxpose.xlu0.c.b16.cont [3/8] 0, 128
  %12083 = vxpose.xlu0.c.b16.cont [4/8] 0, 128
  %12084 = vxpose.xlu0.c.b16.cont [5/8] 0, 128
  %12085 = vxpose.xlu0.c.b16.cont [6/8] 0, 128
  %12086 = vxpose.xlu0.c.b16.cont [7/8] 0, 128
  %12087 = vxpose.xlu0.c.b16.end [8/8] 0, 128
  %v12088 = vpop.trf.xlu0
  %v12089 = vpop.trf.xlu0
  %v12090 = vpop.trf.xlu0
  %v12091 = vpop.trf.xlu0
  %v12092 = vpop.trf.xlu0
  %v12093 = vpop.trf.xlu0
  %v12094 = vpop.trf.xlu0
  %v12095 = vpop.trf.xlu0
  %v12097 = vsel %vm242, %v12088, 0
  %12099 = vmatprep.subr.bf16.mxu0 0
  %12100 = vmatpush1.bf16.msra.mxu0 0
  %12101 = vmatprep.subr.bf16.mxu0 0
  %12102 = vmatpush1.bf16.msra.mxu0 0
  %12103 = vmatprep.subr.bf16.mxu0 0
  %12104 = vmatpush1.bf16.msra.mxu0 0
  %12105 = vmatprep.subr.bf16.mxu0 0
  %12106 = vmatpush1.bf16.msra.mxu0 0
  %12107 = vmatprep.subr.bf16.mxu0 0
  %12108 = vmatpush1.bf16.msra.mxu0 0
  %12109 = vmatprep.subr.bf16.mxu0 0
  %12110 = vmatpush1.bf16.msra.mxu0 0
  %12111 = vmatprep.subr.bf16.mxu0 0
  %12112 = vmatpush1.bf16.msra.mxu0 %v9482
  %12113 = vmatprep.subr.bf16.mxu0 0
  %12114 = vmatpush1.bf16.msra.mxu0 %v9354
  %12115 = vmatprep.subr.bf16.mxu0 0
  %12116 = vmatpush2.bf16.msra.mxu0 0
  %12117 = vmatprep.subr.bf16.mxu0 0
  %12118 = vmatpush2.bf16.msra.mxu0 0
  %12119 = vmatprep.subr.bf16.mxu0 0
  %12120 = vmatpush2.bf16.msra.mxu0 0
  %12121 = vmatprep.subr.bf16.mxu0 0
  %12122 = vmatpush2.bf16.msra.mxu0 0
  %12123 = vmatprep.subr.bf16.mxu0 0
  %12124 = vmatpush2.bf16.msra.mxu0 0
  %12125 = vmatprep.subr.bf16.mxu0 0
  %12126 = vmatpush2.bf16.msra.mxu0 0
  %12127 = vmatprep.subr.bf16.mxu0 0
  %12128 = vmatpush2.bf16.msra.mxu0 0
  %12129 = vmatprep.subr.bf16.mxu0 0
  %12130 = vmatpush2.bf16.msra.mxu0 0
  %12131 = vmatprep.mubr.bf16.mxu0 0
  %12132 = vmatmul.mubr.bf16.gmra.mxu0 %v12097
  %v12133 = vpop.f32.mrf.mxu0
  %v12134 = vadd.f32 0.0, %v12133
  %v12135 = vpop.f32.mrf.mxu0
  %v12136 = vpop.f32.mrf.mxu0
  %v12137 = vadd.f32 0.0, %v12136
  %v12138 = vpop.f32.mrf.mxu0
  %12139 = vdwg.mxu0
  %12140 = vxpose.xlu0.c.b16.start [1/8] %v10878, 128
  %12141 = vxpose.xlu0.c.b16.cont [2/8] %v11006, 128
  %12142 = vxpose.xlu0.c.b16.cont [3/8] 0, 128
  %12143 = vxpose.xlu0.c.b16.cont [4/8] 0, 128
  %12144 = vxpose.xlu0.c.b16.cont [5/8] 0, 128
  %12145 = vxpose.xlu0.c.b16.cont [6/8] 0, 128
  %12146 = vxpose.xlu0.c.b16.cont [7/8] 0, 128
  %12147 = vxpose.xlu0.c.b16.end [8/8] 0, 128
  %v12148 = vpop.trf.xlu0
  %v12149 = vpop.trf.xlu0
  %v12150 = vpop.trf.xlu0
  %v12151 = vpop.trf.xlu0
  %v12152 = vpop.trf.xlu0
  %v12153 = vpop.trf.xlu0
  %v12154 = vpop.trf.xlu0
  %v12155 = vpop.trf.xlu0
  %v12157 = vsel %vm242, %v12148, 0
  %12159 = vmatprep.subr.bf16.mxu0 0
  %12160 = vmatpush1.bf16.msra.mxu0 0
  %12161 = vmatprep.subr.bf16.mxu0 0
  %12162 = vmatpush1.bf16.msra.mxu0 0
  %12163 = vmatprep.subr.bf16.mxu0 0
  %12164 = vmatpush1.bf16.msra.mxu0 0
  %12165 = vmatprep.subr.bf16.mxu0 0
  %12166 = vmatpush1.bf16.msra.mxu0 0
  %12167 = vmatprep.subr.bf16.mxu0 0
  %12168 = vmatpush1.bf16.msra.mxu0 0
  %12169 = vmatprep.subr.bf16.mxu0 0
  %12170 = vmatpush1.bf16.msra.mxu0 0
  %12171 = vmatprep.subr.bf16.mxu0 0
  %12172 = vmatpush1.bf16.msra.mxu0 %v9486
  %12173 = vmatprep.subr.bf16.mxu0 0
  %12174 = vmatpush1.bf16.msra.mxu0 %v9358
  %12175 = vmatprep.subr.bf16.mxu0 0
  %12176 = vmatpush2.bf16.msra.mxu0 0
  %12177 = vmatprep.subr.bf16.mxu0 0
  %12178 = vmatpush2.bf16.msra.mxu0 0
  %12179 = vmatprep.subr.bf16.mxu0 0
  %12180 = vmatpush2.bf16.msra.mxu0 0
  %12181 = vmatprep.subr.bf16.mxu0 0
  %12182 = vmatpush2.bf16.msra.mxu0 0
  %12183 = vmatprep.subr.bf16.mxu0 0
  %12184 = vmatpush2.bf16.msra.mxu0 0
  %12185 = vmatprep.subr.bf16.mxu0 0
  %12186 = vmatpush2.bf16.msra.mxu0 0
  %12187 = vmatprep.subr.bf16.mxu0 0
  %12188 = vmatpush2.bf16.msra.mxu0 0
  %12189 = vmatprep.subr.bf16.mxu0 0
  %12190 = vmatpush2.bf16.msra.mxu0 0
  %12191 = vmatprep.mubr.bf16.mxu0 0
  %12192 = vmatmul.mubr.bf16.gmra.mxu0 %v12157
  %v12193 = vpop.f32.mrf.mxu0
  %v12194 = vadd.f32 0.0, %v12193
  %v12195 = vpop.f32.mrf.mxu0
  %v12196 = vpop.f32.mrf.mxu0
  %v12197 = vadd.f32 0.0, %v12196
  %v12198 = vpop.f32.mrf.mxu0
  %12199 = vdwg.mxu0
  %12200 = vxpose.xlu0.c.b16.start [1/8] %v10882, 128
  %12201 = vxpose.xlu0.c.b16.cont [2/8] %v11010, 128
  %12202 = vxpose.xlu0.c.b16.cont [3/8] 0, 128
  %12203 = vxpose.xlu0.c.b16.cont [4/8] 0, 128
  %12204 = vxpose.xlu0.c.b16.cont [5/8] 0, 128
  %12205 = vxpose.xlu0.c.b16.cont [6/8] 0, 128
  %12206 = vxpose.xlu0.c.b16.cont [7/8] 0, 128
  %12207 = vxpose.xlu0.c.b16.end [8/8] 0, 128
  %v12208 = vpop.trf.xlu0
  %v12209 = vpop.trf.xlu0
  %v12210 = vpop.trf.xlu0
  %v12211 = vpop.trf.xlu0
  %v12212 = vpop.trf.xlu0
  %v12213 = vpop.trf.xlu0
  %v12214 = vpop.trf.xlu0
  %v12215 = vpop.trf.xlu0
  %v12217 = vsel %vm242, %v12208, 0
  %12219 = vmatprep.subr.bf16.mxu0 0
  %12220 = vmatpush1.bf16.msra.mxu0 0
  %12221 = vmatprep.subr.bf16.mxu0 0
  %12222 = vmatpush1.bf16.msra.mxu0 0
  %12223 = vmatprep.subr.bf16.mxu0 0
  %12224 = vmatpush1.bf16.msra.mxu0 0
  %12225 = vmatprep.subr.bf16.mxu0 0
  %12226 = vmatpush1.bf16.msra.mxu0 0
  %12227 = vmatprep.subr.bf16.mxu0 0
  %12228 = vmatpush1.bf16.msra.mxu0 0
  %12229 = vmatprep.subr.bf16.mxu0 0
  %12230 = vmatpush1.bf16.msra.mxu0 0
  %12231 = vmatprep.subr.bf16.mxu0 0
  %12232 = vmatpush1.bf16.msra.mxu0 %v9490
  %12233 = vmatprep.subr.bf16.mxu0 0
  %12234 = vmatpush1.bf16.msra.mxu0 %v9362
  %12235 = vmatprep.subr.bf16.mxu0 0
  %12236 = vmatpush2.bf16.msra.mxu0 0
  %12237 = vmatprep.subr.bf16.mxu0 0
  %12238 = vmatpush2.bf16.msra.mxu0 0
  %12239 = vmatprep.subr.bf16.mxu0 0
  %12240 = vmatpush2.bf16.msra.mxu0 0
  %12241 = vmatprep.subr.bf16.mxu0 0
  %12242 = vmatpush2.bf16.msra.mxu0 0
  %12243 = vmatprep.subr.bf16.mxu0 0
  %12244 = vmatpush2.bf16.msra.mxu0 0
  %12245 = vmatprep.subr.bf16.mxu0 0
  %12246 = vmatpush2.bf16.msra.mxu0 0
  %12247 = vmatprep.subr.bf16.mxu0 0
  %12248 = vmatpush2.bf16.msra.mxu0 0
  %12249 = vmatprep.subr.bf16.mxu0 0
  %12250 = vmatpush2.bf16.msra.mxu0 0
  %12251 = vmatprep.mubr.bf16.mxu0 0
  %12252 = vmatmul.mubr.bf16.gmra.mxu0 %v12217
  %v12253 = vpop.f32.mrf.mxu0
  %v12254 = vadd.f32 0.0, %v12253
  %v12255 = vpop.f32.mrf.mxu0
  %v12256 = vpop.f32.mrf.mxu0
  %v12257 = vadd.f32 0.0, %v12256
  %v12258 = vpop.f32.mrf.mxu0
  %12259 = vdwg.mxu0
  %12260 = vxpose.xlu0.c.b16.start [1/8] %v10886, 128
  %12261 = vxpose.xlu0.c.b16.cont [2/8] %v11014, 128
  %12262 = vxpose.xlu0.c.b16.cont [3/8] 0, 128
  %12263 = vxpose.xlu0.c.b16.cont [4/8] 0, 128
  %12264 = vxpose.xlu0.c.b16.cont [5/8] 0, 128
  %12265 = vxpose.xlu0.c.b16.cont [6/8] 0, 128
  %12266 = vxpose.xlu0.c.b16.cont [7/8] 0, 128
  %12267 = vxpose.xlu0.c.b16.end [8/8] 0, 128
  %v12268 = vpop.trf.xlu0
  %v12269 = vpop.trf.xlu0
  %v12270 = vpop.trf.xlu0
  %v12271 = vpop.trf.xlu0
  %v12272 = vpop.trf.xlu0
  %v12273 = vpop.trf.xlu0
  %v12274 = vpop.trf.xlu0
  %v12275 = vpop.trf.xlu0
  %v12277 = vsel %vm242, %v12268, 0
  %12279 = vmatprep.subr.bf16.mxu0 0
  %12280 = vmatpush1.bf16.msra.mxu0 0
  %12281 = vmatprep.subr.bf16.mxu0 0
  %12282 = vmatpush1.bf16.msra.mxu0 0
  %12283 = vmatprep.subr.bf16.mxu0 0
  %12284 = vmatpush1.bf16.msra.mxu0 0
  %12285 = vmatprep.subr.bf16.mxu0 0
  %12286 = vmatpush1.bf16.msra.mxu0 0
  %12287 = vmatprep.subr.bf16.mxu0 0
  %12288 = vmatpush1.bf16.msra.mxu0 0
  %12289 = vmatprep.subr.bf16.mxu0 0
  %12290 = vmatpush1.bf16.msra.mxu0 0
  %12291 = vmatprep.subr.bf16.mxu0 0
  %12292 = vmatpush1.bf16.msra.mxu0 %v9494
  %12293 = vmatprep.subr.bf16.mxu0 0
  %12294 = vmatpush1.bf16.msra.mxu0 %v9366
  %12295 = vmatprep.subr.bf16.mxu0 0
  %12296 = vmatpush2.bf16.msra.mxu0 0
  %12297 = vmatprep.subr.bf16.mxu0 0
  %12298 = vmatpush2.bf16.msra.mxu0 0
  %12299 = vmatprep.subr.bf16.mxu0 0
  %12300 = vmatpush2.bf16.msra.mxu0 0
  %12301 = vmatprep.subr.bf16.mxu0 0
  %12302 = vmatpush2.bf16.msra.mxu0 0
  %12303 = vmatprep.subr.bf16.mxu0 0
  %12304 = vmatpush2.bf16.msra.mxu0 0
  %12305 = vmatprep.subr.bf16.mxu0 0
  %12306 = vmatpush2.bf16.msra.mxu0 0
  %12307 = vmatprep.subr.bf16.mxu0 0
  %12308 = vmatpush2.bf16.msra.mxu0 0
  %12309 = vmatprep.subr.bf16.mxu0 0
  %12310 = vmatpush2.bf16.msra.mxu0 0
  %12311 = vmatprep.mubr.bf16.mxu0 0
  %12312 = vmatmul.mubr.bf16.gmra.mxu0 %v12277
  %v12313 = vpop.f32.mrf.mxu0
  %v12314 = vadd.f32 0.0, %v12313
  %v12315 = vpop.f32.mrf.mxu0
  %v12316 = vpop.f32.mrf.mxu0
  %v12317 = vadd.f32 0.0, %v12316
  %v12318 = vpop.f32.mrf.mxu0
  %12319 = vdwg.mxu0
  %12320 = vxpose.xlu0.c.b16.start [1/8] %v10890, 128
  %12321 = vxpose.xlu0.c.b16.cont [2/8] %v11018, 128
  %12322 = vxpose.xlu0.c.b16.cont [3/8] 0, 128
  %12323 = vxpose.xlu0.c.b16.cont [4/8] 0, 128
  %12324 = vxpose.xlu0.c.b16.cont [5/8] 0, 128
  %12325 = vxpose.xlu0.c.b16.cont [6/8] 0, 128
  %12326 = vxpose.xlu0.c.b16.cont [7/8] 0, 128
  %12327 = vxpose.xlu0.c.b16.end [8/8] 0, 128
  %v12328 = vpop.trf.xlu0
  %v12329 = vpop.trf.xlu0
  %v12330 = vpop.trf.xlu0
  %v12331 = vpop.trf.xlu0
  %v12332 = vpop.trf.xlu0
  %v12333 = vpop.trf.xlu0
  %v12334 = vpop.trf.xlu0
  %v12335 = vpop.trf.xlu0
  %v12337 = vsel %vm242, %v12328, 0
  %12339 = vmatprep.subr.bf16.mxu0 0
  %12340 = vmatpush1.bf16.msra.mxu0 0
  %12341 = vmatprep.subr.bf16.mxu0 0
  %12342 = vmatpush1.bf16.msra.mxu0 0
  %12343 = vmatprep.subr.bf16.mxu0 0
  %12344 = vmatpush1.bf16.msra.mxu0 0
  %12345 = vmatprep.subr.bf16.mxu0 0
  %12346 = vmatpush1.bf16.msra.mxu0 0
  %12347 = vmatprep.subr.bf16.mxu0 0
  %12348 = vmatpush1.bf16.msra.mxu0 0
  %12349 = vmatprep.subr.bf16.mxu0 0
  %12350 = vmatpush1.bf16.msra.mxu0 0
  %12351 = vmatprep.subr.bf16.mxu0 0
  %12352 = vmatpush1.bf16.msra.mxu0 %v9498
  %12353 = vmatprep.subr.bf16.mxu0 0
  %12354 = vmatpush1.bf16.msra.mxu0 %v9370
  %12355 = vmatprep.subr.bf16.mxu0 0
  %12356 = vmatpush2.bf16.msra.mxu0 0
  %12357 = vmatprep.subr.bf16.mxu0 0
  %12358 = vmatpush2.bf16.msra.mxu0 0
  %12359 = vmatprep.subr.bf16.mxu0 0
  %12360 = vmatpush2.bf16.msra.mxu0 0
  %12361 = vmatprep.subr.bf16.mxu0 0
  %12362 = vmatpush2.bf16.msra.mxu0 0
  %12363 = vmatprep.subr.bf16.mxu0 0
  %12364 = vmatpush2.bf16.msra.mxu0 0
  %12365 = vmatprep.subr.bf16.mxu0 0
  %12366 = vmatpush2.bf16.msra.mxu0 0
  %12367 = vmatprep.subr.bf16.mxu0 0
  %12368 = vmatpush2.bf16.msra.mxu0 0
  %12369 = vmatprep.subr.bf16.mxu0 0
  %12370 = vmatpush2.bf16.msra.mxu0 0
  %12371 = vmatprep.mubr.bf16.mxu0 0
  %12372 = vmatmul.mubr.bf16.gmra.mxu0 %v12337
  %v12373 = vpop.f32.mrf.mxu0
  %v12374 = vadd.f32 0.0, %v12373
  %v12375 = vpop.f32.mrf.mxu0
  %v12376 = vpop.f32.mrf.mxu0
  %v12377 = vadd.f32 0.0, %v12376
  %v12378 = vpop.f32.mrf.mxu0
  %12379 = vdwg.mxu0
  %12380 = vxpose.xlu0.c.b16.start [1/8] %v10894, 128
  %12381 = vxpose.xlu0.c.b16.cont [2/8] %v11022, 128
  %12382 = vxpose.xlu0.c.b16.cont [3/8] 0, 128
  %12383 = vxpose.xlu0.c.b16.cont [4/8] 0, 128
  %12384 = vxpose.xlu0.c.b16.cont [5/8] 0, 128
  %12385 = vxpose.xlu0.c.b16.cont [6/8] 0, 128
  %12386 = vxpose.xlu0.c.b16.cont [7/8] 0, 128
  %12387 = vxpose.xlu0.c.b16.end [8/8] 0, 128
  %v12388 = vpop.trf.xlu0
  %v12389 = vpop.trf.xlu0
  %v12390 = vpop.trf.xlu0
  %v12391 = vpop.trf.xlu0
  %v12392 = vpop.trf.xlu0
  %v12393 = vpop.trf.xlu0
  %v12394 = vpop.trf.xlu0
  %v12395 = vpop.trf.xlu0
  %v12397 = vsel %vm242, %v12388, 0
  %12399 = vmatprep.subr.bf16.mxu0 0
  %12400 = vmatpush1.bf16.msra.mxu0 0
  %12401 = vmatprep.subr.bf16.mxu0 0
  %12402 = vmatpush1.bf16.msra.mxu0 0
  %12403 = vmatprep.subr.bf16.mxu0 0
  %12404 = vmatpush1.bf16.msra.mxu0 0
  %12405 = vmatprep.subr.bf16.mxu0 0
  %12406 = vmatpush1.bf16.msra.mxu0 0
  %12407 = vmatprep.subr.bf16.mxu0 0
  %12408 = vmatpush1.bf16.msra.mxu0 0
  %12409 = vmatprep.subr.bf16.mxu0 0
  %12410 = vmatpush1.bf16.msra.mxu0 0
  %12411 = vmatprep.subr.bf16.mxu0 0
  %12412 = vmatpush1.bf16.msra.mxu0 %v9502
  %12413 = vmatprep.subr.bf16.mxu0 0
  %12414 = vmatpush1.bf16.msra.mxu0 %v9374
  %12415 = vmatprep.subr.bf16.mxu0 0
  %12416 = vmatpush2.bf16.msra.mxu0 0
  %12417 = vmatprep.subr.bf16.mxu0 0
  %12418 = vmatpush2.bf16.msra.mxu0 0
  %12419 = vmatprep.subr.bf16.mxu0 0
  %12420 = vmatpush2.bf16.msra.mxu0 0
  %12421 = vmatprep.subr.bf16.mxu0 0
  %12422 = vmatpush2.bf16.msra.mxu0 0
  %12423 = vmatprep.subr.bf16.mxu0 0
  %12424 = vmatpush2.bf16.msra.mxu0 0
  %12425 = vmatprep.subr.bf16.mxu0 0
  %12426 = vmatpush2.bf16.msra.mxu0 0
  %12427 = vmatprep.subr.bf16.mxu0 0
  %12428 = vmatpush2.bf16.msra.mxu0 0
  %12429 = vmatprep.subr.bf16.mxu0 0
  %12430 = vmatpush2.bf16.msra.mxu0 0
  %12431 = vmatprep.mubr.bf16.mxu0 0
  %12432 = vmatmul.mubr.bf16.gmra.mxu0 %v12397
  %v12433 = vpop.f32.mrf.mxu0
  %v12434 = vadd.f32 0.0, %v12433
  %v12435 = vpop.f32.mrf.mxu0
  %v12436 = vpop.f32.mrf.mxu0
  %v12437 = vadd.f32 0.0, %v12436
  %v12438 = vpop.f32.mrf.mxu0
  %12439 = vdwg.mxu0
  %12440 = vxpose.xlu0.c.b16.start [1/8] %v10898, 128
  %12441 = vxpose.xlu0.c.b16.cont [2/8] %v11026, 128
  %12442 = vxpose.xlu0.c.b16.cont [3/8] 0, 128
  %12443 = vxpose.xlu0.c.b16.cont [4/8] 0, 128
  %12444 = vxpose.xlu0.c.b16.cont [5/8] 0, 128
  %12445 = vxpose.xlu0.c.b16.cont [6/8] 0, 128
  %12446 = vxpose.xlu0.c.b16.cont [7/8] 0, 128
  %12447 = vxpose.xlu0.c.b16.end [8/8] 0, 128
  %v12448 = vpop.trf.xlu0
  %v12449 = vpop.trf.xlu0
  %v12450 = vpop.trf.xlu0
  %v12451 = vpop.trf.xlu0
  %v12452 = vpop.trf.xlu0
  %v12453 = vpop.trf.xlu0
  %v12454 = vpop.trf.xlu0
  %v12455 = vpop.trf.xlu0
  %v12457 = vsel %vm242, %v12448, 0
  %12459 = vmatprep.subr.bf16.mxu0 0
  %12460 = vmatpush1.bf16.msra.mxu0 0
  %12461 = vmatprep.subr.bf16.mxu0 0
  %12462 = vmatpush1.bf16.msra.mxu0 0
  %12463 = vmatprep.subr.bf16.mxu0 0
  %12464 = vmatpush1.bf16.msra.mxu0 0
  %12465 = vmatprep.subr.bf16.mxu0 0
  %12466 = vmatpush1.bf16.msra.mxu0 0
  %12467 = vmatprep.subr.bf16.mxu0 0
  %12468 = vmatpush1.bf16.msra.mxu0 0
  %12469 = vmatprep.subr.bf16.mxu0 0
  %12470 = vmatpush1.bf16.msra.mxu0 0
  %12471 = vmatprep.subr.bf16.mxu0 0
  %12472 = vmatpush1.bf16.msra.mxu0 %v9506
  %12473 = vmatprep.subr.bf16.mxu0 0
  %12474 = vmatpush1.bf16.msra.mxu0 %v9378
  %12475 = vmatprep.subr.bf16.mxu0 0
  %12476 = vmatpush2.bf16.msra.mxu0 0
  %12477 = vmatprep.subr.bf16.mxu0 0
  %12478 = vmatpush2.bf16.msra.mxu0 0
  %12479 = vmatprep.subr.bf16.mxu0 0
  %12480 = vmatpush2.bf16.msra.mxu0 0
  %12481 = vmatprep.subr.bf16.mxu0 0
  %12482 = vmatpush2.bf16.msra.mxu0 0
  %12483 = vmatprep.subr.bf16.mxu0 0
  %12484 = vmatpush2.bf16.msra.mxu0 0
  %12485 = vmatprep.subr.bf16.mxu0 0
  %12486 = vmatpush2.bf16.msra.mxu0 0
  %12487 = vmatprep.subr.bf16.mxu0 0
  %12488 = vmatpush2.bf16.msra.mxu0 0
  %12489 = vmatprep.subr.bf16.mxu0 0
  %12490 = vmatpush2.bf16.msra.mxu0 0
  %12491 = vmatprep.mubr.bf16.mxu0 0
  %12492 = vmatmul.mubr.bf16.gmra.mxu0 %v12457
  %v12493 = vpop.f32.mrf.mxu0
  %v12494 = vadd.f32 0.0, %v12493
  %v12495 = vpop.f32.mrf.mxu0
  %v12496 = vpop.f32.mrf.mxu0
  %v12497 = vadd.f32 0.0, %v12496
  %v12498 = vpop.f32.mrf.mxu0
  %12499 = vdwg.mxu0
  %12500 = vxpose.xlu0.c.b16.start [1/8] %v10902, 128
  %12501 = vxpose.xlu0.c.b16.cont [2/8] %v11030, 128
  %12502 = vxpose.xlu0.c.b16.cont [3/8] 0, 128
  %12503 = vxpose.xlu0.c.b16.cont [4/8] 0, 128
  %12504 = vxpose.xlu0.c.b16.cont [5/8] 0, 128
  %12505 = vxpose.xlu0.c.b16.cont [6/8] 0, 128
  %12506 = vxpose.xlu0.c.b16.cont [7/8] 0, 128
  %12507 = vxpose.xlu0.c.b16.end [8/8] 0, 128
  %v12508 = vpop.trf.xlu0
  %v12509 = vpop.trf.xlu0
  %v12510 = vpop.trf.xlu0
  %v12511 = vpop.trf.xlu0
  %v12512 = vpop.trf.xlu0
  %v12513 = vpop.trf.xlu0
  %v12514 = vpop.trf.xlu0
  %v12515 = vpop.trf.xlu0
  %v12517 = vsel %vm242, %v12508, 0
  %12519 = vmatprep.subr.bf16.mxu0 0
  %12520 = vmatpush1.bf16.msra.mxu0 0
  %12521 = vmatprep.subr.bf16.mxu0 0
  %12522 = vmatpush1.bf16.msra.mxu0 0
  %12523 = vmatprep.subr.bf16.mxu0 0
  %12524 = vmatpush1.bf16.msra.mxu0 0
  %12525 = vmatprep.subr.bf16.mxu0 0
  %12526 = vmatpush1.bf16.msra.mxu0 0
  %12527 = vmatprep.subr.bf16.mxu0 0
  %12528 = vmatpush1.bf16.msra.mxu0 0
  %12529 = vmatprep.subr.bf16.mxu0 0
  %12530 = vmatpush1.bf16.msra.mxu0 0
  %12531 = vmatprep.subr.bf16.mxu0 0
  %12532 = vmatpush1.bf16.msra.mxu0 %v9510
  %12533 = vmatprep.subr.bf16.mxu0 0
  %12534 = vmatpush1.bf16.msra.mxu0 %v9382
  %12535 = vmatprep.subr.bf16.mxu0 0
  %12536 = vmatpush2.bf16.msra.mxu0 0
  %12537 = vmatprep.subr.bf16.mxu0 0
  %12538 = vmatpush2.bf16.msra.mxu0 0
  %12539 = vmatprep.subr.bf16.mxu0 0
  %12540 = vmatpush2.bf16.msra.mxu0 0
  %12541 = vmatprep.subr.bf16.mxu0 0
  %12542 = vmatpush2.bf16.msra.mxu0 0
  %12543 = vmatprep.subr.bf16.mxu0 0
  %12544 = vmatpush2.bf16.msra.mxu0 0
  %12545 = vmatprep.subr.bf16.mxu0 0
  %12546 = vmatpush2.bf16.msra.mxu0 0
  %12547 = vmatprep.subr.bf16.mxu0 0
  %12548 = vmatpush2.bf16.msra.mxu0 0
  %12549 = vmatprep.subr.bf16.mxu0 0
  %12550 = vmatpush2.bf16.msra.mxu0 0
  %12551 = vmatprep.mubr.bf16.mxu0 0
  %12552 = vmatmul.mubr.bf16.gmra.mxu0 %v12517
  %v12553 = vpop.f32.mrf.mxu0
  %v12554 = vadd.f32 0.0, %v12553
  %v12555 = vpop.f32.mrf.mxu0
  %v12556 = vpop.f32.mrf.mxu0
  %v12557 = vadd.f32 0.0, %v12556
  %v12558 = vpop.f32.mrf.mxu0
  %12559 = vdwg.mxu0
  %12560 = vxpose.xlu0.c.b16.start [1/8] %v10906, 128
  %12561 = vxpose.xlu0.c.b16.cont [2/8] %v11034, 128
  %12562 = vxpose.xlu0.c.b16.cont [3/8] 0, 128
  %12563 = vxpose.xlu0.c.b16.cont [4/8] 0, 128
  %12564 = vxpose.xlu0.c.b16.cont [5/8] 0, 128
  %12565 = vxpose.xlu0.c.b16.cont [6/8] 0, 128
  %12566 = vxpose.xlu0.c.b16.cont [7/8] 0, 128
  %12567 = vxpose.xlu0.c.b16.end [8/8] 0, 128
  %v12568 = vpop.trf.xlu0
  %v12569 = vpop.trf.xlu0
  %v12570 = vpop.trf.xlu0
  %v12571 = vpop.trf.xlu0
  %v12572 = vpop.trf.xlu0
  %v12573 = vpop.trf.xlu0
  %v12574 = vpop.trf.xlu0
  %v12575 = vpop.trf.xlu0
  %v12577 = vsel %vm242, %v12568, 0
  %12579 = vmatprep.subr.bf16.mxu0 0
  %12580 = vmatpush1.bf16.msra.mxu0 0
  %12581 = vmatprep.subr.bf16.mxu0 0
  %12582 = vmatpush1.bf16.msra.mxu0 0
  %12583 = vmatprep.subr.bf16.mxu0 0
  %12584 = vmatpush1.bf16.msra.mxu0 0
  %12585 = vmatprep.subr.bf16.mxu0 0
  %12586 = vmatpush1.bf16.msra.mxu0 0
  %12587 = vmatprep.subr.bf16.mxu0 0
  %12588 = vmatpush1.bf16.msra.mxu0 0
  %12589 = vmatprep.subr.bf16.mxu0 0
  %12590 = vmatpush1.bf16.msra.mxu0 0
  %12591 = vmatprep.subr.bf16.mxu0 0
  %12592 = vmatpush1.bf16.msra.mxu0 %v9514
  %12593 = vmatprep.subr.bf16.mxu0 0
  %12594 = vmatpush1.bf16.msra.mxu0 %v9386
  %12595 = vmatprep.subr.bf16.mxu0 0
  %12596 = vmatpush2.bf16.msra.mxu0 0
  %12597 = vmatprep.subr.bf16.mxu0 0
  %12598 = vmatpush2.bf16.msra.mxu0 0
  %12599 = vmatprep.subr.bf16.mxu0 0
  %12600 = vmatpush2.bf16.msra.mxu0 0
  %12601 = vmatprep.subr.bf16.mxu0 0
  %12602 = vmatpush2.bf16.msra.mxu0 0
  %12603 = vmatprep.subr.bf16.mxu0 0
  %12604 = vmatpush2.bf16.msra.mxu0 0
  %12605 = vmatprep.subr.bf16.mxu0 0
  %12606 = vmatpush2.bf16.msra.mxu0 0
  %12607 = vmatprep.subr.bf16.mxu0 0
  %12608 = vmatpush2.bf16.msra.mxu0 0
  %12609 = vmatprep.subr.bf16.mxu0 0
  %12610 = vmatpush2.bf16.msra.mxu0 0
  %12611 = vmatprep.mubr.bf16.mxu0 0
  %12612 = vmatmul.mubr.bf16.gmra.mxu0 %v12577
  %v12613 = vpop.f32.mrf.mxu0
  %v12614 = vadd.f32 0.0, %v12613
  %v12615 = vpop.f32.mrf.mxu0
  %v12616 = vpop.f32.mrf.mxu0
  %v12617 = vadd.f32 0.0, %v12616
  %v12618 = vpop.f32.mrf.mxu0
  %12619 = vdwg.mxu0
  %12620 = vxpose.xlu0.c.b16.start [1/8] %v10910, 128
  %12621 = vxpose.xlu0.c.b16.cont [2/8] %v11038, 128
  %12622 = vxpose.xlu0.c.b16.cont [3/8] 0, 128
  %12623 = vxpose.xlu0.c.b16.cont [4/8] 0, 128
  %12624 = vxpose.xlu0.c.b16.cont [5/8] 0, 128
  %12625 = vxpose.xlu0.c.b16.cont [6/8] 0, 128
  %12626 = vxpose.xlu0.c.b16.cont [7/8] 0, 128
  %12627 = vxpose.xlu0.c.b16.end [8/8] 0, 128
  %v12628 = vpop.trf.xlu0
  %v12629 = vpop.trf.xlu0
  %v12630 = vpop.trf.xlu0
  %v12631 = vpop.trf.xlu0
  %v12632 = vpop.trf.xlu0
  %v12633 = vpop.trf.xlu0
  %v12634 = vpop.trf.xlu0
  %v12635 = vpop.trf.xlu0
  %v12637 = vsel %vm242, %v12628, 0
  %12639 = vmatprep.subr.bf16.mxu0 0
  %12640 = vmatpush1.bf16.msra.mxu0 0
  %12641 = vmatprep.subr.bf16.mxu0 0
  %12642 = vmatpush1.bf16.msra.mxu0 0
  %12643 = vmatprep.subr.bf16.mxu0 0
  %12644 = vmatpush1.bf16.msra.mxu0 0
  %12645 = vmatprep.subr.bf16.mxu0 0
  %12646 = vmatpush1.bf16.msra.mxu0 0
  %12647 = vmatprep.subr.bf16.mxu0 0
  %12648 = vmatpush1.bf16.msra.mxu0 0
  %12649 = vmatprep.subr.bf16.mxu0 0
  %12650 = vmatpush1.bf16.msra.mxu0 0
  %12651 = vmatprep.subr.bf16.mxu0 0
  %12652 = vmatpush1.bf16.msra.mxu0 %v9518
  %12653 = vmatprep.subr.bf16.mxu0 0
  %12654 = vmatpush1.bf16.msra.mxu0 %v9390
  %12655 = vmatprep.subr.bf16.mxu0 0
  %12656 = vmatpush2.bf16.msra.mxu0 0
  %12657 = vmatprep.subr.bf16.mxu0 0
  %12658 = vmatpush2.bf16.msra.mxu0 0
  %12659 = vmatprep.subr.bf16.mxu0 0
  %12660 = vmatpush2.bf16.msra.mxu0 0
  %12661 = vmatprep.subr.bf16.mxu0 0
  %12662 = vmatpush2.bf16.msra.mxu0 0
  %12663 = vmatprep.subr.bf16.mxu0 0
  %12664 = vmatpush2.bf16.msra.mxu0 0
  %12665 = vmatprep.subr.bf16.mxu0 0
  %12666 = vmatpush2.bf16.msra.mxu0 0
  %12667 = vmatprep.subr.bf16.mxu0 0
  %12668 = vmatpush2.bf16.msra.mxu0 0
  %12669 = vmatprep.subr.bf16.mxu0 0
  %12670 = vmatpush2.bf16.msra.mxu0 0
  %12671 = vmatprep.mubr.bf16.mxu0 0
  %12672 = vmatmul.mubr.bf16.gmra.mxu0 %v12637
  %v12673 = vpop.f32.mrf.mxu0
  %v12674 = vadd.f32 0.0, %v12673
  %v12675 = vpop.f32.mrf.mxu0
  %v12676 = vpop.f32.mrf.mxu0
  %v12677 = vadd.f32 0.0, %v12676
  %v12678 = vpop.f32.mrf.mxu0
  %12679 = vdwg.mxu0
  %12680 = vxpose.xlu0.c.b16.start [1/8] %v10914, 128
  %12681 = vxpose.xlu0.c.b16.cont [2/8] %v11042, 128
  %12682 = vxpose.xlu0.c.b16.cont [3/8] 0, 128
  %12683 = vxpose.xlu0.c.b16.cont [4/8] 0, 128
  %12684 = vxpose.xlu0.c.b16.cont [5/8] 0, 128
  %12685 = vxpose.xlu0.c.b16.cont [6/8] 0, 128
  %12686 = vxpose.xlu0.c.b16.cont [7/8] 0, 128
  %12687 = vxpose.xlu0.c.b16.end [8/8] 0, 128
  %v12688 = vpop.trf.xlu0
  %v12689 = vpop.trf.xlu0
  %v12690 = vpop.trf.xlu0
  %v12691 = vpop.trf.xlu0
  %v12692 = vpop.trf.xlu0
  %v12693 = vpop.trf.xlu0
  %v12694 = vpop.trf.xlu0
  %v12695 = vpop.trf.xlu0
  %v12697 = vsel %vm242, %v12688, 0
  %12699 = vmatprep.subr.bf16.mxu0 0
  %12700 = vmatpush1.bf16.msra.mxu0 0
  %12701 = vmatprep.subr.bf16.mxu0 0
  %12702 = vmatpush1.bf16.msra.mxu0 0
  %12703 = vmatprep.subr.bf16.mxu0 0
  %12704 = vmatpush1.bf16.msra.mxu0 0
  %12705 = vmatprep.subr.bf16.mxu0 0
  %12706 = vmatpush1.bf16.msra.mxu0 0
  %12707 = vmatprep.subr.bf16.mxu0 0
  %12708 = vmatpush1.bf16.msra.mxu0 0
  %12709 = vmatprep.subr.bf16.mxu0 0
  %12710 = vmatpush1.bf16.msra.mxu0 0
  %12711 = vmatprep.subr.bf16.mxu0 0
  %12712 = vmatpush1.bf16.msra.mxu0 %v9522
  %12713 = vmatprep.subr.bf16.mxu0 0
  %12714 = vmatpush1.bf16.msra.mxu0 %v9394
  %12715 = vmatprep.subr.bf16.mxu0 0
  %12716 = vmatpush2.bf16.msra.mxu0 0
  %12717 = vmatprep.subr.bf16.mxu0 0
  %12718 = vmatpush2.bf16.msra.mxu0 0
  %12719 = vmatprep.subr.bf16.mxu0 0
  %12720 = vmatpush2.bf16.msra.mxu0 0
  %12721 = vmatprep.subr.bf16.mxu0 0
  %12722 = vmatpush2.bf16.msra.mxu0 0
  %12723 = vmatprep.subr.bf16.mxu0 0
  %12724 = vmatpush2.bf16.msra.mxu0 0
  %12725 = vmatprep.subr.bf16.mxu0 0
  %12726 = vmatpush2.bf16.msra.mxu0 0
  %12727 = vmatprep.subr.bf16.mxu0 0
  %12728 = vmatpush2.bf16.msra.mxu0 0
  %12729 = vmatprep.subr.bf16.mxu0 0
  %12730 = vmatpush2.bf16.msra.mxu0 0
  %12731 = vmatprep.mubr.bf16.mxu0 0
  %12732 = vmatmul.mubr.bf16.gmra.mxu0 %v12697
  %v12733 = vpop.f32.mrf.mxu0
  %v12734 = vadd.f32 0.0, %v12733
  %v12735 = vpop.f32.mrf.mxu0
  %v12736 = vpop.f32.mrf.mxu0
  %v12737 = vadd.f32 0.0, %v12736
  %v12738 = vpop.f32.mrf.mxu0
  %12739 = vdwg.mxu0
  %12740 = vxpose.xlu0.c.b16.start [1/8] %v10918, 128
  %12741 = vxpose.xlu0.c.b16.cont [2/8] %v11046, 128
  %12742 = vxpose.xlu0.c.b16.cont [3/8] 0, 128
  %12743 = vxpose.xlu0.c.b16.cont [4/8] 0, 128
  %12744 = vxpose.xlu0.c.b16.cont [5/8] 0, 128
  %12745 = vxpose.xlu0.c.b16.cont [6/8] 0, 128
  %12746 = vxpose.xlu0.c.b16.cont [7/8] 0, 128
  %12747 = vxpose.xlu0.c.b16.end [8/8] 0, 128
  %v12748 = vpop.trf.xlu0
  %v12749 = vpop.trf.xlu0
  %v12750 = vpop.trf.xlu0
  %v12751 = vpop.trf.xlu0
  %v12752 = vpop.trf.xlu0
  %v12753 = vpop.trf.xlu0
  %v12754 = vpop.trf.xlu0
  %v12755 = vpop.trf.xlu0
  %v12757 = vsel %vm242, %v12748, 0
  %12759 = vmatprep.subr.bf16.mxu0 0
  %12760 = vmatpush1.bf16.msra.mxu0 0
  %12761 = vmatprep.subr.bf16.mxu0 0
  %12762 = vmatpush1.bf16.msra.mxu0 0
  %12763 = vmatprep.subr.bf16.mxu0 0
  %12764 = vmatpush1.bf16.msra.mxu0 0
  %12765 = vmatprep.subr.bf16.mxu0 0
  %12766 = vmatpush1.bf16.msra.mxu0 0
  %12767 = vmatprep.subr.bf16.mxu0 0
  %12768 = vmatpush1.bf16.msra.mxu0 0
  %12769 = vmatprep.subr.bf16.mxu0 0
  %12770 = vmatpush1.bf16.msra.mxu0 0
  %12771 = vmatprep.subr.bf16.mxu0 0
  %12772 = vmatpush1.bf16.msra.mxu0 %v9526
  %12773 = vmatprep.subr.bf16.mxu0 0
  %12774 = vmatpush1.bf16.msra.mxu0 %v9398
  %12775 = vmatprep.subr.bf16.mxu0 0
  %12776 = vmatpush2.bf16.msra.mxu0 0
  %12777 = vmatprep.subr.bf16.mxu0 0
  %12778 = vmatpush2.bf16.msra.mxu0 0
  %12779 = vmatprep.subr.bf16.mxu0 0
  %12780 = vmatpush2.bf16.msra.mxu0 0
  %12781 = vmatprep.subr.bf16.mxu0 0
  %12782 = vmatpush2.bf16.msra.mxu0 0
  %12783 = vmatprep.subr.bf16.mxu0 0
  %12784 = vmatpush2.bf16.msra.mxu0 0
  %12785 = vmatprep.subr.bf16.mxu0 0
  %12786 = vmatpush2.bf16.msra.mxu0 0
  %12787 = vmatprep.subr.bf16.mxu0 0
  %12788 = vmatpush2.bf16.msra.mxu0 0
  %12789 = vmatprep.subr.bf16.mxu0 0
  %12790 = vmatpush2.bf16.msra.mxu0 0
  %12791 = vmatprep.mubr.bf16.mxu0 0
  %12792 = vmatmul.mubr.bf16.gmra.mxu0 %v12757
  %v12793 = vpop.f32.mrf.mxu0
  %v12794 = vadd.f32 0.0, %v12793
  %v12795 = vpop.f32.mrf.mxu0
  %v12796 = vpop.f32.mrf.mxu0
  %v12797 = vadd.f32 0.0, %v12796
  %v12798 = vpop.f32.mrf.mxu0
  %12799 = vdwg.mxu0
  %12800 = vxpose.xlu0.c.b16.start [1/8] %v10922, 128
  %12801 = vxpose.xlu0.c.b16.cont [2/8] %v11050, 128
  %12802 = vxpose.xlu0.c.b16.cont [3/8] 0, 128
  %12803 = vxpose.xlu0.c.b16.cont [4/8] 0, 128
  %12804 = vxpose.xlu0.c.b16.cont [5/8] 0, 128
  %12805 = vxpose.xlu0.c.b16.cont [6/8] 0, 128
  %12806 = vxpose.xlu0.c.b16.cont [7/8] 0, 128
  %12807 = vxpose.xlu0.c.b16.end [8/8] 0, 128
  %v12808 = vpop.trf.xlu0
  %v12809 = vpop.trf.xlu0
  %v12810 = vpop.trf.xlu0
  %v12811 = vpop.trf.xlu0
  %v12812 = vpop.trf.xlu0
  %v12813 = vpop.trf.xlu0
  %v12814 = vpop.trf.xlu0
  %v12815 = vpop.trf.xlu0
  %v12817 = vsel %vm242, %v12808, 0
  %12819 = vmatprep.subr.bf16.mxu0 0
  %12820 = vmatpush1.bf16.msra.mxu0 0
  %12821 = vmatprep.subr.bf16.mxu0 0
  %12822 = vmatpush1.bf16.msra.mxu0 0
  %12823 = vmatprep.subr.bf16.mxu0 0
  %12824 = vmatpush1.bf16.msra.mxu0 0
  %12825 = vmatprep.subr.bf16.mxu0 0
  %12826 = vmatpush1.bf16.msra.mxu0 0
  %12827 = vmatprep.subr.bf16.mxu0 0
  %12828 = vmatpush1.bf16.msra.mxu0 0
  %12829 = vmatprep.subr.bf16.mxu0 0
  %12830 = vmatpush1.bf16.msra.mxu0 0
  %12831 = vmatprep.subr.bf16.mxu0 0
  %12832 = vmatpush1.bf16.msra.mxu0 %v9530
  %12833 = vmatprep.subr.bf16.mxu0 0
  %12834 = vmatpush1.bf16.msra.mxu0 %v9402
  %12835 = vmatprep.subr.bf16.mxu0 0
  %12836 = vmatpush2.bf16.msra.mxu0 0
  %12837 = vmatprep.subr.bf16.mxu0 0
  %12838 = vmatpush2.bf16.msra.mxu0 0
  %12839 = vmatprep.subr.bf16.mxu0 0
  %12840 = vmatpush2.bf16.msra.mxu0 0
  %12841 = vmatprep.subr.bf16.mxu0 0
  %12842 = vmatpush2.bf16.msra.mxu0 0
  %12843 = vmatprep.subr.bf16.mxu0 0
  %12844 = vmatpush2.bf16.msra.mxu0 0
  %12845 = vmatprep.subr.bf16.mxu0 0
  %12846 = vmatpush2.bf16.msra.mxu0 0
  %12847 = vmatprep.subr.bf16.mxu0 0
  %12848 = vmatpush2.bf16.msra.mxu0 0
  %12849 = vmatprep.subr.bf16.mxu0 0
  %12850 = vmatpush2.bf16.msra.mxu0 0
  %12851 = vmatprep.mubr.bf16.mxu0 0
  %12852 = vmatmul.mubr.bf16.gmra.mxu0 %v12817
  %v12853 = vpop.f32.mrf.mxu0
  %v12854 = vadd.f32 0.0, %v12853
  %v12855 = vpop.f32.mrf.mxu0
  %v12856 = vpop.f32.mrf.mxu0
  %v12857 = vadd.f32 0.0, %v12856
  %v12858 = vpop.f32.mrf.mxu0
  %12859 = vdwg.mxu0
  %12860 = vxpose.xlu0.c.b16.start [1/8] %v10926, 128
  %12861 = vxpose.xlu0.c.b16.cont [2/8] %v11054, 128
  %12862 = vxpose.xlu0.c.b16.cont [3/8] 0, 128
  %12863 = vxpose.xlu0.c.b16.cont [4/8] 0, 128
  %12864 = vxpose.xlu0.c.b16.cont [5/8] 0, 128
  %12865 = vxpose.xlu0.c.b16.cont [6/8] 0, 128
  %12866 = vxpose.xlu0.c.b16.cont [7/8] 0, 128
  %12867 = vxpose.xlu0.c.b16.end [8/8] 0, 128
  %v12868 = vpop.trf.xlu0
  %v12869 = vpop.trf.xlu0
  %v12870 = vpop.trf.xlu0
  %v12871 = vpop.trf.xlu0
  %v12872 = vpop.trf.xlu0
  %v12873 = vpop.trf.xlu0
  %v12874 = vpop.trf.xlu0
  %v12875 = vpop.trf.xlu0
  %v12877 = vsel %vm242, %v12868, 0
  %12879 = vmatprep.subr.bf16.mxu0 0
  %12880 = vmatpush1.bf16.msra.mxu0 0
  %12881 = vmatprep.subr.bf16.mxu0 0
  %12882 = vmatpush1.bf16.msra.mxu0 0
  %12883 = vmatprep.subr.bf16.mxu0 0
  %12884 = vmatpush1.bf16.msra.mxu0 0
  %12885 = vmatprep.subr.bf16.mxu0 0
  %12886 = vmatpush1.bf16.msra.mxu0 0
  %12887 = vmatprep.subr.bf16.mxu0 0
  %12888 = vmatpush1.bf16.msra.mxu0 0
  %12889 = vmatprep.subr.bf16.mxu0 0
  %12890 = vmatpush1.bf16.msra.mxu0 0
  %12891 = vmatprep.subr.bf16.mxu0 0
  %12892 = vmatpush1.bf16.msra.mxu0 %v9534
  %12893 = vmatprep.subr.bf16.mxu0 0
  %12894 = vmatpush1.bf16.msra.mxu0 %v9406
  %12895 = vmatprep.subr.bf16.mxu0 0
  %12896 = vmatpush2.bf16.msra.mxu0 0
  %12897 = vmatprep.subr.bf16.mxu0 0
  %12898 = vmatpush2.bf16.msra.mxu0 0
  %12899 = vmatprep.subr.bf16.mxu0 0
  %12900 = vmatpush2.bf16.msra.mxu0 0
  %12901 = vmatprep.subr.bf16.mxu0 0
  %12902 = vmatpush2.bf16.msra.mxu0 0
  %12903 = vmatprep.subr.bf16.mxu0 0
  %12904 = vmatpush2.bf16.msra.mxu0 0
  %12905 = vmatprep.subr.bf16.mxu0 0
  %12906 = vmatpush2.bf16.msra.mxu0 0
  %12907 = vmatprep.subr.bf16.mxu0 0
  %12908 = vmatpush2.bf16.msra.mxu0 0
  %12909 = vmatprep.subr.bf16.mxu0 0
  %12910 = vmatpush2.bf16.msra.mxu0 0
  %12911 = vmatprep.mubr.bf16.mxu0 0
  %12912 = vmatmul.mubr.bf16.gmra.mxu0 %v12877
  %v12913 = vpop.f32.mrf.mxu0
  %v12914 = vadd.f32 0.0, %v12913
  %v12915 = vpop.f32.mrf.mxu0
  %v12916 = vpop.f32.mrf.mxu0
  %v12917 = vadd.f32 0.0, %v12916
  %v12918 = vpop.f32.mrf.mxu0
  %12919 = vdwg.mxu0
  %12920 = vxpose.xlu0.c.b16.start [1/8] %v10930, 128
  %12921 = vxpose.xlu0.c.b16.cont [2/8] %v11058, 128
  %12922 = vxpose.xlu0.c.b16.cont [3/8] 0, 128
  %12923 = vxpose.xlu0.c.b16.cont [4/8] 0, 128
  %12924 = vxpose.xlu0.c.b16.cont [5/8] 0, 128
  %12925 = vxpose.xlu0.c.b16.cont [6/8] 0, 128
  %12926 = vxpose.xlu0.c.b16.cont [7/8] 0, 128
  %12927 = vxpose.xlu0.c.b16.end [8/8] 0, 128
  %v12928 = vpop.trf.xlu0
  %v12929 = vpop.trf.xlu0
  %v12930 = vpop.trf.xlu0
  %v12931 = vpop.trf.xlu0
  %v12932 = vpop.trf.xlu0
  %v12933 = vpop.trf.xlu0
  %v12934 = vpop.trf.xlu0
  %v12935 = vpop.trf.xlu0
  %v12937 = vsel %vm242, %v12928, 0
  %12939 = vmatprep.subr.bf16.mxu0 0
  %12940 = vmatpush1.bf16.msra.mxu0 0
  %12941 = vmatprep.subr.bf16.mxu0 0
  %12942 = vmatpush1.bf16.msra.mxu0 0
  %12943 = vmatprep.subr.bf16.mxu0 0
  %12944 = vmatpush1.bf16.msra.mxu0 0
  %12945 = vmatprep.subr.bf16.mxu0 0
  %12946 = vmatpush1.bf16.msra.mxu0 0
  %12947 = vmatprep.subr.bf16.mxu0 0
  %12948 = vmatpush1.bf16.msra.mxu0 0
  %12949 = vmatprep.subr.bf16.mxu0 0
  %12950 = vmatpush1.bf16.msra.mxu0 0
  %12951 = vmatprep.subr.bf16.mxu0 0
  %12952 = vmatpush1.bf16.msra.mxu0 %v9538
  %12953 = vmatprep.subr.bf16.mxu0 0
  %12954 = vmatpush1.bf16.msra.mxu0 %v9410
  %12955 = vmatprep.subr.bf16.mxu0 0
  %12956 = vmatpush2.bf16.msra.mxu0 0
  %12957 = vmatprep.subr.bf16.mxu0 0
  %12958 = vmatpush2.bf16.msra.mxu0 0
  %12959 = vmatprep.subr.bf16.mxu0 0
  %12960 = vmatpush2.bf16.msra.mxu0 0
  %12961 = vmatprep.subr.bf16.mxu0 0
  %12962 = vmatpush2.bf16.msra.mxu0 0
  %12963 = vmatprep.subr.bf16.mxu0 0
  %12964 = vmatpush2.bf16.msra.mxu0 0
  %12965 = vmatprep.subr.bf16.mxu0 0
  %12966 = vmatpush2.bf16.msra.mxu0 0
  %12967 = vmatprep.subr.bf16.mxu0 0
  %12968 = vmatpush2.bf16.msra.mxu0 0
  %12969 = vmatprep.subr.bf16.mxu0 0
  %12970 = vmatpush2.bf16.msra.mxu0 0
  %12971 = vmatprep.mubr.bf16.mxu0 0
  %12972 = vmatmul.mubr.bf16.gmra.mxu0 %v12937
  %v12973 = vpop.f32.mrf.mxu0
  %v12974 = vadd.f32 0.0, %v12973
  %v12975 = vpop.f32.mrf.mxu0
  %v12976 = vpop.f32.mrf.mxu0
  %v12977 = vadd.f32 0.0, %v12976
  %v12978 = vpop.f32.mrf.mxu0
  %12979 = vdwg.mxu0
  %v12980 = vcombine.low %v11114, %v11234
  %v12981 = vcombine.high %v11114, %v11234
  %v12983 = vunpack.c.l.s4 1983009808
  %v12984 = vunpack.c.0.s8 %v12983
  %v12985 = vlaneseq
  %v12986 = vshrl.u32 %v12985, 7
  %v12987 = vsub.s32 %v12984, %v12986
  %v12988 = vrot.slane %v12980, %v12987
  %v12990 = vunpack.c.l.s4 1983009808
  %v12991 = vunpack.c.0.s8 %v12990
  %v12992 = vlaneseq
  %v12993 = vshrl.u32 %v12992, 7
  %v12994 = vsub.s32 %v12991, %v12993
  %v12995 = vrot.slane %v12981, %v12994
  %v12996 = vcombine.low %v11174, %v11294
  %v12997 = vcombine.high %v11174, %v11294
  %v12999 = vunpack.c.l.s4 1983009808
  %v13000 = vunpack.c.0.s8 %v12999
  %v13001 = vlaneseq
  %v13002 = vshrl.u32 %v13001, 7
  %v13003 = vsub.s32 %v13000, %v13002
  %v13004 = vrot.slane %v12996, %v13003
  %v13006 = vunpack.c.l.s4 1983009808
  %v13007 = vunpack.c.0.s8 %v13006
  %v13008 = vlaneseq
  %v13009 = vshrl.u32 %v13008, 7
  %v13010 = vsub.s32 %v13007, %v13009
  %v13011 = vrot.slane %v12997, %v13010
  %v13012 = vcombine.low %v11354, %v11474
  %v13013 = vcombine.high %v11354, %v11474
  %v13015 = vunpack.c.l.s4 1983009808
  %v13016 = vunpack.c.0.s8 %v13015
  %v13017 = vlaneseq
  %v13018 = vshrl.u32 %v13017, 7
  %v13019 = vsub.s32 %v13016, %v13018
  %v13020 = vrot.slane %v13012, %v13019
  %v13022 = vunpack.c.l.s4 1983009808
  %v13023 = vunpack.c.0.s8 %v13022
  %v13024 = vlaneseq
  %v13025 = vshrl.u32 %v13024, 7
  %v13026 = vsub.s32 %v13023, %v13025
  %v13027 = vrot.slane %v13013, %v13026
  %v13028 = vcombine.low %v11414, %v11534
  %v13029 = vcombine.high %v11414, %v11534
  %v13031 = vunpack.c.l.s4 1983009808
  %v13032 = vunpack.c.0.s8 %v13031
  %v13033 = vlaneseq
  %v13034 = vshrl.u32 %v13033, 7
  %v13035 = vsub.s32 %v13032, %v13034
  %v13036 = vrot.slane %v13028, %v13035
  %v13038 = vunpack.c.l.s4 1983009808
  %v13039 = vunpack.c.0.s8 %v13038
  %v13040 = vlaneseq
  %v13041 = vshrl.u32 %v13040, 7
  %v13042 = vsub.s32 %v13039, %v13041
  %v13043 = vrot.slane %v13029, %v13042
  %v13044 = vcombine.low %v12988, %v13004
  %v13045 = vcombine.high %v12988, %v13004
  %v13047 = vunpack.c.l.s4 1934713408
  %v13048 = vunpack.c.0.s8 %v13047
  %v13049 = vlaneseq
  %v13050 = vshrl.u32 %v13049, 7
  %v13051 = vsub.s32 %v13048, %v13050
  %v13052 = vrot.slane %v13044, %v13051
  %v13054 = vunpack.c.l.s4 1934713408
  %v13055 = vunpack.c.0.s8 %v13054
  %v13056 = vlaneseq
  %v13057 = vshrl.u32 %v13056, 7
  %v13058 = vsub.s32 %v13055, %v13057
  %v13059 = vrot.slane %v13045, %v13058
  %v13060 = vcombine.low %v12995, %v13011
  %v13061 = vcombine.high %v12995, %v13011
  %v13063 = vunpack.c.l.s4 1934713408
  %v13064 = vunpack.c.0.s8 %v13063
  %v13065 = vlaneseq
  %v13066 = vshrl.u32 %v13065, 7
  %v13067 = vsub.s32 %v13064, %v13066
  %v13068 = vrot.slane %v13060, %v13067
  %v13070 = vunpack.c.l.s4 1934713408
  %v13071 = vunpack.c.0.s8 %v13070
  %v13072 = vlaneseq
  %v13073 = vshrl.u32 %v13072, 7
  %v13074 = vsub.s32 %v13071, %v13073
  %v13075 = vrot.slane %v13061, %v13074
  %v13076 = vcombine.low %v13020, %v13036
  %v13077 = vcombine.high %v13020, %v13036
  %v13079 = vunpack.c.l.s4 1934713408
  %v13080 = vunpack.c.0.s8 %v13079
  %v13081 = vlaneseq
  %v13082 = vshrl.u32 %v13081, 7
  %v13083 = vsub.s32 %v13080, %v13082
  %v13084 = vrot.slane %v13076, %v13083
  %v13086 = vunpack.c.l.s4 1934713408
  %v13087 = vunpack.c.0.s8 %v13086
  %v13088 = vlaneseq
  %v13089 = vshrl.u32 %v13088, 7
  %v13090 = vsub.s32 %v13087, %v13089
  %v13091 = vrot.slane %v13077, %v13090
  %v13092 = vcombine.low %v13027, %v13043
  %v13093 = vcombine.high %v13027, %v13043
  %v13095 = vunpack.c.l.s4 1934713408
  %v13096 = vunpack.c.0.s8 %v13095
  %v13097 = vlaneseq
  %v13098 = vshrl.u32 %v13097, 7
  %v13099 = vsub.s32 %v13096, %v13098
  %v13100 = vrot.slane %v13092, %v13099
  %v13102 = vunpack.c.l.s4 1934713408
  %v13103 = vunpack.c.0.s8 %v13102
  %v13104 = vlaneseq
  %v13105 = vshrl.u32 %v13104, 7
  %v13106 = vsub.s32 %v13103, %v13105
  %v13107 = vrot.slane %v13093, %v13106
  %v13108 = vcombine.low %v13052, %v13084
  %v13109 = vcombine.high %v13052, %v13084
  %v13110 = vcombine.low %v13059, %v13091
  %v13111 = vcombine.high %v13059, %v13091
  %v13112 = vcombine.low %v13068, %v13100
  %v13113 = vcombine.high %v13068, %v13100
  %v13114 = vcombine.low %v13075, %v13107
  %v13115 = vcombine.high %v13075, %v13107
  %v13116 = vcombine.low %v11594, %v11714
  %v13117 = vcombine.high %v11594, %v11714
  %v13119 = vunpack.c.l.s4 1983009808
  %v13120 = vunpack.c.0.s8 %v13119
  %v13121 = vlaneseq
  %v13122 = vshrl.u32 %v13121, 7
  %v13123 = vsub.s32 %v13120, %v13122
  %v13124 = vrot.slane %v13116, %v13123
  %v13126 = vunpack.c.l.s4 1983009808
  %v13127 = vunpack.c.0.s8 %v13126
  %v13128 = vlaneseq
  %v13129 = vshrl.u32 %v13128, 7
  %v13130 = vsub.s32 %v13127, %v13129
  %v13131 = vrot.slane %v13117, %v13130
  %v13132 = vcombine.low %v11654, %v11774
  %v13133 = vcombine.high %v11654, %v11774
  %v13135 = vunpack.c.l.s4 1983009808
  %v13136 = vunpack.c.0.s8 %v13135
  %v13137 = vlaneseq
  %v13138 = vshrl.u32 %v13137, 7
  %v13139 = vsub.s32 %v13136, %v13138
  %v13140 = vrot.slane %v13132, %v13139
  %v13142 = vunpack.c.l.s4 1983009808
  %v13143 = vunpack.c.0.s8 %v13142
  %v13144 = vlaneseq
  %v13145 = vshrl.u32 %v13144, 7
  %v13146 = vsub.s32 %v13143, %v13145
  %v13147 = vrot.slane %v13133, %v13146
  %v13148 = vcombine.low %v11834, %v11954
  %v13149 = vcombine.high %v11834, %v11954
  %v13151 = vunpack.c.l.s4 1983009808
  %v13152 = vunpack.c.0.s8 %v13151
  %v13153 = vlaneseq
  %v13154 = vshrl.u32 %v13153, 7
  %v13155 = vsub.s32 %v13152, %v13154
  %v13156 = vrot.slane %v13148, %v13155
  %v13158 = vunpack.c.l.s4 1983009808
  %v13159 = vunpack.c.0.s8 %v13158
  %v13160 = vlaneseq
  %v13161 = vshrl.u32 %v13160, 7
  %v13162 = vsub.s32 %v13159, %v13161
  %v13163 = vrot.slane %v13149, %v13162
  %v13164 = vcombine.low %v11894, %v12014
  %v13165 = vcombine.high %v11894, %v12014
  %v13167 = vunpack.c.l.s4 1983009808
  %v13168 = vunpack.c.0.s8 %v13167
  %v13169 = vlaneseq
  %v13170 = vshrl.u32 %v13169, 7
  %v13171 = vsub.s32 %v13168, %v13170
  %v13172 = vrot.slane %v13164, %v13171
  %v13174 = vunpack.c.l.s4 1983009808
  %v13175 = vunpack.c.0.s8 %v13174
  %v13176 = vlaneseq
  %v13177 = vshrl.u32 %v13176, 7
  %v13178 = vsub.s32 %v13175, %v13177
  %v13179 = vrot.slane %v13165, %v13178
  %v13180 = vcombine.low %v13124, %v13140
  %v13181 = vcombine.high %v13124, %v13140
  %v13183 = vunpack.c.l.s4 1934713408
  %v13184 = vunpack.c.0.s8 %v13183
  %v13185 = vlaneseq
  %v13186 = vshrl.u32 %v13185, 7
  %v13187 = vsub.s32 %v13184, %v13186
  %v13188 = vrot.slane %v13180, %v13187
  %v13190 = vunpack.c.l.s4 1934713408
  %v13191 = vunpack.c.0.s8 %v13190
  %v13192 = vlaneseq
  %v13193 = vshrl.u32 %v13192, 7
  %v13194 = vsub.s32 %v13191, %v13193
  %v13195 = vrot.slane %v13181, %v13194
  %v13196 = vcombine.low %v13131, %v13147
  %v13197 = vcombine.high %v13131, %v13147
  %v13199 = vunpack.c.l.s4 1934713408
  %v13200 = vunpack.c.0.s8 %v13199
  %v13201 = vlaneseq
  %v13202 = vshrl.u32 %v13201, 7
  %v13203 = vsub.s32 %v13200, %v13202
  %v13204 = vrot.slane %v13196, %v13203
  %v13206 = vunpack.c.l.s4 1934713408
  %v13207 = vunpack.c.0.s8 %v13206
  %v13208 = vlaneseq
  %v13209 = vshrl.u32 %v13208, 7
  %v13210 = vsub.s32 %v13207, %v13209
  %v13211 = vrot.slane %v13197, %v13210
  %v13212 = vcombine.low %v13156, %v13172
  %v13213 = vcombine.high %v13156, %v13172
  %v13215 = vunpack.c.l.s4 1934713408
  %v13216 = vunpack.c.0.s8 %v13215
  %v13217 = vlaneseq
  %v13218 = vshrl.u32 %v13217, 7
  %v13219 = vsub.s32 %v13216, %v13218
  %v13220 = vrot.slane %v13212, %v13219
  %v13222 = vunpack.c.l.s4 1934713408
  %v13223 = vunpack.c.0.s8 %v13222
  %v13224 = vlaneseq
  %v13225 = vshrl.u32 %v13224, 7
  %v13226 = vsub.s32 %v13223, %v13225
  %v13227 = vrot.slane %v13213, %v13226
  %v13228 = vcombine.low %v13163, %v13179
  %v13229 = vcombine.high %v13163, %v13179
  %v13231 = vunpack.c.l.s4 1934713408
  %v13232 = vunpack.c.0.s8 %v13231
  %v13233 = vlaneseq
  %v13234 = vshrl.u32 %v13233, 7
  %v13235 = vsub.s32 %v13232, %v13234
  %v13236 = vrot.slane %v13228, %v13235
  %v13238 = vunpack.c.l.s4 1934713408
  %v13239 = vunpack.c.0.s8 %v13238
  %v13240 = vlaneseq
  %v13241 = vshrl.u32 %v13240, 7
  %v13242 = vsub.s32 %v13239, %v13241
  %v13243 = vrot.slane %v13229, %v13242
  %v13244 = vcombine.low %v13188, %v13220
  %v13245 = vcombine.high %v13188, %v13220
  %v13246 = vcombine.low %v13195, %v13227
  %v13247 = vcombine.high %v13195, %v13227
  %v13248 = vcombine.low %v13204, %v13236
  %v13249 = vcombine.high %v13204, %v13236
  %v13250 = vcombine.low %v13211, %v13243
  %v13251 = vcombine.high %v13211, %v13243
  %v13252 = vcombine.low %v12074, %v12194
  %v13253 = vcombine.high %v12074, %v12194
  %v13255 = vunpack.c.l.s4 1983009808
  %v13256 = vunpack.c.0.s8 %v13255
  %v13257 = vlaneseq
  %v13258 = vshrl.u32 %v13257, 7
  %v13259 = vsub.s32 %v13256, %v13258
  %v13260 = vrot.slane %v13252, %v13259
  %v13262 = vunpack.c.l.s4 1983009808
  %v13263 = vunpack.c.0.s8 %v13262
  %v13264 = vlaneseq
  %v13265 = vshrl.u32 %v13264, 7
  %v13266 = vsub.s32 %v13263, %v13265
  %v13267 = vrot.slane %v13253, %v13266
  %v13268 = vcombine.low %v12134, %v12254
  %v13269 = vcombine.high %v12134, %v12254
  %v13271 = vunpack.c.l.s4 1983009808
  %v13272 = vunpack.c.0.s8 %v13271
  %v13273 = vlaneseq
  %v13274 = vshrl.u32 %v13273, 7
  %v13275 = vsub.s32 %v13272, %v13274
  %v13276 = vrot.slane %v13268, %v13275
  %v13278 = vunpack.c.l.s4 1983009808
  %v13279 = vunpack.c.0.s8 %v13278
  %v13280 = vlaneseq
  %v13281 = vshrl.u32 %v13280, 7
  %v13282 = vsub.s32 %v13279, %v13281
  %v13283 = vrot.slane %v13269, %v13282
  %v13284 = vcombine.low %v12314, %v12434
  %v13285 = vcombine.high %v12314, %v12434
  %v13287 = vunpack.c.l.s4 1983009808
  %v13288 = vunpack.c.0.s8 %v13287
  %v13289 = vlaneseq
  %v13290 = vshrl.u32 %v13289, 7
  %v13291 = vsub.s32 %v13288, %v13290
  %v13292 = vrot.slane %v13284, %v13291
  %v13294 = vunpack.c.l.s4 1983009808
  %v13295 = vunpack.c.0.s8 %v13294
  %v13296 = vlaneseq
  %v13297 = vshrl.u32 %v13296, 7
  %v13298 = vsub.s32 %v13295, %v13297
  %v13299 = vrot.slane %v13285, %v13298
  %v13300 = vcombine.low %v12374, %v12494
  %v13301 = vcombine.high %v12374, %v12494
  %v13303 = vunpack.c.l.s4 1983009808
  %v13304 = vunpack.c.0.s8 %v13303
  %v13305 = vlaneseq
  %v13306 = vshrl.u32 %v13305, 7
  %v13307 = vsub.s32 %v13304, %v13306
  %v13308 = vrot.slane %v13300, %v13307
  %v13310 = vunpack.c.l.s4 1983009808
  %v13311 = vunpack.c.0.s8 %v13310
  %v13312 = vlaneseq
  %v13313 = vshrl.u32 %v13312, 7
  %v13314 = vsub.s32 %v13311, %v13313
  %v13315 = vrot.slane %v13301, %v13314
  %v13316 = vcombine.low %v13260, %v13276
  %v13317 = vcombine.high %v13260, %v13276
  %v13319 = vunpack.c.l.s4 1934713408
  %v13320 = vunpack.c.0.s8 %v13319
  %v13321 = vlaneseq
  %v13322 = vshrl.u32 %v13321, 7
  %v13323 = vsub.s32 %v13320, %v13322
  %v13324 = vrot.slane %v13316, %v13323
  %v13326 = vunpack.c.l.s4 1934713408
  %v13327 = vunpack.c.0.s8 %v13326
  %v13328 = vlaneseq
  %v13329 = vshrl.u32 %v13328, 7
  %v13330 = vsub.s32 %v13327, %v13329
  %v13331 = vrot.slane %v13317, %v13330
  %v13332 = vcombine.low %v13267, %v13283
  %v13333 = vcombine.high %v13267, %v13283
  %v13335 = vunpack.c.l.s4 1934713408
  %v13336 = vunpack.c.0.s8 %v13335
  %v13337 = vlaneseq
  %v13338 = vshrl.u32 %v13337, 7
  %v13339 = vsub.s32 %v13336, %v13338
  %v13340 = vrot.slane %v13332, %v13339
  %v13342 = vunpack.c.l.s4 1934713408
  %v13343 = vunpack.c.0.s8 %v13342
  %v13344 = vlaneseq
  %v13345 = vshrl.u32 %v13344, 7
  %v13346 = vsub.s32 %v13343, %v13345
  %v13347 = vrot.slane %v13333, %v13346
  %v13348 = vcombine.low %v13292, %v13308
  %v13349 = vcombine.high %v13292, %v13308
  %v13351 = vunpack.c.l.s4 1934713408
  %v13352 = vunpack.c.0.s8 %v13351
  %v13353 = vlaneseq
  %v13354 = vshrl.u32 %v13353, 7
  %v13355 = vsub.s32 %v13352, %v13354
  %v13356 = vrot.slane %v13348, %v13355
  %v13358 = vunpack.c.l.s4 1934713408
  %v13359 = vunpack.c.0.s8 %v13358
  %v13360 = vlaneseq
  %v13361 = vshrl.u32 %v13360, 7
  %v13362 = vsub.s32 %v13359, %v13361
  %v13363 = vrot.slane %v13349, %v13362
  %v13364 = vcombine.low %v13299, %v13315
  %v13365 = vcombine.high %v13299, %v13315
  %v13367 = vunpack.c.l.s4 1934713408
  %v13368 = vunpack.c.0.s8 %v13367
  %v13369 = vlaneseq
  %v13370 = vshrl.u32 %v13369, 7
  %v13371 = vsub.s32 %v13368, %v13370
  %v13372 = vrot.slane %v13364, %v13371
  %v13374 = vunpack.c.l.s4 1934713408
  %v13375 = vunpack.c.0.s8 %v13374
  %v13376 = vlaneseq
  %v13377 = vshrl.u32 %v13376, 7
  %v13378 = vsub.s32 %v13375, %v13377
  %v13379 = vrot.slane %v13365, %v13378
  %v13380 = vcombine.low %v13324, %v13356
  %v13381 = vcombine.high %v13324, %v13356
  %v13382 = vcombine.low %v13331, %v13363
  %v13383 = vcombine.high %v13331, %v13363
  %v13384 = vcombine.low %v13340, %v13372
  %v13385 = vcombine.high %v13340, %v13372
  %v13386 = vcombine.low %v13347, %v13379
  %v13387 = vcombine.high %v13347, %v13379
  %v13388 = vcombine.low %v12554, %v12674
  %v13389 = vcombine.high %v12554, %v12674
  %v13391 = vunpack.c.l.s4 1983009808
  %v13392 = vunpack.c.0.s8 %v13391
  %v13393 = vlaneseq
  %v13394 = vshrl.u32 %v13393, 7
  %v13395 = vsub.s32 %v13392, %v13394
  %v13396 = vrot.slane %v13388, %v13395
  %v13398 = vunpack.c.l.s4 1983009808
  %v13399 = vunpack.c.0.s8 %v13398
  %v13400 = vlaneseq
  %v13401 = vshrl.u32 %v13400, 7
  %v13402 = vsub.s32 %v13399, %v13401
  %v13403 = vrot.slane %v13389, %v13402
  %v13404 = vcombine.low %v12614, %v12734
  %v13405 = vcombine.high %v12614, %v12734
  %v13407 = vunpack.c.l.s4 1983009808
  %v13408 = vunpack.c.0.s8 %v13407
  %v13409 = vlaneseq
  %v13410 = vshrl.u32 %v13409, 7
  %v13411 = vsub.s32 %v13408, %v13410
  %v13412 = vrot.slane %v13404, %v13411
  %v13414 = vunpack.c.l.s4 1983009808
  %v13415 = vunpack.c.0.s8 %v13414
  %v13416 = vlaneseq
  %v13417 = vshrl.u32 %v13416, 7
  %v13418 = vsub.s32 %v13415, %v13417
  %v13419 = vrot.slane %v13405, %v13418
  %v13420 = vcombine.low %v12794, %v12914
  %v13421 = vcombine.high %v12794, %v12914
  %v13423 = vunpack.c.l.s4 1983009808
  %v13424 = vunpack.c.0.s8 %v13423
  %v13425 = vlaneseq
  %v13426 = vshrl.u32 %v13425, 7
  %v13427 = vsub.s32 %v13424, %v13426
  %v13428 = vrot.slane %v13420, %v13427
  %v13430 = vunpack.c.l.s4 1983009808
  %v13431 = vunpack.c.0.s8 %v13430
  %v13432 = vlaneseq
  %v13433 = vshrl.u32 %v13432, 7
  %v13434 = vsub.s32 %v13431, %v13433
  %v13435 = vrot.slane %v13421, %v13434
  %v13436 = vcombine.low %v12854, %v12974
  %v13437 = vcombine.high %v12854, %v12974
  %v13439 = vunpack.c.l.s4 1983009808
  %v13440 = vunpack.c.0.s8 %v13439
  %v13441 = vlaneseq
  %v13442 = vshrl.u32 %v13441, 7
  %v13443 = vsub.s32 %v13440, %v13442
  %v13444 = vrot.slane %v13436, %v13443
  %v13446 = vunpack.c.l.s4 1983009808
  %v13447 = vunpack.c.0.s8 %v13446
  %v13448 = vlaneseq
  %v13449 = vshrl.u32 %v13448, 7
  %v13450 = vsub.s32 %v13447, %v13449
  %v13451 = vrot.slane %v13437, %v13450
  %v13452 = vcombine.low %v13396, %v13412
  %v13453 = vcombine.high %v13396, %v13412
  %v13455 = vunpack.c.l.s4 1934713408
  %v13456 = vunpack.c.0.s8 %v13455
  %v13457 = vlaneseq
  %v13458 = vshrl.u32 %v13457, 7
  %v13459 = vsub.s32 %v13456, %v13458
  %v13460 = vrot.slane %v13452, %v13459
  %v13462 = vunpack.c.l.s4 1934713408
  %v13463 = vunpack.c.0.s8 %v13462
  %v13464 = vlaneseq
  %v13465 = vshrl.u32 %v13464, 7
  %v13466 = vsub.s32 %v13463, %v13465
  %v13467 = vrot.slane %v13453, %v13466
  %v13468 = vcombine.low %v13403, %v13419
  %v13469 = vcombine.high %v13403, %v13419
  %v13471 = vunpack.c.l.s4 1934713408
  %v13472 = vunpack.c.0.s8 %v13471
  %v13473 = vlaneseq
  %v13474 = vshrl.u32 %v13473, 7
  %v13475 = vsub.s32 %v13472, %v13474
  %v13476 = vrot.slane %v13468, %v13475
  %v13478 = vunpack.c.l.s4 1934713408
  %v13479 = vunpack.c.0.s8 %v13478
  %v13480 = vlaneseq
  %v13481 = vshrl.u32 %v13480, 7
  %v13482 = vsub.s32 %v13479, %v13481
  %v13483 = vrot.slane %v13469, %v13482
  %v13484 = vcombine.low %v13428, %v13444
  %v13485 = vcombine.high %v13428, %v13444
  %v13487 = vunpack.c.l.s4 1934713408
  %v13488 = vunpack.c.0.s8 %v13487
  %v13489 = vlaneseq
  %v13490 = vshrl.u32 %v13489, 7
  %v13491 = vsub.s32 %v13488, %v13490
  %v13492 = vrot.slane %v13484, %v13491
  %v13494 = vunpack.c.l.s4 1934713408
  %v13495 = vunpack.c.0.s8 %v13494
  %v13496 = vlaneseq
  %v13497 = vshrl.u32 %v13496, 7
  %v13498 = vsub.s32 %v13495, %v13497
  %v13499 = vrot.slane %v13485, %v13498
  %v13500 = vcombine.low %v13435, %v13451
  %v13501 = vcombine.high %v13435, %v13451
  %v13503 = vunpack.c.l.s4 1934713408
  %v13504 = vunpack.c.0.s8 %v13503
  %v13505 = vlaneseq
  %v13506 = vshrl.u32 %v13505, 7
  %v13507 = vsub.s32 %v13504, %v13506
  %v13508 = vrot.slane %v13500, %v13507
  %v13510 = vunpack.c.l.s4 1934713408
  %v13511 = vunpack.c.0.s8 %v13510
  %v13512 = vlaneseq
  %v13513 = vshrl.u32 %v13512, 7
  %v13514 = vsub.s32 %v13511, %v13513
  %v13515 = vrot.slane %v13501, %v13514
  %v13516 = vcombine.low %v13460, %v13492
  %v13517 = vcombine.high %v13460, %v13492
  %v13518 = vcombine.low %v13467, %v13499
  %v13519 = vcombine.high %v13467, %v13499
  %v13520 = vcombine.low %v13476, %v13508
  %v13521 = vcombine.high %v13476, %v13508
  %v13522 = vcombine.low %v13483, %v13515
  %v13523 = vcombine.high %v13483, %v13515
  %v13524 = vcombine.low %v11117, %v11237
  %v13525 = vcombine.high %v11117, %v11237
  %v13527 = vunpack.c.l.s4 1983009808
  %v13528 = vunpack.c.0.s8 %v13527
  %v13529 = vlaneseq
  %v13530 = vshrl.u32 %v13529, 7
  %v13531 = vsub.s32 %v13528, %v13530
  %v13532 = vrot.slane %v13524, %v13531
  %v13534 = vunpack.c.l.s4 1983009808
  %v13535 = vunpack.c.0.s8 %v13534
  %v13536 = vlaneseq
  %v13537 = vshrl.u32 %v13536, 7
  %v13538 = vsub.s32 %v13535, %v13537
  %v13539 = vrot.slane %v13525, %v13538
  %v13540 = vcombine.low %v11177, %v11297
  %v13541 = vcombine.high %v11177, %v11297
  %v13543 = vunpack.c.l.s4 1983009808
  %v13544 = vunpack.c.0.s8 %v13543
  %v13545 = vlaneseq
  %v13546 = vshrl.u32 %v13545, 7
  %v13547 = vsub.s32 %v13544, %v13546
  %v13548 = vrot.slane %v13540, %v13547
  %v13550 = vunpack.c.l.s4 1983009808
  %v13551 = vunpack.c.0.s8 %v13550
  %v13552 = vlaneseq
  %v13553 = vshrl.u32 %v13552, 7
  %v13554 = vsub.s32 %v13551, %v13553
  %v13555 = vrot.slane %v13541, %v13554
  %v13556 = vcombine.low %v11357, %v11477
  %v13557 = vcombine.high %v11357, %v11477
  %v13559 = vunpack.c.l.s4 1983009808
  %v13560 = vunpack.c.0.s8 %v13559
  %v13561 = vlaneseq
  %v13562 = vshrl.u32 %v13561, 7
  %v13563 = vsub.s32 %v13560, %v13562
  %v13564 = vrot.slane %v13556, %v13563
  %v13566 = vunpack.c.l.s4 1983009808
  %v13567 = vunpack.c.0.s8 %v13566
  %v13568 = vlaneseq
  %v13569 = vshrl.u32 %v13568, 7
  %v13570 = vsub.s32 %v13567, %v13569
  %v13571 = vrot.slane %v13557, %v13570
  %v13572 = vcombine.low %v11417, %v11537
  %v13573 = vcombine.high %v11417, %v11537
  %v13575 = vunpack.c.l.s4 1983009808
  %v13576 = vunpack.c.0.s8 %v13575
  %v13577 = vlaneseq
  %v13578 = vshrl.u32 %v13577, 7
  %v13579 = vsub.s32 %v13576, %v13578
  %v13580 = vrot.slane %v13572, %v13579
  %v13582 = vunpack.c.l.s4 1983009808
  %v13583 = vunpack.c.0.s8 %v13582
  %v13584 = vlaneseq
  %v13585 = vshrl.u32 %v13584, 7
  %v13586 = vsub.s32 %v13583, %v13585
  %v13587 = vrot.slane %v13573, %v13586
  %v13588 = vcombine.low %v13532, %v13548
  %v13589 = vcombine.high %v13532, %v13548
  %v13591 = vunpack.c.l.s4 1934713408
  %v13592 = vunpack.c.0.s8 %v13591
  %v13593 = vlaneseq
  %v13594 = vshrl.u32 %v13593, 7
  %v13595 = vsub.s32 %v13592, %v13594
  %v13596 = vrot.slane %v13588, %v13595
  %v13598 = vunpack.c.l.s4 1934713408
  %v13599 = vunpack.c.0.s8 %v13598
  %v13600 = vlaneseq
  %v13601 = vshrl.u32 %v13600, 7
  %v13602 = vsub.s32 %v13599, %v13601
  %v13603 = vrot.slane %v13589, %v13602
  %v13604 = vcombine.low %v13539, %v13555
  %v13605 = vcombine.high %v13539, %v13555
  %v13607 = vunpack.c.l.s4 1934713408
  %v13608 = vunpack.c.0.s8 %v13607
  %v13609 = vlaneseq
  %v13610 = vshrl.u32 %v13609, 7
  %v13611 = vsub.s32 %v13608, %v13610
  %v13612 = vrot.slane %v13604, %v13611
  %v13614 = vunpack.c.l.s4 1934713408
  %v13615 = vunpack.c.0.s8 %v13614
  %v13616 = vlaneseq
  %v13617 = vshrl.u32 %v13616, 7
  %v13618 = vsub.s32 %v13615, %v13617
  %v13619 = vrot.slane %v13605, %v13618
  %v13620 = vcombine.low %v13564, %v13580
  %v13621 = vcombine.high %v13564, %v13580
  %v13623 = vunpack.c.l.s4 1934713408
  %v13624 = vunpack.c.0.s8 %v13623
  %v13625 = vlaneseq
  %v13626 = vshrl.u32 %v13625, 7
  %v13627 = vsub.s32 %v13624, %v13626
  %v13628 = vrot.slane %v13620, %v13627
  %v13630 = vunpack.c.l.s4 1934713408
  %v13631 = vunpack.c.0.s8 %v13630
  %v13632 = vlaneseq
  %v13633 = vshrl.u32 %v13632, 7
  %v13634 = vsub.s32 %v13631, %v13633
  %v13635 = vrot.slane %v13621, %v13634
  %v13636 = vcombine.low %v13571, %v13587
  %v13637 = vcombine.high %v13571, %v13587
  %v13639 = vunpack.c.l.s4 1934713408
  %v13640 = vunpack.c.0.s8 %v13639
  %v13641 = vlaneseq
  %v13642 = vshrl.u32 %v13641, 7
  %v13643 = vsub.s32 %v13640, %v13642
  %v13644 = vrot.slane %v13636, %v13643
  %v13646 = vunpack.c.l.s4 1934713408
  %v13647 = vunpack.c.0.s8 %v13646
  %v13648 = vlaneseq
  %v13649 = vshrl.u32 %v13648, 7
  %v13650 = vsub.s32 %v13647, %v13649
  %v13651 = vrot.slane %v13637, %v13650
  %v13652 = vcombine.low %v13596, %v13628
  %v13653 = vcombine.high %v13596, %v13628
  %v13654 = vcombine.low %v13603, %v13635
  %v13655 = vcombine.high %v13603, %v13635
  %v13656 = vcombine.low %v13612, %v13644
  %v13657 = vcombine.high %v13612, %v13644
  %v13658 = vcombine.low %v13619, %v13651
  %v13659 = vcombine.high %v13619, %v13651
  %v13660 = vcombine.low %v11597, %v11717
  %v13661 = vcombine.high %v11597, %v11717
  %v13663 = vunpack.c.l.s4 1983009808
  %v13664 = vunpack.c.0.s8 %v13663
  %v13665 = vlaneseq
  %v13666 = vshrl.u32 %v13665, 7
  %v13667 = vsub.s32 %v13664, %v13666
  %v13668 = vrot.slane %v13660, %v13667
  %v13670 = vunpack.c.l.s4 1983009808
  %v13671 = vunpack.c.0.s8 %v13670
  %v13672 = vlaneseq
  %v13673 = vshrl.u32 %v13672, 7
  %v13674 = vsub.s32 %v13671, %v13673
  %v13675 = vrot.slane %v13661, %v13674
  %v13676 = vcombine.low %v11657, %v11777
  %v13677 = vcombine.high %v11657, %v11777
  %v13679 = vunpack.c.l.s4 1983009808
  %v13680 = vunpack.c.0.s8 %v13679
  %v13681 = vlaneseq
  %v13682 = vshrl.u32 %v13681, 7
  %v13683 = vsub.s32 %v13680, %v13682
  %v13684 = vrot.slane %v13676, %v13683
  %v13686 = vunpack.c.l.s4 1983009808
  %v13687 = vunpack.c.0.s8 %v13686
  %v13688 = vlaneseq
  %v13689 = vshrl.u32 %v13688, 7
  %v13690 = vsub.s32 %v13687, %v13689
  %v13691 = vrot.slane %v13677, %v13690
  %v13692 = vcombine.low %v11837, %v11957
  %v13693 = vcombine.high %v11837, %v11957
  %v13695 = vunpack.c.l.s4 1983009808
  %v13696 = vunpack.c.0.s8 %v13695
  %v13697 = vlaneseq
  %v13698 = vshrl.u32 %v13697, 7
  %v13699 = vsub.s32 %v13696, %v13698
  %v13700 = vrot.slane %v13692, %v13699
  %v13702 = vunpack.c.l.s4 1983009808
  %v13703 = vunpack.c.0.s8 %v13702
  %v13704 = vlaneseq
  %v13705 = vshrl.u32 %v13704, 7
  %v13706 = vsub.s32 %v13703, %v13705
  %v13707 = vrot.slane %v13693, %v13706
  %v13708 = vcombine.low %v11897, %v12017
  %v13709 = vcombine.high %v11897, %v12017
  %v13711 = vunpack.c.l.s4 1983009808
  %v13712 = vunpack.c.0.s8 %v13711
  %v13713 = vlaneseq
  %v13714 = vshrl.u32 %v13713, 7
  %v13715 = vsub.s32 %v13712, %v13714
  %v13716 = vrot.slane %v13708, %v13715
  %v13718 = vunpack.c.l.s4 1983009808
  %v13719 = vunpack.c.0.s8 %v13718
  %v13720 = vlaneseq
  %v13721 = vshrl.u32 %v13720, 7
  %v13722 = vsub.s32 %v13719, %v13721
  %v13723 = vrot.slane %v13709, %v13722
  %v13724 = vcombine.low %v13668, %v13684
  %v13725 = vcombine.high %v13668, %v13684
  %v13727 = vunpack.c.l.s4 1934713408
  %v13728 = vunpack.c.0.s8 %v13727
  %v13729 = vlaneseq
  %v13730 = vshrl.u32 %v13729, 7
  %v13731 = vsub.s32 %v13728, %v13730
  %v13732 = vrot.slane %v13724, %v13731
  %v13734 = vunpack.c.l.s4 1934713408
  %v13735 = vunpack.c.0.s8 %v13734
  %v13736 = vlaneseq
  %v13737 = vshrl.u32 %v13736, 7
  %v13738 = vsub.s32 %v13735, %v13737
  %v13739 = vrot.slane %v13725, %v13738
  %v13740 = vcombine.low %v13675, %v13691
  %v13741 = vcombine.high %v13675, %v13691
  %v13743 = vunpack.c.l.s4 1934713408
  %v13744 = vunpack.c.0.s8 %v13743
  %v13745 = vlaneseq
  %v13746 = vshrl.u32 %v13745, 7
  %v13747 = vsub.s32 %v13744, %v13746
  %v13748 = vrot.slane %v13740, %v13747
  %v13750 = vunpack.c.l.s4 1934713408
  %v13751 = vunpack.c.0.s8 %v13750
  %v13752 = vlaneseq
  %v13753 = vshrl.u32 %v13752, 7
  %v13754 = vsub.s32 %v13751, %v13753
  %v13755 = vrot.slane %v13741, %v13754
  %v13756 = vcombine.low %v13700, %v13716
  %v13757 = vcombine.high %v13700, %v13716
  %v13759 = vunpack.c.l.s4 1934713408
  %v13760 = vunpack.c.0.s8 %v13759
  %v13761 = vlaneseq
  %v13762 = vshrl.u32 %v13761, 7
  %v13763 = vsub.s32 %v13760, %v13762
  %v13764 = vrot.slane %v13756, %v13763
  %v13766 = vunpack.c.l.s4 1934713408
  %v13767 = vunpack.c.0.s8 %v13766
  %v13768 = vlaneseq
  %v13769 = vshrl.u32 %v13768, 7
  %v13770 = vsub.s32 %v13767, %v13769
  %v13771 = vrot.slane %v13757, %v13770
  %v13772 = vcombine.low %v13707, %v13723
  %v13773 = vcombine.high %v13707, %v13723
  %v13775 = vunpack.c.l.s4 1934713408
  %v13776 = vunpack.c.0.s8 %v13775
  %v13777 = vlaneseq
  %v13778 = vshrl.u32 %v13777, 7
  %v13779 = vsub.s32 %v13776, %v13778
  %v13780 = vrot.slane %v13772, %v13779
  %v13782 = vunpack.c.l.s4 1934713408
  %v13783 = vunpack.c.0.s8 %v13782
  %v13784 = vlaneseq
  %v13785 = vshrl.u32 %v13784, 7
  %v13786 = vsub.s32 %v13783, %v13785
  %v13787 = vrot.slane %v13773, %v13786
  %v13788 = vcombine.low %v13732, %v13764
  %v13789 = vcombine.high %v13732, %v13764
  %v13790 = vcombine.low %v13739, %v13771
  %v13791 = vcombine.high %v13739, %v13771
  %v13792 = vcombine.low %v13748, %v13780
  %v13793 = vcombine.high %v13748, %v13780
  %v13794 = vcombine.low %v13755, %v13787
  %v13795 = vcombine.high %v13755, %v13787
  %v13796 = vcombine.low %v12077, %v12197
  %v13797 = vcombine.high %v12077, %v12197
  %v13799 = vunpack.c.l.s4 1983009808
  %v13800 = vunpack.c.0.s8 %v13799
  %v13801 = vlaneseq
  %v13802 = vshrl.u32 %v13801, 7
  %v13803 = vsub.s32 %v13800, %v13802
  %v13804 = vrot.slane %v13796, %v13803
  %v13806 = vunpack.c.l.s4 1983009808
  %v13807 = vunpack.c.0.s8 %v13806
  %v13808 = vlaneseq
  %v13809 = vshrl.u32 %v13808, 7
  %v13810 = vsub.s32 %v13807, %v13809
  %v13811 = vrot.slane %v13797, %v13810
  %v13812 = vcombine.low %v12137, %v12257
  %v13813 = vcombine.high %v12137, %v12257
  %v13815 = vunpack.c.l.s4 1983009808
  %v13816 = vunpack.c.0.s8 %v13815
  %v13817 = vlaneseq
  %v13818 = vshrl.u32 %v13817, 7
  %v13819 = vsub.s32 %v13816, %v13818
  %v13820 = vrot.slane %v13812, %v13819
  %v13822 = vunpack.c.l.s4 1983009808
  %v13823 = vunpack.c.0.s8 %v13822
  %v13824 = vlaneseq
  %v13825 = vshrl.u32 %v13824, 7
  %v13826 = vsub.s32 %v13823, %v13825
  %v13827 = vrot.slane %v13813, %v13826
  %v13828 = vcombine.low %v12317, %v12437
  %v13829 = vcombine.high %v12317, %v12437
  %v13831 = vunpack.c.l.s4 1983009808
  %v13832 = vunpack.c.0.s8 %v13831
  %v13833 = vlaneseq
  %v13834 = vshrl.u32 %v13833, 7
  %v13835 = vsub.s32 %v13832, %v13834
  %v13836 = vrot.slane %v13828, %v13835
  %v13838 = vunpack.c.l.s4 1983009808
  %v13839 = vunpack.c.0.s8 %v13838
  %v13840 = vlaneseq
  %v13841 = vshrl.u32 %v13840, 7
  %v13842 = vsub.s32 %v13839, %v13841
  %v13843 = vrot.slane %v13829, %v13842
  %v13844 = vcombine.low %v12377, %v12497
  %v13845 = vcombine.high %v12377, %v12497
  %v13847 = vunpack.c.l.s4 1983009808
  %v13848 = vunpack.c.0.s8 %v13847
  %v13849 = vlaneseq
  %v13850 = vshrl.u32 %v13849, 7
  %v13851 = vsub.s32 %v13848, %v13850
  %v13852 = vrot.slane %v13844, %v13851
  %v13854 = vunpack.c.l.s4 1983009808
  %v13855 = vunpack.c.0.s8 %v13854
  %v13856 = vlaneseq
  %v13857 = vshrl.u32 %v13856, 7
  %v13858 = vsub.s32 %v13855, %v13857
  %v13859 = vrot.slane %v13845, %v13858
  %v13860 = vcombine.low %v13804, %v13820
  %v13861 = vcombine.high %v13804, %v13820
  %v13863 = vunpack.c.l.s4 1934713408
  %v13864 = vunpack.c.0.s8 %v13863
  %v13865 = vlaneseq
  %v13866 = vshrl.u32 %v13865, 7
  %v13867 = vsub.s32 %v13864, %v13866
  %v13868 = vrot.slane %v13860, %v13867
  %v13870 = vunpack.c.l.s4 1934713408
  %v13871 = vunpack.c.0.s8 %v13870
  %v13872 = vlaneseq
  %v13873 = vshrl.u32 %v13872, 7
  %v13874 = vsub.s32 %v13871, %v13873
  %v13875 = vrot.slane %v13861, %v13874
  %v13876 = vcombine.low %v13811, %v13827
  %v13877 = vcombine.high %v13811, %v13827
  %v13879 = vunpack.c.l.s4 1934713408
  %v13880 = vunpack.c.0.s8 %v13879
  %v13881 = vlaneseq
  %v13882 = vshrl.u32 %v13881, 7
  %v13883 = vsub.s32 %v13880, %v13882
  %v13884 = vrot.slane %v13876, %v13883
  %v13886 = vunpack.c.l.s4 1934713408
  %v13887 = vunpack.c.0.s8 %v13886
  %v13888 = vlaneseq
  %v13889 = vshrl.u32 %v13888, 7
  %v13890 = vsub.s32 %v13887, %v13889
  %v13891 = vrot.slane %v13877, %v13890
  %v13892 = vcombine.low %v13836, %v13852
  %v13893 = vcombine.high %v13836, %v13852
  %v13895 = vunpack.c.l.s4 1934713408
  %v13896 = vunpack.c.0.s8 %v13895
  %v13897 = vlaneseq
  %v13898 = vshrl.u32 %v13897, 7
  %v13899 = vsub.s32 %v13896, %v13898
  %v13900 = vrot.slane %v13892, %v13899
  %v13902 = vunpack.c.l.s4 1934713408
  %v13903 = vunpack.c.0.s8 %v13902
  %v13904 = vlaneseq
  %v13905 = vshrl.u32 %v13904, 7
  %v13906 = vsub.s32 %v13903, %v13905
  %v13907 = vrot.slane %v13893, %v13906
  %v13908 = vcombine.low %v13843, %v13859
  %v13909 = vcombine.high %v13843, %v13859
  %v13911 = vunpack.c.l.s4 1934713408
  %v13912 = vunpack.c.0.s8 %v13911
  %v13913 = vlaneseq
  %v13914 = vshrl.u32 %v13913, 7
  %v13915 = vsub.s32 %v13912, %v13914
  %v13916 = vrot.slane %v13908, %v13915
  %v13918 = vunpack.c.l.s4 1934713408
  %v13919 = vunpack.c.0.s8 %v13918
  %v13920 = vlaneseq
  %v13921 = vshrl.u32 %v13920, 7
  %v13922 = vsub.s32 %v13919, %v13921
  %v13923 = vrot.slane %v13909, %v13922
  %v13924 = vcombine.low %v13868, %v13900
  %v13925 = vcombine.high %v13868, %v13900
  %v13926 = vcombine.low %v13875, %v13907
  %v13927 = vcombine.high %v13875, %v13907
  %v13928 = vcombine.low %v13884, %v13916
  %v13929 = vcombine.high %v13884, %v13916
  %v13930 = vcombine.low %v13891, %v13923
  %v13931 = vcombine.high %v13891, %v13923
  %v13932 = vcombine.low %v12557, %v12677
  %v13933 = vcombine.high %v12557, %v12677
  %v13935 = vunpack.c.l.s4 1983009808
  %v13936 = vunpack.c.0.s8 %v13935
  %v13937 = vlaneseq
  %v13938 = vshrl.u32 %v13937, 7
  %v13939 = vsub.s32 %v13936, %v13938
  %v13940 = vrot.slane %v13932, %v13939
  %v13942 = vunpack.c.l.s4 1983009808
  %v13943 = vunpack.c.0.s8 %v13942
  %v13944 = vlaneseq
  %v13945 = vshrl.u32 %v13944, 7
  %v13946 = vsub.s32 %v13943, %v13945
  %v13947 = vrot.slane %v13933, %v13946
  %v13948 = vcombine.low %v12617, %v12737
  %v13949 = vcombine.high %v12617, %v12737
  %v13951 = vunpack.c.l.s4 1983009808
  %v13952 = vunpack.c.0.s8 %v13951
  %v13953 = vlaneseq
  %v13954 = vshrl.u32 %v13953, 7
  %v13955 = vsub.s32 %v13952, %v13954
  %v13956 = vrot.slane %v13948, %v13955
  %v13958 = vunpack.c.l.s4 1983009808
  %v13959 = vunpack.c.0.s8 %v13958
  %v13960 = vlaneseq
  %v13961 = vshrl.u32 %v13960, 7
  %v13962 = vsub.s32 %v13959, %v13961
  %v13963 = vrot.slane %v13949, %v13962
  %v13964 = vcombine.low %v12797, %v12917
  %v13965 = vcombine.high %v12797, %v12917
  %v13967 = vunpack.c.l.s4 1983009808
  %v13968 = vunpack.c.0.s8 %v13967
  %v13969 = vlaneseq
  %v13970 = vshrl.u32 %v13969, 7
  %v13971 = vsub.s32 %v13968, %v13970
  %v13972 = vrot.slane %v13964, %v13971
  %v13974 = vunpack.c.l.s4 1983009808
  %v13975 = vunpack.c.0.s8 %v13974
  %v13976 = vlaneseq
  %v13977 = vshrl.u32 %v13976, 7
  %v13978 = vsub.s32 %v13975, %v13977
  %v13979 = vrot.slane %v13965, %v13978
  %v13980 = vcombine.low %v12857, %v12977
  %v13981 = vcombine.high %v12857, %v12977
  %v13983 = vunpack.c.l.s4 1983009808
  %v13984 = vunpack.c.0.s8 %v13983
  %v13985 = vlaneseq
  %v13986 = vshrl.u32 %v13985, 7
  %v13987 = vsub.s32 %v13984, %v13986
  %v13988 = vrot.slane %v13980, %v13987
  %v13990 = vunpack.c.l.s4 1983009808
  %v13991 = vunpack.c.0.s8 %v13990
  %v13992 = vlaneseq
  %v13993 = vshrl.u32 %v13992, 7
  %v13994 = vsub.s32 %v13991, %v13993
  %v13995 = vrot.slane %v13981, %v13994
  %v13996 = vcombine.low %v13940, %v13956
  %v13997 = vcombine.high %v13940, %v13956
  %v13999 = vunpack.c.l.s4 1934713408
  %v14000 = vunpack.c.0.s8 %v13999
  %v14001 = vlaneseq
  %v14002 = vshrl.u32 %v14001, 7
  %v14003 = vsub.s32 %v14000, %v14002
  %v14004 = vrot.slane %v13996, %v14003
  %v14006 = vunpack.c.l.s4 1934713408
  %v14007 = vunpack.c.0.s8 %v14006
  %v14008 = vlaneseq
  %v14009 = vshrl.u32 %v14008, 7
  %v14010 = vsub.s32 %v14007, %v14009
  %v14011 = vrot.slane %v13997, %v14010
  %v14012 = vcombine.low %v13947, %v13963
  %v14013 = vcombine.high %v13947, %v13963
  %v14015 = vunpack.c.l.s4 1934713408
  %v14016 = vunpack.c.0.s8 %v14015
  %v14017 = vlaneseq
  %v14018 = vshrl.u32 %v14017, 7
  %v14019 = vsub.s32 %v14016, %v14018
  %v14020 = vrot.slane %v14012, %v14019
  %v14022 = vunpack.c.l.s4 1934713408
  %v14023 = vunpack.c.0.s8 %v14022
  %v14024 = vlaneseq
  %v14025 = vshrl.u32 %v14024, 7
  %v14026 = vsub.s32 %v14023, %v14025
  %v14027 = vrot.slane %v14013, %v14026
  %v14028 = vcombine.low %v13972, %v13988
  %v14029 = vcombine.high %v13972, %v13988
  %v14031 = vunpack.c.l.s4 1934713408
  %v14032 = vunpack.c.0.s8 %v14031
  %v14033 = vlaneseq
  %v14034 = vshrl.u32 %v14033, 7
  %v14035 = vsub.s32 %v14032, %v14034
  %v14036 = vrot.slane %v14028, %v14035
  %v14038 = vunpack.c.l.s4 1934713408
  %v14039 = vunpack.c.0.s8 %v14038
  %v14040 = vlaneseq
  %v14041 = vshrl.u32 %v14040, 7
  %v14042 = vsub.s32 %v14039, %v14041
  %v14043 = vrot.slane %v14029, %v14042
  %v14044 = vcombine.low %v13979, %v13995
  %v14045 = vcombine.high %v13979, %v13995
  %v14047 = vunpack.c.l.s4 1934713408
  %v14048 = vunpack.c.0.s8 %v14047
  %v14049 = vlaneseq
  %v14050 = vshrl.u32 %v14049, 7
  %v14051 = vsub.s32 %v14048, %v14050
  %v14052 = vrot.slane %v14044, %v14051
  %v14054 = vunpack.c.l.s4 1934713408
  %v14055 = vunpack.c.0.s8 %v14054
  %v14056 = vlaneseq
  %v14057 = vshrl.u32 %v14056, 7
  %v14058 = vsub.s32 %v14055, %v14057
  %v14059 = vrot.slane %v14045, %v14058
  %v14060 = vcombine.low %v14004, %v14036
  %v14061 = vcombine.high %v14004, %v14036
  %v14062 = vcombine.low %v14011, %v14043
  %v14063 = vcombine.high %v14011, %v14043
  %v14064 = vcombine.low %v14020, %v14052
  %v14065 = vcombine.high %v14020, %v14052
  %v14066 = vcombine.low %v14027, %v14059
  %v14067 = vcombine.high %v14027, %v14059
  %14072 = vrot.lane.b32.xlu0 %v13109, 16
  %v14073 = vpop.permute.xlu0 %14072
  %14074 = vrot.lane.b32.xlu0 %v13245, 16
  %v14075 = vpop.permute.xlu0 %14074
  %14076 = vrot.lane.b32.xlu0 %v13381, 16
  %v14077 = vpop.permute.xlu0 %14076
  %14078 = vrot.lane.b32.xlu0 %v13517, 16
  %v14079 = vpop.permute.xlu0 %14078
  %14088 = vrot.lane.b32.xlu0 %v13110, 32
  %v14089 = vpop.permute.xlu0 %14088
  %14090 = vrot.lane.b32.xlu0 %v13246, 32
  %v14091 = vpop.permute.xlu0 %14090
  %14092 = vrot.lane.b32.xlu0 %v13382, 32
  %v14093 = vpop.permute.xlu0 %14092
  %14094 = vrot.lane.b32.xlu0 %v13518, 32
  %v14095 = vpop.permute.xlu0 %14094
  %14104 = vrot.lane.b32.xlu0 %v13111, 48
  %v14105 = vpop.permute.xlu0 %14104
  %14106 = vrot.lane.b32.xlu0 %v13247, 48
  %v14107 = vpop.permute.xlu0 %14106
  %14108 = vrot.lane.b32.xlu0 %v13383, 48
  %v14109 = vpop.permute.xlu0 %14108
  %14110 = vrot.lane.b32.xlu0 %v13519, 48
  %v14111 = vpop.permute.xlu0 %14110
  %14120 = vrot.lane.b32.xlu0 %v13112, 64
  %v14121 = vpop.permute.xlu0 %14120
  %14122 = vrot.lane.b32.xlu0 %v13248, 64
  %v14123 = vpop.permute.xlu0 %14122
  %14124 = vrot.lane.b32.xlu0 %v13384, 64
  %v14125 = vpop.permute.xlu0 %14124
  %14126 = vrot.lane.b32.xlu0 %v13520, 64
  %v14127 = vpop.permute.xlu0 %14126
  %14136 = vrot.lane.b32.xlu0 %v13113, 80
  %v14137 = vpop.permute.xlu0 %14136
  %14138 = vrot.lane.b32.xlu0 %v13249, 80
  %v14139 = vpop.permute.xlu0 %14138
  %14140 = vrot.lane.b32.xlu0 %v13385, 80
  %v14141 = vpop.permute.xlu0 %14140
  %14142 = vrot.lane.b32.xlu0 %v13521, 80
  %v14143 = vpop.permute.xlu0 %14142
  %14152 = vrot.lane.b32.xlu0 %v13114, 96
  %v14153 = vpop.permute.xlu0 %14152
  %14154 = vrot.lane.b32.xlu0 %v13250, 96
  %v14155 = vpop.permute.xlu0 %14154
  %14156 = vrot.lane.b32.xlu0 %v13386, 96
  %v14157 = vpop.permute.xlu0 %14156
  %14158 = vrot.lane.b32.xlu0 %v13522, 96
  %v14159 = vpop.permute.xlu0 %14158
  %14168 = vrot.lane.b32.xlu0 %v13115, 112
  %v14169 = vpop.permute.xlu0 %14168
  %14170 = vrot.lane.b32.xlu0 %v13251, 112
  %v14171 = vpop.permute.xlu0 %14170
  %14172 = vrot.lane.b32.xlu0 %v13387, 112
  %v14173 = vpop.permute.xlu0 %14172
  %14174 = vrot.lane.b32.xlu0 %v13523, 112
  %v14175 = vpop.permute.xlu0 %14174
  %14184 = vrot.lane.b32.xlu0 %v13653, 16
  %v14185 = vpop.permute.xlu0 %14184
  %14186 = vrot.lane.b32.xlu0 %v13789, 16
  %v14187 = vpop.permute.xlu0 %14186
  %14188 = vrot.lane.b32.xlu0 %v13925, 16
  %v14189 = vpop.permute.xlu0 %14188
  %14190 = vrot.lane.b32.xlu0 %v14061, 16
  %v14191 = vpop.permute.xlu0 %14190
  %14200 = vrot.lane.b32.xlu0 %v13654, 32
  %v14201 = vpop.permute.xlu0 %14200
  %14202 = vrot.lane.b32.xlu0 %v13790, 32
  %v14203 = vpop.permute.xlu0 %14202
  %14204 = vrot.lane.b32.xlu0 %v13926, 32
  %v14205 = vpop.permute.xlu0 %14204
  %14206 = vrot.lane.b32.xlu0 %v14062, 32
  %v14207 = vpop.permute.xlu0 %14206
  %14216 = vrot.lane.b32.xlu0 %v13655, 48
  %v14217 = vpop.permute.xlu0 %14216
  %14218 = vrot.lane.b32.xlu0 %v13791, 48
  %v14219 = vpop.permute.xlu0 %14218
  %14220 = vrot.lane.b32.xlu0 %v13927, 48
  %v14221 = vpop.permute.xlu0 %14220
  %14222 = vrot.lane.b32.xlu0 %v14063, 48
  %v14223 = vpop.permute.xlu0 %14222
  %14232 = vrot.lane.b32.xlu0 %v13656, 64
  %v14233 = vpop.permute.xlu0 %14232
  %14234 = vrot.lane.b32.xlu0 %v13792, 64
  %v14235 = vpop.permute.xlu0 %14234
  %14236 = vrot.lane.b32.xlu0 %v13928, 64
  %v14237 = vpop.permute.xlu0 %14236
  %14238 = vrot.lane.b32.xlu0 %v14064, 64
  %v14239 = vpop.permute.xlu0 %14238
  %14248 = vrot.lane.b32.xlu0 %v13657, 80
  %v14249 = vpop.permute.xlu0 %14248
  %14250 = vrot.lane.b32.xlu0 %v13793, 80
  %v14251 = vpop.permute.xlu0 %14250
  %14252 = vrot.lane.b32.xlu0 %v13929, 80
  %v14253 = vpop.permute.xlu0 %14252
  %14254 = vrot.lane.b32.xlu0 %v14065, 80
  %v14255 = vpop.permute.xlu0 %14254
  %14264 = vrot.lane.b32.xlu0 %v13658, 96
  %v14265 = vpop.permute.xlu0 %14264
  %14266 = vrot.lane.b32.xlu0 %v13794, 96
  %v14267 = vpop.permute.xlu0 %14266
  %14268 = vrot.lane.b32.xlu0 %v13930, 96
  %v14269 = vpop.permute.xlu0 %14268
  %14270 = vrot.lane.b32.xlu0 %v14066, 96
  %v14271 = vpop.permute.xlu0 %14270
  %14280 = vrot.lane.b32.xlu0 %v13659, 112
  %v14281 = vpop.permute.xlu0 %14280
  %14282 = vrot.lane.b32.xlu0 %v13795, 112
  %v14283 = vpop.permute.xlu0 %14282
  %14284 = vrot.lane.b32.xlu0 %v13931, 112
  %v14285 = vpop.permute.xlu0 %14284
  %14286 = vrot.lane.b32.xlu0 %v14067, 112
  %v14287 = vpop.permute.xlu0 %14286
  %v14292 = vsel %vm709, %v13108, %v14073
  %v14293 = vsel %vm709, %v13244, %v14075
  %v14294 = vsel %vm709, %v13380, %v14077
  %v14295 = vsel %vm709, %v13516, %v14079
  %v14296 = vsel %vm242, %v14292, %v14089
  %v14297 = vsel %vm242, %v14293, %v14091
  %v14298 = vsel %vm242, %v14294, %v14093
  %v14299 = vsel %vm242, %v14295, %v14095
  %v14300 = vsel %vm712, %v14296, %v14105
  %v14301 = vsel %vm712, %v14297, %v14107
  %v14302 = vsel %vm712, %v14298, %v14109
  %v14303 = vsel %vm712, %v14299, %v14111
  %v14304 = vsel %vm714, %v14300, %v14121
  %v14305 = vsel %vm714, %v14301, %v14123
  %v14306 = vsel %vm714, %v14302, %v14125
  %v14307 = vsel %vm714, %v14303, %v14127
  %v14308 = vsel %vm716, %v14304, %v14137
  %v14309 = vsel %vm716, %v14305, %v14139
  %v14310 = vsel %vm716, %v14306, %v14141
  %v14311 = vsel %vm716, %v14307, %v14143
  %v14312 = vsel %vm718, %v14308, %v14153
  %v14313 = vsel %vm718, %v14309, %v14155
  %v14314 = vsel %vm718, %v14310, %v14157
  %v14315 = vsel %vm718, %v14311, %v14159
  %v14316 = vsel %vm720, %v14312, %v14169
  %v14317 = vsel %vm720, %v14313, %v14171
  %v14318 = vsel %vm720, %v14314, %v14173
  %v14319 = vsel %vm720, %v14315, %v14175
  %v14320 = vsel %vm709, %v13652, %v14185
  %v14321 = vsel %vm709, %v13788, %v14187
  %v14322 = vsel %vm709, %v13924, %v14189
  %v14323 = vsel %vm709, %v14060, %v14191
  %v14324 = vsel %vm242, %v14320, %v14201
  %v14325 = vsel %vm242, %v14321, %v14203
  %v14326 = vsel %vm242, %v14322, %v14205
  %v14327 = vsel %vm242, %v14323, %v14207
  %v14328 = vsel %vm712, %v14324, %v14217
  %v14329 = vsel %vm712, %v14325, %v14219
  %v14330 = vsel %vm712, %v14326, %v14221
  %v14331 = vsel %vm712, %v14327, %v14223
  %v14332 = vsel %vm714, %v14328, %v14233
  %v14333 = vsel %vm714, %v14329, %v14235
  %v14334 = vsel %vm714, %v14330, %v14237
  %v14335 = vsel %vm714, %v14331, %v14239
  %v14336 = vsel %vm716, %v14332, %v14249
  %v14337 = vsel %vm716, %v14333, %v14251
  %v14338 = vsel %vm716, %v14334, %v14253
  %v14339 = vsel %vm716, %v14335, %v14255
  %v14340 = vsel %vm718, %v14336, %v14265
  %v14341 = vsel %vm718, %v14337, %v14267
  %v14342 = vsel %vm718, %v14338, %v14269
  %v14343 = vsel %vm718, %v14339, %v14271
  %v14344 = vsel %vm720, %v14340, %v14281
  %v14345 = vsel %vm720, %v14341, %v14283
  %v14346 = vsel %vm720, %v14342, %v14285
  %v14347 = vsel %vm720, %v14343, %v14287
  %v14348 = vxor.u32 %v14316, 2147483648
  %v14349 = vxor.u32 %v14344, 2147483648
  %v14350 = vxor.u32 %v14317, 2147483648
  %v14351 = vxor.u32 %v14345, 2147483648
  %v14352 = vxor.u32 %v14318, 2147483648
  %v14353 = vxor.u32 %v14346, 2147483648
  %v14354 = vxor.u32 %v14319, 2147483648
  %v14355 = vxor.u32 %v14347, 2147483648
  %v14356 = vmul.f32 %v14348, 1.442695
  %v14357 = vpow.pop %v14356
  %v14358 = vmul.f32 %v14349, 1.442695
  %v14359 = vpow.pop %v14358
  %v14360 = vmul.f32 %v14350, 1.442695
  %v14361 = vpow.pop %v14360
  %v14362 = vmul.f32 %v14351, 1.442695
  %v14363 = vpow.pop %v14362
  %v14364 = vmul.f32 %v14352, 1.442695
  %v14365 = vpow.pop %v14364
  %v14366 = vmul.f32 %v14353, 1.442695
  %v14367 = vpow.pop %v14366
  %v14368 = vmul.f32 %v14354, 1.442695
  %v14369 = vpow.pop %v14368
  %v14370 = vmul.f32 %v14355, 1.442695
  %v14371 = vpow.pop %v14370
  %v14372 = vadd.f32 %v14357, 1.0
  %v14373 = vadd.f32 %v14359, 1.0
  %v14374 = vadd.f32 %v14361, 1.0
  %v14375 = vadd.f32 %v14363, 1.0
  %v14376 = vadd.f32 %v14365, 1.0
  %v14377 = vadd.f32 %v14367, 1.0
  %v14378 = vadd.f32 %v14369, 1.0
  %v14379 = vadd.f32 %v14371, 1.0
  %v14380 = vrcp.pop %v14372
  %v14381 = vmul.f32 1.0, %v14380
  %v14382 = vrcp.pop %v14373
  %v14383 = vmul.f32 1.0, %v14382
  %v14384 = vrcp.pop %v14374
  %v14385 = vmul.f32 1.0, %v14384
  %v14386 = vrcp.pop %v14375
  %v14387 = vmul.f32 1.0, %v14386
  %v14388 = vrcp.pop %v14376
  %v14389 = vmul.f32 1.0, %v14388
  %v14390 = vrcp.pop %v14377
  %v14391 = vmul.f32 1.0, %v14390
  %v14392 = vrcp.pop %v14378
  %v14393 = vmul.f32 1.0, %v14392
  %v14394 = vrcp.pop %v14379
  %v14395 = vmul.f32 1.0, %v14394
  %v14396 = vmul.f32 %v14381, %v7394
  %v14397 = vmul.f32 %v14383, %v7395
  %v14398 = vmul.f32 %v14385, %v7396
  %v14399 = vmul.f32 %v14387, %v7397
  %v14400 = vmul.f32 %v14389, %v7398
  %v14401 = vmul.f32 %v14391, %v7399
  %v14402 = vmul.f32 %v14393, %v7400
  %v14403 = vmul.f32 %v14395, %v7401
  %s14404 = scalar_lea.vmem %s7, 64
  %14405 = vst [vmem:[%s14404] sm:$0xff] %v14396
  %14406 = vst [vmem:[%s14404 + $0x8] sm:$0xff] %v14397
  %14407 = vst [vmem:[%s14404 + $0x10] sm:$0xff] %v14398
  %14408 = vst [vmem:[%s14404 + $0x18] sm:$0xff] %v14399
  %14409 = vst [vmem:[%s14404 + $0x20] sm:$0xff] %v14400
  %14410 = vst [vmem:[%s14404 + $0x28] sm:$0xff] %v14401
  %14411 = vst [vmem:[%s14404 + $0x30] sm:$0xff] %v14402
  %14412 = vst [vmem:[%s14404 + $0x38] sm:$0xff] %v14403
  // Predicated region
  $region30: #{dam_forward.1} parent=0 // pred_check
    _
  $region31: #{dam_forward.1} parent=0 // pred_check_branch
    %14414 = sbr.rel (0) target = $region33
  $region32: #{dam_forward.1} parent=0 // pred_region
    _
  $region33: #{dam_forward.1} parent=0 // pred_fallthru
    _
  // Predicated region
  $region34: #{dam_forward.1} parent=0 // pred_check
    _
  $region35: #{dam_forward.1} parent=0 // pred_check_branch
    %14416 = sbr.rel (0) target = $region37
  $region36: #{dam_forward.1} parent=0 // pred_region
    _
  $region37: #{dam_forward.1} parent=0 // pred_fallthru
    _

</llo_original>
